<compile_context>
chip_gen: v6e
topology: v6e:2x2x1
jax: 0.10.0
libtpu: 0.0.40
codegen_flags: <defaults>
</compile_context>

<pallas_src>
import jax
import jax.numpy as jnp
from jax.experimental import pallas as pl
from jax.experimental.pallas import tpu as pltpu


# ----------------------------------------------------------------------------
# Pallas kernel: conv3x3 -> BN -> ReLU -> conv3x3 -> BN -> +residual -> ReLU
# (block_n batch images per grid step)
# ----------------------------------------------------------------------------
def basic_block_kernel(x_ref, w1_ref, w2_ref, s1_ref, b1_ref, s2_ref, b2_ref,
                       out_ref, pad_ref, patch_ref):
    # x_ref    : (Bn, H, W, C)        f32 input tile (channels lane-padded)
    # w*_ref   : (9*C, C)             bf16 folded conv weights, row block dh*3+dw
    # s*_ref   : (1, C)               f32 folded BN scale
    # b*_ref   : (1, C)               f32 folded BN shift
    # out_ref  : (Bn, H, W, C)        f32 output tile
    # pad_ref  : (Bn, H+2, W+2, C)    bf16 zero-halo conv-input staging scratch
    # patch_ref: (Bn*H*W, 9*C)        bf16 im2col patch scratch (reused)
    Bn, H, W, C = x_ref.shape
    Hp, Wp = H + 2, W + 2
    M = Bn * H * W

    # Zero only the 1-pixel halo each step (interior is fully overwritten
    # below); done every step so correctness never depends on cross-step /
    # cross-core scratch state.
    zrow = jnp.zeros((Bn, 1, Wp, C), jnp.bfloat16)
    zcol = jnp.zeros((Bn, Hp, 1, C), jnp.bfloat16)
    pad_ref[:, 0:1, :, :] = zrow
    pad_ref[:, Hp - 1:Hp, :, :] = zrow
    pad_ref[:, :, 0:1, :] = zcol
    pad_ref[:, :, Wp - 1:Wp, :] = zcol

    def conv3x3(w_ref):
        # Stage the 9 im2col taps into the pre-allocated bf16 patch scratch
        # (each tap is a lane-aligned 128-wide column block), then do ONE MXU
        # matmul: (M, 9*C) x (9*C, C), bf16 operands, f32 accumulation.
        t = 0
        for dh in range(3):
            for dw in range(3):
                patch_ref[:, t * C:(t + 1) * C] = (
                    pad_ref[:, dh:dh + H, dw:dw + W, :].reshape(M, C))
                t += 1
        return jnp.dot(patch_ref[...], w_ref[...],
                       preferred_element_type=jnp.float32)

    x = x_ref[...]                                           # (Bn,H,W,C) f32

    # ---- conv1 + BN1 + ReLU ----
    pad_ref[:, 1:H + 1, 1:W + 1, :] = x.astype(jnp.bfloat16)
    y = conv3x3(w1_ref)                                      # (M, C) f32
    y = jnp.maximum(y * s1_ref[...] + b1_ref[...], 0.0)

    # ---- conv2 + BN2 ----
    pad_ref[:, 1:H + 1, 1:W + 1, :] = y.reshape(Bn, H, W, C).astype(jnp.bfloat16)
    out = conv3x3(w2_ref)
    out = out * s2_ref[...] + b2_ref[...]

    # ---- identity residual + ReLU ----
    out = jnp.maximum(out + x.reshape(M, C), 0.0)
    out_ref[...] = out.reshape(Bn, H, W, C)


# ----------------------------------------------------------------------------
# Wrapper: parameter folding, channel padding, block sizing, pallas_call
# ----------------------------------------------------------------------------
def _round_up(x, m):
    return (x + m - 1) // m * m


_VMEM_LIMIT_BYTES = 32 * 1024 * 1024          # safe on v5e/v6e/v7x
_VMEM_BUDGET_BYTES = 12 * 1024 * 1024         # cap for the kernel working set


def _pick_block_n(N, H, W, C, budget=_VMEM_BUDGET_BYTES):
    """Largest batch block that divides N, fits the VMEM budget and (if
    possible) keeps >= 2 grid steps so both TensorCores get work."""
    def vmem_bytes(bn):
        tile_f32 = bn * H * W * C * 4                       # x / out tile
        pad_bf16 = bn * (H + 2) * (W + 2) * C * 2
        patch_bf16 = bn * H * W * 9 * C * 2
        weights = 2 * (9 * C) * C * 2
        # x & out tiles double-buffered by the pipeline; weights likewise.
        return 2 * 2 * tile_f32 + pad_bf16 + patch_bf16 + 2 * weights

    divs = [d for d in range(1, N + 1)
            if N % d == 0 and vmem_bytes(d) <= budget]
    if not divs:
        return 1
    pref = [d for d in divs if N // d >= 2] or divs
    return max(pref)


def _fold_params(params, eps, C):
    """Fold BN into per-channel scale/shift and convs into (9*C, C) matrices,
    all zero-padded to the lane-dense channel count C."""
    planes = params["w1"].shape[-1]
    cin = params["w1"].shape[-2]

    def fold_bn(bn):
        scale = bn["gamma"] / jnp.sqrt(bn["var"] + eps)
        shift = bn["beta"] - bn["mean"] * scale
        scale = jnp.pad(scale, (0, C - planes)).reshape(1, C).astype(jnp.float32)
        shift = jnp.pad(shift, (0, C - planes)).reshape(1, C).astype(jnp.float32)
        return scale, shift

    def fold_w(w, c_in):
        # (3,3,cin,planes) -> zero-pad channels -> (9*C, C); row block = dh*3+dw
        w = jnp.pad(w, ((0, 0), (0, 0), (0, C - c_in), (0, C - planes)))
        return w.reshape(9 * C, C).astype(jnp.bfloat16)

    return (fold_w(params["w1"], cin), fold_w(params["w2"], planes),
            *fold_bn(params["bn1"]), *fold_bn(params["bn2"]))


def basic_block_nhwc(x_padded, folded, block_n=None):
    """Core entry point on lane-padded NHWC activations.  Chain this across
    blocks of a network to avoid per-block transpose/pad/slice HBM traffic."""
    w1, w2, s1, b1, s2, b2 = folded
    N, H, W, C = x_padded.shape
    if block_n is None:
        block_n = _pick_block_n(N, H, W, C)
    assert N % block_n == 0

    return pl.pallas_call(
        basic_block_kernel,
        out_shape=jax.ShapeDtypeStruct((N, H, W, C), jnp.float32),
        grid=(N // block_n,),
        in_specs=[
            pl.BlockSpec((block_n, H, W, C), lambda n: (n, 0, 0, 0)),  # x tile
            pl.BlockSpec((9 * C, C), lambda n: (0, 0)),                # w1
            pl.BlockSpec((9 * C, C), lambda n: (0, 0)),                # w2
            pl.BlockSpec((1, C), lambda n: (0, 0)),                    # s1
            pl.BlockSpec((1, C), lambda n: (0, 0)),                    # b1
            pl.BlockSpec((1, C), lambda n: (0, 0)),                    # s2
            pl.BlockSpec((1, C), lambda n: (0, 0)),                    # b2
        ],
        out_specs=pl.BlockSpec((block_n, H, W, C), lambda n: (n, 0, 0, 0)),
        scratch_shapes=[
            pltpu.VMEM((block_n, H + 2, W + 2, C), jnp.bfloat16),      # pad buf
            pltpu.VMEM((block_n * H * W, 9 * C), jnp.bfloat16),        # im2col
        ],
        compiler_params=pltpu.CompilerParams(
            dimension_semantics=("parallel",),
            vmem_limit_bytes=_VMEM_LIMIT_BYTES),
    )(x_padded, w1, w2, s1, b1, s2, b2)


def basic_block_forward(x_nchw, params, eps=1e-5):
    """NCHW adapter matching the PyTorch module interface (test entry)."""
    N, Cin, H, W = x_nchw.shape
    planes = params["w1"].shape[-1]
    assert Cin == planes, "identity residual path requires inplanes == planes"
    C = _round_up(planes, 128)                 # lane-dense channel padding

    folded = _fold_params(params, eps, C)

    # NCHW -> NHWC, zero-pad channels (padded channels provably stay zero).
    x = jnp.transpose(x_nchw, (0, 2, 3, 1)).astype(jnp.float32)
    x = jnp.pad(x, ((0, 0), (0, 0), (0, 0), (0, C - planes)))

    out = basic_block_nhwc(x, folded)

    out = out[..., :planes]                    # drop lane padding
    return jnp.transpose(out, (0, 3, 1, 2))    # NHWC -> NCHW


# ----------------------------------------------------------------------------
# Deterministic parameter initialization (shapes per nn.Module __init__)
# ----------------------------------------------------------------------------
def init_params(key, inplanes, planes):
    k1, k2 = jax.random.split(key)
    w1 = jax.random.normal(k1, (3, 3, inplanes, planes), jnp.float32) \
        * (2.0 / (9 * inplanes)) ** 0.5
    w2 = jax.random.normal(k2, (3, 3, planes, planes), jnp.float32) \
        * (2.0 / (9 * planes)) ** 0.5

    def bn_params(c, off):
        r = jnp.arange(c, dtype=jnp.float32)
        return dict(gamma=1.0 + 0.10 * r + off,
                    beta=0.05 * r - off,
                    mean=0.01 * r,
                    var=1.0 + 0.02 * r)

    return dict(w1=w1, w2=w2, bn1=bn_params(planes, 0.0), bn2=bn_params(planes, 0.1))


# ----------------------------------------------------------------------------
# Pure-JAX reference (same bf16-operand / f32-accumulate conv numerics)
# ----------------------------------------------------------------------------
def basic_block_reference(x_nchw, params, eps=1e-5):
    x = jnp.transpose(x_nchw, (0, 2, 3, 1)).astype(jnp.float32)

    def conv(h, w):
        return jax.lax.conv_general_dilated(
            h.astype(jnp.bfloat16), w.astype(jnp.bfloat16),
            window_strides=(1, 1), padding=((1, 1), (1, 1)),
            dimension_numbers=("NHWC", "HWIO", "NHWC"),
            preferred_element_type=jnp.float32)

    def bn(h, p):
        return (h - p["mean"]) / jnp.sqrt(p["var"] + eps) * p["gamma"] + p["beta"]

    out = jax.nn.relu(bn(conv(x, params["w1"]), params["bn1"]))
    out = bn(conv(out, params["w2"]), params["bn2"])
    out = jax.nn.relu(out + x)
    return jnp.transpose(out, (0, 3, 1, 2))


if __name__ == "__main__":
    key = jax.random.PRNGKey(0)
    kx, kp = jax.random.split(key)

    # small shapes consistent with the module: batch=2, inplanes=planes=4, 16x16
    inplanes = planes = 4
    x = jax.random.normal(kx, (2, inplanes, 16, 16), jnp.float32)
    params = init_params(kp, inplanes, planes)

    out = jax.block_until_ready(basic_block_forward(x, params))
    ref = basic_block_reference(x, params)

    assert out.shape == ref.shape == (2, planes, 16, 16)
    err = jnp.max(jnp.abs(out - ref))
    assert jnp.allclose(out, ref, atol=1e-2, rtol=1e-2), f"max abs err = {err}"

    print("KERNEL_OK")
</pallas_src>

<mosaic_0001>
module attributes {stable_mosaic.version = 11 : i64} {
  func.func @basic_block_kernel(%arg0: i32, %arg1: memref<1x16x16x128xf32, #tpu.memory_space<vmem>>, %arg2: memref<1152x128xbf16, #tpu.memory_space<vmem>>, %arg3: memref<1152x128xbf16, #tpu.memory_space<vmem>>, %arg4: memref<1x128xf32, #tpu.memory_space<vmem>>, %arg5: memref<1x128xf32, #tpu.memory_space<vmem>>, %arg6: memref<1x128xf32, #tpu.memory_space<vmem>>, %arg7: memref<1x128xf32, #tpu.memory_space<vmem>>, %arg8: memref<1x16x16x128xf32, #tpu.memory_space<vmem>>, %arg9: memref<1x18x18x128xbf16, #tpu.memory_space<vmem>>, %arg10: memref<256x1152xbf16, #tpu.memory_space<vmem>>) attributes {dimension_semantics = [#tpu.dimension_semantics<parallel>], iteration_bounds = array<i64: 2>, scalar_prefetch = 0 : i64, scratch_operands = 2 : i64, tpu.core_type = #tpu.core_type<tc>, window_params = [{transform_indices = @transform_0, window_bounds = array<i64: 1, 16, 16, 128>}, {pipeline_mode = #tpu.pipeline_mode<synchronous>, transform_indices = @transform_1, window_bounds = array<i64: 1152, 128>}, {pipeline_mode = #tpu.pipeline_mode<synchronous>, transform_indices = @transform_2, window_bounds = array<i64: 1152, 128>}, {pipeline_mode = #tpu.pipeline_mode<synchronous>, transform_indices = @transform_3, window_bounds = array<i64: 1, 128>}, {pipeline_mode = #tpu.pipeline_mode<synchronous>, transform_indices = @transform_4, window_bounds = array<i64: 1, 128>}, {pipeline_mode = #tpu.pipeline_mode<synchronous>, transform_indices = @transform_5, window_bounds = array<i64: 1, 128>}, {pipeline_mode = #tpu.pipeline_mode<synchronous>, transform_indices = @transform_6, window_bounds = array<i64: 1, 128>}, {transform_indices = @transform_7, window_bounds = array<i64: 1, 16, 16, 128>}]} {
    %cst = arith.constant 0.000000e+00 : bf16
    %0 = vector.broadcast %cst : bf16 to vector<1x1x18x128xbf16>
    %cst_0 = arith.constant 0.000000e+00 : bf16
    %1 = vector.broadcast %cst_0 : bf16 to vector<1x18x1x128xbf16>
    %c0 = arith.constant 0 : index
    %c0_1 = arith.constant 0 : index
    %c0_2 = arith.constant 0 : index
    %c0_3 = arith.constant 0 : index
    %2 = vector.load %arg9[%c0, %c0_1, %c0_2, %c0_3] : memref<1x18x18x128xbf16, #tpu.memory_space<vmem>>, vector<1x1x18x128xbf16>
    tpu.vector_store %arg9[%c0, %c0_1, %c0_2, %c0_3], %0 {strides = array<i32>} : memref<1x18x18x128xbf16, #tpu.memory_space<vmem>>, vector<1x1x18x128xbf16>,
    %c0_4 = arith.constant 0 : index
    %c17 = arith.constant 17 : index
    %c0_5 = arith.constant 0 : index
    %c0_6 = arith.constant 0 : index
    %3 = vector.load %arg9[%c0_4, %c17, %c0_5, %c0_6] : memref<1x18x18x128xbf16, #tpu.memory_space<vmem>>, vector<1x1x18x128xbf16>
    tpu.vector_store %arg9[%c0_4, %c17, %c0_5, %c0_6], %0 {strides = array<i32>} : memref<1x18x18x128xbf16, #tpu.memory_space<vmem>>, vector<1x1x18x128xbf16>,
    %c0_7 = arith.constant 0 : index
    %c0_8 = arith.constant 0 : index
    %c0_9 = arith.constant 0 : index
    %c0_10 = arith.constant 0 : index
    %4 = vector.load %arg9[%c0_7, %c0_8, %c0_9, %c0_10] : memref<1x18x18x128xbf16, #tpu.memory_space<vmem>>, vector<1x18x1x128xbf16>
    tpu.vector_store %arg9[%c0_7, %c0_8, %c0_9, %c0_10], %1 {strides = array<i32>} : memref<1x18x18x128xbf16, #tpu.memory_space<vmem>>, vector<1x18x1x128xbf16>,
    %c0_11 = arith.constant 0 : index
    %c0_12 = arith.constant 0 : index
    %c17_13 = arith.constant 17 : index
    %c0_14 = arith.constant 0 : index
    %5 = vector.load %arg9[%c0_11, %c0_12, %c17_13, %c0_14] : memref<1x18x18x128xbf16, #tpu.memory_space<vmem>>, vector<1x18x1x128xbf16>
    tpu.vector_store %arg9[%c0_11, %c0_12, %c17_13, %c0_14], %1 {strides = array<i32>} : memref<1x18x18x128xbf16, #tpu.memory_space<vmem>>, vector<1x18x1x128xbf16>,
    %c0_15 = arith.constant 0 : index
    %c0_16 = arith.constant 0 : index
    %c0_17 = arith.constant 0 : index
    %c0_18 = arith.constant 0 : index
    %6 = vector.load %arg1[%c0_15, %c0_16, %c0_17, %c0_18] : memref<1x16x16x128xf32, #tpu.memory_space<vmem>>, vector<1x16x16x128xf32>
    %7 = arith.truncf %6 : vector<1x16x16x128xf32> to vector<1x16x16x128xbf16>
    %c0_19 = arith.constant 0 : index
    %c1 = arith.constant 1 : index
    %c1_20 = arith.constant 1 : index
    %c0_21 = arith.constant 0 : index
    %8 = vector.load %arg9[%c0_19, %c1, %c1_20, %c0_21] : memref<1x18x18x128xbf16, #tpu.memory_space<vmem>>, vector<1x16x16x128xbf16>
    tpu.vector_store %arg9[%c0_19, %c1, %c1_20, %c0_21], %7 {strides = array<i32>} : memref<1x18x18x128xbf16, #tpu.memory_space<vmem>>, vector<1x16x16x128xbf16>,
    %c0_22 = arith.constant 0 : index
    %c0_23 = arith.constant 0 : index
    %c0_24 = arith.constant 0 : index
    %c0_25 = arith.constant 0 : index
    %9 = vector.load %arg9[%c0_22, %c0_23, %c0_24, %c0_25] : memref<1x18x18x128xbf16, #tpu.memory_space<vmem>>, vector<1x16x16x128xbf16>
    %10 = vector.shape_cast %9 : vector<1x16x16x128xbf16> to vector<256x128xbf16>
    %c0_26 = arith.constant 0 : index
    %c0_27 = arith.constant 0 : index
    %11 = vector.load %arg10[%c0_26, %c0_27] : memref<256x1152xbf16, #tpu.memory_space<vmem>>, vector<256x128xbf16>
    tpu.vector_store %arg10[%c0_26, %c0_27], %10 {strides = array<i32>} : memref<256x1152xbf16, #tpu.memory_space<vmem>>, vector<256x128xbf16>,
    %c0_28 = arith.constant 0 : index
    %c0_29 = arith.constant 0 : index
    %c1_30 = arith.constant 1 : index
    %c0_31 = arith.constant 0 : index
    %12 = vector.load %arg9[%c0_28, %c0_29, %c1_30, %c0_31] : memref<1x18x18x128xbf16, #tpu.memory_space<vmem>>, vector<1x16x16x128xbf16>
    %13 = vector.shape_cast %12 : vector<1x16x16x128xbf16> to vector<256x128xbf16>
    %c0_32 = arith.constant 0 : index
    %c128 = arith.constant 128 : index
    %14 = vector.load %arg10[%c0_32, %c128] : memref<256x1152xbf16, #tpu.memory_space<vmem>>, vector<256x128xbf16>
    tpu.vector_store %arg10[%c0_32, %c128], %13 {strides = array<i32>} : memref<256x1152xbf16, #tpu.memory_space<vmem>>, vector<256x128xbf16>,
    %c0_33 = arith.constant 0 : index
    %c0_34 = arith.constant 0 : index
    %c2 = arith.constant 2 : index
    %c0_35 = arith.constant 0 : index
    %15 = vector.load %arg9[%c0_33, %c0_34, %c2, %c0_35] : memref<1x18x18x128xbf16, #tpu.memory_space<vmem>>, vector<1x16x16x128xbf16>
    %16 = vector.shape_cast %15 : vector<1x16x16x128xbf16> to vector<256x128xbf16>
    %c0_36 = arith.constant 0 : index
    %c256 = arith.constant 256 : index
    %17 = vector.load %arg10[%c0_36, %c256] : memref<256x1152xbf16, #tpu.memory_space<vmem>>, vector<256x128xbf16>
    tpu.vector_store %arg10[%c0_36, %c256], %16 {strides = array<i32>} : memref<256x1152xbf16, #tpu.memory_space<vmem>>, vector<256x128xbf16>,
    %c0_37 = arith.constant 0 : index
    %c1_38 = arith.constant 1 : index
    %c0_39 = arith.constant 0 : index
    %c0_40 = arith.constant 0 : index
    %18 = vector.load %arg9[%c0_37, %c1_38, %c0_39, %c0_40] : memref<1x18x18x128xbf16, #tpu.memory_space<vmem>>, vector<1x16x16x128xbf16>
    %19 = vector.shape_cast %18 : vector<1x16x16x128xbf16> to vector<256x128xbf16>
    %c0_41 = arith.constant 0 : index
    %c384 = arith.constant 384 : index
    %20 = vector.load %arg10[%c0_41, %c384] : memref<256x1152xbf16, #tpu.memory_space<vmem>>, vector<256x128xbf16>
    tpu.vector_store %arg10[%c0_41, %c384], %19 {strides = array<i32>} : memref<256x1152xbf16, #tpu.memory_space<vmem>>, vector<256x128xbf16>,
    %c0_42 = arith.constant 0 : index
    %c1_43 = arith.constant 1 : index
    %c1_44 = arith.constant 1 : index
    %c0_45 = arith.constant 0 : index
    %21 = vector.load %arg9[%c0_42, %c1_43, %c1_44, %c0_45] : memref<1x18x18x128xbf16, #tpu.memory_space<vmem>>, vector<1x16x16x128xbf16>
    %22 = vector.shape_cast %21 : vector<1x16x16x128xbf16> to vector<256x128xbf16>
    %c0_46 = arith.constant 0 : index
    %c512 = arith.constant 512 : index
    %23 = vector.load %arg10[%c0_46, %c512] : memref<256x1152xbf16, #tpu.memory_space<vmem>>, vector<256x128xbf16>
    tpu.vector_store %arg10[%c0_46, %c512], %22 {strides = array<i32>} : memref<256x1152xbf16, #tpu.memory_space<vmem>>, vector<256x128xbf16>,
    %c0_47 = arith.constant 0 : index
    %c1_48 = arith.constant 1 : index
    %c2_49 = arith.constant 2 : index
    %c0_50 = arith.constant 0 : index
    %24 = vector.load %arg9[%c0_47, %c1_48, %c2_49, %c0_50] : memref<1x18x18x128xbf16, #tpu.memory_space<vmem>>, vector<1x16x16x128xbf16>
    %25 = vector.shape_cast %24 : vector<1x16x16x128xbf16> to vector<256x128xbf16>
    %c0_51 = arith.constant 0 : index
    %c640 = arith.constant 640 : index
    %26 = vector.load %arg10[%c0_51, %c640] : memref<256x1152xbf16, #tpu.memory_space<vmem>>, vector<256x128xbf16>
    tpu.vector_store %arg10[%c0_51, %c640], %25 {strides = array<i32>} : memref<256x1152xbf16, #tpu.memory_space<vmem>>, vector<256x128xbf16>,
    %c0_52 = arith.constant 0 : index
    %c2_53 = arith.constant 2 : index
    %c0_54 = arith.constant 0 : index
    %c0_55 = arith.constant 0 : index
    %27 = vector.load %arg9[%c0_52, %c2_53, %c0_54, %c0_55] : memref<1x18x18x128xbf16, #tpu.memory_space<vmem>>, vector<1x16x16x128xbf16>
    %28 = vector.shape_cast %27 : vector<1x16x16x128xbf16> to vector<256x128xbf16>
    %c0_56 = arith.constant 0 : index
    %c768 = arith.constant 768 : index
    %29 = vector.load %arg10[%c0_56, %c768] : memref<256x1152xbf16, #tpu.memory_space<vmem>>, vector<256x128xbf16>
    tpu.vector_store %arg10[%c0_56, %c768], %28 {strides = array<i32>} : memref<256x1152xbf16, #tpu.memory_space<vmem>>, vector<256x128xbf16>,
    %c0_57 = arith.constant 0 : index
    %c2_58 = arith.constant 2 : index
    %c1_59 = arith.constant 1 : index
    %c0_60 = arith.constant 0 : index
    %30 = vector.load %arg9[%c0_57, %c2_58, %c1_59, %c0_60] : memref<1x18x18x128xbf16, #tpu.memory_space<vmem>>, vector<1x16x16x128xbf16>
    %31 = vector.shape_cast %30 : vector<1x16x16x128xbf16> to vector<256x128xbf16>
    %c0_61 = arith.constant 0 : index
    %c896 = arith.constant 896 : index
    %32 = vector.load %arg10[%c0_61, %c896] : memref<256x1152xbf16, #tpu.memory_space<vmem>>, vector<256x128xbf16>
    tpu.vector_store %arg10[%c0_61, %c896], %31 {strides = array<i32>} : memref<256x1152xbf16, #tpu.memory_space<vmem>>, vector<256x128xbf16>,
    %c0_62 = arith.constant 0 : index
    %c2_63 = arith.constant 2 : index
    %c2_64 = arith.constant 2 : index
    %c0_65 = arith.constant 0 : index
    %33 = vector.load %arg9[%c0_62, %c2_63, %c2_64, %c0_65] : memref<1x18x18x128xbf16, #tpu.memory_space<vmem>>, vector<1x16x16x128xbf16>
    %34 = vector.shape_cast %33 : vector<1x16x16x128xbf16> to vector<256x128xbf16>
    %c0_66 = arith.constant 0 : index
    %c1024 = arith.constant 1024 : index
    %35 = vector.load %arg10[%c0_66, %c1024] : memref<256x1152xbf16, #tpu.memory_space<vmem>>, vector<256x128xbf16>
    tpu.vector_store %arg10[%c0_66, %c1024], %34 {strides = array<i32>} : memref<256x1152xbf16, #tpu.memory_space<vmem>>, vector<256x128xbf16>,
    %c0_67 = arith.constant 0 : index
    %c0_68 = arith.constant 0 : index
    %36 = vector.load %arg10[%c0_67, %c0_68] : memref<256x1152xbf16, #tpu.memory_space<vmem>>, vector<256x1152xbf16>
    %c0_69 = arith.constant 0 : index
    %c0_70 = arith.constant 0 : index
    %37 = vector.load %arg2[%c0_69, %c0_70] : memref<1152x128xbf16, #tpu.memory_space<vmem>>, vector<1152x128xbf16>
    %cst_71 = arith.constant dense<0.000000e+00> : vector<256x128xf32>
    %38 = tpu.matmul %36, %37, %cst_71 {dimension_numbers = #tpu.dot_dimension_numbers<[1], [0], [0], [1], [0, 0, 1, 1], [], []>} : vector<256x1152xbf16>, vector<1152x128xbf16>, vector<256x128xf32> -> vector<256x128xf32>
    %c0_72 = arith.constant 0 : index
    %c0_73 = arith.constant 0 : index
    %39 = vector.load %arg4[%c0_72, %c0_73] : memref<1x128xf32, #tpu.memory_space<vmem>>, vector<1x128xf32>
    %40 = vector.broadcast %39 : vector<1x128xf32> to vector<256x128xf32>
    %41 = arith.mulf %38, %40 : vector<256x128xf32>
    %c0_74 = arith.constant 0 : index
    %c0_75 = arith.constant 0 : index
    %42 = vector.load %arg5[%c0_74, %c0_75] : memref<1x128xf32, #tpu.memory_space<vmem>>, vector<1x128xf32>
    %43 = vector.broadcast %42 : vector<1x128xf32> to vector<256x128xf32>
    %44 = arith.addf %41, %43 : vector<256x128xf32>
    %cst_76 = arith.constant 0.000000e+00 : f32
    %45 = vector.broadcast %cst_76 : f32 to vector<256x128xf32>
    %46 = arith.maximumf %44, %45 : vector<256x128xf32>
    %47 = vector.shape_cast %46 : vector<256x128xf32> to vector<1x16x16x128xf32>
    %48 = arith.truncf %47 : vector<1x16x16x128xf32> to vector<1x16x16x128xbf16>
    %c0_77 = arith.constant 0 : index
    %c1_78 = arith.constant 1 : index
    %c1_79 = arith.constant 1 : index
    %c0_80 = arith.constant 0 : index
    %49 = vector.load %arg9[%c0_77, %c1_78, %c1_79, %c0_80] : memref<1x18x18x128xbf16, #tpu.memory_space<vmem>>, vector<1x16x16x128xbf16>
    tpu.vector_store %arg9[%c0_77, %c1_78, %c1_79, %c0_80], %48 {strides = array<i32>} : memref<1x18x18x128xbf16, #tpu.memory_space<vmem>>, vector<1x16x16x128xbf16>,
    %c0_81 = arith.constant 0 : index
    %c0_82 = arith.constant 0 : index
    %c0_83 = arith.constant 0 : index
    %c0_84 = arith.constant 0 : index
    %50 = vector.load %arg9[%c0_81, %c0_82, %c0_83, %c0_84] : memref<1x18x18x128xbf16, #tpu.memory_space<vmem>>, vector<1x16x16x128xbf16>
    %51 = vector.shape_cast %50 : vector<1x16x16x128xbf16> to vector<256x128xbf16>
    %c0_85 = arith.constant 0 : index
    %c0_86 = arith.constant 0 : index
    %52 = vector.load %arg10[%c0_85, %c0_86] : memref<256x1152xbf16, #tpu.memory_space<vmem>>, vector<256x128xbf16>
    tpu.vector_store %arg10[%c0_85, %c0_86], %51 {strides = array<i32>} : memref<256x1152xbf16, #tpu.memory_space<vmem>>, vector<256x128xbf16>,
    %c0_87 = arith.constant 0 : index
    %c0_88 = arith.constant 0 : index
    %c1_89 = arith.constant 1 : index
    %c0_90 = arith.constant 0 : index
    %53 = vector.load %arg9[%c0_87, %c0_88, %c1_89, %c0_90] : memref<1x18x18x128xbf16, #tpu.memory_space<vmem>>, vector<1x16x16x128xbf16>
    %54 = vector.shape_cast %53 : vector<1x16x16x128xbf16> to vector<256x128xbf16>
    %c0_91 = arith.constant 0 : index
    %c128_92 = arith.constant 128 : index
    %55 = vector.load %arg10[%c0_91, %c128_92] : memref<256x1152xbf16, #tpu.memory_space<vmem>>, vector<256x128xbf16>
    tpu.vector_store %arg10[%c0_91, %c128_92], %54 {strides = array<i32>} : memref<256x1152xbf16, #tpu.memory_space<vmem>>, vector<256x128xbf16>,
    %c0_93 = arith.constant 0 : index
    %c0_94 = arith.constant 0 : index
    %c2_95 = arith.constant 2 : index
    %c0_96 = arith.constant 0 : index
    %56 = vector.load %arg9[%c0_93, %c0_94, %c2_95, %c0_96] : memref<1x18x18x128xbf16, #tpu.memory_space<vmem>>, vector<1x16x16x128xbf16>
    %57 = vector.shape_cast %56 : vector<1x16x16x128xbf16> to vector<256x128xbf16>
    %c0_97 = arith.constant 0 : index
    %c256_98 = arith.constant 256 : index
    %58 = vector.load %arg10[%c0_97, %c256_98] : memref<256x1152xbf16, #tpu.memory_space<vmem>>, vector<256x128xbf16>
    tpu.vector_store %arg10[%c0_97, %c256_98], %57 {strides = array<i32>} : memref<256x1152xbf16, #tpu.memory_space<vmem>>, vector<256x128xbf16>,
    %c0_99 = arith.constant 0 : index
    %c1_100 = arith.constant 1 : index
    %c0_101 = arith.constant 0 : index
    %c0_102 = arith.constant 0 : index
    %59 = vector.load %arg9[%c0_99, %c1_100, %c0_101, %c0_102] : memref<1x18x18x128xbf16, #tpu.memory_space<vmem>>, vector<1x16x16x128xbf16>
    %60 = vector.shape_cast %59 : vector<1x16x16x128xbf16> to vector<256x128xbf16>
    %c0_103 = arith.constant 0 : index
    %c384_104 = arith.constant 384 : index
    %61 = vector.load %arg10[%c0_103, %c384_104] : memref<256x1152xbf16, #tpu.memory_space<vmem>>, vector<256x128xbf16>
    tpu.vector_store %arg10[%c0_103, %c384_104], %60 {strides = array<i32>} : memref<256x1152xbf16, #tpu.memory_space<vmem>>, vector<256x128xbf16>,
    %c0_105 = arith.constant 0 : index
    %c1_106 = arith.constant 1 : index
    %c1_107 = arith.constant 1 : index
    %c0_108 = arith.constant 0 : index
    %62 = vector.load %arg9[%c0_105, %c1_106, %c1_107, %c0_108] : memref<1x18x18x128xbf16, #tpu.memory_space<vmem>>, vector<1x16x16x128xbf16>
    %63 = vector.shape_cast %62 : vector<1x16x16x128xbf16> to vector<256x128xbf16>
    %c0_109 = arith.constant 0 : index
    %c512_110 = arith.constant 512 : index
    %64 = vector.load %arg10[%c0_109, %c512_110] : memref<256x1152xbf16, #tpu.memory_space<vmem>>, vector<256x128xbf16>
    tpu.vector_store %arg10[%c0_109, %c512_110], %63 {strides = array<i32>} : memref<256x1152xbf16, #tpu.memory_space<vmem>>, vector<256x128xbf16>,
    %c0_111 = arith.constant 0 : index
    %c1_112 = arith.constant 1 : index
    %c2_113 = arith.constant 2 : index
    %c0_114 = arith.constant 0 : index
    %65 = vector.load %arg9[%c0_111, %c1_112, %c2_113, %c0_114] : memref<1x18x18x128xbf16, #tpu.memory_space<vmem>>, vector<1x16x16x128xbf16>
    %66 = vector.shape_cast %65 : vector<1x16x16x128xbf16> to vector<256x128xbf16>
    %c0_115 = arith.constant 0 : index
    %c640_116 = arith.constant 640 : index
    %67 = vector.load %arg10[%c0_115, %c640_116] : memref<256x1152xbf16, #tpu.memory_space<vmem>>, vector<256x128xbf16>
    tpu.vector_store %arg10[%c0_115, %c640_116], %66 {strides = array<i32>} : memref<256x1152xbf16, #tpu.memory_space<vmem>>, vector<256x128xbf16>,
    %c0_117 = arith.constant 0 : index
    %c2_118 = arith.constant 2 : index
    %c0_119 = arith.constant 0 : index
    %c0_120 = arith.constant 0 : index
    %68 = vector.load %arg9[%c0_117, %c2_118, %c0_119, %c0_120] : memref<1x18x18x128xbf16, #tpu.memory_space<vmem>>, vector<1x16x16x128xbf16>
    %69 = vector.shape_cast %68 : vector<1x16x16x128xbf16> to vector<256x128xbf16>
    %c0_121 = arith.constant 0 : index
    %c768_122 = arith.constant 768 : index
    %70 = vector.load %arg10[%c0_121, %c768_122] : memref<256x1152xbf16, #tpu.memory_space<vmem>>, vector<256x128xbf16>
    tpu.vector_store %arg10[%c0_121, %c768_122], %69 {strides = array<i32>} : memref<256x1152xbf16, #tpu.memory_space<vmem>>, vector<256x128xbf16>,
    %c0_123 = arith.constant 0 : index
    %c2_124 = arith.constant 2 : index
    %c1_125 = arith.constant 1 : index
    %c0_126 = arith.constant 0 : index
    %71 = vector.load %arg9[%c0_123, %c2_124, %c1_125, %c0_126] : memref<1x18x18x128xbf16, #tpu.memory_space<vmem>>, vector<1x16x16x128xbf16>
    %72 = vector.shape_cast %71 : vector<1x16x16x128xbf16> to vector<256x128xbf16>
    %c0_127 = arith.constant 0 : index
    %c896_128 = arith.constant 896 : index
    %73 = vector.load %arg10[%c0_127, %c896_128] : memref<256x1152xbf16, #tpu.memory_space<vmem>>, vector<256x128xbf16>
    tpu.vector_store %arg10[%c0_127, %c896_128], %72 {strides = array<i32>} : memref<256x1152xbf16, #tpu.memory_space<vmem>>, vector<256x128xbf16>,
    %c0_129 = arith.constant 0 : index
    %c2_130 = arith.constant 2 : index
    %c2_131 = arith.constant 2 : index
    %c0_132 = arith.constant 0 : index
    %74 = vector.load %arg9[%c0_129, %c2_130, %c2_131, %c0_132] : memref<1x18x18x128xbf16, #tpu.memory_space<vmem>>, vector<1x16x16x128xbf16>
    %75 = vector.shape_cast %74 : vector<1x16x16x128xbf16> to vector<256x128xbf16>
    %c0_133 = arith.constant 0 : index
    %c1024_134 = arith.constant 1024 : index
    %76 = vector.load %arg10[%c0_133, %c1024_134] : memref<256x1152xbf16, #tpu.memory_space<vmem>>, vector<256x128xbf16>
    tpu.vector_store %arg10[%c0_133, %c1024_134], %75 {strides = array<i32>} : memref<256x1152xbf16, #tpu.memory_space<vmem>>, vector<256x128xbf16>,
    %c0_135 = arith.constant 0 : index
    %c0_136 = arith.constant 0 : index
    %77 = vector.load %arg10[%c0_135, %c0_136] : memref<256x1152xbf16, #tpu.memory_space<vmem>>, vector<256x1152xbf16>
    %c0_137 = arith.constant 0 : index
    %c0_138 = arith.constant 0 : index
    %78 = vector.load %arg3[%c0_137, %c0_138] : memref<1152x128xbf16, #tpu.memory_space<vmem>>, vector<1152x128xbf16>
    %cst_139 = arith.constant dense<0.000000e+00> : vector<256x128xf32>
    %79 = tpu.matmul %77, %78, %cst_139 {dimension_numbers = #tpu.dot_dimension_numbers<[1], [0], [0], [1], [0, 0, 1, 1], [], []>} : vector<256x1152xbf16>, vector<1152x128xbf16>, vector<256x128xf32> -> vector<256x128xf32>
    %c0_140 = arith.constant 0 : index
    %c0_141 = arith.constant 0 : index
    %80 = vector.load %arg6[%c0_140, %c0_141] : memref<1x128xf32, #tpu.memory_space<vmem>>, vector<1x128xf32>
    %81 = vector.broadcast %80 : vector<1x128xf32> to vector<256x128xf32>
    %82 = arith.mulf %79, %81 : vector<256x128xf32>
    %c0_142 = arith.constant 0 : index
    %c0_143 = arith.constant 0 : index
    %83 = vector.load %arg7[%c0_142, %c0_143] : memref<1x128xf32, #tpu.memory_space<vmem>>, vector<1x128xf32>
    %84 = vector.broadcast %83 : vector<1x128xf32> to vector<256x128xf32>
    %85 = arith.addf %82, %84 : vector<256x128xf32>
    %86 = vector.shape_cast %6 : vector<1x16x16x128xf32> to vector<256x128xf32>
    %87 = arith.addf %85, %86 : vector<256x128xf32>
    %cst_144 = arith.constant 0.000000e+00 : f32
    %88 = vector.broadcast %cst_144 : f32 to vector<256x128xf32>
    %89 = arith.maximumf %87, %88 : vector<256x128xf32>
    %90 = vector.shape_cast %89 : vector<256x128xf32> to vector<1x16x16x128xf32>
    %c0_145 = arith.constant 0 : index
    %c0_146 = arith.constant 0 : index
    %c0_147 = arith.constant 0 : index
    %c0_148 = arith.constant 0 : index
    %91 = vector.load %arg8[%c0_145, %c0_146, %c0_147, %c0_148] : memref<1x16x16x128xf32, #tpu.memory_space<vmem>>, vector<1x16x16x128xf32>
    tpu.vector_store %arg8[%c0_145, %c0_146, %c0_147, %c0_148], %90 {strides = array<i32>} : memref<1x16x16x128xf32, #tpu.memory_space<vmem>>, vector<1x16x16x128xf32>,
    return
  }
  func.func @transform_0(%arg0: i32) -> (i32, i32, i32, i32) {
    %c0_i32 = arith.constant 0 : i32
    %c0_i32_0 = arith.constant 0 : i32
    %c0_i32_1 = arith.constant 0 : i32
    %c0_i32_2 = arith.constant 0 : i32
    return %arg0, %c0_i32, %c0_i32_0, %c0_i32_1 : i32, i32, i32, i32
  }
  func.func @transform_1(%arg0: i32) -> (i32, i32) {
    %c0_i32 = arith.constant 0 : i32
    %c0_i32_0 = arith.constant 0 : i32
    %c0_i32_1 = arith.constant 0 : i32
    return %c0_i32, %c0_i32_0 : i32, i32
  }
  func.func @transform_2(%arg0: i32) -> (i32, i32) {
    %c0_i32 = arith.constant 0 : i32
    %c0_i32_0 = arith.constant 0 : i32
    %c0_i32_1 = arith.constant 0 : i32
    return %c0_i32, %c0_i32_0 : i32, i32
  }
  func.func @transform_3(%arg0: i32) -> (i32, i32) {
    %c0_i32 = arith.constant 0 : i32
    %c0_i32_0 = arith.constant 0 : i32
    %c0_i32_1 = arith.constant 0 : i32
    return %c0_i32, %c0_i32_0 : i32, i32
  }
  func.func @transform_4(%arg0: i32) -> (i32, i32) {
    %c0_i32 = arith.constant 0 : i32
    %c0_i32_0 = arith.constant 0 : i32
    %c0_i32_1 = arith.constant 0 : i32
    return %c0_i32, %c0_i32_0 : i32, i32
  }
  func.func @transform_5(%arg0: i32) -> (i32, i32) {
    %c0_i32 = arith.constant 0 : i32
    %c0_i32_0 = arith.constant 0 : i32
    %c0_i32_1 = arith.constant 0 : i32
    return %c0_i32, %c0_i32_0 : i32, i32
  }
  func.func @transform_6(%arg0: i32) -> (i32, i32) {
    %c0_i32 = arith.constant 0 : i32
    %c0_i32_0 = arith.constant 0 : i32
    %c0_i32_1 = arith.constant 0 : i32
    return %c0_i32, %c0_i32_0 : i32, i32
  }
  func.func @transform_7(%arg0: i32) -> (i32, i32, i32, i32) {
    %c0_i32 = arith.constant 0 : i32
    %c0_i32_0 = arith.constant 0 : i32
    %c0_i32_1 = arith.constant 0 : i32
    %c0_i32_2 = arith.constant 0 : i32
    return %arg0, %c0_i32, %c0_i32_0, %c0_i32_1 : i32, i32, i32, i32
  }
}

</mosaic_0001>

<llo_original>
// kernel: tpu_custom_call.1
$region0: #{tpu_custom_call.1}
  #allocation0 [shape = 'u32[]', space=smem, size = 0x4, offset = 0x4, fixed_abs, tag = 'smem constant byte address 0x4 - core index']
  #allocation1 [shape = 'u32[144,128]{1,0:T(1,128)}', space=vmem, size = 0x12000, scoped, tag = 'internal scratch']
  #allocation2 [shape = 'bf16[1,18,18,128]{3,2,1,0:T(8,128)(2,1)}', space=vmem, size = 0x1b000, scoped, tag = 'scratch operand']
  #allocation3 [shape = 'bf16[256,1152]{1,0:T(8,128)(2,1)}', space=vmem, size = 0x90000, scoped, tag = 'scratch operand']
  %s0 = inlined_call_operand.hbm [shape: f32[2,16,16,128], index: 0, kind: input, shape index: {}]
  %s1 = inlined_call_operand.hbm [shape: bf16[1152,128], index: 1, kind: input, shape index: {}]
  %s2 = inlined_call_operand.hbm [shape: bf16[1152,128], index: 2, kind: input, shape index: {}]
  %s3 = inlined_call_operand.vmem [shape: f32[1,128], index: 3, kind: input, shape index: {}]
  %s4 = inlined_call_operand.vmem [shape: f32[1,128], index: 4, kind: input, shape index: {}]
  %s5 = inlined_call_operand.vmem [shape: f32[1,128], index: 5, kind: input, shape index: {}]
  %s6 = inlined_call_operand.vmem [shape: f32[1,128], index: 6, kind: input, shape index: {}]
  %s7 = inlined_call_operand.hbm [shape: f32[2,16,16,128], index: 7, kind: output, shape index: {}]
  %s8 = sld [smem:[#allocation0]]
  $region73: #{tpu_custom_call.1} parent=0
    _
  %s10 = ssub.s32 1, %s8
  %s11 = scalar_select 0, %s10, %s8
  $region1: #{tpu_custom_call.1} parent=0
    #allocation4 [shape = 'u8[262144]{0}', space=vmem, size = 0x40000, scoped, tag = 'input window, operand 0']
    #allocation5 [shape = 's32[2]{0}', space=sflag, size = 0x8, scoped, tag = 'scoped memory for tpu_custom_call.1']
    #allocation6 [shape = 's32[2]{0}', space=sflag, size = 0x8, scoped, tag = 'scoped memory for tpu_custom_call.1']
    #allocation7 [shape = 'u8[294912]{0}', space=vmem, size = 0x48000, scoped, tag = 'input window, operand 1, single buffered']
    #allocation8 [shape = 's32[1]{0}', space=sflag, size = 0x4, scoped, tag = 'scoped memory for tpu_custom_call.1']
    #allocation9 [shape = 'u8[294912]{0}', space=vmem, size = 0x48000, scoped, tag = 'input window, operand 2, single buffered']
    #allocation10 [shape = 'u8[262144]{0}', space=vmem, size = 0x40000, scoped, tag = 'output window, operand 0']
    %12 = vsyncpa [#allocation5], 0
    %s13 = scalar_lea.sflag [#allocation5], 1
    %14 = vsyncpa %s13, 0
    %15 = vsyncpa [#allocation8], 0
    %16 = vsyncpa [#allocation6], 0
    %s17 = scalar_lea.sflag [#allocation6], 1
    %18 = vsyncpa %s17, 0
    loop: start=0, step=1, limit=4
    $region2: #{tpu_custom_call.1} parent=1 // loop_pre_header
      _
    $region3: #{tpu_custom_call.1} parent=1 // loop_header
      %s20 = sphi 0, %s24
      %p21 = scmp.ge.s32.totalorder %s20, 4
      %s30 = sphi 0, %s32
      %s33 = sphi 0, %s30
      %s34 = sphi 0, %s33
      %s50 = sphi 0, %s34
      %s54 = sphi 0, %s54
      %s56 = sphi 0, %s54
      %s57 = sphi 0, %s56
      %s71 = sphi 0, %s57
      %s75 = sphi 0, %s75
      %s77 = sphi 0, %s75
      %s78 = sphi 0, %s77
      %s92 = sphi 0, %s78
      %s96 = sphi 0, %s96
      %s98 = sphi 0, %s96
      %s99 = sphi 0, %s98
      %s113 = sphi 0, %s99
      %s117 = sphi 0, %s117
      %s119 = sphi 0, %s117
      %s120 = sphi 0, %s119
      %s134 = sphi 0, %s120
      %s138 = sphi 0, %s138
      %s140 = sphi 0, %s138
      %s141 = sphi 0, %s140
      %s155 = sphi 0, %s141
      %s159 = sphi 0, %s159
      %s161 = sphi 0, %s159
      %s162 = sphi 0, %s161
      %s176 = sphi 0, %s162
      %s182 = sphi 0, %s184
      %s185 = sphi 0, %s182
      %s186 = sphi 0, %s185
      %s202 = sphi 0, %s186
    $region4: #{tpu_custom_call.1} parent=1 // loop_header_branch
      %23 = sbr.rel (%p21) target = $region8
    $region5: #{tpu_custom_call.1} parent=1 // loop_body
      %s25 = ssub.s32 %s20, 1
      %s26 = ssub.s32 %s20, 2
      %s27 = sadd.s32 %s20, 1
      %s28 = ssub.s32 %s20, %s27
      %p29 = scmp.eq.s32.totalorder %s28, 0
      %s31 = sadd.s32 %s30, 1
      %s32 = scalar_select %p29, %s30, %s31
      %p35 = pneg %p29
      %p36 = scmp.eq.s32.totalorder %s20, 1
      %p37 = por %p35, %p36
      %p38 = scmp.ne.s32.totalorder %s30, %s33
      %p39 = scmp.eq.s32.totalorder %s20, 0
      %p40 = por %p38, %p39
      %p41 = scmp.ne.s32.totalorder %s30, %s33
      %p42 = scmp.eq.s32.totalorder %s25, 1
      %p43 = por %p41, %p42
      %p44 = scmp.ne.s32.totalorder %s33, %s34
      %p45 = scmp.eq.s32.totalorder %s25, 0
      %p46 = por %p44, %p45
      %p47 = scmp.ne.s32.totalorder %s33, %s34
      %p48 = scmp.eq.s32.totalorder %s26, 1
      %p49 = por %p47, %p48
      %p51 = scmp.ne.s32.totalorder %s34, %s50
      %p52 = scmp.eq.s32.totalorder %s26, 0
      %p53 = por %p51, %p52
      %s55 = sadd.s32 %s54, 1
      %p58 = scmp.eq.s32.totalorder %s20, 1
      %p59 = scmp.ne.s32.totalorder %s54, %s56
      %p60 = scmp.eq.s32.totalorder %s20, 0
      %p61 = por %p59, %p60
      %p62 = scmp.ne.s32.totalorder %s54, %s56
      %p63 = scmp.eq.s32.totalorder %s25, 1
      %p64 = por %p62, %p63
      %p65 = scmp.ne.s32.totalorder %s56, %s57
      %p66 = scmp.eq.s32.totalorder %s25, 0
      %p67 = por %p65, %p66
      %p68 = scmp.ne.s32.totalorder %s56, %s57
      %p69 = scmp.eq.s32.totalorder %s26, 1
      %p70 = por %p68, %p69
      %p72 = scmp.ne.s32.totalorder %s57, %s71
      %p73 = scmp.eq.s32.totalorder %s26, 0
      %p74 = por %p72, %p73
      %s76 = sadd.s32 %s75, 1
      %p79 = scmp.eq.s32.totalorder %s20, 1
      %p80 = scmp.ne.s32.totalorder %s75, %s77
      %p81 = scmp.eq.s32.totalorder %s20, 0
      %p82 = por %p80, %p81
      %p83 = scmp.ne.s32.totalorder %s75, %s77
      %p84 = scmp.eq.s32.totalorder %s25, 1
      %p85 = por %p83, %p84
      %p86 = scmp.ne.s32.totalorder %s77, %s78
      %p87 = scmp.eq.s32.totalorder %s25, 0
      %p88 = por %p86, %p87
      %p89 = scmp.ne.s32.totalorder %s77, %s78
      %p90 = scmp.eq.s32.totalorder %s26, 1
      %p91 = por %p89, %p90
      %p93 = scmp.ne.s32.totalorder %s78, %s92
      %p94 = scmp.eq.s32.totalorder %s26, 0
      %p95 = por %p93, %p94
      %s97 = sadd.s32 %s96, 1
      %p100 = scmp.eq.s32.totalorder %s20, 1
      %p101 = scmp.ne.s32.totalorder %s96, %s98
      %p102 = scmp.eq.s32.totalorder %s20, 0
      %p103 = por %p101, %p102
      %p104 = scmp.ne.s32.totalorder %s96, %s98
      %p105 = scmp.eq.s32.totalorder %s25, 1
      %p106 = por %p104, %p105
      %p107 = scmp.ne.s32.totalorder %s98, %s99
      %p108 = scmp.eq.s32.totalorder %s25, 0
      %p109 = por %p107, %p108
      %p110 = scmp.ne.s32.totalorder %s98, %s99
      %p111 = scmp.eq.s32.totalorder %s26, 1
      %p112 = por %p110, %p111
      %p114 = scmp.ne.s32.totalorder %s99, %s113
      %p115 = scmp.eq.s32.totalorder %s26, 0
      %p116 = por %p114, %p115
      %s118 = sadd.s32 %s117, 1
      %p121 = scmp.eq.s32.totalorder %s20, 1
      %p122 = scmp.ne.s32.totalorder %s117, %s119
      %p123 = scmp.eq.s32.totalorder %s20, 0
      %p124 = por %p122, %p123
      %p125 = scmp.ne.s32.totalorder %s117, %s119
      %p126 = scmp.eq.s32.totalorder %s25, 1
      %p127 = por %p125, %p126
      %p128 = scmp.ne.s32.totalorder %s119, %s120
      %p129 = scmp.eq.s32.totalorder %s25, 0
      %p130 = por %p128, %p129
      %p131 = scmp.ne.s32.totalorder %s119, %s120
      %p132 = scmp.eq.s32.totalorder %s26, 1
      %p133 = por %p131, %p132
      %p135 = scmp.ne.s32.totalorder %s120, %s134
      %p136 = scmp.eq.s32.totalorder %s26, 0
      %p137 = por %p135, %p136
      %s139 = sadd.s32 %s138, 1
      %p142 = scmp.eq.s32.totalorder %s20, 1
      %p143 = scmp.ne.s32.totalorder %s138, %s140
      %p144 = scmp.eq.s32.totalorder %s20, 0
      %p145 = por %p143, %p144
      %p146 = scmp.ne.s32.totalorder %s138, %s140
      %p147 = scmp.eq.s32.totalorder %s25, 1
      %p148 = por %p146, %p147
      %p149 = scmp.ne.s32.totalorder %s140, %s141
      %p150 = scmp.eq.s32.totalorder %s25, 0
      %p151 = por %p149, %p150
      %p152 = scmp.ne.s32.totalorder %s140, %s141
      %p153 = scmp.eq.s32.totalorder %s26, 1
      %p154 = por %p152, %p153
      %p156 = scmp.ne.s32.totalorder %s141, %s155
      %p157 = scmp.eq.s32.totalorder %s26, 0
      %p158 = por %p156, %p157
      %s160 = sadd.s32 %s159, 1
      %p163 = scmp.eq.s32.totalorder %s20, 1
      %p164 = scmp.ne.s32.totalorder %s159, %s161
      %p165 = scmp.eq.s32.totalorder %s20, 0
      %p166 = por %p164, %p165
      %p167 = scmp.ne.s32.totalorder %s159, %s161
      %p168 = scmp.eq.s32.totalorder %s25, 1
      %p169 = por %p167, %p168
      %p170 = scmp.ne.s32.totalorder %s161, %s162
      %p171 = scmp.eq.s32.totalorder %s25, 0
      %p172 = por %p170, %p171
      %p173 = scmp.ne.s32.totalorder %s161, %s162
      %p174 = scmp.eq.s32.totalorder %s26, 1
      %p175 = por %p173, %p174
      %p177 = scmp.ne.s32.totalorder %s162, %s176
      %p178 = scmp.eq.s32.totalorder %s26, 0
      %p179 = por %p177, %p178
      %s180 = ssub.s32 %s20, %s27
      %p181 = scmp.eq.s32.totalorder %s180, 0
      %s183 = sadd.s32 %s182, 1
      %s184 = scalar_select %p181, %s182, %s183
      %p187 = pneg %p181
      %p188 = scmp.eq.s32.totalorder %s20, 1
      %p189 = por %p187, %p188
      %p190 = scmp.ne.s32.totalorder %s182, %s185
      %p191 = scmp.eq.s32.totalorder %s20, 0
      %p192 = por %p190, %p191
      %p193 = scmp.ne.s32.totalorder %s182, %s185
      %p194 = scmp.eq.s32.totalorder %s25, 1
      %p195 = por %p193, %p194
      %p196 = scmp.ne.s32.totalorder %s185, %s186
      %p197 = scmp.eq.s32.totalorder %s25, 0
      %p198 = por %p196, %p197
      %p199 = scmp.ne.s32.totalorder %s185, %s186
      %p200 = scmp.eq.s32.totalorder %s26, 1
      %p201 = por %p199, %p200
      %p203 = scmp.ne.s32.totalorder %s186, %s202
      %p204 = scmp.eq.s32.totalorder %s26, 0
      %p205 = por %p203, %p204
      %p206 = scmp.le.s32.totalorder 1, %s20
      %p207 = scmp.lt.s32.totalorder %s20, 3
      %p208 = pnand %p206, %p207
      %p209 = pneg %p208
      // Predicated region
      $region9: #{tpu_custom_call.1} parent=5 // pred_check
        _
      $region10: #{tpu_custom_call.1} parent=5 // pred_check_branch
        %211 = sbr.rel (%p208) target = $region12
      $region11: #{tpu_custom_call.1} parent=5 // pred_region
        %s212 = ssub.s32 %s20, 1
        // Predicated region
        $region13: #{tpu_custom_call.1} parent=11 // pred_check
          %p213 = pneg %p67
        $region14: #{tpu_custom_call.1} parent=11 // pred_check_branch
          %215 = sbr.rel (%p213) target = $region16
        $region15: #{tpu_custom_call.1} parent=11 // pred_region
          %s217 = ssub.s32 9216, 9216
          %218 = vsyncadd [#allocation8], %s217
          %s219 = sshll.u32 [#allocation7], 4
          %s220 = int_to_ptr.vmem [resolvable:$true] %s219
          %225 = dma.hbm_to_vmem [thread:$0]  %s1, 9216, %s220, [#allocation8], 64, 64, 4
        $region16: #{tpu_custom_call.1} parent=11 // pred_fallthru
          _
        // Predicated region
        $region17: #{tpu_custom_call.1} parent=11 // pred_check
          %p226 = pneg %p88
        $region18: #{tpu_custom_call.1} parent=11 // pred_check_branch
          %228 = sbr.rel (%p226) target = $region20
        $region19: #{tpu_custom_call.1} parent=11 // pred_region
          %s230 = ssub.s32 9216, 9216
          %231 = vsyncadd [#allocation8], %s230
          %s232 = sshll.u32 [#allocation9], 4
          %s233 = int_to_ptr.vmem [resolvable:$true] %s232
          %238 = dma.hbm_to_vmem [thread:$0]  %s2, 9216, %s233, [#allocation8], 64, 64, 4
        $region20: #{tpu_custom_call.1} parent=11 // pred_fallthru
          _
        // Predicated region
        $region21: #{tpu_custom_call.1} parent=11 // pred_check
          %p239 = pneg %p109
        $region22: #{tpu_custom_call.1} parent=11 // pred_check_branch
          %241 = sbr.rel (%p239) target = $region24
        $region23: #{tpu_custom_call.1} parent=11 // pred_region
          _
        $region24: #{tpu_custom_call.1} parent=11 // pred_fallthru
          _
        // Predicated region
        $region25: #{tpu_custom_call.1} parent=11 // pred_check
          %p242 = pneg %p130
        $region26: #{tpu_custom_call.1} parent=11 // pred_check_branch
          %244 = sbr.rel (%p242) target = $region28
        $region27: #{tpu_custom_call.1} parent=11 // pred_region
          _
        $region28: #{tpu_custom_call.1} parent=11 // pred_fallthru
          _
        // Predicated region
        $region29: #{tpu_custom_call.1} parent=11 // pred_check
          %p245 = pneg %p151
        $region30: #{tpu_custom_call.1} parent=11 // pred_check_branch
          %247 = sbr.rel (%p245) target = $region32
        $region31: #{tpu_custom_call.1} parent=11 // pred_region
          _
        $region32: #{tpu_custom_call.1} parent=11 // pred_fallthru
          _
        // Predicated region
        $region33: #{tpu_custom_call.1} parent=11 // pred_check
          %p248 = pneg %p172
        $region34: #{tpu_custom_call.1} parent=11 // pred_check_branch
          %250 = sbr.rel (%p248) target = $region36
        $region35: #{tpu_custom_call.1} parent=11 // pred_region
          _
        $region36: #{tpu_custom_call.1} parent=11 // pred_fallthru
          _
      $region12: #{tpu_custom_call.1} parent=5 // pred_fallthru
        _
      %p251 = scmp.lt.s32.totalorder %s20, 2
      // Predicated region
      $region37: #{tpu_custom_call.1} parent=5 // pred_check
        %p252 = pneg %p251
      $region38: #{tpu_custom_call.1} parent=5 // pred_check_branch
        %254 = sbr.rel (%p252) target = $region40
      $region39: #{tpu_custom_call.1} parent=5 // pred_region
        // Predicated region
        $region41: #{tpu_custom_call.1} parent=39 // pred_check
          %p255 = pneg %p40
        $region42: #{tpu_custom_call.1} parent=39 // pred_check_branch
          %257 = sbr.rel (%p255) target = $region44
        $region43: #{tpu_custom_call.1} parent=39 // pred_region
          %s258 = sand.u32 %s30, 1
          %s259 = scalar_lea.sflag [#allocation5], %s258
          %s260 = sand.u32 %s30, 1
          %s261 = smul.addr %s260, 256
          %s262 = scalar_lea.vmem [#allocation4], %s261
          %s264 = ssub.s32 4096, 4096
          %265 = vsyncadd %s259, %s264
          %s266 = smul.addr %s20, 32
          %s267 = smul.addr %s266, 128
          %s268 = scalar_lea.hbm %s0, %s267
          %s269 = sshll.u32 %s262, 4
          %s270 = int_to_ptr.vmem [resolvable:$true] %s269
          %275 = dma.hbm_to_vmem [thread:$0]  %s268, 4096, %s270, %s259, 128, 128, 8
        $region44: #{tpu_custom_call.1} parent=39 // pred_fallthru
          _
      $region40: #{tpu_custom_call.1} parent=5 // pred_fallthru
        _
      %p276 = scmp.le.s32.totalorder 1, %s20
      %p277 = scmp.lt.s32.totalorder %s20, 3
      %p278 = pnand %p276, %p277
      %p279 = pneg %p278
      // Predicated region
      $region45: #{tpu_custom_call.1} parent=5 // pred_check
        _
      $region46: #{tpu_custom_call.1} parent=5 // pred_check_branch
        %281 = sbr.rel (%p278) target = $region48
      $region47: #{tpu_custom_call.1} parent=5 // pred_region
        %s282 = ssub.s32 %s20, 1
        %s283 = sand.u32 %s33, 1
        %s284 = scalar_lea.sflag [#allocation5], %s283
        %s285 = sand.u32 %s33, 1
        %s286 = smul.addr %s285, 256
        %s287 = scalar_lea.vmem [#allocation4], %s286
        // Predicated region
        $region49: #{tpu_custom_call.1} parent=47 // pred_check
          %p288 = pneg %p46
        $region50: #{tpu_custom_call.1} parent=47 // pred_check_branch
          %290 = sbr.rel (%p288) target = $region52
        $region51: #{tpu_custom_call.1} parent=47 // pred_region
          %291 = dma.done %s284, 4096
        $region52: #{tpu_custom_call.1} parent=47 // pred_fallthru
          _
        // Predicated region
        $region53: #{tpu_custom_call.1} parent=47 // pred_check
          %p292 = pneg %p67
        $region54: #{tpu_custom_call.1} parent=47 // pred_check_branch
          %294 = sbr.rel (%p292) target = $region56
        $region55: #{tpu_custom_call.1} parent=47 // pred_region
          %295 = dma.done [#allocation8], 9216
        $region56: #{tpu_custom_call.1} parent=47 // pred_fallthru
          _
        // Predicated region
        $region57: #{tpu_custom_call.1} parent=47 // pred_check
          %p296 = pneg %p88
        $region58: #{tpu_custom_call.1} parent=47 // pred_check_branch
          %298 = sbr.rel (%p296) target = $region60
        $region59: #{tpu_custom_call.1} parent=47 // pred_region
          %299 = dma.done [#allocation8], 9216
        $region60: #{tpu_custom_call.1} parent=47 // pred_fallthru
          _
        %s300 = sand.u32 %s33, 1
        %s301 = scalar_lea.sflag [#allocation5], %s300
        %s302 = sand.u32 %s33, 1
        %s303 = smul.addr %s302, 256
        %s304 = scalar_lea.vmem [#allocation4], %s303
        %p305 = pneg %p46
        %p306 = pneg %p43
        %p307 = pneg %p67
        %p308 = pneg %p64
        %p309 = pneg %p88
        %p310 = pneg %p85
        %p311 = pneg %p109
        %p312 = pneg %p106
        %p313 = pneg %p130
        %p314 = pneg %p127
        %p315 = pneg %p151
        %p316 = pneg %p148
        %p317 = pneg %p172
        %p318 = pneg %p169
        %p319 = pneg %p198
        %p320 = pneg %p195
        %s321 = sand.u32 %s185, 1
        %s322 = scalar_lea.sflag [#allocation6], %s321
        %s323 = sand.u32 %s185, 1
        %s324 = smul.addr %s323, 256
        %s325 = scalar_lea.vmem [#allocation10], %s324
        %327 = vst [vmem:[#allocation2] sm:$0xf] 0
        %328 = vst [vmem:[#allocation2 + $0x4] sm:$0xf] 0
        %329 = vst [vmem:[#allocation2 + $0x8] sm:$0x1] 0
        %s330 = scalar_lea.vmem [#allocation2], 204
        %331 = vst [vmem:[%s330] sm:$0xf] 0
        %332 = vst [vmem:[%s330 + $0x4] sm:$0xf] 0
        %333 = vst [vmem:[%s330 + $0x8] sm:$0x1] 0
        %vm334 = vcmask 1040384
        %vm335 = vsmask.f32 256
        %vm336 = vmand %vm334, %vm335
        %v337 = vld [vmem:[#allocation2] sm:$0x1]
        %v338 = vsel %vm336, 0, %v337
        %339 = vst [vmem:[#allocation2] sm:$0x1] %v338
        %v340 = vld [vmem:[#allocation2 + $0xc] sm:$0x1]
        %v341 = vsel %vm336, 0, %v340
        %342 = vst [vmem:[#allocation2 + $0xc] sm:$0x1] %v341
        %v343 = vld [vmem:[#allocation2 + $0x18] sm:$0x1]
        %v344 = vsel %vm336, 0, %v343
        %345 = vst [vmem:[#allocation2 + $0x18] sm:$0x1] %v344
        %v346 = vld [vmem:[#allocation2 + $0x24] sm:$0x1]
        %v347 = vsel %vm336, 0, %v346
        %348 = vst [vmem:[#allocation2 + $0x24] sm:$0x1] %v347
        %v349 = vld [vmem:[#allocation2 + $0x30] sm:$0x1]
        %v350 = vsel %vm336, 0, %v349
        %351 = vst [vmem:[#allocation2 + $0x30] sm:$0x1] %v350
        %v352 = vld [vmem:[#allocation2 + $0x3c] sm:$0x1]
        %v353 = vsel %vm336, 0, %v352
        %354 = vst [vmem:[#allocation2 + $0x3c] sm:$0x1] %v353
        %v355 = vld [vmem:[#allocation2 + $0x48] sm:$0x1]
        %v356 = vsel %vm336, 0, %v355
        %357 = vst [vmem:[#allocation2 + $0x48] sm:$0x1] %v356
        %v358 = vld [vmem:[#allocation2 + $0x54] sm:$0x1]
        %v359 = vsel %vm336, 0, %v358
        %360 = vst [vmem:[#allocation2 + $0x54] sm:$0x1] %v359
        %v361 = vld [vmem:[#allocation2 + $0x60] sm:$0x1]
        %v362 = vsel %vm336, 0, %v361
        %363 = vst [vmem:[#allocation2 + $0x60] sm:$0x1] %v362
        %v364 = vld [vmem:[#allocation2 + $0x6c] sm:$0x1]
        %v365 = vsel %vm336, 0, %v364
        %366 = vst [vmem:[#allocation2 + $0x6c] sm:$0x1] %v365
        %v367 = vld [vmem:[#allocation2 + $0x78] sm:$0x1]
        %v368 = vsel %vm336, 0, %v367
        %369 = vst [vmem:[#allocation2 + $0x78] sm:$0x1] %v368
        %v370 = vld [vmem:[#allocation2 + $0x84] sm:$0x1]
        %v371 = vsel %vm336, 0, %v370
        %372 = vst [vmem:[#allocation2 + $0x84] sm:$0x1] %v371
        %v373 = vld [vmem:[#allocation2 + $0x90] sm:$0x1]
        %v374 = vsel %vm336, 0, %v373
        %375 = vst [vmem:[#allocation2 + $0x90] sm:$0x1] %v374
        %v376 = vld [vmem:[#allocation2 + $0x9c] sm:$0x1]
        %v377 = vsel %vm336, 0, %v376
        %378 = vst [vmem:[#allocation2 + $0x9c] sm:$0x1] %v377
        %v379 = vld [vmem:[#allocation2 + $0xa8] sm:$0x1]
        %v380 = vsel %vm336, 0, %v379
        %381 = vst [vmem:[#allocation2 + $0xa8] sm:$0x1] %v380
        %v382 = vld [vmem:[#allocation2 + $0xb4] sm:$0x1]
        %v383 = vsel %vm336, 0, %v382
        %384 = vst [vmem:[#allocation2 + $0xb4] sm:$0x1] %v383
        %v385 = vld [vmem:[#allocation2 + $0xc0] sm:$0x1]
        %v386 = vsel %vm336, 0, %v385
        %387 = vst [vmem:[#allocation2 + $0xc0] sm:$0x1] %v386
        %v388 = vld [vmem:[#allocation2 + $0xcc] sm:$0x1]
        %v389 = vsel %vm336, 0, %v388
        %390 = vst [vmem:[#allocation2 + $0xcc] sm:$0x1] %v389
        %vm391 = vsmask.f32 7938
        %vm392 = vmand %vm334, %vm391
        %v393 = vld [vmem:[#allocation2 + $0x8] sm:$0x1]
        %v394 = vsel %vm392, 0, %v393
        %395 = vst [vmem:[#allocation2 + $0x8] sm:$0x1] %v394
        %v396 = vld [vmem:[#allocation2 + $0x14] sm:$0x1]
        %v397 = vsel %vm392, 0, %v396
        %398 = vst [vmem:[#allocation2 + $0x14] sm:$0x1] %v397
        %v399 = vld [vmem:[#allocation2 + $0x20] sm:$0x1]
        %v400 = vsel %vm392, 0, %v399
        %401 = vst [vmem:[#allocation2 + $0x20] sm:$0x1] %v400
        %v402 = vld [vmem:[#allocation2 + $0x2c] sm:$0x1]
        %v403 = vsel %vm392, 0, %v402
        %404 = vst [vmem:[#allocation2 + $0x2c] sm:$0x1] %v403
        %v405 = vld [vmem:[#allocation2 + $0x38] sm:$0x1]
        %v406 = vsel %vm392, 0, %v405
        %407 = vst [vmem:[#allocation2 + $0x38] sm:$0x1] %v406
        %v408 = vld [vmem:[#allocation2 + $0x44] sm:$0x1]
        %v409 = vsel %vm392, 0, %v408
        %410 = vst [vmem:[#allocation2 + $0x44] sm:$0x1] %v409
        %v411 = vld [vmem:[#allocation2 + $0x50] sm:$0x1]
        %v412 = vsel %vm392, 0, %v411
        %413 = vst [vmem:[#allocation2 + $0x50] sm:$0x1] %v412
        %v414 = vld [vmem:[#allocation2 + $0x5c] sm:$0x1]
        %v415 = vsel %vm392, 0, %v414
        %416 = vst [vmem:[#allocation2 + $0x5c] sm:$0x1] %v415
        %v417 = vld [vmem:[#allocation2 + $0x68] sm:$0x1]
        %v418 = vsel %vm392, 0, %v417
        %419 = vst [vmem:[#allocation2 + $0x68] sm:$0x1] %v418
        %v420 = vld [vmem:[#allocation2 + $0x74] sm:$0x1]
        %v421 = vsel %vm392, 0, %v420
        %422 = vst [vmem:[#allocation2 + $0x74] sm:$0x1] %v421
        %v423 = vld [vmem:[#allocation2 + $0x80] sm:$0x1]
        %v424 = vsel %vm392, 0, %v423
        %425 = vst [vmem:[#allocation2 + $0x80] sm:$0x1] %v424
        %v426 = vld [vmem:[#allocation2 + $0x8c] sm:$0x1]
        %v427 = vsel %vm392, 0, %v426
        %428 = vst [vmem:[#allocation2 + $0x8c] sm:$0x1] %v427
        %v429 = vld [vmem:[#allocation2 + $0x98] sm:$0x1]
        %v430 = vsel %vm392, 0, %v429
        %431 = vst [vmem:[#allocation2 + $0x98] sm:$0x1] %v430
        %v432 = vld [vmem:[#allocation2 + $0xa4] sm:$0x1]
        %v433 = vsel %vm392, 0, %v432
        %434 = vst [vmem:[#allocation2 + $0xa4] sm:$0x1] %v433
        %v435 = vld [vmem:[#allocation2 + $0xb0] sm:$0x1]
        %v436 = vsel %vm392, 0, %v435
        %437 = vst [vmem:[#allocation2 + $0xb0] sm:$0x1] %v436
        %v438 = vld [vmem:[#allocation2 + $0xbc] sm:$0x1]
        %v439 = vsel %vm392, 0, %v438
        %440 = vst [vmem:[#allocation2 + $0xbc] sm:$0x1] %v439
        %v441 = vld [vmem:[#allocation2 + $0xc8] sm:$0x1]
        %v442 = vsel %vm392, 0, %v441
        %443 = vst [vmem:[#allocation2 + $0xc8] sm:$0x1] %v442
        %v444 = vld [vmem:[#allocation2 + $0xd4] sm:$0x1]
        %v445 = vsel %vm392, 0, %v444
        %446 = vst [vmem:[#allocation2 + $0xd4] sm:$0x1] %v445
        %v447 = vld [vmem:[%s287] sm:$0xff]
        %v448 = vld [vmem:[%s287 + $0x8] sm:$0xff]
        %v449 = vld [vmem:[%s287 + $0x10] sm:$0xff]
        %v450 = vld [vmem:[%s287 + $0x18] sm:$0xff]
        %v451 = vld [vmem:[%s287 + $0x20] sm:$0xff]
        %v452 = vld [vmem:[%s287 + $0x28] sm:$0xff]
        %v453 = vld [vmem:[%s287 + $0x30] sm:$0xff]
        %v454 = vld [vmem:[%s287 + $0x38] sm:$0xff]
        %v455 = vld [vmem:[%s287 + $0x40] sm:$0xff]
        %v456 = vld [vmem:[%s287 + $0x48] sm:$0xff]
        %v457 = vld [vmem:[%s287 + $0x50] sm:$0xff]
        %v458 = vld [vmem:[%s287 + $0x58] sm:$0xff]
        %v459 = vld [vmem:[%s287 + $0x60] sm:$0xff]
        %v460 = vld [vmem:[%s287 + $0x68] sm:$0xff]
        %v461 = vld [vmem:[%s287 + $0x70] sm:$0xff]
        %v462 = vld [vmem:[%s287 + $0x78] sm:$0xff]
        %v463 = vld [vmem:[%s287 + $0x80] sm:$0xff]
        %v464 = vld [vmem:[%s287 + $0x88] sm:$0xff]
        %v465 = vld [vmem:[%s287 + $0x90] sm:$0xff]
        %v466 = vld [vmem:[%s287 + $0x98] sm:$0xff]
        %v467 = vld [vmem:[%s287 + $0xa0] sm:$0xff]
        %v468 = vld [vmem:[%s287 + $0xa8] sm:$0xff]
        %v469 = vld [vmem:[%s287 + $0xb0] sm:$0xff]
        %v470 = vld [vmem:[%s287 + $0xb8] sm:$0xff]
        %v471 = vld [vmem:[%s287 + $0xc0] sm:$0xff]
        %v472 = vld [vmem:[%s287 + $0xc8] sm:$0xff]
        %v473 = vld [vmem:[%s287 + $0xd0] sm:$0xff]
        %v474 = vld [vmem:[%s287 + $0xd8] sm:$0xff]
        %v475 = vld [vmem:[%s287 + $0xe0] sm:$0xff]
        %v476 = vld [vmem:[%s287 + $0xe8] sm:$0xff]
        %v477 = vld [vmem:[%s287 + $0xf0] sm:$0xff]
        %v478 = vld [vmem:[%s287 + $0xf8] sm:$0xff]
        %v479 = vpack.c.bf16 %v448, %v447
        %v480 = vpack.c.bf16 %v450, %v449
        %v481 = vpack.c.bf16 %v452, %v451
        %v482 = vpack.c.bf16 %v454, %v453
        %v483 = vpack.c.bf16 %v456, %v455
        %v484 = vpack.c.bf16 %v458, %v457
        %v485 = vpack.c.bf16 %v460, %v459
        %v486 = vpack.c.bf16 %v462, %v461
        %v487 = vpack.c.bf16 %v464, %v463
        %v488 = vpack.c.bf16 %v466, %v465
        %v489 = vpack.c.bf16 %v468, %v467
        %v490 = vpack.c.bf16 %v470, %v469
        %v491 = vpack.c.bf16 %v472, %v471
        %v492 = vpack.c.bf16 %v474, %v473
        %v493 = vpack.c.bf16 %v476, %v475
        %v494 = vpack.c.bf16 %v478, %v477
        %v511 = vunpack.c.l.b16 %v479
        %v512 = vunpack.c.h.b16 %v479
        %v513 = vunpack.c.l.b16 %v480
        %v514 = vunpack.c.h.b16 %v480
        %v515 = vunpack.c.l.b16 %v481
        %v516 = vunpack.c.h.b16 %v481
        %v517 = vunpack.c.l.b16 %v482
        %v518 = vunpack.c.h.b16 %v482
        %v519 = vunpack.c.l.b16 %v483
        %v520 = vunpack.c.h.b16 %v483
        %v521 = vunpack.c.l.b16 %v484
        %v522 = vunpack.c.h.b16 %v484
        %v523 = vunpack.c.l.b16 %v485
        %v524 = vunpack.c.h.b16 %v485
        %v525 = vunpack.c.l.b16 %v486
        %v526 = vunpack.c.h.b16 %v486
        %v527 = vunpack.c.l.b16 %v487
        %v528 = vunpack.c.h.b16 %v487
        %v529 = vunpack.c.l.b16 %v488
        %v530 = vunpack.c.h.b16 %v488
        %v531 = vunpack.c.l.b16 %v489
        %v532 = vunpack.c.h.b16 %v489
        %v533 = vunpack.c.l.b16 %v490
        %v534 = vunpack.c.h.b16 %v490
        %v535 = vunpack.c.l.b16 %v491
        %v536 = vunpack.c.h.b16 %v491
        %v537 = vunpack.c.l.b16 %v492
        %v538 = vunpack.c.h.b16 %v492
        %v539 = vunpack.c.l.b16 %v493
        %v540 = vunpack.c.h.b16 %v493
        %v541 = vunpack.c.l.b16 %v494
        %v542 = vunpack.c.h.b16 %v494
        %v543 = vpack.c.b16 %v511, %v511
        %v544 = vpack.c.b16 %v512, %v512
        %v545 = vpack.c.b16 %v513, %v513
        %v546 = vpack.c.b16 %v514, %v514
        %v547 = vpack.c.b16 %v515, %v515
        %v548 = vpack.c.b16 %v516, %v516
        %v549 = vpack.c.b16 %v517, %v517
        %v550 = vpack.c.b16 %v518, %v518
        %v551 = vpack.c.b16 %v519, %v519
        %v552 = vpack.c.b16 %v520, %v520
        %v553 = vpack.c.b16 %v521, %v521
        %v554 = vpack.c.b16 %v522, %v522
        %v555 = vpack.c.b16 %v523, %v523
        %v556 = vpack.c.b16 %v524, %v524
        %v557 = vpack.c.b16 %v525, %v525
        %v558 = vpack.c.b16 %v526, %v526
        %v559 = vpack.c.b16 %v527, %v527
        %v560 = vpack.c.b16 %v528, %v528
        %v561 = vpack.c.b16 %v529, %v529
        %v562 = vpack.c.b16 %v530, %v530
        %v563 = vpack.c.b16 %v531, %v531
        %v564 = vpack.c.b16 %v532, %v532
        %v565 = vpack.c.b16 %v533, %v533
        %v566 = vpack.c.b16 %v534, %v534
        %v567 = vpack.c.b16 %v535, %v535
        %v568 = vpack.c.b16 %v536, %v536
        %v569 = vpack.c.b16 %v537, %v537
        %v570 = vpack.c.b16 %v538, %v538
        %v571 = vpack.c.b16 %v539, %v539
        %v572 = vpack.c.b16 %v540, %v540
        %v573 = vpack.c.b16 %v541, %v541
        %v574 = vpack.c.b16 %v542, %v542
        %vm575 = vsmask.f32 4368
        %vm576 = vmor %vm335, %vm575
        %v578 = vshrl.u32 %v543, 16
        %v580 = vrot.slane %v578, 7
        %v581 = vshll.u32 %v543, 16
        %v583 = vor.u32 %v580, %v581
        %v584 = vrot.slane %v580, 4
        %v586 = vshrl.u32 %v544, 16
        %v588 = vrot.slane %v586, 7
        %v589 = vshll.u32 %v544, 16
        %v591 = vor.u32 %v588, %v589
        %v592 = vsel %vm576, %v584, %v591
        %v593 = vrot.slane %v588, 4
        %v595 = vshrl.u32 %v545, 16
        %v597 = vrot.slane %v595, 7
        %v598 = vshll.u32 %v545, 16
        %v600 = vor.u32 %v597, %v598
        %v601 = vrot.slane %v597, 4
        %v603 = vshrl.u32 %v546, 16
        %v605 = vrot.slane %v603, 7
        %v606 = vshll.u32 %v546, 16
        %v608 = vor.u32 %v605, %v606
        %v609 = vsel %vm576, %v601, %v608
        %v610 = vrot.slane %v605, 4
        %v612 = vshrl.u32 %v547, 16
        %v614 = vrot.slane %v612, 7
        %v615 = vshll.u32 %v547, 16
        %v617 = vor.u32 %v614, %v615
        %v618 = vrot.slane %v614, 4
        %v620 = vshrl.u32 %v548, 16
        %v622 = vrot.slane %v620, 7
        %v623 = vshll.u32 %v548, 16
        %v625 = vor.u32 %v622, %v623
        %v626 = vsel %vm576, %v618, %v625
        %v627 = vrot.slane %v622, 4
        %v629 = vshrl.u32 %v549, 16
        %v631 = vrot.slane %v629, 7
        %v632 = vshll.u32 %v549, 16
        %v634 = vor.u32 %v631, %v632
        %v635 = vrot.slane %v631, 4
        %v637 = vshrl.u32 %v550, 16
        %v639 = vrot.slane %v637, 7
        %v640 = vshll.u32 %v550, 16
        %v642 = vor.u32 %v639, %v640
        %v643 = vsel %vm576, %v635, %v642
        %v644 = vrot.slane %v639, 4
        %v646 = vshrl.u32 %v551, 16
        %v648 = vrot.slane %v646, 7
        %v649 = vshll.u32 %v551, 16
        %v651 = vor.u32 %v648, %v649
        %v652 = vrot.slane %v648, 4
        %v654 = vshrl.u32 %v552, 16
        %v656 = vrot.slane %v654, 7
        %v657 = vshll.u32 %v552, 16
        %v659 = vor.u32 %v656, %v657
        %v660 = vsel %vm576, %v652, %v659
        %v661 = vrot.slane %v656, 4
        %v663 = vshrl.u32 %v553, 16
        %v665 = vrot.slane %v663, 7
        %v666 = vshll.u32 %v553, 16
        %v668 = vor.u32 %v665, %v666
        %v669 = vrot.slane %v665, 4
        %v671 = vshrl.u32 %v554, 16
        %v673 = vrot.slane %v671, 7
        %v674 = vshll.u32 %v554, 16
        %v676 = vor.u32 %v673, %v674
        %v677 = vsel %vm576, %v669, %v676
        %v678 = vrot.slane %v673, 4
        %v680 = vshrl.u32 %v555, 16
        %v682 = vrot.slane %v680, 7
        %v683 = vshll.u32 %v555, 16
        %v685 = vor.u32 %v682, %v683
        %v686 = vrot.slane %v682, 4
        %v688 = vshrl.u32 %v556, 16
        %v690 = vrot.slane %v688, 7
        %v691 = vshll.u32 %v556, 16
        %v693 = vor.u32 %v690, %v691
        %v694 = vsel %vm576, %v686, %v693
        %v695 = vrot.slane %v690, 4
        %v697 = vshrl.u32 %v557, 16
        %v699 = vrot.slane %v697, 7
        %v700 = vshll.u32 %v557, 16
        %v702 = vor.u32 %v699, %v700
        %v703 = vrot.slane %v699, 4
        %v705 = vshrl.u32 %v558, 16
        %v707 = vrot.slane %v705, 7
        %v708 = vshll.u32 %v558, 16
        %v710 = vor.u32 %v707, %v708
        %v711 = vsel %vm576, %v703, %v710
        %v712 = vrot.slane %v707, 4
        %v714 = vshrl.u32 %v559, 16
        %v716 = vrot.slane %v714, 7
        %v717 = vshll.u32 %v559, 16
        %v719 = vor.u32 %v716, %v717
        %v720 = vrot.slane %v716, 4
        %v722 = vshrl.u32 %v560, 16
        %v724 = vrot.slane %v722, 7
        %v725 = vshll.u32 %v560, 16
        %v727 = vor.u32 %v724, %v725
        %v728 = vsel %vm576, %v720, %v727
        %v729 = vrot.slane %v724, 4
        %v731 = vshrl.u32 %v561, 16
        %v733 = vrot.slane %v731, 7
        %v734 = vshll.u32 %v561, 16
        %v736 = vor.u32 %v733, %v734
        %v737 = vrot.slane %v733, 4
        %v739 = vshrl.u32 %v562, 16
        %v741 = vrot.slane %v739, 7
        %v742 = vshll.u32 %v562, 16
        %v744 = vor.u32 %v741, %v742
        %v745 = vsel %vm576, %v737, %v744
        %v746 = vrot.slane %v741, 4
        %v748 = vshrl.u32 %v563, 16
        %v750 = vrot.slane %v748, 7
        %v751 = vshll.u32 %v563, 16
        %v753 = vor.u32 %v750, %v751
        %v754 = vrot.slane %v750, 4
        %v756 = vshrl.u32 %v564, 16
        %v758 = vrot.slane %v756, 7
        %v759 = vshll.u32 %v564, 16
        %v761 = vor.u32 %v758, %v759
        %v762 = vsel %vm576, %v754, %v761
        %v763 = vrot.slane %v758, 4
        %v765 = vshrl.u32 %v565, 16
        %v767 = vrot.slane %v765, 7
        %v768 = vshll.u32 %v565, 16
        %v770 = vor.u32 %v767, %v768
        %v771 = vrot.slane %v767, 4
        %v773 = vshrl.u32 %v566, 16
        %v775 = vrot.slane %v773, 7
        %v776 = vshll.u32 %v566, 16
        %v778 = vor.u32 %v775, %v776
        %v779 = vsel %vm576, %v771, %v778
        %v780 = vrot.slane %v775, 4
        %v782 = vshrl.u32 %v567, 16
        %v784 = vrot.slane %v782, 7
        %v785 = vshll.u32 %v567, 16
        %v787 = vor.u32 %v784, %v785
        %v788 = vrot.slane %v784, 4
        %v790 = vshrl.u32 %v568, 16
        %v792 = vrot.slane %v790, 7
        %v793 = vshll.u32 %v568, 16
        %v795 = vor.u32 %v792, %v793
        %v796 = vsel %vm576, %v788, %v795
        %v797 = vrot.slane %v792, 4
        %v799 = vshrl.u32 %v569, 16
        %v801 = vrot.slane %v799, 7
        %v802 = vshll.u32 %v569, 16
        %v804 = vor.u32 %v801, %v802
        %v805 = vrot.slane %v801, 4
        %v807 = vshrl.u32 %v570, 16
        %v809 = vrot.slane %v807, 7
        %v810 = vshll.u32 %v570, 16
        %v812 = vor.u32 %v809, %v810
        %v813 = vsel %vm576, %v805, %v812
        %v814 = vrot.slane %v809, 4
        %v816 = vshrl.u32 %v571, 16
        %v818 = vrot.slane %v816, 7
        %v819 = vshll.u32 %v571, 16
        %v821 = vor.u32 %v818, %v819
        %v822 = vrot.slane %v818, 4
        %v824 = vshrl.u32 %v572, 16
        %v826 = vrot.slane %v824, 7
        %v827 = vshll.u32 %v572, 16
        %v829 = vor.u32 %v826, %v827
        %v830 = vsel %vm576, %v822, %v829
        %v831 = vrot.slane %v826, 4
        %v833 = vshrl.u32 %v573, 16
        %v835 = vrot.slane %v833, 7
        %v836 = vshll.u32 %v573, 16
        %v838 = vor.u32 %v835, %v836
        %v839 = vrot.slane %v835, 4
        %v841 = vshrl.u32 %v574, 16
        %v843 = vrot.slane %v841, 7
        %v844 = vshll.u32 %v574, 16
        %v846 = vor.u32 %v843, %v844
        %v847 = vsel %vm576, %v839, %v846
        %v848 = vrot.slane %v843, 4
        %s897 = scalar_lea.vmem [#allocation2], 12
        %vm898 = vcmask 1043456
        %vm899 = vmand %vm898, %vm391
        %v900 = vld [vmem:[%s897] sm:$0xf]
        %v901 = vsel %vm899, %v583, %v900
        %902 = vst [vmem:[%s897] sm:$0xf] %v901
        %903 = vst [vmem:[%s897 + $0x4] sm:$0xf] %v592
        %v904 = vld [vmem:[%s897 + $0x8] sm:$0x1]
        %v905 = vsel %vm336, %v593, %v904
        %906 = vst [vmem:[%s897 + $0x8] sm:$0x1] %v905
        %v907 = vld [vmem:[%s897 + $0xc] sm:$0xf]
        %v908 = vsel %vm899, %v600, %v907
        %909 = vst [vmem:[%s897 + $0xc] sm:$0xf] %v908
        %910 = vst [vmem:[%s897 + $0x10] sm:$0xf] %v609
        %v911 = vld [vmem:[%s897 + $0x14] sm:$0x1]
        %v912 = vsel %vm336, %v610, %v911
        %913 = vst [vmem:[%s897 + $0x14] sm:$0x1] %v912
        %v914 = vld [vmem:[%s897 + $0x18] sm:$0xf]
        %v915 = vsel %vm899, %v617, %v914
        %916 = vst [vmem:[%s897 + $0x18] sm:$0xf] %v915
        %917 = vst [vmem:[%s897 + $0x1c] sm:$0xf] %v626
        %v918 = vld [vmem:[%s897 + $0x20] sm:$0x1]
        %v919 = vsel %vm336, %v627, %v918
        %920 = vst [vmem:[%s897 + $0x20] sm:$0x1] %v919
        %v921 = vld [vmem:[%s897 + $0x24] sm:$0xf]
        %v922 = vsel %vm899, %v634, %v921
        %923 = vst [vmem:[%s897 + $0x24] sm:$0xf] %v922
        %924 = vst [vmem:[%s897 + $0x28] sm:$0xf] %v643
        %v925 = vld [vmem:[%s897 + $0x2c] sm:$0x1]
        %v926 = vsel %vm336, %v644, %v925
        %927 = vst [vmem:[%s897 + $0x2c] sm:$0x1] %v926
        %v928 = vld [vmem:[%s897 + $0x30] sm:$0xf]
        %v929 = vsel %vm899, %v651, %v928
        %930 = vst [vmem:[%s897 + $0x30] sm:$0xf] %v929
        %931 = vst [vmem:[%s897 + $0x34] sm:$0xf] %v660
        %v932 = vld [vmem:[%s897 + $0x38] sm:$0x1]
        %v933 = vsel %vm336, %v661, %v932
        %934 = vst [vmem:[%s897 + $0x38] sm:$0x1] %v933
        %v935 = vld [vmem:[%s897 + $0x3c] sm:$0xf]
        %v936 = vsel %vm899, %v668, %v935
        %937 = vst [vmem:[%s897 + $0x3c] sm:$0xf] %v936
        %938 = vst [vmem:[%s897 + $0x40] sm:$0xf] %v677
        %v939 = vld [vmem:[%s897 + $0x44] sm:$0x1]
        %v940 = vsel %vm336, %v678, %v939
        %941 = vst [vmem:[%s897 + $0x44] sm:$0x1] %v940
        %v942 = vld [vmem:[%s897 + $0x48] sm:$0xf]
        %v943 = vsel %vm899, %v685, %v942
        %944 = vst [vmem:[%s897 + $0x48] sm:$0xf] %v943
        %945 = vst [vmem:[%s897 + $0x4c] sm:$0xf] %v694
        %v946 = vld [vmem:[%s897 + $0x50] sm:$0x1]
        %v947 = vsel %vm336, %v695, %v946
        %948 = vst [vmem:[%s897 + $0x50] sm:$0x1] %v947
        %v949 = vld [vmem:[%s897 + $0x54] sm:$0xf]
        %v950 = vsel %vm899, %v702, %v949
        %951 = vst [vmem:[%s897 + $0x54] sm:$0xf] %v950
        %952 = vst [vmem:[%s897 + $0x58] sm:$0xf] %v711
        %v953 = vld [vmem:[%s897 + $0x5c] sm:$0x1]
        %v954 = vsel %vm336, %v712, %v953
        %955 = vst [vmem:[%s897 + $0x5c] sm:$0x1] %v954
        %v956 = vld [vmem:[%s897 + $0x60] sm:$0xf]
        %v957 = vsel %vm899, %v719, %v956
        %958 = vst [vmem:[%s897 + $0x60] sm:$0xf] %v957
        %959 = vst [vmem:[%s897 + $0x64] sm:$0xf] %v728
        %v960 = vld [vmem:[%s897 + $0x68] sm:$0x1]
        %v961 = vsel %vm336, %v729, %v960
        %962 = vst [vmem:[%s897 + $0x68] sm:$0x1] %v961
        %v963 = vld [vmem:[%s897 + $0x6c] sm:$0xf]
        %v964 = vsel %vm899, %v736, %v963
        %965 = vst [vmem:[%s897 + $0x6c] sm:$0xf] %v964
        %966 = vst [vmem:[%s897 + $0x70] sm:$0xf] %v745
        %v967 = vld [vmem:[%s897 + $0x74] sm:$0x1]
        %v968 = vsel %vm336, %v746, %v967
        %969 = vst [vmem:[%s897 + $0x74] sm:$0x1] %v968
        %v970 = vld [vmem:[%s897 + $0x78] sm:$0xf]
        %v971 = vsel %vm899, %v753, %v970
        %972 = vst [vmem:[%s897 + $0x78] sm:$0xf] %v971
        %973 = vst [vmem:[%s897 + $0x7c] sm:$0xf] %v762
        %v974 = vld [vmem:[%s897 + $0x80] sm:$0x1]
        %v975 = vsel %vm336, %v763, %v974
        %976 = vst [vmem:[%s897 + $0x80] sm:$0x1] %v975
        %v977 = vld [vmem:[%s897 + $0x84] sm:$0xf]
        %v978 = vsel %vm899, %v770, %v977
        %979 = vst [vmem:[%s897 + $0x84] sm:$0xf] %v978
        %980 = vst [vmem:[%s897 + $0x88] sm:$0xf] %v779
        %v981 = vld [vmem:[%s897 + $0x8c] sm:$0x1]
        %v982 = vsel %vm336, %v780, %v981
        %983 = vst [vmem:[%s897 + $0x8c] sm:$0x1] %v982
        %v984 = vld [vmem:[%s897 + $0x90] sm:$0xf]
        %v985 = vsel %vm899, %v787, %v984
        %986 = vst [vmem:[%s897 + $0x90] sm:$0xf] %v985
        %987 = vst [vmem:[%s897 + $0x94] sm:$0xf] %v796
        %v988 = vld [vmem:[%s897 + $0x98] sm:$0x1]
        %v989 = vsel %vm336, %v797, %v988
        %990 = vst [vmem:[%s897 + $0x98] sm:$0x1] %v989
        %v991 = vld [vmem:[%s897 + $0x9c] sm:$0xf]
        %v992 = vsel %vm899, %v804, %v991
        %993 = vst [vmem:[%s897 + $0x9c] sm:$0xf] %v992
        %994 = vst [vmem:[%s897 + $0xa0] sm:$0xf] %v813
        %v995 = vld [vmem:[%s897 + $0xa4] sm:$0x1]
        %v996 = vsel %vm336, %v814, %v995
        %997 = vst [vmem:[%s897 + $0xa4] sm:$0x1] %v996
        %v998 = vld [vmem:[%s897 + $0xa8] sm:$0xf]
        %v999 = vsel %vm899, %v821, %v998
        %1000 = vst [vmem:[%s897 + $0xa8] sm:$0xf] %v999
        %1001 = vst [vmem:[%s897 + $0xac] sm:$0xf] %v830
        %v1002 = vld [vmem:[%s897 + $0xb0] sm:$0x1]
        %v1003 = vsel %vm336, %v831, %v1002
        %1004 = vst [vmem:[%s897 + $0xb0] sm:$0x1] %v1003
        %v1005 = vld [vmem:[%s897 + $0xb4] sm:$0xf]
        %v1006 = vsel %vm899, %v838, %v1005
        %1007 = vst [vmem:[%s897 + $0xb4] sm:$0xf] %v1006
        %1008 = vst [vmem:[%s897 + $0xb8] sm:$0xf] %v847
        %v1009 = vld [vmem:[%s897 + $0xbc] sm:$0x1]
        %v1010 = vsel %vm336, %v848, %v1009
        %1011 = vst [vmem:[%s897 + $0xbc] sm:$0x1] %v1010
        %v1012 = vld [vmem:[#allocation2] sm:$0xf]
        %v1013 = vld [vmem:[#allocation2 + $0x4] sm:$0xf]
        %v1014 = vld [vmem:[#allocation2 + $0xc] sm:$0xf]
        %v1015 = vld [vmem:[#allocation2 + $0x10] sm:$0xf]
        %v1016 = vld [vmem:[#allocation2 + $0x18] sm:$0xf]
        %v1017 = vld [vmem:[#allocation2 + $0x1c] sm:$0xf]
        %v1018 = vld [vmem:[#allocation2 + $0x24] sm:$0xf]
        %v1019 = vld [vmem:[#allocation2 + $0x28] sm:$0xf]
        %v1020 = vld [vmem:[#allocation2 + $0x30] sm:$0xf]
        %v1021 = vld [vmem:[#allocation2 + $0x34] sm:$0xf]
        %v1022 = vld [vmem:[#allocation2 + $0x3c] sm:$0xf]
        %v1023 = vld [vmem:[#allocation2 + $0x40] sm:$0xf]
        %v1024 = vld [vmem:[#allocation2 + $0x48] sm:$0xf]
        %v1025 = vld [vmem:[#allocation2 + $0x4c] sm:$0xf]
        %v1026 = vld [vmem:[#allocation2 + $0x54] sm:$0xf]
        %v1027 = vld [vmem:[#allocation2 + $0x58] sm:$0xf]
        %v1028 = vld [vmem:[#allocation2 + $0x60] sm:$0xf]
        %v1029 = vld [vmem:[#allocation2 + $0x64] sm:$0xf]
        %v1030 = vld [vmem:[#allocation2 + $0x6c] sm:$0xf]
        %v1031 = vld [vmem:[#allocation2 + $0x70] sm:$0xf]
        %v1032 = vld [vmem:[#allocation2 + $0x78] sm:$0xf]
        %v1033 = vld [vmem:[#allocation2 + $0x7c] sm:$0xf]
        %v1034 = vld [vmem:[#allocation2 + $0x84] sm:$0xf]
        %v1035 = vld [vmem:[#allocation2 + $0x88] sm:$0xf]
        %v1036 = vld [vmem:[#allocation2 + $0x90] sm:$0xf]
        %v1037 = vld [vmem:[#allocation2 + $0x94] sm:$0xf]
        %v1038 = vld [vmem:[#allocation2 + $0x9c] sm:$0xf]
        %v1039 = vld [vmem:[#allocation2 + $0xa0] sm:$0xf]
        %v1040 = vld [vmem:[#allocation2 + $0xa8] sm:$0xf]
        %v1041 = vld [vmem:[#allocation2 + $0xac] sm:$0xf]
        %v1042 = vld [vmem:[#allocation2 + $0xb4] sm:$0xf]
        %v1043 = vld [vmem:[#allocation2 + $0xb8] sm:$0xf]
        %1044 = vst [vmem:[#allocation3] sm:$0xf] %v1012
        %1045 = vst [vmem:[#allocation3 + $0x24] sm:$0xf] %v1013
        %1046 = vst [vmem:[#allocation3 + $0x48] sm:$0xf] %v1014
        %1047 = vst [vmem:[#allocation3 + $0x6c] sm:$0xf] %v1015
        %1048 = vst [vmem:[#allocation3 + $0x90] sm:$0xf] %v1016
        %1049 = vst [vmem:[#allocation3 + $0xb4] sm:$0xf] %v1017
        %1050 = vst [vmem:[#allocation3 + $0xd8] sm:$0xf] %v1018
        %1051 = vst [vmem:[#allocation3 + $0xfc] sm:$0xf] %v1019
        %1052 = vst [vmem:[#allocation3 + $0x120] sm:$0xf] %v1020
        %1053 = vst [vmem:[#allocation3 + $0x144] sm:$0xf] %v1021
        %1054 = vst [vmem:[#allocation3 + $0x168] sm:$0xf] %v1022
        %1055 = vst [vmem:[#allocation3 + $0x18c] sm:$0xf] %v1023
        %1056 = vst [vmem:[#allocation3 + $0x1b0] sm:$0xf] %v1024
        %1057 = vst [vmem:[#allocation3 + $0x1d4] sm:$0xf] %v1025
        %1058 = vst [vmem:[#allocation3 + $0x1f8] sm:$0xf] %v1026
        %1059 = vst [vmem:[#allocation3 + $0x21c] sm:$0xf] %v1027
        %1060 = vst [vmem:[#allocation3 + $0x240] sm:$0xf] %v1028
        %1061 = vst [vmem:[#allocation3 + $0x264] sm:$0xf] %v1029
        %1062 = vst [vmem:[#allocation3 + $0x288] sm:$0xf] %v1030
        %1063 = vst [vmem:[#allocation3 + $0x2ac] sm:$0xf] %v1031
        %1064 = vst [vmem:[#allocation3 + $0x2d0] sm:$0xf] %v1032
        %1065 = vst [vmem:[#allocation3 + $0x2f4] sm:$0xf] %v1033
        %1066 = vst [vmem:[#allocation3 + $0x318] sm:$0xf] %v1034
        %1067 = vst [vmem:[#allocation3 + $0x33c] sm:$0xf] %v1035
        %1068 = vst [vmem:[#allocation3 + $0x360] sm:$0xf] %v1036
        %1069 = vst [vmem:[#allocation3 + $0x384] sm:$0xf] %v1037
        %1070 = vst [vmem:[#allocation3 + $0x3a8] sm:$0xf] %v1038
        %1071 = vst [vmem:[#allocation3 + $0x3cc] sm:$0xf] %v1039
        %1072 = vst [vmem:[#allocation3 + $0x3f0] sm:$0xf] %v1040
        %1073 = vst [vmem:[#allocation3 + $0x414] sm:$0xf] %v1041
        %1074 = vst [vmem:[#allocation3 + $0x438] sm:$0xf] %v1042
        %1075 = vst [vmem:[#allocation3 + $0x45c] sm:$0xf] %v1043
        %v1076 = vld [vmem:[#allocation2] sm:$0xf]
        %v1077 = vld [vmem:[#allocation2 + $0x4] sm:$0xf]
        %v1078 = vld [vmem:[#allocation2 + $0x8] sm:$0x1]
        %v1079 = vld [vmem:[#allocation2 + $0xc] sm:$0xf]
        %v1080 = vld [vmem:[#allocation2 + $0x10] sm:$0xf]
        %v1081 = vld [vmem:[#allocation2 + $0x14] sm:$0x1]
        %v1082 = vld [vmem:[#allocation2 + $0x18] sm:$0xf]
        %v1083 = vld [vmem:[#allocation2 + $0x1c] sm:$0xf]
        %v1084 = vld [vmem:[#allocation2 + $0x20] sm:$0x1]
        %v1085 = vld [vmem:[#allocation2 + $0x24] sm:$0xf]
        %v1086 = vld [vmem:[#allocation2 + $0x28] sm:$0xf]
        %v1087 = vld [vmem:[#allocation2 + $0x2c] sm:$0x1]
        %v1088 = vld [vmem:[#allocation2 + $0x30] sm:$0xf]
        %v1089 = vld [vmem:[#allocation2 + $0x34] sm:$0xf]
        %v1090 = vld [vmem:[#allocation2 + $0x38] sm:$0x1]
        %v1091 = vld [vmem:[#allocation2 + $0x3c] sm:$0xf]
        %v1092 = vld [vmem:[#allocation2 + $0x40] sm:$0xf]
        %v1093 = vld [vmem:[#allocation2 + $0x44] sm:$0x1]
        %v1094 = vld [vmem:[#allocation2 + $0x48] sm:$0xf]
        %v1095 = vld [vmem:[#allocation2 + $0x4c] sm:$0xf]
        %v1096 = vld [vmem:[#allocation2 + $0x50] sm:$0x1]
        %v1097 = vld [vmem:[#allocation2 + $0x54] sm:$0xf]
        %v1098 = vld [vmem:[#allocation2 + $0x58] sm:$0xf]
        %v1099 = vld [vmem:[#allocation2 + $0x5c] sm:$0x1]
        %v1100 = vld [vmem:[#allocation2 + $0x60] sm:$0xf]
        %v1101 = vld [vmem:[#allocation2 + $0x64] sm:$0xf]
        %v1102 = vld [vmem:[#allocation2 + $0x68] sm:$0x1]
        %v1103 = vld [vmem:[#allocation2 + $0x6c] sm:$0xf]
        %v1104 = vld [vmem:[#allocation2 + $0x70] sm:$0xf]
        %v1105 = vld [vmem:[#allocation2 + $0x74] sm:$0x1]
        %v1106 = vld [vmem:[#allocation2 + $0x78] sm:$0xf]
        %v1107 = vld [vmem:[#allocation2 + $0x7c] sm:$0xf]
        %v1108 = vld [vmem:[#allocation2 + $0x80] sm:$0x1]
        %v1109 = vld [vmem:[#allocation2 + $0x84] sm:$0xf]
        %v1110 = vld [vmem:[#allocation2 + $0x88] sm:$0xf]
        %v1111 = vld [vmem:[#allocation2 + $0x8c] sm:$0x1]
        %v1112 = vld [vmem:[#allocation2 + $0x90] sm:$0xf]
        %v1113 = vld [vmem:[#allocation2 + $0x94] sm:$0xf]
        %v1114 = vld [vmem:[#allocation2 + $0x98] sm:$0x1]
        %v1115 = vld [vmem:[#allocation2 + $0x9c] sm:$0xf]
        %v1116 = vld [vmem:[#allocation2 + $0xa0] sm:$0xf]
        %v1117 = vld [vmem:[#allocation2 + $0xa4] sm:$0x1]
        %v1118 = vld [vmem:[#allocation2 + $0xa8] sm:$0xf]
        %v1119 = vld [vmem:[#allocation2 + $0xac] sm:$0xf]
        %v1120 = vld [vmem:[#allocation2 + $0xb0] sm:$0x1]
        %v1121 = vld [vmem:[#allocation2 + $0xb4] sm:$0xf]
        %v1122 = vld [vmem:[#allocation2 + $0xb8] sm:$0xf]
        %v1123 = vld [vmem:[#allocation2 + $0xbc] sm:$0x1]
        %vm1124 = vsmask.f32 3328
        %vm1125 = vsmask.f32 7440
        %vm1126 = vmor %vm1124, %vm1125
        %v1128 = vshrl.u32 %v1076, 16
        %v1130 = vrot.slane %v1128, 4
        %v1131 = vshll.u32 %v1076, 16
        %v1133 = vrot.slane %v1131, 5
        %v1134 = vor.u32 %v1130, %v1133
        %v1135 = vrot.slane %v1134, 4
        %v1137 = vshll.u32 %v1077, 16
        %v1139 = vrot.slane %v1137, 5
        %v1140 = vsel %vm1126, %v1135, %v1139
        %v1141 = vshrl.u32 %v1077, 16
        %v1143 = vrot.slane %v1141, 4
        %v1144 = vor.u32 %v1143, %v1139
        %v1145 = vrot.slane %v1144, 4
        %v1147 = vshll.u32 %v1078, 16
        %v1149 = vrot.slane %v1147, 5
        %v1150 = vsel %vm1126, %v1145, %v1149
        %v1152 = vshrl.u32 %v1079, 16
        %v1154 = vrot.slane %v1152, 4
        %v1155 = vshll.u32 %v1079, 16
        %v1157 = vrot.slane %v1155, 5
        %v1158 = vor.u32 %v1154, %v1157
        %v1159 = vrot.slane %v1158, 4
        %v1161 = vshll.u32 %v1080, 16
        %v1163 = vrot.slane %v1161, 5
        %v1164 = vsel %vm1126, %v1159, %v1163
        %v1165 = vshrl.u32 %v1080, 16
        %v1167 = vrot.slane %v1165, 4
        %v1168 = vor.u32 %v1167, %v1163
        %v1169 = vrot.slane %v1168, 4
        %v1171 = vshll.u32 %v1081, 16
        %v1173 = vrot.slane %v1171, 5
        %v1174 = vsel %vm1126, %v1169, %v1173
        %v1176 = vshrl.u32 %v1082, 16
        %v1178 = vrot.slane %v1176, 4
        %v1179 = vshll.u32 %v1082, 16
        %v1181 = vrot.slane %v1179, 5
        %v1182 = vor.u32 %v1178, %v1181
        %v1183 = vrot.slane %v1182, 4
        %v1185 = vshll.u32 %v1083, 16
        %v1187 = vrot.slane %v1185, 5
        %v1188 = vsel %vm1126, %v1183, %v1187
        %v1189 = vshrl.u32 %v1083, 16
        %v1191 = vrot.slane %v1189, 4
        %v1192 = vor.u32 %v1191, %v1187
        %v1193 = vrot.slane %v1192, 4
        %v1195 = vshll.u32 %v1084, 16
        %v1197 = vrot.slane %v1195, 5
        %v1198 = vsel %vm1126, %v1193, %v1197
        %v1200 = vshrl.u32 %v1085, 16
        %v1202 = vrot.slane %v1200, 4
        %v1203 = vshll.u32 %v1085, 16
        %v1205 = vrot.slane %v1203, 5
        %v1206 = vor.u32 %v1202, %v1205
        %v1207 = vrot.slane %v1206, 4
        %v1209 = vshll.u32 %v1086, 16
        %v1211 = vrot.slane %v1209, 5
        %v1212 = vsel %vm1126, %v1207, %v1211
        %v1213 = vshrl.u32 %v1086, 16
        %v1215 = vrot.slane %v1213, 4
        %v1216 = vor.u32 %v1215, %v1211
        %v1217 = vrot.slane %v1216, 4
        %v1219 = vshll.u32 %v1087, 16
        %v1221 = vrot.slane %v1219, 5
        %v1222 = vsel %vm1126, %v1217, %v1221
        %v1224 = vshrl.u32 %v1088, 16
        %v1226 = vrot.slane %v1224, 4
        %v1227 = vshll.u32 %v1088, 16
        %v1229 = vrot.slane %v1227, 5
        %v1230 = vor.u32 %v1226, %v1229
        %v1231 = vrot.slane %v1230, 4
        %v1233 = vshll.u32 %v1089, 16
        %v1235 = vrot.slane %v1233, 5
        %v1236 = vsel %vm1126, %v1231, %v1235
        %v1237 = vshrl.u32 %v1089, 16
        %v1239 = vrot.slane %v1237, 4
        %v1240 = vor.u32 %v1239, %v1235
        %v1241 = vrot.slane %v1240, 4
        %v1243 = vshll.u32 %v1090, 16
        %v1245 = vrot.slane %v1243, 5
        %v1246 = vsel %vm1126, %v1241, %v1245
        %v1248 = vshrl.u32 %v1091, 16
        %v1250 = vrot.slane %v1248, 4
        %v1251 = vshll.u32 %v1091, 16
        %v1253 = vrot.slane %v1251, 5
        %v1254 = vor.u32 %v1250, %v1253
        %v1255 = vrot.slane %v1254, 4
        %v1257 = vshll.u32 %v1092, 16
        %v1259 = vrot.slane %v1257, 5
        %v1260 = vsel %vm1126, %v1255, %v1259
        %v1261 = vshrl.u32 %v1092, 16
        %v1263 = vrot.slane %v1261, 4
        %v1264 = vor.u32 %v1263, %v1259
        %v1265 = vrot.slane %v1264, 4
        %v1267 = vshll.u32 %v1093, 16
        %v1269 = vrot.slane %v1267, 5
        %v1270 = vsel %vm1126, %v1265, %v1269
        %v1272 = vshrl.u32 %v1094, 16
        %v1274 = vrot.slane %v1272, 4
        %v1275 = vshll.u32 %v1094, 16
        %v1277 = vrot.slane %v1275, 5
        %v1278 = vor.u32 %v1274, %v1277
        %v1279 = vrot.slane %v1278, 4
        %v1281 = vshll.u32 %v1095, 16
        %v1283 = vrot.slane %v1281, 5
        %v1284 = vsel %vm1126, %v1279, %v1283
        %v1285 = vshrl.u32 %v1095, 16
        %v1287 = vrot.slane %v1285, 4
        %v1288 = vor.u32 %v1287, %v1283
        %v1289 = vrot.slane %v1288, 4
        %v1291 = vshll.u32 %v1096, 16
        %v1293 = vrot.slane %v1291, 5
        %v1294 = vsel %vm1126, %v1289, %v1293
        %v1296 = vshrl.u32 %v1097, 16
        %v1298 = vrot.slane %v1296, 4
        %v1299 = vshll.u32 %v1097, 16
        %v1301 = vrot.slane %v1299, 5
        %v1302 = vor.u32 %v1298, %v1301
        %v1303 = vrot.slane %v1302, 4
        %v1305 = vshll.u32 %v1098, 16
        %v1307 = vrot.slane %v1305, 5
        %v1308 = vsel %vm1126, %v1303, %v1307
        %v1309 = vshrl.u32 %v1098, 16
        %v1311 = vrot.slane %v1309, 4
        %v1312 = vor.u32 %v1311, %v1307
        %v1313 = vrot.slane %v1312, 4
        %v1315 = vshll.u32 %v1099, 16
        %v1317 = vrot.slane %v1315, 5
        %v1318 = vsel %vm1126, %v1313, %v1317
        %v1320 = vshrl.u32 %v1100, 16
        %v1322 = vrot.slane %v1320, 4
        %v1323 = vshll.u32 %v1100, 16
        %v1325 = vrot.slane %v1323, 5
        %v1326 = vor.u32 %v1322, %v1325
        %v1327 = vrot.slane %v1326, 4
        %v1329 = vshll.u32 %v1101, 16
        %v1331 = vrot.slane %v1329, 5
        %v1332 = vsel %vm1126, %v1327, %v1331
        %v1333 = vshrl.u32 %v1101, 16
        %v1335 = vrot.slane %v1333, 4
        %v1336 = vor.u32 %v1335, %v1331
        %v1337 = vrot.slane %v1336, 4
        %v1339 = vshll.u32 %v1102, 16
        %v1341 = vrot.slane %v1339, 5
        %v1342 = vsel %vm1126, %v1337, %v1341
        %v1344 = vshrl.u32 %v1103, 16
        %v1346 = vrot.slane %v1344, 4
        %v1347 = vshll.u32 %v1103, 16
        %v1349 = vrot.slane %v1347, 5
        %v1350 = vor.u32 %v1346, %v1349
        %v1351 = vrot.slane %v1350, 4
        %v1353 = vshll.u32 %v1104, 16
        %v1355 = vrot.slane %v1353, 5
        %v1356 = vsel %vm1126, %v1351, %v1355
        %v1357 = vshrl.u32 %v1104, 16
        %v1359 = vrot.slane %v1357, 4
        %v1360 = vor.u32 %v1359, %v1355
        %v1361 = vrot.slane %v1360, 4
        %v1363 = vshll.u32 %v1105, 16
        %v1365 = vrot.slane %v1363, 5
        %v1366 = vsel %vm1126, %v1361, %v1365
        %v1368 = vshrl.u32 %v1106, 16
        %v1370 = vrot.slane %v1368, 4
        %v1371 = vshll.u32 %v1106, 16
        %v1373 = vrot.slane %v1371, 5
        %v1374 = vor.u32 %v1370, %v1373
        %v1375 = vrot.slane %v1374, 4
        %v1377 = vshll.u32 %v1107, 16
        %v1379 = vrot.slane %v1377, 5
        %v1380 = vsel %vm1126, %v1375, %v1379
        %v1381 = vshrl.u32 %v1107, 16
        %v1383 = vrot.slane %v1381, 4
        %v1384 = vor.u32 %v1383, %v1379
        %v1385 = vrot.slane %v1384, 4
        %v1387 = vshll.u32 %v1108, 16
        %v1389 = vrot.slane %v1387, 5
        %v1390 = vsel %vm1126, %v1385, %v1389
        %v1392 = vshrl.u32 %v1109, 16
        %v1394 = vrot.slane %v1392, 4
        %v1395 = vshll.u32 %v1109, 16
        %v1397 = vrot.slane %v1395, 5
        %v1398 = vor.u32 %v1394, %v1397
        %v1399 = vrot.slane %v1398, 4
        %v1401 = vshll.u32 %v1110, 16
        %v1403 = vrot.slane %v1401, 5
        %v1404 = vsel %vm1126, %v1399, %v1403
        %v1405 = vshrl.u32 %v1110, 16
        %v1407 = vrot.slane %v1405, 4
        %v1408 = vor.u32 %v1407, %v1403
        %v1409 = vrot.slane %v1408, 4
        %v1411 = vshll.u32 %v1111, 16
        %v1413 = vrot.slane %v1411, 5
        %v1414 = vsel %vm1126, %v1409, %v1413
        %v1416 = vshrl.u32 %v1112, 16
        %v1418 = vrot.slane %v1416, 4
        %v1419 = vshll.u32 %v1112, 16
        %v1421 = vrot.slane %v1419, 5
        %v1422 = vor.u32 %v1418, %v1421
        %v1423 = vrot.slane %v1422, 4
        %v1425 = vshll.u32 %v1113, 16
        %v1427 = vrot.slane %v1425, 5
        %v1428 = vsel %vm1126, %v1423, %v1427
        %v1429 = vshrl.u32 %v1113, 16
        %v1431 = vrot.slane %v1429, 4
        %v1432 = vor.u32 %v1431, %v1427
        %v1433 = vrot.slane %v1432, 4
        %v1435 = vshll.u32 %v1114, 16
        %v1437 = vrot.slane %v1435, 5
        %v1438 = vsel %vm1126, %v1433, %v1437
        %v1440 = vshrl.u32 %v1115, 16
        %v1442 = vrot.slane %v1440, 4
        %v1443 = vshll.u32 %v1115, 16
        %v1445 = vrot.slane %v1443, 5
        %v1446 = vor.u32 %v1442, %v1445
        %v1447 = vrot.slane %v1446, 4
        %v1449 = vshll.u32 %v1116, 16
        %v1451 = vrot.slane %v1449, 5
        %v1452 = vsel %vm1126, %v1447, %v1451
        %v1453 = vshrl.u32 %v1116, 16
        %v1455 = vrot.slane %v1453, 4
        %v1456 = vor.u32 %v1455, %v1451
        %v1457 = vrot.slane %v1456, 4
        %v1459 = vshll.u32 %v1117, 16
        %v1461 = vrot.slane %v1459, 5
        %v1462 = vsel %vm1126, %v1457, %v1461
        %v1464 = vshrl.u32 %v1118, 16
        %v1466 = vrot.slane %v1464, 4
        %v1467 = vshll.u32 %v1118, 16
        %v1469 = vrot.slane %v1467, 5
        %v1470 = vor.u32 %v1466, %v1469
        %v1471 = vrot.slane %v1470, 4
        %v1473 = vshll.u32 %v1119, 16
        %v1475 = vrot.slane %v1473, 5
        %v1476 = vsel %vm1126, %v1471, %v1475
        %v1477 = vshrl.u32 %v1119, 16
        %v1479 = vrot.slane %v1477, 4
        %v1480 = vor.u32 %v1479, %v1475
        %v1481 = vrot.slane %v1480, 4
        %v1483 = vshll.u32 %v1120, 16
        %v1485 = vrot.slane %v1483, 5
        %v1486 = vsel %vm1126, %v1481, %v1485
        %v1488 = vshrl.u32 %v1121, 16
        %v1490 = vrot.slane %v1488, 4
        %v1491 = vshll.u32 %v1121, 16
        %v1493 = vrot.slane %v1491, 5
        %v1494 = vor.u32 %v1490, %v1493
        %v1495 = vrot.slane %v1494, 4
        %v1497 = vshll.u32 %v1122, 16
        %v1499 = vrot.slane %v1497, 5
        %v1500 = vsel %vm1126, %v1495, %v1499
        %v1501 = vshrl.u32 %v1122, 16
        %v1503 = vrot.slane %v1501, 4
        %v1504 = vor.u32 %v1503, %v1499
        %v1505 = vrot.slane %v1504, 4
        %v1507 = vshll.u32 %v1123, 16
        %v1509 = vrot.slane %v1507, 5
        %v1510 = vsel %vm1126, %v1505, %v1509
        %1543 = vst [vmem:[#allocation3 + $0x4] sm:$0xf] %v1140
        %1544 = vst [vmem:[#allocation3 + $0x28] sm:$0xf] %v1150
        %1545 = vst [vmem:[#allocation3 + $0x4c] sm:$0xf] %v1164
        %1546 = vst [vmem:[#allocation3 + $0x70] sm:$0xf] %v1174
        %1547 = vst [vmem:[#allocation3 + $0x94] sm:$0xf] %v1188
        %1548 = vst [vmem:[#allocation3 + $0xb8] sm:$0xf] %v1198
        %1549 = vst [vmem:[#allocation3 + $0xdc] sm:$0xf] %v1212
        %1550 = vst [vmem:[#allocation3 + $0x100] sm:$0xf] %v1222
        %1551 = vst [vmem:[#allocation3 + $0x124] sm:$0xf] %v1236
        %1552 = vst [vmem:[#allocation3 + $0x148] sm:$0xf] %v1246
        %1553 = vst [vmem:[#allocation3 + $0x16c] sm:$0xf] %v1260
        %1554 = vst [vmem:[#allocation3 + $0x190] sm:$0xf] %v1270
        %1555 = vst [vmem:[#allocation3 + $0x1b4] sm:$0xf] %v1284
        %1556 = vst [vmem:[#allocation3 + $0x1d8] sm:$0xf] %v1294
        %1557 = vst [vmem:[#allocation3 + $0x1fc] sm:$0xf] %v1308
        %1558 = vst [vmem:[#allocation3 + $0x220] sm:$0xf] %v1318
        %1559 = vst [vmem:[#allocation3 + $0x244] sm:$0xf] %v1332
        %1560 = vst [vmem:[#allocation3 + $0x268] sm:$0xf] %v1342
        %1561 = vst [vmem:[#allocation3 + $0x28c] sm:$0xf] %v1356
        %1562 = vst [vmem:[#allocation3 + $0x2b0] sm:$0xf] %v1366
        %1563 = vst [vmem:[#allocation3 + $0x2d4] sm:$0xf] %v1380
        %1564 = vst [vmem:[#allocation3 + $0x2f8] sm:$0xf] %v1390
        %1565 = vst [vmem:[#allocation3 + $0x31c] sm:$0xf] %v1404
        %1566 = vst [vmem:[#allocation3 + $0x340] sm:$0xf] %v1414
        %1567 = vst [vmem:[#allocation3 + $0x364] sm:$0xf] %v1428
        %1568 = vst [vmem:[#allocation3 + $0x388] sm:$0xf] %v1438
        %1569 = vst [vmem:[#allocation3 + $0x3ac] sm:$0xf] %v1452
        %1570 = vst [vmem:[#allocation3 + $0x3d0] sm:$0xf] %v1462
        %1571 = vst [vmem:[#allocation3 + $0x3f4] sm:$0xf] %v1476
        %1572 = vst [vmem:[#allocation3 + $0x418] sm:$0xf] %v1486
        %1573 = vst [vmem:[#allocation3 + $0x43c] sm:$0xf] %v1500
        %1574 = vst [vmem:[#allocation3 + $0x460] sm:$0xf] %v1510
        %v1575 = vld [vmem:[#allocation2] sm:$0xe]
        %v1576 = vld [vmem:[#allocation2 + $0x4] sm:$0xf]
        %v1577 = vld [vmem:[#allocation2 + $0x8] sm:$0x1]
        %v1578 = vld [vmem:[#allocation2 + $0xc] sm:$0xe]
        %v1579 = vld [vmem:[#allocation2 + $0x10] sm:$0xf]
        %v1580 = vld [vmem:[#allocation2 + $0x14] sm:$0x1]
        %v1581 = vld [vmem:[#allocation2 + $0x18] sm:$0xe]
        %v1582 = vld [vmem:[#allocation2 + $0x1c] sm:$0xf]
        %v1583 = vld [vmem:[#allocation2 + $0x20] sm:$0x1]
        %v1584 = vld [vmem:[#allocation2 + $0x24] sm:$0xe]
        %v1585 = vld [vmem:[#allocation2 + $0x28] sm:$0xf]
        %v1586 = vld [vmem:[#allocation2 + $0x2c] sm:$0x1]
        %v1587 = vld [vmem:[#allocation2 + $0x30] sm:$0xe]
        %v1588 = vld [vmem:[#allocation2 + $0x34] sm:$0xf]
        %v1589 = vld [vmem:[#allocation2 + $0x38] sm:$0x1]
        %v1590 = vld [vmem:[#allocation2 + $0x3c] sm:$0xe]
        %v1591 = vld [vmem:[#allocation2 + $0x40] sm:$0xf]
        %v1592 = vld [vmem:[#allocation2 + $0x44] sm:$0x1]
        %v1593 = vld [vmem:[#allocation2 + $0x48] sm:$0xe]
        %v1594 = vld [vmem:[#allocation2 + $0x4c] sm:$0xf]
        %v1595 = vld [vmem:[#allocation2 + $0x50] sm:$0x1]
        %v1596 = vld [vmem:[#allocation2 + $0x54] sm:$0xe]
        %v1597 = vld [vmem:[#allocation2 + $0x58] sm:$0xf]
        %v1598 = vld [vmem:[#allocation2 + $0x5c] sm:$0x1]
        %v1599 = vld [vmem:[#allocation2 + $0x60] sm:$0xe]
        %v1600 = vld [vmem:[#allocation2 + $0x64] sm:$0xf]
        %v1601 = vld [vmem:[#allocation2 + $0x68] sm:$0x1]
        %v1602 = vld [vmem:[#allocation2 + $0x6c] sm:$0xe]
        %v1603 = vld [vmem:[#allocation2 + $0x70] sm:$0xf]
        %v1604 = vld [vmem:[#allocation2 + $0x74] sm:$0x1]
        %v1605 = vld [vmem:[#allocation2 + $0x78] sm:$0xe]
        %v1606 = vld [vmem:[#allocation2 + $0x7c] sm:$0xf]
        %v1607 = vld [vmem:[#allocation2 + $0x80] sm:$0x1]
        %v1608 = vld [vmem:[#allocation2 + $0x84] sm:$0xe]
        %v1609 = vld [vmem:[#allocation2 + $0x88] sm:$0xf]
        %v1610 = vld [vmem:[#allocation2 + $0x8c] sm:$0x1]
        %v1611 = vld [vmem:[#allocation2 + $0x90] sm:$0xe]
        %v1612 = vld [vmem:[#allocation2 + $0x94] sm:$0xf]
        %v1613 = vld [vmem:[#allocation2 + $0x98] sm:$0x1]
        %v1614 = vld [vmem:[#allocation2 + $0x9c] sm:$0xe]
        %v1615 = vld [vmem:[#allocation2 + $0xa0] sm:$0xf]
        %v1616 = vld [vmem:[#allocation2 + $0xa4] sm:$0x1]
        %v1617 = vld [vmem:[#allocation2 + $0xa8] sm:$0xe]
        %v1618 = vld [vmem:[#allocation2 + $0xac] sm:$0xf]
        %v1619 = vld [vmem:[#allocation2 + $0xb0] sm:$0x1]
        %v1620 = vld [vmem:[#allocation2 + $0xb4] sm:$0xe]
        %v1621 = vld [vmem:[#allocation2 + $0xb8] sm:$0xf]
        %v1622 = vld [vmem:[#allocation2 + $0xbc] sm:$0x1]
        %vm1671 = vcmask 1042432
        %vm1672 = vcmask 1046532
        %vm1673 = vmor %vm1671, %vm1672
        %v1674 = vrot.slane %v1575, 5
        %v1675 = vrot.slane %v1674, 4
        %v1676 = vrot.slane %v1576, 5
        %v1677 = vsel %vm1673, %v1675, %v1676
        %v1678 = vrot.slane %v1676, 4
        %v1679 = vrot.slane %v1577, 5
        %v1680 = vsel %vm1673, %v1678, %v1679
        %v1681 = vrot.slane %v1578, 5
        %v1682 = vrot.slane %v1681, 4
        %v1683 = vrot.slane %v1579, 5
        %v1684 = vsel %vm1673, %v1682, %v1683
        %v1685 = vrot.slane %v1683, 4
        %v1686 = vrot.slane %v1580, 5
        %v1687 = vsel %vm1673, %v1685, %v1686
        %v1688 = vrot.slane %v1581, 5
        %v1689 = vrot.slane %v1688, 4
        %v1690 = vrot.slane %v1582, 5
        %v1691 = vsel %vm1673, %v1689, %v1690
        %v1692 = vrot.slane %v1690, 4
        %v1693 = vrot.slane %v1583, 5
        %v1694 = vsel %vm1673, %v1692, %v1693
        %v1695 = vrot.slane %v1584, 5
        %v1696 = vrot.slane %v1695, 4
        %v1697 = vrot.slane %v1585, 5
        %v1698 = vsel %vm1673, %v1696, %v1697
        %v1699 = vrot.slane %v1697, 4
        %v1700 = vrot.slane %v1586, 5
        %v1701 = vsel %vm1673, %v1699, %v1700
        %v1702 = vrot.slane %v1587, 5
        %v1703 = vrot.slane %v1702, 4
        %v1704 = vrot.slane %v1588, 5
        %v1705 = vsel %vm1673, %v1703, %v1704
        %v1706 = vrot.slane %v1704, 4
        %v1707 = vrot.slane %v1589, 5
        %v1708 = vsel %vm1673, %v1706, %v1707
        %v1709 = vrot.slane %v1590, 5
        %v1710 = vrot.slane %v1709, 4
        %v1711 = vrot.slane %v1591, 5
        %v1712 = vsel %vm1673, %v1710, %v1711
        %v1713 = vrot.slane %v1711, 4
        %v1714 = vrot.slane %v1592, 5
        %v1715 = vsel %vm1673, %v1713, %v1714
        %v1716 = vrot.slane %v1593, 5
        %v1717 = vrot.slane %v1716, 4
        %v1718 = vrot.slane %v1594, 5
        %v1719 = vsel %vm1673, %v1717, %v1718
        %v1720 = vrot.slane %v1718, 4
        %v1721 = vrot.slane %v1595, 5
        %v1722 = vsel %vm1673, %v1720, %v1721
        %v1723 = vrot.slane %v1596, 5
        %v1724 = vrot.slane %v1723, 4
        %v1725 = vrot.slane %v1597, 5
        %v1726 = vsel %vm1673, %v1724, %v1725
        %v1727 = vrot.slane %v1725, 4
        %v1728 = vrot.slane %v1598, 5
        %v1729 = vsel %vm1673, %v1727, %v1728
        %v1730 = vrot.slane %v1599, 5
        %v1731 = vrot.slane %v1730, 4
        %v1732 = vrot.slane %v1600, 5
        %v1733 = vsel %vm1673, %v1731, %v1732
        %v1734 = vrot.slane %v1732, 4
        %v1735 = vrot.slane %v1601, 5
        %v1736 = vsel %vm1673, %v1734, %v1735
        %v1737 = vrot.slane %v1602, 5
        %v1738 = vrot.slane %v1737, 4
        %v1739 = vrot.slane %v1603, 5
        %v1740 = vsel %vm1673, %v1738, %v1739
        %v1741 = vrot.slane %v1739, 4
        %v1742 = vrot.slane %v1604, 5
        %v1743 = vsel %vm1673, %v1741, %v1742
        %v1744 = vrot.slane %v1605, 5
        %v1745 = vrot.slane %v1744, 4
        %v1746 = vrot.slane %v1606, 5
        %v1747 = vsel %vm1673, %v1745, %v1746
        %v1748 = vrot.slane %v1746, 4
        %v1749 = vrot.slane %v1607, 5
        %v1750 = vsel %vm1673, %v1748, %v1749
        %v1751 = vrot.slane %v1608, 5
        %v1752 = vrot.slane %v1751, 4
        %v1753 = vrot.slane %v1609, 5
        %v1754 = vsel %vm1673, %v1752, %v1753
        %v1755 = vrot.slane %v1753, 4
        %v1756 = vrot.slane %v1610, 5
        %v1757 = vsel %vm1673, %v1755, %v1756
        %v1758 = vrot.slane %v1611, 5
        %v1759 = vrot.slane %v1758, 4
        %v1760 = vrot.slane %v1612, 5
        %v1761 = vsel %vm1673, %v1759, %v1760
        %v1762 = vrot.slane %v1760, 4
        %v1763 = vrot.slane %v1613, 5
        %v1764 = vsel %vm1673, %v1762, %v1763
        %v1765 = vrot.slane %v1614, 5
        %v1766 = vrot.slane %v1765, 4
        %v1767 = vrot.slane %v1615, 5
        %v1768 = vsel %vm1673, %v1766, %v1767
        %v1769 = vrot.slane %v1767, 4
        %v1770 = vrot.slane %v1616, 5
        %v1771 = vsel %vm1673, %v1769, %v1770
        %v1772 = vrot.slane %v1617, 5
        %v1773 = vrot.slane %v1772, 4
        %v1774 = vrot.slane %v1618, 5
        %v1775 = vsel %vm1673, %v1773, %v1774
        %v1776 = vrot.slane %v1774, 4
        %v1777 = vrot.slane %v1619, 5
        %v1778 = vsel %vm1673, %v1776, %v1777
        %v1779 = vrot.slane %v1620, 5
        %v1780 = vrot.slane %v1779, 4
        %v1781 = vrot.slane %v1621, 5
        %v1782 = vsel %vm1673, %v1780, %v1781
        %v1783 = vrot.slane %v1781, 4
        %v1784 = vrot.slane %v1622, 5
        %v1785 = vsel %vm1673, %v1783, %v1784
        %1818 = vst [vmem:[#allocation3 + $0x8] sm:$0xf] %v1677
        %1819 = vst [vmem:[#allocation3 + $0x2c] sm:$0xf] %v1680
        %1820 = vst [vmem:[#allocation3 + $0x50] sm:$0xf] %v1684
        %1821 = vst [vmem:[#allocation3 + $0x74] sm:$0xf] %v1687
        %1822 = vst [vmem:[#allocation3 + $0x98] sm:$0xf] %v1691
        %1823 = vst [vmem:[#allocation3 + $0xbc] sm:$0xf] %v1694
        %1824 = vst [vmem:[#allocation3 + $0xe0] sm:$0xf] %v1698
        %1825 = vst [vmem:[#allocation3 + $0x104] sm:$0xf] %v1701
        %1826 = vst [vmem:[#allocation3 + $0x128] sm:$0xf] %v1705
        %1827 = vst [vmem:[#allocation3 + $0x14c] sm:$0xf] %v1708
        %1828 = vst [vmem:[#allocation3 + $0x170] sm:$0xf] %v1712
        %1829 = vst [vmem:[#allocation3 + $0x194] sm:$0xf] %v1715
        %1830 = vst [vmem:[#allocation3 + $0x1b8] sm:$0xf] %v1719
        %1831 = vst [vmem:[#allocation3 + $0x1dc] sm:$0xf] %v1722
        %1832 = vst [vmem:[#allocation3 + $0x200] sm:$0xf] %v1726
        %1833 = vst [vmem:[#allocation3 + $0x224] sm:$0xf] %v1729
        %1834 = vst [vmem:[#allocation3 + $0x248] sm:$0xf] %v1733
        %1835 = vst [vmem:[#allocation3 + $0x26c] sm:$0xf] %v1736
        %1836 = vst [vmem:[#allocation3 + $0x290] sm:$0xf] %v1740
        %1837 = vst [vmem:[#allocation3 + $0x2b4] sm:$0xf] %v1743
        %1838 = vst [vmem:[#allocation3 + $0x2d8] sm:$0xf] %v1747
        %1839 = vst [vmem:[#allocation3 + $0x2fc] sm:$0xf] %v1750
        %1840 = vst [vmem:[#allocation3 + $0x320] sm:$0xf] %v1754
        %1841 = vst [vmem:[#allocation3 + $0x344] sm:$0xf] %v1757
        %1842 = vst [vmem:[#allocation3 + $0x368] sm:$0xf] %v1761
        %1843 = vst [vmem:[#allocation3 + $0x38c] sm:$0xf] %v1764
        %1844 = vst [vmem:[#allocation3 + $0x3b0] sm:$0xf] %v1768
        %1845 = vst [vmem:[#allocation3 + $0x3d4] sm:$0xf] %v1771
        %1846 = vst [vmem:[#allocation3 + $0x3f8] sm:$0xf] %v1775
        %1847 = vst [vmem:[#allocation3 + $0x41c] sm:$0xf] %v1778
        %1848 = vst [vmem:[#allocation3 + $0x440] sm:$0xf] %v1782
        %1849 = vst [vmem:[#allocation3 + $0x464] sm:$0xf] %v1785
        %v1850 = vld [vmem:[%s897] sm:$0xf]
        %v1851 = vld [vmem:[%s897 + $0x4] sm:$0xf]
        %v1852 = vld [vmem:[%s897 + $0xc] sm:$0xf]
        %v1853 = vld [vmem:[%s897 + $0x10] sm:$0xf]
        %v1854 = vld [vmem:[%s897 + $0x18] sm:$0xf]
        %v1855 = vld [vmem:[%s897 + $0x1c] sm:$0xf]
        %v1856 = vld [vmem:[%s897 + $0x24] sm:$0xf]
        %v1857 = vld [vmem:[%s897 + $0x28] sm:$0xf]
        %v1858 = vld [vmem:[%s897 + $0x30] sm:$0xf]
        %v1859 = vld [vmem:[%s897 + $0x34] sm:$0xf]
        %v1860 = vld [vmem:[%s897 + $0x3c] sm:$0xf]
        %v1861 = vld [vmem:[%s897 + $0x40] sm:$0xf]
        %v1862 = vld [vmem:[%s897 + $0x48] sm:$0xf]
        %v1863 = vld [vmem:[%s897 + $0x4c] sm:$0xf]
        %v1864 = vld [vmem:[%s897 + $0x54] sm:$0xf]
        %v1865 = vld [vmem:[%s897 + $0x58] sm:$0xf]
        %v1866 = vld [vmem:[%s897 + $0x60] sm:$0xf]
        %v1867 = vld [vmem:[%s897 + $0x64] sm:$0xf]
        %v1868 = vld [vmem:[%s897 + $0x6c] sm:$0xf]
        %v1869 = vld [vmem:[%s897 + $0x70] sm:$0xf]
        %v1870 = vld [vmem:[%s897 + $0x78] sm:$0xf]
        %v1871 = vld [vmem:[%s897 + $0x7c] sm:$0xf]
        %v1872 = vld [vmem:[%s897 + $0x84] sm:$0xf]
        %v1873 = vld [vmem:[%s897 + $0x88] sm:$0xf]
        %v1874 = vld [vmem:[%s897 + $0x90] sm:$0xf]
        %v1875 = vld [vmem:[%s897 + $0x94] sm:$0xf]
        %v1876 = vld [vmem:[%s897 + $0x9c] sm:$0xf]
        %v1877 = vld [vmem:[%s897 + $0xa0] sm:$0xf]
        %v1878 = vld [vmem:[%s897 + $0xa8] sm:$0xf]
        %v1879 = vld [vmem:[%s897 + $0xac] sm:$0xf]
        %v1880 = vld [vmem:[%s897 + $0xb4] sm:$0xf]
        %v1881 = vld [vmem:[%s897 + $0xb8] sm:$0xf]
        %1882 = vst [vmem:[#allocation3 + $0xc] sm:$0xf] %v1850
        %1883 = vst [vmem:[#allocation3 + $0x30] sm:$0xf] %v1851
        %1884 = vst [vmem:[#allocation3 + $0x54] sm:$0xf] %v1852
        %1885 = vst [vmem:[#allocation3 + $0x78] sm:$0xf] %v1853
        %1886 = vst [vmem:[#allocation3 + $0x9c] sm:$0xf] %v1854
        %1887 = vst [vmem:[#allocation3 + $0xc0] sm:$0xf] %v1855
        %1888 = vst [vmem:[#allocation3 + $0xe4] sm:$0xf] %v1856
        %1889 = vst [vmem:[#allocation3 + $0x108] sm:$0xf] %v1857
        %1890 = vst [vmem:[#allocation3 + $0x12c] sm:$0xf] %v1858
        %1891 = vst [vmem:[#allocation3 + $0x150] sm:$0xf] %v1859
        %1892 = vst [vmem:[#allocation3 + $0x174] sm:$0xf] %v1860
        %1893 = vst [vmem:[#allocation3 + $0x198] sm:$0xf] %v1861
        %1894 = vst [vmem:[#allocation3 + $0x1bc] sm:$0xf] %v1862
        %1895 = vst [vmem:[#allocation3 + $0x1e0] sm:$0xf] %v1863
        %1896 = vst [vmem:[#allocation3 + $0x204] sm:$0xf] %v1864
        %1897 = vst [vmem:[#allocation3 + $0x228] sm:$0xf] %v1865
        %1898 = vst [vmem:[#allocation3 + $0x24c] sm:$0xf] %v1866
        %1899 = vst [vmem:[#allocation3 + $0x270] sm:$0xf] %v1867
        %1900 = vst [vmem:[#allocation3 + $0x294] sm:$0xf] %v1868
        %1901 = vst [vmem:[#allocation3 + $0x2b8] sm:$0xf] %v1869
        %1902 = vst [vmem:[#allocation3 + $0x2dc] sm:$0xf] %v1870
        %1903 = vst [vmem:[#allocation3 + $0x300] sm:$0xf] %v1871
        %1904 = vst [vmem:[#allocation3 + $0x324] sm:$0xf] %v1872
        %1905 = vst [vmem:[#allocation3 + $0x348] sm:$0xf] %v1873
        %1906 = vst [vmem:[#allocation3 + $0x36c] sm:$0xf] %v1874
        %1907 = vst [vmem:[#allocation3 + $0x390] sm:$0xf] %v1875
        %1908 = vst [vmem:[#allocation3 + $0x3b4] sm:$0xf] %v1876
        %1909 = vst [vmem:[#allocation3 + $0x3d8] sm:$0xf] %v1877
        %1910 = vst [vmem:[#allocation3 + $0x3fc] sm:$0xf] %v1878
        %1911 = vst [vmem:[#allocation3 + $0x420] sm:$0xf] %v1879
        %1912 = vst [vmem:[#allocation3 + $0x444] sm:$0xf] %v1880
        %1913 = vst [vmem:[#allocation3 + $0x468] sm:$0xf] %v1881
        %v1914 = vld [vmem:[%s897] sm:$0xf]
        %v1915 = vld [vmem:[%s897 + $0x4] sm:$0xf]
        %v1916 = vld [vmem:[%s897 + $0x8] sm:$0x1]
        %v1917 = vld [vmem:[%s897 + $0xc] sm:$0xf]
        %v1918 = vld [vmem:[%s897 + $0x10] sm:$0xf]
        %v1919 = vld [vmem:[%s897 + $0x14] sm:$0x1]
        %v1920 = vld [vmem:[%s897 + $0x18] sm:$0xf]
        %v1921 = vld [vmem:[%s897 + $0x1c] sm:$0xf]
        %v1922 = vld [vmem:[%s897 + $0x20] sm:$0x1]
        %v1923 = vld [vmem:[%s897 + $0x24] sm:$0xf]
        %v1924 = vld [vmem:[%s897 + $0x28] sm:$0xf]
        %v1925 = vld [vmem:[%s897 + $0x2c] sm:$0x1]
        %v1926 = vld [vmem:[%s897 + $0x30] sm:$0xf]
        %v1927 = vld [vmem:[%s897 + $0x34] sm:$0xf]
        %v1928 = vld [vmem:[%s897 + $0x38] sm:$0x1]
        %v1929 = vld [vmem:[%s897 + $0x3c] sm:$0xf]
        %v1930 = vld [vmem:[%s897 + $0x40] sm:$0xf]
        %v1931 = vld [vmem:[%s897 + $0x44] sm:$0x1]
        %v1932 = vld [vmem:[%s897 + $0x48] sm:$0xf]
        %v1933 = vld [vmem:[%s897 + $0x4c] sm:$0xf]
        %v1934 = vld [vmem:[%s897 + $0x50] sm:$0x1]
        %v1935 = vld [vmem:[%s897 + $0x54] sm:$0xf]
        %v1936 = vld [vmem:[%s897 + $0x58] sm:$0xf]
        %v1937 = vld [vmem:[%s897 + $0x5c] sm:$0x1]
        %v1938 = vld [vmem:[%s897 + $0x60] sm:$0xf]
        %v1939 = vld [vmem:[%s897 + $0x64] sm:$0xf]
        %v1940 = vld [vmem:[%s897 + $0x68] sm:$0x1]
        %v1941 = vld [vmem:[%s897 + $0x6c] sm:$0xf]
        %v1942 = vld [vmem:[%s897 + $0x70] sm:$0xf]
        %v1943 = vld [vmem:[%s897 + $0x74] sm:$0x1]
        %v1944 = vld [vmem:[%s897 + $0x78] sm:$0xf]
        %v1945 = vld [vmem:[%s897 + $0x7c] sm:$0xf]
        %v1946 = vld [vmem:[%s897 + $0x80] sm:$0x1]
        %v1947 = vld [vmem:[%s897 + $0x84] sm:$0xf]
        %v1948 = vld [vmem:[%s897 + $0x88] sm:$0xf]
        %v1949 = vld [vmem:[%s897 + $0x8c] sm:$0x1]
        %v1950 = vld [vmem:[%s897 + $0x90] sm:$0xf]
        %v1951 = vld [vmem:[%s897 + $0x94] sm:$0xf]
        %v1952 = vld [vmem:[%s897 + $0x98] sm:$0x1]
        %v1953 = vld [vmem:[%s897 + $0x9c] sm:$0xf]
        %v1954 = vld [vmem:[%s897 + $0xa0] sm:$0xf]
        %v1955 = vld [vmem:[%s897 + $0xa4] sm:$0x1]
        %v1956 = vld [vmem:[%s897 + $0xa8] sm:$0xf]
        %v1957 = vld [vmem:[%s897 + $0xac] sm:$0xf]
        %v1958 = vld [vmem:[%s897 + $0xb0] sm:$0x1]
        %v1959 = vld [vmem:[%s897 + $0xb4] sm:$0xf]
        %v1960 = vld [vmem:[%s897 + $0xb8] sm:$0xf]
        %v1961 = vld [vmem:[%s897 + $0xbc] sm:$0x1]
        %v1963 = vshrl.u32 %v1914, 16
        %v1965 = vrot.slane %v1963, 4
        %v1966 = vshll.u32 %v1914, 16
        %v1968 = vrot.slane %v1966, 5
        %v1969 = vor.u32 %v1965, %v1968
        %v1970 = vrot.slane %v1969, 4
        %v1972 = vshll.u32 %v1915, 16
        %v1974 = vrot.slane %v1972, 5
        %v1975 = vsel %vm1126, %v1970, %v1974
        %v1976 = vshrl.u32 %v1915, 16
        %v1978 = vrot.slane %v1976, 4
        %v1979 = vor.u32 %v1978, %v1974
        %v1980 = vrot.slane %v1979, 4
        %v1982 = vshll.u32 %v1916, 16
        %v1984 = vrot.slane %v1982, 5
        %v1985 = vsel %vm1126, %v1980, %v1984
        %v1987 = vshrl.u32 %v1917, 16
        %v1989 = vrot.slane %v1987, 4
        %v1990 = vshll.u32 %v1917, 16
        %v1992 = vrot.slane %v1990, 5
        %v1993 = vor.u32 %v1989, %v1992
        %v1994 = vrot.slane %v1993, 4
        %v1996 = vshll.u32 %v1918, 16
        %v1998 = vrot.slane %v1996, 5
        %v1999 = vsel %vm1126, %v1994, %v1998
        %v2000 = vshrl.u32 %v1918, 16
        %v2002 = vrot.slane %v2000, 4
        %v2003 = vor.u32 %v2002, %v1998
        %v2004 = vrot.slane %v2003, 4
        %v2006 = vshll.u32 %v1919, 16
        %v2008 = vrot.slane %v2006, 5
        %v2009 = vsel %vm1126, %v2004, %v2008
        %v2011 = vshrl.u32 %v1920, 16
        %v2013 = vrot.slane %v2011, 4
        %v2014 = vshll.u32 %v1920, 16
        %v2016 = vrot.slane %v2014, 5
        %v2017 = vor.u32 %v2013, %v2016
        %v2018 = vrot.slane %v2017, 4
        %v2020 = vshll.u32 %v1921, 16
        %v2022 = vrot.slane %v2020, 5
        %v2023 = vsel %vm1126, %v2018, %v2022
        %v2024 = vshrl.u32 %v1921, 16
        %v2026 = vrot.slane %v2024, 4
        %v2027 = vor.u32 %v2026, %v2022
        %v2028 = vrot.slane %v2027, 4
        %v2030 = vshll.u32 %v1922, 16
        %v2032 = vrot.slane %v2030, 5
        %v2033 = vsel %vm1126, %v2028, %v2032
        %v2035 = vshrl.u32 %v1923, 16
        %v2037 = vrot.slane %v2035, 4
        %v2038 = vshll.u32 %v1923, 16
        %v2040 = vrot.slane %v2038, 5
        %v2041 = vor.u32 %v2037, %v2040
        %v2042 = vrot.slane %v2041, 4
        %v2044 = vshll.u32 %v1924, 16
        %v2046 = vrot.slane %v2044, 5
        %v2047 = vsel %vm1126, %v2042, %v2046
        %v2048 = vshrl.u32 %v1924, 16
        %v2050 = vrot.slane %v2048, 4
        %v2051 = vor.u32 %v2050, %v2046
        %v2052 = vrot.slane %v2051, 4
        %v2054 = vshll.u32 %v1925, 16
        %v2056 = vrot.slane %v2054, 5
        %v2057 = vsel %vm1126, %v2052, %v2056
        %v2059 = vshrl.u32 %v1926, 16
        %v2061 = vrot.slane %v2059, 4
        %v2062 = vshll.u32 %v1926, 16
        %v2064 = vrot.slane %v2062, 5
        %v2065 = vor.u32 %v2061, %v2064
        %v2066 = vrot.slane %v2065, 4
        %v2068 = vshll.u32 %v1927, 16
        %v2070 = vrot.slane %v2068, 5
        %v2071 = vsel %vm1126, %v2066, %v2070
        %v2072 = vshrl.u32 %v1927, 16
        %v2074 = vrot.slane %v2072, 4
        %v2075 = vor.u32 %v2074, %v2070
        %v2076 = vrot.slane %v2075, 4
        %v2078 = vshll.u32 %v1928, 16
        %v2080 = vrot.slane %v2078, 5
        %v2081 = vsel %vm1126, %v2076, %v2080
        %v2083 = vshrl.u32 %v1929, 16
        %v2085 = vrot.slane %v2083, 4
        %v2086 = vshll.u32 %v1929, 16
        %v2088 = vrot.slane %v2086, 5
        %v2089 = vor.u32 %v2085, %v2088
        %v2090 = vrot.slane %v2089, 4
        %v2092 = vshll.u32 %v1930, 16
        %v2094 = vrot.slane %v2092, 5
        %v2095 = vsel %vm1126, %v2090, %v2094
        %v2096 = vshrl.u32 %v1930, 16
        %v2098 = vrot.slane %v2096, 4
        %v2099 = vor.u32 %v2098, %v2094
        %v2100 = vrot.slane %v2099, 4
        %v2102 = vshll.u32 %v1931, 16
        %v2104 = vrot.slane %v2102, 5
        %v2105 = vsel %vm1126, %v2100, %v2104
        %v2107 = vshrl.u32 %v1932, 16
        %v2109 = vrot.slane %v2107, 4
        %v2110 = vshll.u32 %v1932, 16
        %v2112 = vrot.slane %v2110, 5
        %v2113 = vor.u32 %v2109, %v2112
        %v2114 = vrot.slane %v2113, 4
        %v2116 = vshll.u32 %v1933, 16
        %v2118 = vrot.slane %v2116, 5
        %v2119 = vsel %vm1126, %v2114, %v2118
        %v2120 = vshrl.u32 %v1933, 16
        %v2122 = vrot.slane %v2120, 4
        %v2123 = vor.u32 %v2122, %v2118
        %v2124 = vrot.slane %v2123, 4
        %v2126 = vshll.u32 %v1934, 16
        %v2128 = vrot.slane %v2126, 5
        %v2129 = vsel %vm1126, %v2124, %v2128
        %v2131 = vshrl.u32 %v1935, 16
        %v2133 = vrot.slane %v2131, 4
        %v2134 = vshll.u32 %v1935, 16
        %v2136 = vrot.slane %v2134, 5
        %v2137 = vor.u32 %v2133, %v2136
        %v2138 = vrot.slane %v2137, 4
        %v2140 = vshll.u32 %v1936, 16
        %v2142 = vrot.slane %v2140, 5
        %v2143 = vsel %vm1126, %v2138, %v2142
        %v2144 = vshrl.u32 %v1936, 16
        %v2146 = vrot.slane %v2144, 4
        %v2147 = vor.u32 %v2146, %v2142
        %v2148 = vrot.slane %v2147, 4
        %v2150 = vshll.u32 %v1937, 16
        %v2152 = vrot.slane %v2150, 5
        %v2153 = vsel %vm1126, %v2148, %v2152
        %v2155 = vshrl.u32 %v1938, 16
        %v2157 = vrot.slane %v2155, 4
        %v2158 = vshll.u32 %v1938, 16
        %v2160 = vrot.slane %v2158, 5
        %v2161 = vor.u32 %v2157, %v2160
        %v2162 = vrot.slane %v2161, 4
        %v2164 = vshll.u32 %v1939, 16
        %v2166 = vrot.slane %v2164, 5
        %v2167 = vsel %vm1126, %v2162, %v2166
        %v2168 = vshrl.u32 %v1939, 16
        %v2170 = vrot.slane %v2168, 4
        %v2171 = vor.u32 %v2170, %v2166
        %v2172 = vrot.slane %v2171, 4
        %v2174 = vshll.u32 %v1940, 16
        %v2176 = vrot.slane %v2174, 5
        %v2177 = vsel %vm1126, %v2172, %v2176
        %v2179 = vshrl.u32 %v1941, 16
        %v2181 = vrot.slane %v2179, 4
        %v2182 = vshll.u32 %v1941, 16
        %v2184 = vrot.slane %v2182, 5
        %v2185 = vor.u32 %v2181, %v2184
        %v2186 = vrot.slane %v2185, 4
        %v2188 = vshll.u32 %v1942, 16
        %v2190 = vrot.slane %v2188, 5
        %v2191 = vsel %vm1126, %v2186, %v2190
        %v2192 = vshrl.u32 %v1942, 16
        %v2194 = vrot.slane %v2192, 4
        %v2195 = vor.u32 %v2194, %v2190
        %v2196 = vrot.slane %v2195, 4
        %v2198 = vshll.u32 %v1943, 16
        %v2200 = vrot.slane %v2198, 5
        %v2201 = vsel %vm1126, %v2196, %v2200
        %v2203 = vshrl.u32 %v1944, 16
        %v2205 = vrot.slane %v2203, 4
        %v2206 = vshll.u32 %v1944, 16
        %v2208 = vrot.slane %v2206, 5
        %v2209 = vor.u32 %v2205, %v2208
        %v2210 = vrot.slane %v2209, 4
        %v2212 = vshll.u32 %v1945, 16
        %v2214 = vrot.slane %v2212, 5
        %v2215 = vsel %vm1126, %v2210, %v2214
        %v2216 = vshrl.u32 %v1945, 16
        %v2218 = vrot.slane %v2216, 4
        %v2219 = vor.u32 %v2218, %v2214
        %v2220 = vrot.slane %v2219, 4
        %v2222 = vshll.u32 %v1946, 16
        %v2224 = vrot.slane %v2222, 5
        %v2225 = vsel %vm1126, %v2220, %v2224
        %v2227 = vshrl.u32 %v1947, 16
        %v2229 = vrot.slane %v2227, 4
        %v2230 = vshll.u32 %v1947, 16
        %v2232 = vrot.slane %v2230, 5
        %v2233 = vor.u32 %v2229, %v2232
        %v2234 = vrot.slane %v2233, 4
        %v2236 = vshll.u32 %v1948, 16
        %v2238 = vrot.slane %v2236, 5
        %v2239 = vsel %vm1126, %v2234, %v2238
        %v2240 = vshrl.u32 %v1948, 16
        %v2242 = vrot.slane %v2240, 4
        %v2243 = vor.u32 %v2242, %v2238
        %v2244 = vrot.slane %v2243, 4
        %v2246 = vshll.u32 %v1949, 16
        %v2248 = vrot.slane %v2246, 5
        %v2249 = vsel %vm1126, %v2244, %v2248
        %v2251 = vshrl.u32 %v1950, 16
        %v2253 = vrot.slane %v2251, 4
        %v2254 = vshll.u32 %v1950, 16
        %v2256 = vrot.slane %v2254, 5
        %v2257 = vor.u32 %v2253, %v2256
        %v2258 = vrot.slane %v2257, 4
        %v2260 = vshll.u32 %v1951, 16
        %v2262 = vrot.slane %v2260, 5
        %v2263 = vsel %vm1126, %v2258, %v2262
        %v2264 = vshrl.u32 %v1951, 16
        %v2266 = vrot.slane %v2264, 4
        %v2267 = vor.u32 %v2266, %v2262
        %v2268 = vrot.slane %v2267, 4
        %v2270 = vshll.u32 %v1952, 16
        %v2272 = vrot.slane %v2270, 5
        %v2273 = vsel %vm1126, %v2268, %v2272
        %v2275 = vshrl.u32 %v1953, 16
        %v2277 = vrot.slane %v2275, 4
        %v2278 = vshll.u32 %v1953, 16
        %v2280 = vrot.slane %v2278, 5
        %v2281 = vor.u32 %v2277, %v2280
        %v2282 = vrot.slane %v2281, 4
        %v2284 = vshll.u32 %v1954, 16
        %v2286 = vrot.slane %v2284, 5
        %v2287 = vsel %vm1126, %v2282, %v2286
        %v2288 = vshrl.u32 %v1954, 16
        %v2290 = vrot.slane %v2288, 4
        %v2291 = vor.u32 %v2290, %v2286
        %v2292 = vrot.slane %v2291, 4
        %v2294 = vshll.u32 %v1955, 16
        %v2296 = vrot.slane %v2294, 5
        %v2297 = vsel %vm1126, %v2292, %v2296
        %v2299 = vshrl.u32 %v1956, 16
        %v2301 = vrot.slane %v2299, 4
        %v2302 = vshll.u32 %v1956, 16
        %v2304 = vrot.slane %v2302, 5
        %v2305 = vor.u32 %v2301, %v2304
        %v2306 = vrot.slane %v2305, 4
        %v2308 = vshll.u32 %v1957, 16
        %v2310 = vrot.slane %v2308, 5
        %v2311 = vsel %vm1126, %v2306, %v2310
        %v2312 = vshrl.u32 %v1957, 16
        %v2314 = vrot.slane %v2312, 4
        %v2315 = vor.u32 %v2314, %v2310
        %v2316 = vrot.slane %v2315, 4
        %v2318 = vshll.u32 %v1958, 16
        %v2320 = vrot.slane %v2318, 5
        %v2321 = vsel %vm1126, %v2316, %v2320
        %v2323 = vshrl.u32 %v1959, 16
        %v2325 = vrot.slane %v2323, 4
        %v2326 = vshll.u32 %v1959, 16
        %v2328 = vrot.slane %v2326, 5
        %v2329 = vor.u32 %v2325, %v2328
        %v2330 = vrot.slane %v2329, 4
        %v2332 = vshll.u32 %v1960, 16
        %v2334 = vrot.slane %v2332, 5
        %v2335 = vsel %vm1126, %v2330, %v2334
        %v2336 = vshrl.u32 %v1960, 16
        %v2338 = vrot.slane %v2336, 4
        %v2339 = vor.u32 %v2338, %v2334
        %v2340 = vrot.slane %v2339, 4
        %v2342 = vshll.u32 %v1961, 16
        %v2344 = vrot.slane %v2342, 5
        %v2345 = vsel %vm1126, %v2340, %v2344
        %2378 = vst [vmem:[#allocation3 + $0x10] sm:$0xf] %v1975
        %2379 = vst [vmem:[#allocation3 + $0x34] sm:$0xf] %v1985
        %2380 = vst [vmem:[#allocation3 + $0x58] sm:$0xf] %v1999
        %2381 = vst [vmem:[#allocation3 + $0x7c] sm:$0xf] %v2009
        %2382 = vst [vmem:[#allocation3 + $0xa0] sm:$0xf] %v2023
        %2383 = vst [vmem:[#allocation3 + $0xc4] sm:$0xf] %v2033
        %2384 = vst [vmem:[#allocation3 + $0xe8] sm:$0xf] %v2047
        %2385 = vst [vmem:[#allocation3 + $0x10c] sm:$0xf] %v2057
        %2386 = vst [vmem:[#allocation3 + $0x130] sm:$0xf] %v2071
        %2387 = vst [vmem:[#allocation3 + $0x154] sm:$0xf] %v2081
        %2388 = vst [vmem:[#allocation3 + $0x178] sm:$0xf] %v2095
        %2389 = vst [vmem:[#allocation3 + $0x19c] sm:$0xf] %v2105
        %2390 = vst [vmem:[#allocation3 + $0x1c0] sm:$0xf] %v2119
        %2391 = vst [vmem:[#allocation3 + $0x1e4] sm:$0xf] %v2129
        %2392 = vst [vmem:[#allocation3 + $0x208] sm:$0xf] %v2143
        %2393 = vst [vmem:[#allocation3 + $0x22c] sm:$0xf] %v2153
        %2394 = vst [vmem:[#allocation3 + $0x250] sm:$0xf] %v2167
        %2395 = vst [vmem:[#allocation3 + $0x274] sm:$0xf] %v2177
        %2396 = vst [vmem:[#allocation3 + $0x298] sm:$0xf] %v2191
        %2397 = vst [vmem:[#allocation3 + $0x2bc] sm:$0xf] %v2201
        %2398 = vst [vmem:[#allocation3 + $0x2e0] sm:$0xf] %v2215
        %2399 = vst [vmem:[#allocation3 + $0x304] sm:$0xf] %v2225
        %2400 = vst [vmem:[#allocation3 + $0x328] sm:$0xf] %v2239
        %2401 = vst [vmem:[#allocation3 + $0x34c] sm:$0xf] %v2249
        %2402 = vst [vmem:[#allocation3 + $0x370] sm:$0xf] %v2263
        %2403 = vst [vmem:[#allocation3 + $0x394] sm:$0xf] %v2273
        %2404 = vst [vmem:[#allocation3 + $0x3b8] sm:$0xf] %v2287
        %2405 = vst [vmem:[#allocation3 + $0x3dc] sm:$0xf] %v2297
        %2406 = vst [vmem:[#allocation3 + $0x400] sm:$0xf] %v2311
        %2407 = vst [vmem:[#allocation3 + $0x424] sm:$0xf] %v2321
        %2408 = vst [vmem:[#allocation3 + $0x448] sm:$0xf] %v2335
        %2409 = vst [vmem:[#allocation3 + $0x46c] sm:$0xf] %v2345
        %v2410 = vld [vmem:[%s897] sm:$0xe]
        %v2411 = vld [vmem:[%s897 + $0x4] sm:$0xf]
        %v2412 = vld [vmem:[%s897 + $0x8] sm:$0x1]
        %v2413 = vld [vmem:[%s897 + $0xc] sm:$0xe]
        %v2414 = vld [vmem:[%s897 + $0x10] sm:$0xf]
        %v2415 = vld [vmem:[%s897 + $0x14] sm:$0x1]
        %v2416 = vld [vmem:[%s897 + $0x18] sm:$0xe]
        %v2417 = vld [vmem:[%s897 + $0x1c] sm:$0xf]
        %v2418 = vld [vmem:[%s897 + $0x20] sm:$0x1]
        %v2419 = vld [vmem:[%s897 + $0x24] sm:$0xe]
        %v2420 = vld [vmem:[%s897 + $0x28] sm:$0xf]
        %v2421 = vld [vmem:[%s897 + $0x2c] sm:$0x1]
        %v2422 = vld [vmem:[%s897 + $0x30] sm:$0xe]
        %v2423 = vld [vmem:[%s897 + $0x34] sm:$0xf]
        %v2424 = vld [vmem:[%s897 + $0x38] sm:$0x1]
        %v2425 = vld [vmem:[%s897 + $0x3c] sm:$0xe]
        %v2426 = vld [vmem:[%s897 + $0x40] sm:$0xf]
        %v2427 = vld [vmem:[%s897 + $0x44] sm:$0x1]
        %v2428 = vld [vmem:[%s897 + $0x48] sm:$0xe]
        %v2429 = vld [vmem:[%s897 + $0x4c] sm:$0xf]
        %v2430 = vld [vmem:[%s897 + $0x50] sm:$0x1]
        %v2431 = vld [vmem:[%s897 + $0x54] sm:$0xe]
        %v2432 = vld [vmem:[%s897 + $0x58] sm:$0xf]
        %v2433 = vld [vmem:[%s897 + $0x5c] sm:$0x1]
        %v2434 = vld [vmem:[%s897 + $0x60] sm:$0xe]
        %v2435 = vld [vmem:[%s897 + $0x64] sm:$0xf]
        %v2436 = vld [vmem:[%s897 + $0x68] sm:$0x1]
        %v2437 = vld [vmem:[%s897 + $0x6c] sm:$0xe]
        %v2438 = vld [vmem:[%s897 + $0x70] sm:$0xf]
        %v2439 = vld [vmem:[%s897 + $0x74] sm:$0x1]
        %v2440 = vld [vmem:[%s897 + $0x78] sm:$0xe]
        %v2441 = vld [vmem:[%s897 + $0x7c] sm:$0xf]
        %v2442 = vld [vmem:[%s897 + $0x80] sm:$0x1]
        %v2443 = vld [vmem:[%s897 + $0x84] sm:$0xe]
        %v2444 = vld [vmem:[%s897 + $0x88] sm:$0xf]
        %v2445 = vld [vmem:[%s897 + $0x8c] sm:$0x1]
        %v2446 = vld [vmem:[%s897 + $0x90] sm:$0xe]
        %v2447 = vld [vmem:[%s897 + $0x94] sm:$0xf]
        %v2448 = vld [vmem:[%s897 + $0x98] sm:$0x1]
        %v2449 = vld [vmem:[%s897 + $0x9c] sm:$0xe]
        %v2450 = vld [vmem:[%s897 + $0xa0] sm:$0xf]
        %v2451 = vld [vmem:[%s897 + $0xa4] sm:$0x1]
        %v2452 = vld [vmem:[%s897 + $0xa8] sm:$0xe]
        %v2453 = vld [vmem:[%s897 + $0xac] sm:$0xf]
        %v2454 = vld [vmem:[%s897 + $0xb0] sm:$0x1]
        %v2455 = vld [vmem:[%s897 + $0xb4] sm:$0xe]
        %v2456 = vld [vmem:[%s897 + $0xb8] sm:$0xf]
        %v2457 = vld [vmem:[%s897 + $0xbc] sm:$0x1]
        %v2506 = vrot.slane %v2410, 5
        %v2507 = vrot.slane %v2506, 4
        %v2508 = vrot.slane %v2411, 5
        %v2509 = vsel %vm1673, %v2507, %v2508
        %v2510 = vrot.slane %v2508, 4
        %v2511 = vrot.slane %v2412, 5
        %v2512 = vsel %vm1673, %v2510, %v2511
        %v2513 = vrot.slane %v2413, 5
        %v2514 = vrot.slane %v2513, 4
        %v2515 = vrot.slane %v2414, 5
        %v2516 = vsel %vm1673, %v2514, %v2515
        %v2517 = vrot.slane %v2515, 4
        %v2518 = vrot.slane %v2415, 5
        %v2519 = vsel %vm1673, %v2517, %v2518
        %v2520 = vrot.slane %v2416, 5
        %v2521 = vrot.slane %v2520, 4
        %v2522 = vrot.slane %v2417, 5
        %v2523 = vsel %vm1673, %v2521, %v2522
        %v2524 = vrot.slane %v2522, 4
        %v2525 = vrot.slane %v2418, 5
        %v2526 = vsel %vm1673, %v2524, %v2525
        %v2527 = vrot.slane %v2419, 5
        %v2528 = vrot.slane %v2527, 4
        %v2529 = vrot.slane %v2420, 5
        %v2530 = vsel %vm1673, %v2528, %v2529
        %v2531 = vrot.slane %v2529, 4
        %v2532 = vrot.slane %v2421, 5
        %v2533 = vsel %vm1673, %v2531, %v2532
        %v2534 = vrot.slane %v2422, 5
        %v2535 = vrot.slane %v2534, 4
        %v2536 = vrot.slane %v2423, 5
        %v2537 = vsel %vm1673, %v2535, %v2536
        %v2538 = vrot.slane %v2536, 4
        %v2539 = vrot.slane %v2424, 5
        %v2540 = vsel %vm1673, %v2538, %v2539
        %v2541 = vrot.slane %v2425, 5
        %v2542 = vrot.slane %v2541, 4
        %v2543 = vrot.slane %v2426, 5
        %v2544 = vsel %vm1673, %v2542, %v2543
        %v2545 = vrot.slane %v2543, 4
        %v2546 = vrot.slane %v2427, 5
        %v2547 = vsel %vm1673, %v2545, %v2546
        %v2548 = vrot.slane %v2428, 5
        %v2549 = vrot.slane %v2548, 4
        %v2550 = vrot.slane %v2429, 5
        %v2551 = vsel %vm1673, %v2549, %v2550
        %v2552 = vrot.slane %v2550, 4
        %v2553 = vrot.slane %v2430, 5
        %v2554 = vsel %vm1673, %v2552, %v2553
        %v2555 = vrot.slane %v2431, 5
        %v2556 = vrot.slane %v2555, 4
        %v2557 = vrot.slane %v2432, 5
        %v2558 = vsel %vm1673, %v2556, %v2557
        %v2559 = vrot.slane %v2557, 4
        %v2560 = vrot.slane %v2433, 5
        %v2561 = vsel %vm1673, %v2559, %v2560
        %v2562 = vrot.slane %v2434, 5
        %v2563 = vrot.slane %v2562, 4
        %v2564 = vrot.slane %v2435, 5
        %v2565 = vsel %vm1673, %v2563, %v2564
        %v2566 = vrot.slane %v2564, 4
        %v2567 = vrot.slane %v2436, 5
        %v2568 = vsel %vm1673, %v2566, %v2567
        %v2569 = vrot.slane %v2437, 5
        %v2570 = vrot.slane %v2569, 4
        %v2571 = vrot.slane %v2438, 5
        %v2572 = vsel %vm1673, %v2570, %v2571
        %v2573 = vrot.slane %v2571, 4
        %v2574 = vrot.slane %v2439, 5
        %v2575 = vsel %vm1673, %v2573, %v2574
        %v2576 = vrot.slane %v2440, 5
        %v2577 = vrot.slane %v2576, 4
        %v2578 = vrot.slane %v2441, 5
        %v2579 = vsel %vm1673, %v2577, %v2578
        %v2580 = vrot.slane %v2578, 4
        %v2581 = vrot.slane %v2442, 5
        %v2582 = vsel %vm1673, %v2580, %v2581
        %v2583 = vrot.slane %v2443, 5
        %v2584 = vrot.slane %v2583, 4
        %v2585 = vrot.slane %v2444, 5
        %v2586 = vsel %vm1673, %v2584, %v2585
        %v2587 = vrot.slane %v2585, 4
        %v2588 = vrot.slane %v2445, 5
        %v2589 = vsel %vm1673, %v2587, %v2588
        %v2590 = vrot.slane %v2446, 5
        %v2591 = vrot.slane %v2590, 4
        %v2592 = vrot.slane %v2447, 5
        %v2593 = vsel %vm1673, %v2591, %v2592
        %v2594 = vrot.slane %v2592, 4
        %v2595 = vrot.slane %v2448, 5
        %v2596 = vsel %vm1673, %v2594, %v2595
        %v2597 = vrot.slane %v2449, 5
        %v2598 = vrot.slane %v2597, 4
        %v2599 = vrot.slane %v2450, 5
        %v2600 = vsel %vm1673, %v2598, %v2599
        %v2601 = vrot.slane %v2599, 4
        %v2602 = vrot.slane %v2451, 5
        %v2603 = vsel %vm1673, %v2601, %v2602
        %v2604 = vrot.slane %v2452, 5
        %v2605 = vrot.slane %v2604, 4
        %v2606 = vrot.slane %v2453, 5
        %v2607 = vsel %vm1673, %v2605, %v2606
        %v2608 = vrot.slane %v2606, 4
        %v2609 = vrot.slane %v2454, 5
        %v2610 = vsel %vm1673, %v2608, %v2609
        %v2611 = vrot.slane %v2455, 5
        %v2612 = vrot.slane %v2611, 4
        %v2613 = vrot.slane %v2456, 5
        %v2614 = vsel %vm1673, %v2612, %v2613
        %v2615 = vrot.slane %v2613, 4
        %v2616 = vrot.slane %v2457, 5
        %v2617 = vsel %vm1673, %v2615, %v2616
        %2650 = vst [vmem:[#allocation3 + $0x14] sm:$0xf] %v2509
        %2651 = vst [vmem:[#allocation3 + $0x38] sm:$0xf] %v2512
        %2652 = vst [vmem:[#allocation3 + $0x5c] sm:$0xf] %v2516
        %2653 = vst [vmem:[#allocation3 + $0x80] sm:$0xf] %v2519
        %2654 = vst [vmem:[#allocation3 + $0xa4] sm:$0xf] %v2523
        %2655 = vst [vmem:[#allocation3 + $0xc8] sm:$0xf] %v2526
        %2656 = vst [vmem:[#allocation3 + $0xec] sm:$0xf] %v2530
        %2657 = vst [vmem:[#allocation3 + $0x110] sm:$0xf] %v2533
        %2658 = vst [vmem:[#allocation3 + $0x134] sm:$0xf] %v2537
        %2659 = vst [vmem:[#allocation3 + $0x158] sm:$0xf] %v2540
        %2660 = vst [vmem:[#allocation3 + $0x17c] sm:$0xf] %v2544
        %2661 = vst [vmem:[#allocation3 + $0x1a0] sm:$0xf] %v2547
        %2662 = vst [vmem:[#allocation3 + $0x1c4] sm:$0xf] %v2551
        %2663 = vst [vmem:[#allocation3 + $0x1e8] sm:$0xf] %v2554
        %2664 = vst [vmem:[#allocation3 + $0x20c] sm:$0xf] %v2558
        %2665 = vst [vmem:[#allocation3 + $0x230] sm:$0xf] %v2561
        %2666 = vst [vmem:[#allocation3 + $0x254] sm:$0xf] %v2565
        %2667 = vst [vmem:[#allocation3 + $0x278] sm:$0xf] %v2568
        %2668 = vst [vmem:[#allocation3 + $0x29c] sm:$0xf] %v2572
        %2669 = vst [vmem:[#allocation3 + $0x2c0] sm:$0xf] %v2575
        %2670 = vst [vmem:[#allocation3 + $0x2e4] sm:$0xf] %v2579
        %2671 = vst [vmem:[#allocation3 + $0x308] sm:$0xf] %v2582
        %2672 = vst [vmem:[#allocation3 + $0x32c] sm:$0xf] %v2586
        %2673 = vst [vmem:[#allocation3 + $0x350] sm:$0xf] %v2589
        %2674 = vst [vmem:[#allocation3 + $0x374] sm:$0xf] %v2593
        %2675 = vst [vmem:[#allocation3 + $0x398] sm:$0xf] %v2596
        %2676 = vst [vmem:[#allocation3 + $0x3bc] sm:$0xf] %v2600
        %2677 = vst [vmem:[#allocation3 + $0x3e0] sm:$0xf] %v2603
        %2678 = vst [vmem:[#allocation3 + $0x404] sm:$0xf] %v2607
        %2679 = vst [vmem:[#allocation3 + $0x428] sm:$0xf] %v2610
        %2680 = vst [vmem:[#allocation3 + $0x44c] sm:$0xf] %v2614
        %2681 = vst [vmem:[#allocation3 + $0x470] sm:$0xf] %v2617
        %s2682 = scalar_lea.vmem [#allocation2], 24
        %v2683 = vld [vmem:[%s2682] sm:$0xf]
        %v2684 = vld [vmem:[%s2682 + $0x4] sm:$0xf]
        %v2685 = vld [vmem:[%s2682 + $0xc] sm:$0xf]
        %v2686 = vld [vmem:[%s2682 + $0x10] sm:$0xf]
        %v2687 = vld [vmem:[%s2682 + $0x18] sm:$0xf]
        %v2688 = vld [vmem:[%s2682 + $0x1c] sm:$0xf]
        %v2689 = vld [vmem:[%s2682 + $0x24] sm:$0xf]
        %v2690 = vld [vmem:[%s2682 + $0x28] sm:$0xf]
        %v2691 = vld [vmem:[%s2682 + $0x30] sm:$0xf]
        %v2692 = vld [vmem:[%s2682 + $0x34] sm:$0xf]
        %v2693 = vld [vmem:[%s2682 + $0x3c] sm:$0xf]
        %v2694 = vld [vmem:[%s2682 + $0x40] sm:$0xf]
        %v2695 = vld [vmem:[%s2682 + $0x48] sm:$0xf]
        %v2696 = vld [vmem:[%s2682 + $0x4c] sm:$0xf]
        %v2697 = vld [vmem:[%s2682 + $0x54] sm:$0xf]
        %v2698 = vld [vmem:[%s2682 + $0x58] sm:$0xf]
        %v2699 = vld [vmem:[%s2682 + $0x60] sm:$0xf]
        %v2700 = vld [vmem:[%s2682 + $0x64] sm:$0xf]
        %v2701 = vld [vmem:[%s2682 + $0x6c] sm:$0xf]
        %v2702 = vld [vmem:[%s2682 + $0x70] sm:$0xf]
        %v2703 = vld [vmem:[%s2682 + $0x78] sm:$0xf]
        %v2704 = vld [vmem:[%s2682 + $0x7c] sm:$0xf]
        %v2705 = vld [vmem:[%s2682 + $0x84] sm:$0xf]
        %v2706 = vld [vmem:[%s2682 + $0x88] sm:$0xf]
        %v2707 = vld [vmem:[%s2682 + $0x90] sm:$0xf]
        %v2708 = vld [vmem:[%s2682 + $0x94] sm:$0xf]
        %v2709 = vld [vmem:[%s2682 + $0x9c] sm:$0xf]
        %v2710 = vld [vmem:[%s2682 + $0xa0] sm:$0xf]
        %v2711 = vld [vmem:[%s2682 + $0xa8] sm:$0xf]
        %v2712 = vld [vmem:[%s2682 + $0xac] sm:$0xf]
        %v2713 = vld [vmem:[%s2682 + $0xb4] sm:$0xf]
        %v2714 = vld [vmem:[%s2682 + $0xb8] sm:$0xf]
        %2715 = vst [vmem:[#allocation3 + $0x18] sm:$0xf] %v2683
        %2716 = vst [vmem:[#allocation3 + $0x3c] sm:$0xf] %v2684
        %2717 = vst [vmem:[#allocation3 + $0x60] sm:$0xf] %v2685
        %2718 = vst [vmem:[#allocation3 + $0x84] sm:$0xf] %v2686
        %2719 = vst [vmem:[#allocation3 + $0xa8] sm:$0xf] %v2687
        %2720 = vst [vmem:[#allocation3 + $0xcc] sm:$0xf] %v2688
        %2721 = vst [vmem:[#allocation3 + $0xf0] sm:$0xf] %v2689
        %2722 = vst [vmem:[#allocation3 + $0x114] sm:$0xf] %v2690
        %2723 = vst [vmem:[#allocation3 + $0x138] sm:$0xf] %v2691
        %2724 = vst [vmem:[#allocation3 + $0x15c] sm:$0xf] %v2692
        %2725 = vst [vmem:[#allocation3 + $0x180] sm:$0xf] %v2693
        %2726 = vst [vmem:[#allocation3 + $0x1a4] sm:$0xf] %v2694
        %2727 = vst [vmem:[#allocation3 + $0x1c8] sm:$0xf] %v2695
        %2728 = vst [vmem:[#allocation3 + $0x1ec] sm:$0xf] %v2696
        %2729 = vst [vmem:[#allocation3 + $0x210] sm:$0xf] %v2697
        %2730 = vst [vmem:[#allocation3 + $0x234] sm:$0xf] %v2698
        %2731 = vst [vmem:[#allocation3 + $0x258] sm:$0xf] %v2699
        %2732 = vst [vmem:[#allocation3 + $0x27c] sm:$0xf] %v2700
        %2733 = vst [vmem:[#allocation3 + $0x2a0] sm:$0xf] %v2701
        %2734 = vst [vmem:[#allocation3 + $0x2c4] sm:$0xf] %v2702
        %2735 = vst [vmem:[#allocation3 + $0x2e8] sm:$0xf] %v2703
        %2736 = vst [vmem:[#allocation3 + $0x30c] sm:$0xf] %v2704
        %2737 = vst [vmem:[#allocation3 + $0x330] sm:$0xf] %v2705
        %2738 = vst [vmem:[#allocation3 + $0x354] sm:$0xf] %v2706
        %2739 = vst [vmem:[#allocation3 + $0x378] sm:$0xf] %v2707
        %2740 = vst [vmem:[#allocation3 + $0x39c] sm:$0xf] %v2708
        %2741 = vst [vmem:[#allocation3 + $0x3c0] sm:$0xf] %v2709
        %2742 = vst [vmem:[#allocation3 + $0x3e4] sm:$0xf] %v2710
        %2743 = vst [vmem:[#allocation3 + $0x408] sm:$0xf] %v2711
        %2744 = vst [vmem:[#allocation3 + $0x42c] sm:$0xf] %v2712
        %2745 = vst [vmem:[#allocation3 + $0x450] sm:$0xf] %v2713
        %2746 = vst [vmem:[#allocation3 + $0x474] sm:$0xf] %v2714
        %v2747 = vld [vmem:[%s2682] sm:$0xf]
        %v2748 = vld [vmem:[%s2682 + $0x4] sm:$0xf]
        %v2749 = vld [vmem:[%s2682 + $0x8] sm:$0x1]
        %v2750 = vld [vmem:[%s2682 + $0xc] sm:$0xf]
        %v2751 = vld [vmem:[%s2682 + $0x10] sm:$0xf]
        %v2752 = vld [vmem:[%s2682 + $0x14] sm:$0x1]
        %v2753 = vld [vmem:[%s2682 + $0x18] sm:$0xf]
        %v2754 = vld [vmem:[%s2682 + $0x1c] sm:$0xf]
        %v2755 = vld [vmem:[%s2682 + $0x20] sm:$0x1]
        %v2756 = vld [vmem:[%s2682 + $0x24] sm:$0xf]
        %v2757 = vld [vmem:[%s2682 + $0x28] sm:$0xf]
        %v2758 = vld [vmem:[%s2682 + $0x2c] sm:$0x1]
        %v2759 = vld [vmem:[%s2682 + $0x30] sm:$0xf]
        %v2760 = vld [vmem:[%s2682 + $0x34] sm:$0xf]
        %v2761 = vld [vmem:[%s2682 + $0x38] sm:$0x1]
        %v2762 = vld [vmem:[%s2682 + $0x3c] sm:$0xf]
        %v2763 = vld [vmem:[%s2682 + $0x40] sm:$0xf]
        %v2764 = vld [vmem:[%s2682 + $0x44] sm:$0x1]
        %v2765 = vld [vmem:[%s2682 + $0x48] sm:$0xf]
        %v2766 = vld [vmem:[%s2682 + $0x4c] sm:$0xf]
        %v2767 = vld [vmem:[%s2682 + $0x50] sm:$0x1]
        %v2768 = vld [vmem:[%s2682 + $0x54] sm:$0xf]
        %v2769 = vld [vmem:[%s2682 + $0x58] sm:$0xf]
        %v2770 = vld [vmem:[%s2682 + $0x5c] sm:$0x1]
        %v2771 = vld [vmem:[%s2682 + $0x60] sm:$0xf]
        %v2772 = vld [vmem:[%s2682 + $0x64] sm:$0xf]
        %v2773 = vld [vmem:[%s2682 + $0x68] sm:$0x1]
        %v2774 = vld [vmem:[%s2682 + $0x6c] sm:$0xf]
        %v2775 = vld [vmem:[%s2682 + $0x70] sm:$0xf]
        %v2776 = vld [vmem:[%s2682 + $0x74] sm:$0x1]
        %v2777 = vld [vmem:[%s2682 + $0x78] sm:$0xf]
        %v2778 = vld [vmem:[%s2682 + $0x7c] sm:$0xf]
        %v2779 = vld [vmem:[%s2682 + $0x80] sm:$0x1]
        %v2780 = vld [vmem:[%s2682 + $0x84] sm:$0xf]
        %v2781 = vld [vmem:[%s2682 + $0x88] sm:$0xf]
        %v2782 = vld [vmem:[%s2682 + $0x8c] sm:$0x1]
        %v2783 = vld [vmem:[%s2682 + $0x90] sm:$0xf]
        %v2784 = vld [vmem:[%s2682 + $0x94] sm:$0xf]
        %v2785 = vld [vmem:[%s2682 + $0x98] sm:$0x1]
        %v2786 = vld [vmem:[%s2682 + $0x9c] sm:$0xf]
        %v2787 = vld [vmem:[%s2682 + $0xa0] sm:$0xf]
        %v2788 = vld [vmem:[%s2682 + $0xa4] sm:$0x1]
        %v2789 = vld [vmem:[%s2682 + $0xa8] sm:$0xf]
        %v2790 = vld [vmem:[%s2682 + $0xac] sm:$0xf]
        %v2791 = vld [vmem:[%s2682 + $0xb0] sm:$0x1]
        %v2792 = vld [vmem:[%s2682 + $0xb4] sm:$0xf]
        %v2793 = vld [vmem:[%s2682 + $0xb8] sm:$0xf]
        %v2794 = vld [vmem:[%s2682 + $0xbc] sm:$0x1]
        %v2796 = vshrl.u32 %v2747, 16
        %v2798 = vrot.slane %v2796, 4
        %v2799 = vshll.u32 %v2747, 16
        %v2801 = vrot.slane %v2799, 5
        %v2802 = vor.u32 %v2798, %v2801
        %v2803 = vrot.slane %v2802, 4
        %v2805 = vshll.u32 %v2748, 16
        %v2807 = vrot.slane %v2805, 5
        %v2808 = vsel %vm1126, %v2803, %v2807
        %v2809 = vshrl.u32 %v2748, 16
        %v2811 = vrot.slane %v2809, 4
        %v2812 = vor.u32 %v2811, %v2807
        %v2813 = vrot.slane %v2812, 4
        %v2815 = vshll.u32 %v2749, 16
        %v2817 = vrot.slane %v2815, 5
        %v2818 = vsel %vm1126, %v2813, %v2817
        %v2820 = vshrl.u32 %v2750, 16
        %v2822 = vrot.slane %v2820, 4
        %v2823 = vshll.u32 %v2750, 16
        %v2825 = vrot.slane %v2823, 5
        %v2826 = vor.u32 %v2822, %v2825
        %v2827 = vrot.slane %v2826, 4
        %v2829 = vshll.u32 %v2751, 16
        %v2831 = vrot.slane %v2829, 5
        %v2832 = vsel %vm1126, %v2827, %v2831
        %v2833 = vshrl.u32 %v2751, 16
        %v2835 = vrot.slane %v2833, 4
        %v2836 = vor.u32 %v2835, %v2831
        %v2837 = vrot.slane %v2836, 4
        %v2839 = vshll.u32 %v2752, 16
        %v2841 = vrot.slane %v2839, 5
        %v2842 = vsel %vm1126, %v2837, %v2841
        %v2844 = vshrl.u32 %v2753, 16
        %v2846 = vrot.slane %v2844, 4
        %v2847 = vshll.u32 %v2753, 16
        %v2849 = vrot.slane %v2847, 5
        %v2850 = vor.u32 %v2846, %v2849
        %v2851 = vrot.slane %v2850, 4
        %v2853 = vshll.u32 %v2754, 16
        %v2855 = vrot.slane %v2853, 5
        %v2856 = vsel %vm1126, %v2851, %v2855
        %v2857 = vshrl.u32 %v2754, 16
        %v2859 = vrot.slane %v2857, 4
        %v2860 = vor.u32 %v2859, %v2855
        %v2861 = vrot.slane %v2860, 4
        %v2863 = vshll.u32 %v2755, 16
        %v2865 = vrot.slane %v2863, 5
        %v2866 = vsel %vm1126, %v2861, %v2865
        %v2868 = vshrl.u32 %v2756, 16
        %v2870 = vrot.slane %v2868, 4
        %v2871 = vshll.u32 %v2756, 16
        %v2873 = vrot.slane %v2871, 5
        %v2874 = vor.u32 %v2870, %v2873
        %v2875 = vrot.slane %v2874, 4
        %v2877 = vshll.u32 %v2757, 16
        %v2879 = vrot.slane %v2877, 5
        %v2880 = vsel %vm1126, %v2875, %v2879
        %v2881 = vshrl.u32 %v2757, 16
        %v2883 = vrot.slane %v2881, 4
        %v2884 = vor.u32 %v2883, %v2879
        %v2885 = vrot.slane %v2884, 4
        %v2887 = vshll.u32 %v2758, 16
        %v2889 = vrot.slane %v2887, 5
        %v2890 = vsel %vm1126, %v2885, %v2889
        %v2892 = vshrl.u32 %v2759, 16
        %v2894 = vrot.slane %v2892, 4
        %v2895 = vshll.u32 %v2759, 16
        %v2897 = vrot.slane %v2895, 5
        %v2898 = vor.u32 %v2894, %v2897
        %v2899 = vrot.slane %v2898, 4
        %v2901 = vshll.u32 %v2760, 16
        %v2903 = vrot.slane %v2901, 5
        %v2904 = vsel %vm1126, %v2899, %v2903
        %v2905 = vshrl.u32 %v2760, 16
        %v2907 = vrot.slane %v2905, 4
        %v2908 = vor.u32 %v2907, %v2903
        %v2909 = vrot.slane %v2908, 4
        %v2911 = vshll.u32 %v2761, 16
        %v2913 = vrot.slane %v2911, 5
        %v2914 = vsel %vm1126, %v2909, %v2913
        %v2916 = vshrl.u32 %v2762, 16
        %v2918 = vrot.slane %v2916, 4
        %v2919 = vshll.u32 %v2762, 16
        %v2921 = vrot.slane %v2919, 5
        %v2922 = vor.u32 %v2918, %v2921
        %v2923 = vrot.slane %v2922, 4
        %v2925 = vshll.u32 %v2763, 16
        %v2927 = vrot.slane %v2925, 5
        %v2928 = vsel %vm1126, %v2923, %v2927
        %v2929 = vshrl.u32 %v2763, 16
        %v2931 = vrot.slane %v2929, 4
        %v2932 = vor.u32 %v2931, %v2927
        %v2933 = vrot.slane %v2932, 4
        %v2935 = vshll.u32 %v2764, 16
        %v2937 = vrot.slane %v2935, 5
        %v2938 = vsel %vm1126, %v2933, %v2937
        %v2940 = vshrl.u32 %v2765, 16
        %v2942 = vrot.slane %v2940, 4
        %v2943 = vshll.u32 %v2765, 16
        %v2945 = vrot.slane %v2943, 5
        %v2946 = vor.u32 %v2942, %v2945
        %v2947 = vrot.slane %v2946, 4
        %v2949 = vshll.u32 %v2766, 16
        %v2951 = vrot.slane %v2949, 5
        %v2952 = vsel %vm1126, %v2947, %v2951
        %v2953 = vshrl.u32 %v2766, 16
        %v2955 = vrot.slane %v2953, 4
        %v2956 = vor.u32 %v2955, %v2951
        %v2957 = vrot.slane %v2956, 4
        %v2959 = vshll.u32 %v2767, 16
        %v2961 = vrot.slane %v2959, 5
        %v2962 = vsel %vm1126, %v2957, %v2961
        %v2964 = vshrl.u32 %v2768, 16
        %v2966 = vrot.slane %v2964, 4
        %v2967 = vshll.u32 %v2768, 16
        %v2969 = vrot.slane %v2967, 5
        %v2970 = vor.u32 %v2966, %v2969
        %v2971 = vrot.slane %v2970, 4
        %v2973 = vshll.u32 %v2769, 16
        %v2975 = vrot.slane %v2973, 5
        %v2976 = vsel %vm1126, %v2971, %v2975
        %v2977 = vshrl.u32 %v2769, 16
        %v2979 = vrot.slane %v2977, 4
        %v2980 = vor.u32 %v2979, %v2975
        %v2981 = vrot.slane %v2980, 4
        %v2983 = vshll.u32 %v2770, 16
        %v2985 = vrot.slane %v2983, 5
        %v2986 = vsel %vm1126, %v2981, %v2985
        %v2988 = vshrl.u32 %v2771, 16
        %v2990 = vrot.slane %v2988, 4
        %v2991 = vshll.u32 %v2771, 16
        %v2993 = vrot.slane %v2991, 5
        %v2994 = vor.u32 %v2990, %v2993
        %v2995 = vrot.slane %v2994, 4
        %v2997 = vshll.u32 %v2772, 16
        %v2999 = vrot.slane %v2997, 5
        %v3000 = vsel %vm1126, %v2995, %v2999
        %v3001 = vshrl.u32 %v2772, 16
        %v3003 = vrot.slane %v3001, 4
        %v3004 = vor.u32 %v3003, %v2999
        %v3005 = vrot.slane %v3004, 4
        %v3007 = vshll.u32 %v2773, 16
        %v3009 = vrot.slane %v3007, 5
        %v3010 = vsel %vm1126, %v3005, %v3009
        %v3012 = vshrl.u32 %v2774, 16
        %v3014 = vrot.slane %v3012, 4
        %v3015 = vshll.u32 %v2774, 16
        %v3017 = vrot.slane %v3015, 5
        %v3018 = vor.u32 %v3014, %v3017
        %v3019 = vrot.slane %v3018, 4
        %v3021 = vshll.u32 %v2775, 16
        %v3023 = vrot.slane %v3021, 5
        %v3024 = vsel %vm1126, %v3019, %v3023
        %v3025 = vshrl.u32 %v2775, 16
        %v3027 = vrot.slane %v3025, 4
        %v3028 = vor.u32 %v3027, %v3023
        %v3029 = vrot.slane %v3028, 4
        %v3031 = vshll.u32 %v2776, 16
        %v3033 = vrot.slane %v3031, 5
        %v3034 = vsel %vm1126, %v3029, %v3033
        %v3036 = vshrl.u32 %v2777, 16
        %v3038 = vrot.slane %v3036, 4
        %v3039 = vshll.u32 %v2777, 16
        %v3041 = vrot.slane %v3039, 5
        %v3042 = vor.u32 %v3038, %v3041
        %v3043 = vrot.slane %v3042, 4
        %v3045 = vshll.u32 %v2778, 16
        %v3047 = vrot.slane %v3045, 5
        %v3048 = vsel %vm1126, %v3043, %v3047
        %v3049 = vshrl.u32 %v2778, 16
        %v3051 = vrot.slane %v3049, 4
        %v3052 = vor.u32 %v3051, %v3047
        %v3053 = vrot.slane %v3052, 4
        %v3055 = vshll.u32 %v2779, 16
        %v3057 = vrot.slane %v3055, 5
        %v3058 = vsel %vm1126, %v3053, %v3057
        %v3060 = vshrl.u32 %v2780, 16
        %v3062 = vrot.slane %v3060, 4
        %v3063 = vshll.u32 %v2780, 16
        %v3065 = vrot.slane %v3063, 5
        %v3066 = vor.u32 %v3062, %v3065
        %v3067 = vrot.slane %v3066, 4
        %v3069 = vshll.u32 %v2781, 16
        %v3071 = vrot.slane %v3069, 5
        %v3072 = vsel %vm1126, %v3067, %v3071
        %v3073 = vshrl.u32 %v2781, 16
        %v3075 = vrot.slane %v3073, 4
        %v3076 = vor.u32 %v3075, %v3071
        %v3077 = vrot.slane %v3076, 4
        %v3079 = vshll.u32 %v2782, 16
        %v3081 = vrot.slane %v3079, 5
        %v3082 = vsel %vm1126, %v3077, %v3081
        %v3084 = vshrl.u32 %v2783, 16
        %v3086 = vrot.slane %v3084, 4
        %v3087 = vshll.u32 %v2783, 16
        %v3089 = vrot.slane %v3087, 5
        %v3090 = vor.u32 %v3086, %v3089
        %v3091 = vrot.slane %v3090, 4
        %v3093 = vshll.u32 %v2784, 16
        %v3095 = vrot.slane %v3093, 5
        %v3096 = vsel %vm1126, %v3091, %v3095
        %v3097 = vshrl.u32 %v2784, 16
        %v3099 = vrot.slane %v3097, 4
        %v3100 = vor.u32 %v3099, %v3095
        %v3101 = vrot.slane %v3100, 4
        %v3103 = vshll.u32 %v2785, 16
        %v3105 = vrot.slane %v3103, 5
        %v3106 = vsel %vm1126, %v3101, %v3105
        %v3108 = vshrl.u32 %v2786, 16
        %v3110 = vrot.slane %v3108, 4
        %v3111 = vshll.u32 %v2786, 16
        %v3113 = vrot.slane %v3111, 5
        %v3114 = vor.u32 %v3110, %v3113
        %v3115 = vrot.slane %v3114, 4
        %v3117 = vshll.u32 %v2787, 16
        %v3119 = vrot.slane %v3117, 5
        %v3120 = vsel %vm1126, %v3115, %v3119
        %v3121 = vshrl.u32 %v2787, 16
        %v3123 = vrot.slane %v3121, 4
        %v3124 = vor.u32 %v3123, %v3119
        %v3125 = vrot.slane %v3124, 4
        %v3127 = vshll.u32 %v2788, 16
        %v3129 = vrot.slane %v3127, 5
        %v3130 = vsel %vm1126, %v3125, %v3129
        %v3132 = vshrl.u32 %v2789, 16
        %v3134 = vrot.slane %v3132, 4
        %v3135 = vshll.u32 %v2789, 16
        %v3137 = vrot.slane %v3135, 5
        %v3138 = vor.u32 %v3134, %v3137
        %v3139 = vrot.slane %v3138, 4
        %v3141 = vshll.u32 %v2790, 16
        %v3143 = vrot.slane %v3141, 5
        %v3144 = vsel %vm1126, %v3139, %v3143
        %v3145 = vshrl.u32 %v2790, 16
        %v3147 = vrot.slane %v3145, 4
        %v3148 = vor.u32 %v3147, %v3143
        %v3149 = vrot.slane %v3148, 4
        %v3151 = vshll.u32 %v2791, 16
        %v3153 = vrot.slane %v3151, 5
        %v3154 = vsel %vm1126, %v3149, %v3153
        %v3156 = vshrl.u32 %v2792, 16
        %v3158 = vrot.slane %v3156, 4
        %v3159 = vshll.u32 %v2792, 16
        %v3161 = vrot.slane %v3159, 5
        %v3162 = vor.u32 %v3158, %v3161
        %v3163 = vrot.slane %v3162, 4
        %v3165 = vshll.u32 %v2793, 16
        %v3167 = vrot.slane %v3165, 5
        %v3168 = vsel %vm1126, %v3163, %v3167
        %v3169 = vshrl.u32 %v2793, 16
        %v3171 = vrot.slane %v3169, 4
        %v3172 = vor.u32 %v3171, %v3167
        %v3173 = vrot.slane %v3172, 4
        %v3175 = vshll.u32 %v2794, 16
        %v3177 = vrot.slane %v3175, 5
        %v3178 = vsel %vm1126, %v3173, %v3177
        %3211 = vst [vmem:[#allocation3 + $0x1c] sm:$0xf] %v2808
        %3212 = vst [vmem:[#allocation3 + $0x40] sm:$0xf] %v2818
        %3213 = vst [vmem:[#allocation3 + $0x64] sm:$0xf] %v2832
        %3214 = vst [vmem:[#allocation3 + $0x88] sm:$0xf] %v2842
        %3215 = vst [vmem:[#allocation3 + $0xac] sm:$0xf] %v2856
        %3216 = vst [vmem:[#allocation3 + $0xd0] sm:$0xf] %v2866
        %3217 = vst [vmem:[#allocation3 + $0xf4] sm:$0xf] %v2880
        %3218 = vst [vmem:[#allocation3 + $0x118] sm:$0xf] %v2890
        %3219 = vst [vmem:[#allocation3 + $0x13c] sm:$0xf] %v2904
        %3220 = vst [vmem:[#allocation3 + $0x160] sm:$0xf] %v2914
        %3221 = vst [vmem:[#allocation3 + $0x184] sm:$0xf] %v2928
        %3222 = vst [vmem:[#allocation3 + $0x1a8] sm:$0xf] %v2938
        %3223 = vst [vmem:[#allocation3 + $0x1cc] sm:$0xf] %v2952
        %3224 = vst [vmem:[#allocation3 + $0x1f0] sm:$0xf] %v2962
        %3225 = vst [vmem:[#allocation3 + $0x214] sm:$0xf] %v2976
        %3226 = vst [vmem:[#allocation3 + $0x238] sm:$0xf] %v2986
        %3227 = vst [vmem:[#allocation3 + $0x25c] sm:$0xf] %v3000
        %3228 = vst [vmem:[#allocation3 + $0x280] sm:$0xf] %v3010
        %3229 = vst [vmem:[#allocation3 + $0x2a4] sm:$0xf] %v3024
        %3230 = vst [vmem:[#allocation3 + $0x2c8] sm:$0xf] %v3034
        %3231 = vst [vmem:[#allocation3 + $0x2ec] sm:$0xf] %v3048
        %3232 = vst [vmem:[#allocation3 + $0x310] sm:$0xf] %v3058
        %3233 = vst [vmem:[#allocation3 + $0x334] sm:$0xf] %v3072
        %3234 = vst [vmem:[#allocation3 + $0x358] sm:$0xf] %v3082
        %3235 = vst [vmem:[#allocation3 + $0x37c] sm:$0xf] %v3096
        %3236 = vst [vmem:[#allocation3 + $0x3a0] sm:$0xf] %v3106
        %3237 = vst [vmem:[#allocation3 + $0x3c4] sm:$0xf] %v3120
        %3238 = vst [vmem:[#allocation3 + $0x3e8] sm:$0xf] %v3130
        %3239 = vst [vmem:[#allocation3 + $0x40c] sm:$0xf] %v3144
        %3240 = vst [vmem:[#allocation3 + $0x430] sm:$0xf] %v3154
        %3241 = vst [vmem:[#allocation3 + $0x454] sm:$0xf] %v3168
        %3242 = vst [vmem:[#allocation3 + $0x478] sm:$0xf] %v3178
        %v3243 = vld [vmem:[%s2682] sm:$0xe]
        %v3244 = vld [vmem:[%s2682 + $0x4] sm:$0xf]
        %v3245 = vld [vmem:[%s2682 + $0x8] sm:$0x1]
        %v3246 = vld [vmem:[%s2682 + $0xc] sm:$0xe]
        %v3247 = vld [vmem:[%s2682 + $0x10] sm:$0xf]
        %v3248 = vld [vmem:[%s2682 + $0x14] sm:$0x1]
        %v3249 = vld [vmem:[%s2682 + $0x18] sm:$0xe]
        %v3250 = vld [vmem:[%s2682 + $0x1c] sm:$0xf]
        %v3251 = vld [vmem:[%s2682 + $0x20] sm:$0x1]
        %v3252 = vld [vmem:[%s2682 + $0x24] sm:$0xe]
        %v3253 = vld [vmem:[%s2682 + $0x28] sm:$0xf]
        %v3254 = vld [vmem:[%s2682 + $0x2c] sm:$0x1]
        %v3255 = vld [vmem:[%s2682 + $0x30] sm:$0xe]
        %v3256 = vld [vmem:[%s2682 + $0x34] sm:$0xf]
        %v3257 = vld [vmem:[%s2682 + $0x38] sm:$0x1]
        %v3258 = vld [vmem:[%s2682 + $0x3c] sm:$0xe]
        %v3259 = vld [vmem:[%s2682 + $0x40] sm:$0xf]
        %v3260 = vld [vmem:[%s2682 + $0x44] sm:$0x1]
        %v3261 = vld [vmem:[%s2682 + $0x48] sm:$0xe]
        %v3262 = vld [vmem:[%s2682 + $0x4c] sm:$0xf]
        %v3263 = vld [vmem:[%s2682 + $0x50] sm:$0x1]
        %v3264 = vld [vmem:[%s2682 + $0x54] sm:$0xe]
        %v3265 = vld [vmem:[%s2682 + $0x58] sm:$0xf]
        %v3266 = vld [vmem:[%s2682 + $0x5c] sm:$0x1]
        %v3267 = vld [vmem:[%s2682 + $0x60] sm:$0xe]
        %v3268 = vld [vmem:[%s2682 + $0x64] sm:$0xf]
        %v3269 = vld [vmem:[%s2682 + $0x68] sm:$0x1]
        %v3270 = vld [vmem:[%s2682 + $0x6c] sm:$0xe]
        %v3271 = vld [vmem:[%s2682 + $0x70] sm:$0xf]
        %v3272 = vld [vmem:[%s2682 + $0x74] sm:$0x1]
        %v3273 = vld [vmem:[%s2682 + $0x78] sm:$0xe]
        %v3274 = vld [vmem:[%s2682 + $0x7c] sm:$0xf]
        %v3275 = vld [vmem:[%s2682 + $0x80] sm:$0x1]
        %v3276 = vld [vmem:[%s2682 + $0x84] sm:$0xe]
        %v3277 = vld [vmem:[%s2682 + $0x88] sm:$0xf]
        %v3278 = vld [vmem:[%s2682 + $0x8c] sm:$0x1]
        %v3279 = vld [vmem:[%s2682 + $0x90] sm:$0xe]
        %v3280 = vld [vmem:[%s2682 + $0x94] sm:$0xf]
        %v3281 = vld [vmem:[%s2682 + $0x98] sm:$0x1]
        %v3282 = vld [vmem:[%s2682 + $0x9c] sm:$0xe]
        %v3283 = vld [vmem:[%s2682 + $0xa0] sm:$0xf]
        %v3284 = vld [vmem:[%s2682 + $0xa4] sm:$0x1]
        %v3285 = vld [vmem:[%s2682 + $0xa8] sm:$0xe]
        %v3286 = vld [vmem:[%s2682 + $0xac] sm:$0xf]
        %v3287 = vld [vmem:[%s2682 + $0xb0] sm:$0x1]
        %v3288 = vld [vmem:[%s2682 + $0xb4] sm:$0xe]
        %v3289 = vld [vmem:[%s2682 + $0xb8] sm:$0xf]
        %v3290 = vld [vmem:[%s2682 + $0xbc] sm:$0x1]
        %v3339 = vrot.slane %v3243, 5
        %v3340 = vrot.slane %v3339, 4
        %v3341 = vrot.slane %v3244, 5
        %v3342 = vsel %vm1673, %v3340, %v3341
        %v3343 = vrot.slane %v3341, 4
        %v3344 = vrot.slane %v3245, 5
        %v3345 = vsel %vm1673, %v3343, %v3344
        %v3346 = vrot.slane %v3246, 5
        %v3347 = vrot.slane %v3346, 4
        %v3348 = vrot.slane %v3247, 5
        %v3349 = vsel %vm1673, %v3347, %v3348
        %v3350 = vrot.slane %v3348, 4
        %v3351 = vrot.slane %v3248, 5
        %v3352 = vsel %vm1673, %v3350, %v3351
        %v3353 = vrot.slane %v3249, 5
        %v3354 = vrot.slane %v3353, 4
        %v3355 = vrot.slane %v3250, 5
        %v3356 = vsel %vm1673, %v3354, %v3355
        %v3357 = vrot.slane %v3355, 4
        %v3358 = vrot.slane %v3251, 5
        %v3359 = vsel %vm1673, %v3357, %v3358
        %v3360 = vrot.slane %v3252, 5
        %v3361 = vrot.slane %v3360, 4
        %v3362 = vrot.slane %v3253, 5
        %v3363 = vsel %vm1673, %v3361, %v3362
        %v3364 = vrot.slane %v3362, 4
        %v3365 = vrot.slane %v3254, 5
        %v3366 = vsel %vm1673, %v3364, %v3365
        %v3367 = vrot.slane %v3255, 5
        %v3368 = vrot.slane %v3367, 4
        %v3369 = vrot.slane %v3256, 5
        %v3370 = vsel %vm1673, %v3368, %v3369
        %v3371 = vrot.slane %v3369, 4
        %v3372 = vrot.slane %v3257, 5
        %v3373 = vsel %vm1673, %v3371, %v3372
        %v3374 = vrot.slane %v3258, 5
        %v3375 = vrot.slane %v3374, 4
        %v3376 = vrot.slane %v3259, 5
        %v3377 = vsel %vm1673, %v3375, %v3376
        %v3378 = vrot.slane %v3376, 4
        %v3379 = vrot.slane %v3260, 5
        %v3380 = vsel %vm1673, %v3378, %v3379
        %v3381 = vrot.slane %v3261, 5
        %v3382 = vrot.slane %v3381, 4
        %v3383 = vrot.slane %v3262, 5
        %v3384 = vsel %vm1673, %v3382, %v3383
        %v3385 = vrot.slane %v3383, 4
        %v3386 = vrot.slane %v3263, 5
        %v3387 = vsel %vm1673, %v3385, %v3386
        %v3388 = vrot.slane %v3264, 5
        %v3389 = vrot.slane %v3388, 4
        %v3390 = vrot.slane %v3265, 5
        %v3391 = vsel %vm1673, %v3389, %v3390
        %v3392 = vrot.slane %v3390, 4
        %v3393 = vrot.slane %v3266, 5
        %v3394 = vsel %vm1673, %v3392, %v3393
        %v3395 = vrot.slane %v3267, 5
        %v3396 = vrot.slane %v3395, 4
        %v3397 = vrot.slane %v3268, 5
        %v3398 = vsel %vm1673, %v3396, %v3397
        %v3399 = vrot.slane %v3397, 4
        %v3400 = vrot.slane %v3269, 5
        %v3401 = vsel %vm1673, %v3399, %v3400
        %v3402 = vrot.slane %v3270, 5
        %v3403 = vrot.slane %v3402, 4
        %v3404 = vrot.slane %v3271, 5
        %v3405 = vsel %vm1673, %v3403, %v3404
        %v3406 = vrot.slane %v3404, 4
        %v3407 = vrot.slane %v3272, 5
        %v3408 = vsel %vm1673, %v3406, %v3407
        %v3409 = vrot.slane %v3273, 5
        %v3410 = vrot.slane %v3409, 4
        %v3411 = vrot.slane %v3274, 5
        %v3412 = vsel %vm1673, %v3410, %v3411
        %v3413 = vrot.slane %v3411, 4
        %v3414 = vrot.slane %v3275, 5
        %v3415 = vsel %vm1673, %v3413, %v3414
        %v3416 = vrot.slane %v3276, 5
        %v3417 = vrot.slane %v3416, 4
        %v3418 = vrot.slane %v3277, 5
        %v3419 = vsel %vm1673, %v3417, %v3418
        %v3420 = vrot.slane %v3418, 4
        %v3421 = vrot.slane %v3278, 5
        %v3422 = vsel %vm1673, %v3420, %v3421
        %v3423 = vrot.slane %v3279, 5
        %v3424 = vrot.slane %v3423, 4
        %v3425 = vrot.slane %v3280, 5
        %v3426 = vsel %vm1673, %v3424, %v3425
        %v3427 = vrot.slane %v3425, 4
        %v3428 = vrot.slane %v3281, 5
        %v3429 = vsel %vm1673, %v3427, %v3428
        %v3430 = vrot.slane %v3282, 5
        %v3431 = vrot.slane %v3430, 4
        %v3432 = vrot.slane %v3283, 5
        %v3433 = vsel %vm1673, %v3431, %v3432
        %v3434 = vrot.slane %v3432, 4
        %v3435 = vrot.slane %v3284, 5
        %v3436 = vsel %vm1673, %v3434, %v3435
        %v3437 = vrot.slane %v3285, 5
        %v3438 = vrot.slane %v3437, 4
        %v3439 = vrot.slane %v3286, 5
        %v3440 = vsel %vm1673, %v3438, %v3439
        %v3441 = vrot.slane %v3439, 4
        %v3442 = vrot.slane %v3287, 5
        %v3443 = vsel %vm1673, %v3441, %v3442
        %v3444 = vrot.slane %v3288, 5
        %v3445 = vrot.slane %v3444, 4
        %v3446 = vrot.slane %v3289, 5
        %v3447 = vsel %vm1673, %v3445, %v3446
        %v3448 = vrot.slane %v3446, 4
        %v3449 = vrot.slane %v3290, 5
        %v3450 = vsel %vm1673, %v3448, %v3449
        %3483 = vst [vmem:[#allocation3 + $0x20] sm:$0xf] %v3342
        %3484 = vst [vmem:[#allocation3 + $0x44] sm:$0xf] %v3345
        %3485 = vst [vmem:[#allocation3 + $0x68] sm:$0xf] %v3349
        %3486 = vst [vmem:[#allocation3 + $0x8c] sm:$0xf] %v3352
        %3487 = vst [vmem:[#allocation3 + $0xb0] sm:$0xf] %v3356
        %3488 = vst [vmem:[#allocation3 + $0xd4] sm:$0xf] %v3359
        %3489 = vst [vmem:[#allocation3 + $0xf8] sm:$0xf] %v3363
        %3490 = vst [vmem:[#allocation3 + $0x11c] sm:$0xf] %v3366
        %3491 = vst [vmem:[#allocation3 + $0x140] sm:$0xf] %v3370
        %3492 = vst [vmem:[#allocation3 + $0x164] sm:$0xf] %v3373
        %3493 = vst [vmem:[#allocation3 + $0x188] sm:$0xf] %v3377
        %3494 = vst [vmem:[#allocation3 + $0x1ac] sm:$0xf] %v3380
        %3495 = vst [vmem:[#allocation3 + $0x1d0] sm:$0xf] %v3384
        %3496 = vst [vmem:[#allocation3 + $0x1f4] sm:$0xf] %v3387
        %3497 = vst [vmem:[#allocation3 + $0x218] sm:$0xf] %v3391
        %3498 = vst [vmem:[#allocation3 + $0x23c] sm:$0xf] %v3394
        %3499 = vst [vmem:[#allocation3 + $0x260] sm:$0xf] %v3398
        %3500 = vst [vmem:[#allocation3 + $0x284] sm:$0xf] %v3401
        %3501 = vst [vmem:[#allocation3 + $0x2a8] sm:$0xf] %v3405
        %3502 = vst [vmem:[#allocation3 + $0x2cc] sm:$0xf] %v3408
        %3503 = vst [vmem:[#allocation3 + $0x2f0] sm:$0xf] %v3412
        %3504 = vst [vmem:[#allocation3 + $0x314] sm:$0xf] %v3415
        %3505 = vst [vmem:[#allocation3 + $0x338] sm:$0xf] %v3419
        %3506 = vst [vmem:[#allocation3 + $0x35c] sm:$0xf] %v3422
        %3507 = vst [vmem:[#allocation3 + $0x380] sm:$0xf] %v3426
        %3508 = vst [vmem:[#allocation3 + $0x3a4] sm:$0xf] %v3429
        %3509 = vst [vmem:[#allocation3 + $0x3c8] sm:$0xf] %v3433
        %3510 = vst [vmem:[#allocation3 + $0x3ec] sm:$0xf] %v3436
        %3511 = vst [vmem:[#allocation3 + $0x410] sm:$0xf] %v3440
        %3512 = vst [vmem:[#allocation3 + $0x434] sm:$0xf] %v3443
        %3513 = vst [vmem:[#allocation3 + $0x458] sm:$0xf] %v3447
        %3514 = vst [vmem:[#allocation3 + $0x47c] sm:$0xf] %v3450
        %v3515 = vld [vmem:[#allocation3] sm:$0xff]
        %v3516 = vld [vmem:[#allocation3 + $0x8] sm:$0xff]
        %v3517 = vld [vmem:[#allocation3 + $0x10] sm:$0xff]
        %v3518 = vld [vmem:[#allocation3 + $0x18] sm:$0xff]
        %v3519 = vld [vmem:[#allocation3 + $0x20] sm:$0xf]
        %v3520 = vld [vmem:[#allocation3 + $0x24] sm:$0xff]
        %v3521 = vld [vmem:[#allocation3 + $0x2c] sm:$0xff]
        %v3522 = vld [vmem:[#allocation3 + $0x34] sm:$0xff]
        %v3523 = vld [vmem:[#allocation3 + $0x3c] sm:$0xff]
        %v3524 = vld [vmem:[#allocation3 + $0x44] sm:$0xf]
        %v3525 = vld [vmem:[#allocation3 + $0x48] sm:$0xff]
        %v3526 = vld [vmem:[#allocation3 + $0x50] sm:$0xff]
        %v3527 = vld [vmem:[#allocation3 + $0x58] sm:$0xff]
        %v3528 = vld [vmem:[#allocation3 + $0x60] sm:$0xff]
        %v3529 = vld [vmem:[#allocation3 + $0x68] sm:$0xf]
        %v3530 = vld [vmem:[#allocation3 + $0x6c] sm:$0xff]
        %v3531 = vld [vmem:[#allocation3 + $0x74] sm:$0xff]
        %v3532 = vld [vmem:[#allocation3 + $0x7c] sm:$0xff]
        %v3533 = vld [vmem:[#allocation3 + $0x84] sm:$0xff]
        %v3534 = vld [vmem:[#allocation3 + $0x8c] sm:$0xf]
        %v3535 = vld [vmem:[#allocation3 + $0x90] sm:$0xff]
        %v3536 = vld [vmem:[#allocation3 + $0x98] sm:$0xff]
        %v3537 = vld [vmem:[#allocation3 + $0xa0] sm:$0xff]
        %v3538 = vld [vmem:[#allocation3 + $0xa8] sm:$0xff]
        %v3539 = vld [vmem:[#allocation3 + $0xb0] sm:$0xf]
        %v3540 = vld [vmem:[#allocation3 + $0xb4] sm:$0xff]
        %v3541 = vld [vmem:[#allocation3 + $0xbc] sm:$0xff]
        %v3542 = vld [vmem:[#allocation3 + $0xc4] sm:$0xff]
        %v3543 = vld [vmem:[#allocation3 + $0xcc] sm:$0xff]
        %v3544 = vld [vmem:[#allocation3 + $0xd4] sm:$0xf]
        %v3545 = vld [vmem:[#allocation3 + $0xd8] sm:$0xff]
        %v3546 = vld [vmem:[#allocation3 + $0xe0] sm:$0xff]
        %v3547 = vld [vmem:[#allocation3 + $0xe8] sm:$0xff]
        %v3548 = vld [vmem:[#allocation3 + $0xf0] sm:$0xff]
        %v3549 = vld [vmem:[#allocation3 + $0xf8] sm:$0xf]
        %v3550 = vld [vmem:[#allocation3 + $0xfc] sm:$0xff]
        %v3551 = vld [vmem:[#allocation3 + $0x104] sm:$0xff]
        %v3552 = vld [vmem:[#allocation3 + $0x10c] sm:$0xff]
        %v3553 = vld [vmem:[#allocation3 + $0x114] sm:$0xff]
        %v3554 = vld [vmem:[#allocation3 + $0x11c] sm:$0xf]
        %v3555 = vld [vmem:[#allocation3 + $0x120] sm:$0xff]
        %v3556 = vld [vmem:[#allocation3 + $0x128] sm:$0xff]
        %v3557 = vld [vmem:[#allocation3 + $0x130] sm:$0xff]
        %v3558 = vld [vmem:[#allocation3 + $0x138] sm:$0xff]
        %v3559 = vld [vmem:[#allocation3 + $0x140] sm:$0xf]
        %v3560 = vld [vmem:[#allocation3 + $0x144] sm:$0xff]
        %v3561 = vld [vmem:[#allocation3 + $0x14c] sm:$0xff]
        %v3562 = vld [vmem:[#allocation3 + $0x154] sm:$0xff]
        %v3563 = vld [vmem:[#allocation3 + $0x15c] sm:$0xff]
        %v3564 = vld [vmem:[#allocation3 + $0x164] sm:$0xf]
        %v3565 = vld [vmem:[#allocation3 + $0x168] sm:$0xff]
        %v3566 = vld [vmem:[#allocation3 + $0x170] sm:$0xff]
        %v3567 = vld [vmem:[#allocation3 + $0x178] sm:$0xff]
        %v3568 = vld [vmem:[#allocation3 + $0x180] sm:$0xff]
        %v3569 = vld [vmem:[#allocation3 + $0x188] sm:$0xf]
        %v3570 = vld [vmem:[#allocation3 + $0x18c] sm:$0xff]
        %v3571 = vld [vmem:[#allocation3 + $0x194] sm:$0xff]
        %v3572 = vld [vmem:[#allocation3 + $0x19c] sm:$0xff]
        %v3573 = vld [vmem:[#allocation3 + $0x1a4] sm:$0xff]
        %v3574 = vld [vmem:[#allocation3 + $0x1ac] sm:$0xf]
        %v3575 = vld [vmem:[#allocation3 + $0x1b0] sm:$0xff]
        %v3576 = vld [vmem:[#allocation3 + $0x1b8] sm:$0xff]
        %v3577 = vld [vmem:[#allocation3 + $0x1c0] sm:$0xff]
        %v3578 = vld [vmem:[#allocation3 + $0x1c8] sm:$0xff]
        %v3579 = vld [vmem:[#allocation3 + $0x1d0] sm:$0xf]
        %v3580 = vld [vmem:[#allocation3 + $0x1d4] sm:$0xff]
        %v3581 = vld [vmem:[#allocation3 + $0x1dc] sm:$0xff]
        %v3582 = vld [vmem:[#allocation3 + $0x1e4] sm:$0xff]
        %v3583 = vld [vmem:[#allocation3 + $0x1ec] sm:$0xff]
        %v3584 = vld [vmem:[#allocation3 + $0x1f4] sm:$0xf]
        %v3585 = vld [vmem:[#allocation3 + $0x1f8] sm:$0xff]
        %v3586 = vld [vmem:[#allocation3 + $0x200] sm:$0xff]
        %v3587 = vld [vmem:[#allocation3 + $0x208] sm:$0xff]
        %v3588 = vld [vmem:[#allocation3 + $0x210] sm:$0xff]
        %v3589 = vld [vmem:[#allocation3 + $0x218] sm:$0xf]
        %v3590 = vld [vmem:[#allocation3 + $0x21c] sm:$0xff]
        %v3591 = vld [vmem:[#allocation3 + $0x224] sm:$0xff]
        %v3592 = vld [vmem:[#allocation3 + $0x22c] sm:$0xff]
        %v3593 = vld [vmem:[#allocation3 + $0x234] sm:$0xff]
        %v3594 = vld [vmem:[#allocation3 + $0x23c] sm:$0xf]
        %v3595 = vld [vmem:[#allocation3 + $0x240] sm:$0xff]
        %v3596 = vld [vmem:[#allocation3 + $0x248] sm:$0xff]
        %v3597 = vld [vmem:[#allocation3 + $0x250] sm:$0xff]
        %v3598 = vld [vmem:[#allocation3 + $0x258] sm:$0xff]
        %v3599 = vld [vmem:[#allocation3 + $0x260] sm:$0xf]
        %v3600 = vld [vmem:[#allocation3 + $0x264] sm:$0xff]
        %v3601 = vld [vmem:[#allocation3 + $0x26c] sm:$0xff]
        %v3602 = vld [vmem:[#allocation3 + $0x274] sm:$0xff]
        %v3603 = vld [vmem:[#allocation3 + $0x27c] sm:$0xff]
        %v3604 = vld [vmem:[#allocation3 + $0x284] sm:$0xf]
        %v3605 = vld [vmem:[#allocation3 + $0x288] sm:$0xff]
        %v3606 = vld [vmem:[#allocation3 + $0x290] sm:$0xff]
        %v3607 = vld [vmem:[#allocation3 + $0x298] sm:$0xff]
        %v3608 = vld [vmem:[#allocation3 + $0x2a0] sm:$0xff]
        %v3609 = vld [vmem:[#allocation3 + $0x2a8] sm:$0xf]
        %v3610 = vld [vmem:[#allocation3 + $0x2ac] sm:$0xff]
        %v3611 = vld [vmem:[#allocation3 + $0x2b4] sm:$0xff]
        %v3612 = vld [vmem:[#allocation3 + $0x2bc] sm:$0xff]
        %v3613 = vld [vmem:[#allocation3 + $0x2c4] sm:$0xff]
        %v3614 = vld [vmem:[#allocation3 + $0x2cc] sm:$0xf]
        %v3615 = vld [vmem:[#allocation3 + $0x2d0] sm:$0xff]
        %v3616 = vld [vmem:[#allocation3 + $0x2d8] sm:$0xff]
        %v3617 = vld [vmem:[#allocation3 + $0x2e0] sm:$0xff]
        %v3618 = vld [vmem:[#allocation3 + $0x2e8] sm:$0xff]
        %v3619 = vld [vmem:[#allocation3 + $0x2f0] sm:$0xf]
        %v3620 = vld [vmem:[#allocation3 + $0x2f4] sm:$0xff]
        %v3621 = vld [vmem:[#allocation3 + $0x2fc] sm:$0xff]
        %v3622 = vld [vmem:[#allocation3 + $0x304] sm:$0xff]
        %v3623 = vld [vmem:[#allocation3 + $0x30c] sm:$0xff]
        %v3624 = vld [vmem:[#allocation3 + $0x314] sm:$0xf]
        %v3625 = vld [vmem:[#allocation3 + $0x318] sm:$0xff]
        %v3626 = vld [vmem:[#allocation3 + $0x320] sm:$0xff]
        %v3627 = vld [vmem:[#allocation3 + $0x328] sm:$0xff]
        %v3628 = vld [vmem:[#allocation3 + $0x330] sm:$0xff]
        %v3629 = vld [vmem:[#allocation3 + $0x338] sm:$0xf]
        %v3630 = vld [vmem:[#allocation3 + $0x33c] sm:$0xff]
        %v3631 = vld [vmem:[#allocation3 + $0x344] sm:$0xff]
        %v3632 = vld [vmem:[#allocation3 + $0x34c] sm:$0xff]
        %v3633 = vld [vmem:[#allocation3 + $0x354] sm:$0xff]
        %v3634 = vld [vmem:[#allocation3 + $0x35c] sm:$0xf]
        %v3635 = vld [vmem:[#allocation3 + $0x360] sm:$0xff]
        %v3636 = vld [vmem:[#allocation3 + $0x368] sm:$0xff]
        %v3637 = vld [vmem:[#allocation3 + $0x370] sm:$0xff]
        %v3638 = vld [vmem:[#allocation3 + $0x378] sm:$0xff]
        %v3639 = vld [vmem:[#allocation3 + $0x380] sm:$0xf]
        %v3640 = vld [vmem:[#allocation3 + $0x384] sm:$0xff]
        %v3641 = vld [vmem:[#allocation3 + $0x38c] sm:$0xff]
        %v3642 = vld [vmem:[#allocation3 + $0x394] sm:$0xff]
        %v3643 = vld [vmem:[#allocation3 + $0x39c] sm:$0xff]
        %v3644 = vld [vmem:[#allocation3 + $0x3a4] sm:$0xf]
        %v3645 = vld [vmem:[#allocation3 + $0x3a8] sm:$0xff]
        %v3646 = vld [vmem:[#allocation3 + $0x3b0] sm:$0xff]
        %v3647 = vld [vmem:[#allocation3 + $0x3b8] sm:$0xff]
        %v3648 = vld [vmem:[#allocation3 + $0x3c0] sm:$0xff]
        %v3649 = vld [vmem:[#allocation3 + $0x3c8] sm:$0xf]
        %v3650 = vld [vmem:[#allocation3 + $0x3cc] sm:$0xff]
        %v3651 = vld [vmem:[#allocation3 + $0x3d4] sm:$0xff]
        %v3652 = vld [vmem:[#allocation3 + $0x3dc] sm:$0xff]
        %v3653 = vld [vmem:[#allocation3 + $0x3e4] sm:$0xff]
        %v3654 = vld [vmem:[#allocation3 + $0x3ec] sm:$0xf]
        %v3655 = vld [vmem:[#allocation3 + $0x3f0] sm:$0xff]
        %v3656 = vld [vmem:[#allocation3 + $0x3f8] sm:$0xff]
        %v3657 = vld [vmem:[#allocation3 + $0x400] sm:$0xff]
        %v3658 = vld [vmem:[#allocation3 + $0x408] sm:$0xff]
        %v3659 = vld [vmem:[#allocation3 + $0x410] sm:$0xf]
        %v3660 = vld [vmem:[#allocation3 + $0x414] sm:$0xff]
        %v3661 = vld [vmem:[#allocation3 + $0x41c] sm:$0xff]
        %v3662 = vld [vmem:[#allocation3 + $0x424] sm:$0xff]
        %v3663 = vld [vmem:[#allocation3 + $0x42c] sm:$0xff]
        %v3664 = vld [vmem:[#allocation3 + $0x434] sm:$0xf]
        %v3665 = vld [vmem:[#allocation3 + $0x438] sm:$0xff]
        %v3666 = vld [vmem:[#allocation3 + $0x440] sm:$0xff]
        %v3667 = vld [vmem:[#allocation3 + $0x448] sm:$0xff]
        %v3668 = vld [vmem:[#allocation3 + $0x450] sm:$0xff]
        %v3669 = vld [vmem:[#allocation3 + $0x458] sm:$0xf]
        %v3670 = vld [vmem:[#allocation3 + $0x45c] sm:$0xff]
        %v3671 = vld [vmem:[#allocation3 + $0x464] sm:$0xff]
        %v3672 = vld [vmem:[#allocation3 + $0x46c] sm:$0xff]
        %v3673 = vld [vmem:[#allocation3 + $0x474] sm:$0xff]
        %v3674 = vld [vmem:[#allocation3 + $0x47c] sm:$0xf]
        %v3675 = vld [vmem:[#allocation7] sm:$0xf]
        %v3676 = vld [vmem:[#allocation7 + $0x4] sm:$0xf]
        %v3677 = vld [vmem:[#allocation7 + $0x8] sm:$0xf]
        %v3678 = vld [vmem:[#allocation7 + $0xc] sm:$0xf]
        %v3679 = vld [vmem:[#allocation7 + $0x10] sm:$0xf]
        %v3680 = vld [vmem:[#allocation7 + $0x14] sm:$0xf]
        %v3681 = vld [vmem:[#allocation7 + $0x18] sm:$0xf]
        %v3682 = vld [vmem:[#allocation7 + $0x1c] sm:$0xf]
        %v3683 = vld [vmem:[#allocation7 + $0x20] sm:$0xf]
        %v3684 = vld [vmem:[#allocation7 + $0x24] sm:$0xf]
        %v3685 = vld [vmem:[#allocation7 + $0x28] sm:$0xf]
        %v3686 = vld [vmem:[#allocation7 + $0x2c] sm:$0xf]
        %v3687 = vld [vmem:[#allocation7 + $0x30] sm:$0xf]
        %v3688 = vld [vmem:[#allocation7 + $0x34] sm:$0xf]
        %v3689 = vld [vmem:[#allocation7 + $0x38] sm:$0xf]
        %v3690 = vld [vmem:[#allocation7 + $0x3c] sm:$0xf]
        %v3691 = vld [vmem:[#allocation7 + $0x40] sm:$0xf]
        %v3692 = vld [vmem:[#allocation7 + $0x44] sm:$0xf]
        %v3693 = vld [vmem:[#allocation7 + $0x48] sm:$0xf]
        %v3694 = vld [vmem:[#allocation7 + $0x4c] sm:$0xf]
        %v3695 = vld [vmem:[#allocation7 + $0x50] sm:$0xf]
        %v3696 = vld [vmem:[#allocation7 + $0x54] sm:$0xf]
        %v3697 = vld [vmem:[#allocation7 + $0x58] sm:$0xf]
        %v3698 = vld [vmem:[#allocation7 + $0x5c] sm:$0xf]
        %v3699 = vld [vmem:[#allocation7 + $0x60] sm:$0xf]
        %v3700 = vld [vmem:[#allocation7 + $0x64] sm:$0xf]
        %v3701 = vld [vmem:[#allocation7 + $0x68] sm:$0xf]
        %v3702 = vld [vmem:[#allocation7 + $0x6c] sm:$0xf]
        %v3703 = vld [vmem:[#allocation7 + $0x70] sm:$0xf]
        %v3704 = vld [vmem:[#allocation7 + $0x74] sm:$0xf]
        %v3705 = vld [vmem:[#allocation7 + $0x78] sm:$0xf]
        %v3706 = vld [vmem:[#allocation7 + $0x7c] sm:$0xf]
        %v3707 = vld [vmem:[#allocation7 + $0x80] sm:$0xf]
        %v3708 = vld [vmem:[#allocation7 + $0x84] sm:$0xf]
        %v3709 = vld [vmem:[#allocation7 + $0x88] sm:$0xf]
        %v3710 = vld [vmem:[#allocation7 + $0x8c] sm:$0xf]
        %v3711 = vld [vmem:[#allocation7 + $0x90] sm:$0xf]
        %v3712 = vld [vmem:[#allocation7 + $0x94] sm:$0xf]
        %v3713 = vld [vmem:[#allocation7 + $0x98] sm:$0xf]
        %v3714 = vld [vmem:[#allocation7 + $0x9c] sm:$0xf]
        %v3715 = vld [vmem:[#allocation7 + $0xa0] sm:$0xf]
        %v3716 = vld [vmem:[#allocation7 + $0xa4] sm:$0xf]
        %v3717 = vld [vmem:[#allocation7 + $0xa8] sm:$0xf]
        %v3718 = vld [vmem:[#allocation7 + $0xac] sm:$0xf]
        %v3719 = vld [vmem:[#allocation7 + $0xb0] sm:$0xf]
        %v3720 = vld [vmem:[#allocation7 + $0xb4] sm:$0xf]
        %v3721 = vld [vmem:[#allocation7 + $0xb8] sm:$0xf]
        %v3722 = vld [vmem:[#allocation7 + $0xbc] sm:$0xf]
        %v3723 = vld [vmem:[#allocation7 + $0xc0] sm:$0xf]
        %v3724 = vld [vmem:[#allocation7 + $0xc4] sm:$0xf]
        %v3725 = vld [vmem:[#allocation7 + $0xc8] sm:$0xf]
        %v3726 = vld [vmem:[#allocation7 + $0xcc] sm:$0xf]
        %v3727 = vld [vmem:[#allocation7 + $0xd0] sm:$0xf]
        %v3728 = vld [vmem:[#allocation7 + $0xd4] sm:$0xf]
        %v3729 = vld [vmem:[#allocation7 + $0xd8] sm:$0xf]
        %v3730 = vld [vmem:[#allocation7 + $0xdc] sm:$0xf]
        %v3731 = vld [vmem:[#allocation7 + $0xe0] sm:$0xf]
        %v3732 = vld [vmem:[#allocation7 + $0xe4] sm:$0xf]
        %v3733 = vld [vmem:[#allocation7 + $0xe8] sm:$0xf]
        %v3734 = vld [vmem:[#allocation7 + $0xec] sm:$0xf]
        %v3735 = vld [vmem:[#allocation7 + $0xf0] sm:$0xf]
        %v3736 = vld [vmem:[#allocation7 + $0xf4] sm:$0xf]
        %v3737 = vld [vmem:[#allocation7 + $0xf8] sm:$0xf]
        %v3738 = vld [vmem:[#allocation7 + $0xfc] sm:$0xf]
        %v3739 = vld [vmem:[#allocation7 + $0x100] sm:$0xf]
        %v3740 = vld [vmem:[#allocation7 + $0x104] sm:$0xf]
        %v3741 = vld [vmem:[#allocation7 + $0x108] sm:$0xf]
        %v3742 = vld [vmem:[#allocation7 + $0x10c] sm:$0xf]
        %v3743 = vld [vmem:[#allocation7 + $0x110] sm:$0xf]
        %v3744 = vld [vmem:[#allocation7 + $0x114] sm:$0xf]
        %v3745 = vld [vmem:[#allocation7 + $0x118] sm:$0xf]
        %v3746 = vld [vmem:[#allocation7 + $0x11c] sm:$0xf]
        %v3747 = vld [vmem:[#allocation7 + $0x120] sm:$0xf]
        %v3748 = vld [vmem:[#allocation7 + $0x124] sm:$0xf]
        %v3749 = vld [vmem:[#allocation7 + $0x128] sm:$0xf]
        %v3750 = vld [vmem:[#allocation7 + $0x12c] sm:$0xf]
        %v3751 = vld [vmem:[#allocation7 + $0x130] sm:$0xf]
        %v3752 = vld [vmem:[#allocation7 + $0x134] sm:$0xf]
        %v3753 = vld [vmem:[#allocation7 + $0x138] sm:$0xf]
        %v3754 = vld [vmem:[#allocation7 + $0x13c] sm:$0xf]
        %v3755 = vld [vmem:[#allocation7 + $0x140] sm:$0xf]
        %v3756 = vld [vmem:[#allocation7 + $0x144] sm:$0xf]
        %v3757 = vld [vmem:[#allocation7 + $0x148] sm:$0xf]
        %v3758 = vld [vmem:[#allocation7 + $0x14c] sm:$0xf]
        %v3759 = vld [vmem:[#allocation7 + $0x150] sm:$0xf]
        %v3760 = vld [vmem:[#allocation7 + $0x154] sm:$0xf]
        %v3761 = vld [vmem:[#allocation7 + $0x158] sm:$0xf]
        %v3762 = vld [vmem:[#allocation7 + $0x15c] sm:$0xf]
        %v3763 = vld [vmem:[#allocation7 + $0x160] sm:$0xf]
        %v3764 = vld [vmem:[#allocation7 + $0x164] sm:$0xf]
        %v3765 = vld [vmem:[#allocation7 + $0x168] sm:$0xf]
        %v3766 = vld [vmem:[#allocation7 + $0x16c] sm:$0xf]
        %v3767 = vld [vmem:[#allocation7 + $0x170] sm:$0xf]
        %v3768 = vld [vmem:[#allocation7 + $0x174] sm:$0xf]
        %v3769 = vld [vmem:[#allocation7 + $0x178] sm:$0xf]
        %v3770 = vld [vmem:[#allocation7 + $0x17c] sm:$0xf]
        %v3771 = vld [vmem:[#allocation7 + $0x180] sm:$0xf]
        %v3772 = vld [vmem:[#allocation7 + $0x184] sm:$0xf]
        %v3773 = vld [vmem:[#allocation7 + $0x188] sm:$0xf]
        %v3774 = vld [vmem:[#allocation7 + $0x18c] sm:$0xf]
        %v3775 = vld [vmem:[#allocation7 + $0x190] sm:$0xf]
        %v3776 = vld [vmem:[#allocation7 + $0x194] sm:$0xf]
        %v3777 = vld [vmem:[#allocation7 + $0x198] sm:$0xf]
        %v3778 = vld [vmem:[#allocation7 + $0x19c] sm:$0xf]
        %v3779 = vld [vmem:[#allocation7 + $0x1a0] sm:$0xf]
        %v3780 = vld [vmem:[#allocation7 + $0x1a4] sm:$0xf]
        %v3781 = vld [vmem:[#allocation7 + $0x1a8] sm:$0xf]
        %v3782 = vld [vmem:[#allocation7 + $0x1ac] sm:$0xf]
        %v3783 = vld [vmem:[#allocation7 + $0x1b0] sm:$0xf]
        %v3784 = vld [vmem:[#allocation7 + $0x1b4] sm:$0xf]
        %v3785 = vld [vmem:[#allocation7 + $0x1b8] sm:$0xf]
        %v3786 = vld [vmem:[#allocation7 + $0x1bc] sm:$0xf]
        %v3787 = vld [vmem:[#allocation7 + $0x1c0] sm:$0xf]
        %v3788 = vld [vmem:[#allocation7 + $0x1c4] sm:$0xf]
        %v3789 = vld [vmem:[#allocation7 + $0x1c8] sm:$0xf]
        %v3790 = vld [vmem:[#allocation7 + $0x1cc] sm:$0xf]
        %v3791 = vld [vmem:[#allocation7 + $0x1d0] sm:$0xf]
        %v3792 = vld [vmem:[#allocation7 + $0x1d4] sm:$0xf]
        %v3793 = vld [vmem:[#allocation7 + $0x1d8] sm:$0xf]
        %v3794 = vld [vmem:[#allocation7 + $0x1dc] sm:$0xf]
        %v3795 = vld [vmem:[#allocation7 + $0x1e0] sm:$0xf]
        %v3796 = vld [vmem:[#allocation7 + $0x1e4] sm:$0xf]
        %v3797 = vld [vmem:[#allocation7 + $0x1e8] sm:$0xf]
        %v3798 = vld [vmem:[#allocation7 + $0x1ec] sm:$0xf]
        %v3799 = vld [vmem:[#allocation7 + $0x1f0] sm:$0xf]
        %v3800 = vld [vmem:[#allocation7 + $0x1f4] sm:$0xf]
        %v3801 = vld [vmem:[#allocation7 + $0x1f8] sm:$0xf]
        %v3802 = vld [vmem:[#allocation7 + $0x1fc] sm:$0xf]
        %v3803 = vld [vmem:[#allocation7 + $0x200] sm:$0xf]
        %v3804 = vld [vmem:[#allocation7 + $0x204] sm:$0xf]
        %v3805 = vld [vmem:[#allocation7 + $0x208] sm:$0xf]
        %v3806 = vld [vmem:[#allocation7 + $0x20c] sm:$0xf]
        %v3807 = vld [vmem:[#allocation7 + $0x210] sm:$0xf]
        %v3808 = vld [vmem:[#allocation7 + $0x214] sm:$0xf]
        %v3809 = vld [vmem:[#allocation7 + $0x218] sm:$0xf]
        %v3810 = vld [vmem:[#allocation7 + $0x21c] sm:$0xf]
        %v3811 = vld [vmem:[#allocation7 + $0x220] sm:$0xf]
        %v3812 = vld [vmem:[#allocation7 + $0x224] sm:$0xf]
        %v3813 = vld [vmem:[#allocation7 + $0x228] sm:$0xf]
        %v3814 = vld [vmem:[#allocation7 + $0x22c] sm:$0xf]
        %v3815 = vld [vmem:[#allocation7 + $0x230] sm:$0xf]
        %v3816 = vld [vmem:[#allocation7 + $0x234] sm:$0xf]
        %v3817 = vld [vmem:[#allocation7 + $0x238] sm:$0xf]
        %v3818 = vld [vmem:[#allocation7 + $0x23c] sm:$0xf]
        %v3979 = vunpack.c.l.b16 %v3515
        %v3980 = vunpack.c.h.b16 %v3515
        %v3981 = vunpack.c.l.b16 %v3516
        %v3982 = vunpack.c.h.b16 %v3516
        %v3983 = vunpack.c.l.b16 %v3517
        %v3984 = vunpack.c.h.b16 %v3517
        %v3985 = vunpack.c.l.b16 %v3518
        %v3986 = vunpack.c.h.b16 %v3518
        %v3987 = vunpack.c.l.b16 %v3519
        %v3988 = vunpack.c.l.b16 %v3520
        %v3989 = vunpack.c.h.b16 %v3520
        %v3990 = vunpack.c.l.b16 %v3521
        %v3991 = vunpack.c.h.b16 %v3521
        %v3992 = vunpack.c.l.b16 %v3522
        %v3993 = vunpack.c.h.b16 %v3522
        %v3994 = vunpack.c.l.b16 %v3523
        %v3995 = vunpack.c.h.b16 %v3523
        %v3996 = vunpack.c.l.b16 %v3524
        %v3997 = vunpack.c.l.b16 %v3525
        %v3998 = vunpack.c.h.b16 %v3525
        %v3999 = vunpack.c.l.b16 %v3526
        %v4000 = vunpack.c.h.b16 %v3526
        %v4001 = vunpack.c.l.b16 %v3527
        %v4002 = vunpack.c.h.b16 %v3527
        %v4003 = vunpack.c.l.b16 %v3528
        %v4004 = vunpack.c.h.b16 %v3528
        %v4005 = vunpack.c.l.b16 %v3529
        %v4006 = vunpack.c.l.b16 %v3530
        %v4007 = vunpack.c.h.b16 %v3530
        %v4008 = vunpack.c.l.b16 %v3531
        %v4009 = vunpack.c.h.b16 %v3531
        %v4010 = vunpack.c.l.b16 %v3532
        %v4011 = vunpack.c.h.b16 %v3532
        %v4012 = vunpack.c.l.b16 %v3533
        %v4013 = vunpack.c.h.b16 %v3533
        %v4014 = vunpack.c.l.b16 %v3534
        %v4015 = vunpack.c.l.b16 %v3535
        %v4016 = vunpack.c.h.b16 %v3535
        %v4017 = vunpack.c.l.b16 %v3536
        %v4018 = vunpack.c.h.b16 %v3536
        %v4019 = vunpack.c.l.b16 %v3537
        %v4020 = vunpack.c.h.b16 %v3537
        %v4021 = vunpack.c.l.b16 %v3538
        %v4022 = vunpack.c.h.b16 %v3538
        %v4023 = vunpack.c.l.b16 %v3539
        %v4024 = vunpack.c.l.b16 %v3540
        %v4025 = vunpack.c.h.b16 %v3540
        %v4026 = vunpack.c.l.b16 %v3541
        %v4027 = vunpack.c.h.b16 %v3541
        %v4028 = vunpack.c.l.b16 %v3542
        %v4029 = vunpack.c.h.b16 %v3542
        %v4030 = vunpack.c.l.b16 %v3543
        %v4031 = vunpack.c.h.b16 %v3543
        %v4032 = vunpack.c.l.b16 %v3544
        %v4033 = vunpack.c.l.b16 %v3545
        %v4034 = vunpack.c.h.b16 %v3545
        %v4035 = vunpack.c.l.b16 %v3546
        %v4036 = vunpack.c.h.b16 %v3546
        %v4037 = vunpack.c.l.b16 %v3547
        %v4038 = vunpack.c.h.b16 %v3547
        %v4039 = vunpack.c.l.b16 %v3548
        %v4040 = vunpack.c.h.b16 %v3548
        %v4041 = vunpack.c.l.b16 %v3549
        %v4042 = vunpack.c.l.b16 %v3550
        %v4043 = vunpack.c.h.b16 %v3550
        %v4044 = vunpack.c.l.b16 %v3551
        %v4045 = vunpack.c.h.b16 %v3551
        %v4046 = vunpack.c.l.b16 %v3552
        %v4047 = vunpack.c.h.b16 %v3552
        %v4048 = vunpack.c.l.b16 %v3553
        %v4049 = vunpack.c.h.b16 %v3553
        %v4050 = vunpack.c.l.b16 %v3554
        %v4051 = vunpack.c.l.b16 %v3555
        %v4052 = vunpack.c.h.b16 %v3555
        %v4053 = vunpack.c.l.b16 %v3556
        %v4054 = vunpack.c.h.b16 %v3556
        %v4055 = vunpack.c.l.b16 %v3557
        %v4056 = vunpack.c.h.b16 %v3557
        %v4057 = vunpack.c.l.b16 %v3558
        %v4058 = vunpack.c.h.b16 %v3558
        %v4059 = vunpack.c.l.b16 %v3559
        %v4060 = vunpack.c.l.b16 %v3560
        %v4061 = vunpack.c.h.b16 %v3560
        %v4062 = vunpack.c.l.b16 %v3561
        %v4063 = vunpack.c.h.b16 %v3561
        %v4064 = vunpack.c.l.b16 %v3562
        %v4065 = vunpack.c.h.b16 %v3562
        %v4066 = vunpack.c.l.b16 %v3563
        %v4067 = vunpack.c.h.b16 %v3563
        %v4068 = vunpack.c.l.b16 %v3564
        %v4069 = vunpack.c.l.b16 %v3565
        %v4070 = vunpack.c.h.b16 %v3565
        %v4071 = vunpack.c.l.b16 %v3566
        %v4072 = vunpack.c.h.b16 %v3566
        %v4073 = vunpack.c.l.b16 %v3567
        %v4074 = vunpack.c.h.b16 %v3567
        %v4075 = vunpack.c.l.b16 %v3568
        %v4076 = vunpack.c.h.b16 %v3568
        %v4077 = vunpack.c.l.b16 %v3569
        %v4078 = vunpack.c.l.b16 %v3570
        %v4079 = vunpack.c.h.b16 %v3570
        %v4080 = vunpack.c.l.b16 %v3571
        %v4081 = vunpack.c.h.b16 %v3571
        %v4082 = vunpack.c.l.b16 %v3572
        %v4083 = vunpack.c.h.b16 %v3572
        %v4084 = vunpack.c.l.b16 %v3573
        %v4085 = vunpack.c.h.b16 %v3573
        %v4086 = vunpack.c.l.b16 %v3574
        %v4087 = vunpack.c.l.b16 %v3575
        %v4088 = vunpack.c.h.b16 %v3575
        %v4089 = vunpack.c.l.b16 %v3576
        %v4090 = vunpack.c.h.b16 %v3576
        %v4091 = vunpack.c.l.b16 %v3577
        %v4092 = vunpack.c.h.b16 %v3577
        %v4093 = vunpack.c.l.b16 %v3578
        %v4094 = vunpack.c.h.b16 %v3578
        %v4095 = vunpack.c.l.b16 %v3579
        %v4096 = vunpack.c.l.b16 %v3580
        %v4097 = vunpack.c.h.b16 %v3580
        %v4098 = vunpack.c.l.b16 %v3581
        %v4099 = vunpack.c.h.b16 %v3581
        %v4100 = vunpack.c.l.b16 %v3582
        %v4101 = vunpack.c.h.b16 %v3582
        %v4102 = vunpack.c.l.b16 %v3583
        %v4103 = vunpack.c.h.b16 %v3583
        %v4104 = vunpack.c.l.b16 %v3584
        %v4105 = vunpack.c.l.b16 %v3585
        %v4106 = vunpack.c.h.b16 %v3585
        %v4107 = vunpack.c.l.b16 %v3586
        %v4108 = vunpack.c.h.b16 %v3586
        %v4109 = vunpack.c.l.b16 %v3587
        %v4110 = vunpack.c.h.b16 %v3587
        %v4111 = vunpack.c.l.b16 %v3588
        %v4112 = vunpack.c.h.b16 %v3588
        %v4113 = vunpack.c.l.b16 %v3589
        %v4114 = vunpack.c.l.b16 %v3590
        %v4115 = vunpack.c.h.b16 %v3590
        %v4116 = vunpack.c.l.b16 %v3591
        %v4117 = vunpack.c.h.b16 %v3591
        %v4118 = vunpack.c.l.b16 %v3592
        %v4119 = vunpack.c.h.b16 %v3592
        %v4120 = vunpack.c.l.b16 %v3593
        %v4121 = vunpack.c.h.b16 %v3593
        %v4122 = vunpack.c.l.b16 %v3594
        %v4123 = vunpack.c.l.b16 %v3595
        %v4124 = vunpack.c.h.b16 %v3595
        %v4125 = vunpack.c.l.b16 %v3596
        %v4126 = vunpack.c.h.b16 %v3596
        %v4127 = vunpack.c.l.b16 %v3597
        %v4128 = vunpack.c.h.b16 %v3597
        %v4129 = vunpack.c.l.b16 %v3598
        %v4130 = vunpack.c.h.b16 %v3598
        %v4131 = vunpack.c.l.b16 %v3599
        %v4132 = vunpack.c.l.b16 %v3600
        %v4133 = vunpack.c.h.b16 %v3600
        %v4134 = vunpack.c.l.b16 %v3601
        %v4135 = vunpack.c.h.b16 %v3601
        %v4136 = vunpack.c.l.b16 %v3602
        %v4137 = vunpack.c.h.b16 %v3602
        %v4138 = vunpack.c.l.b16 %v3603
        %v4139 = vunpack.c.h.b16 %v3603
        %v4140 = vunpack.c.l.b16 %v3604
        %v4141 = vunpack.c.l.b16 %v3605
        %v4142 = vunpack.c.h.b16 %v3605
        %v4143 = vunpack.c.l.b16 %v3606
        %v4144 = vunpack.c.h.b16 %v3606
        %v4145 = vunpack.c.l.b16 %v3607
        %v4146 = vunpack.c.h.b16 %v3607
        %v4147 = vunpack.c.l.b16 %v3608
        %v4148 = vunpack.c.h.b16 %v3608
        %v4149 = vunpack.c.l.b16 %v3609
        %v4150 = vunpack.c.l.b16 %v3610
        %v4151 = vunpack.c.h.b16 %v3610
        %v4152 = vunpack.c.l.b16 %v3611
        %v4153 = vunpack.c.h.b16 %v3611
        %v4154 = vunpack.c.l.b16 %v3612
        %v4155 = vunpack.c.h.b16 %v3612
        %v4156 = vunpack.c.l.b16 %v3613
        %v4157 = vunpack.c.h.b16 %v3613
        %v4158 = vunpack.c.l.b16 %v3614
        %v4159 = vunpack.c.l.b16 %v3615
        %v4160 = vunpack.c.h.b16 %v3615
        %v4161 = vunpack.c.l.b16 %v3616
        %v4162 = vunpack.c.h.b16 %v3616
        %v4163 = vunpack.c.l.b16 %v3617
        %v4164 = vunpack.c.h.b16 %v3617
        %v4165 = vunpack.c.l.b16 %v3618
        %v4166 = vunpack.c.h.b16 %v3618
        %v4167 = vunpack.c.l.b16 %v3619
        %v4168 = vunpack.c.l.b16 %v3620
        %v4169 = vunpack.c.h.b16 %v3620
        %v4170 = vunpack.c.l.b16 %v3621
        %v4171 = vunpack.c.h.b16 %v3621
        %v4172 = vunpack.c.l.b16 %v3622
        %v4173 = vunpack.c.h.b16 %v3622
        %v4174 = vunpack.c.l.b16 %v3623
        %v4175 = vunpack.c.h.b16 %v3623
        %v4176 = vunpack.c.l.b16 %v3624
        %v4177 = vunpack.c.l.b16 %v3625
        %v4178 = vunpack.c.h.b16 %v3625
        %v4179 = vunpack.c.l.b16 %v3626
        %v4180 = vunpack.c.h.b16 %v3626
        %v4181 = vunpack.c.l.b16 %v3627
        %v4182 = vunpack.c.h.b16 %v3627
        %v4183 = vunpack.c.l.b16 %v3628
        %v4184 = vunpack.c.h.b16 %v3628
        %v4185 = vunpack.c.l.b16 %v3629
        %v4186 = vunpack.c.l.b16 %v3630
        %v4187 = vunpack.c.h.b16 %v3630
        %v4188 = vunpack.c.l.b16 %v3631
        %v4189 = vunpack.c.h.b16 %v3631
        %v4190 = vunpack.c.l.b16 %v3632
        %v4191 = vunpack.c.h.b16 %v3632
        %v4192 = vunpack.c.l.b16 %v3633
        %v4193 = vunpack.c.h.b16 %v3633
        %v4194 = vunpack.c.l.b16 %v3634
        %v4195 = vunpack.c.l.b16 %v3635
        %v4196 = vunpack.c.h.b16 %v3635
        %v4197 = vunpack.c.l.b16 %v3636
        %v4198 = vunpack.c.h.b16 %v3636
        %v4199 = vunpack.c.l.b16 %v3637
        %v4200 = vunpack.c.h.b16 %v3637
        %v4201 = vunpack.c.l.b16 %v3638
        %v4202 = vunpack.c.h.b16 %v3638
        %v4203 = vunpack.c.l.b16 %v3639
        %v4204 = vunpack.c.l.b16 %v3640
        %v4205 = vunpack.c.h.b16 %v3640
        %v4206 = vunpack.c.l.b16 %v3641
        %v4207 = vunpack.c.h.b16 %v3641
        %v4208 = vunpack.c.l.b16 %v3642
        %v4209 = vunpack.c.h.b16 %v3642
        %v4210 = vunpack.c.l.b16 %v3643
        %v4211 = vunpack.c.h.b16 %v3643
        %v4212 = vunpack.c.l.b16 %v3644
        %v4213 = vunpack.c.l.b16 %v3645
        %v4214 = vunpack.c.h.b16 %v3645
        %v4215 = vunpack.c.l.b16 %v3646
        %v4216 = vunpack.c.h.b16 %v3646
        %v4217 = vunpack.c.l.b16 %v3647
        %v4218 = vunpack.c.h.b16 %v3647
        %v4219 = vunpack.c.l.b16 %v3648
        %v4220 = vunpack.c.h.b16 %v3648
        %v4221 = vunpack.c.l.b16 %v3649
        %v4222 = vunpack.c.l.b16 %v3650
        %v4223 = vunpack.c.h.b16 %v3650
        %v4224 = vunpack.c.l.b16 %v3651
        %v4225 = vunpack.c.h.b16 %v3651
        %v4226 = vunpack.c.l.b16 %v3652
        %v4227 = vunpack.c.h.b16 %v3652
        %v4228 = vunpack.c.l.b16 %v3653
        %v4229 = vunpack.c.h.b16 %v3653
        %v4230 = vunpack.c.l.b16 %v3654
        %v4231 = vunpack.c.l.b16 %v3655
        %v4232 = vunpack.c.h.b16 %v3655
        %v4233 = vunpack.c.l.b16 %v3656
        %v4234 = vunpack.c.h.b16 %v3656
        %v4235 = vunpack.c.l.b16 %v3657
        %v4236 = vunpack.c.h.b16 %v3657
        %v4237 = vunpack.c.l.b16 %v3658
        %v4238 = vunpack.c.h.b16 %v3658
        %v4239 = vunpack.c.l.b16 %v3659
        %v4240 = vunpack.c.l.b16 %v3660
        %v4241 = vunpack.c.h.b16 %v3660
        %v4242 = vunpack.c.l.b16 %v3661
        %v4243 = vunpack.c.h.b16 %v3661
        %v4244 = vunpack.c.l.b16 %v3662
        %v4245 = vunpack.c.h.b16 %v3662
        %v4246 = vunpack.c.l.b16 %v3663
        %v4247 = vunpack.c.h.b16 %v3663
        %v4248 = vunpack.c.l.b16 %v3664
        %v4249 = vunpack.c.l.b16 %v3665
        %v4250 = vunpack.c.h.b16 %v3665
        %v4251 = vunpack.c.l.b16 %v3666
        %v4252 = vunpack.c.h.b16 %v3666
        %v4253 = vunpack.c.l.b16 %v3667
        %v4254 = vunpack.c.h.b16 %v3667
        %v4255 = vunpack.c.l.b16 %v3668
        %v4256 = vunpack.c.h.b16 %v3668
        %v4257 = vunpack.c.l.b16 %v3669
        %v4258 = vunpack.c.l.b16 %v3670
        %v4259 = vunpack.c.h.b16 %v3670
        %v4260 = vunpack.c.l.b16 %v3671
        %v4261 = vunpack.c.h.b16 %v3671
        %v4262 = vunpack.c.l.b16 %v3672
        %v4263 = vunpack.c.h.b16 %v3672
        %v4264 = vunpack.c.l.b16 %v3673
        %v4265 = vunpack.c.h.b16 %v3673
        %v4266 = vunpack.c.l.b16 %v3674
        %v4267 = vpack.c.b16 %v3988, %v3979
        %v4268 = vpack.c.b16 %v3989, %v3980
        %v4269 = vpack.c.b16 %v3990, %v3981
        %v4270 = vpack.c.b16 %v3991, %v3982
        %v4271 = vpack.c.b16 %v3992, %v3983
        %v4272 = vpack.c.b16 %v3993, %v3984
        %v4273 = vpack.c.b16 %v3994, %v3985
        %v4274 = vpack.c.b16 %v3995, %v3986
        %v4275 = vpack.c.b16 %v3996, %v3987
        %v4276 = vpack.c.b16 %v4006, %v3997
        %v4277 = vpack.c.b16 %v4007, %v3998
        %v4278 = vpack.c.b16 %v4008, %v3999
        %v4279 = vpack.c.b16 %v4009, %v4000
        %v4280 = vpack.c.b16 %v4010, %v4001
        %v4281 = vpack.c.b16 %v4011, %v4002
        %v4282 = vpack.c.b16 %v4012, %v4003
        %v4283 = vpack.c.b16 %v4013, %v4004
        %v4284 = vpack.c.b16 %v4014, %v4005
        %v4285 = vpack.c.b16 %v4024, %v4015
        %v4286 = vpack.c.b16 %v4025, %v4016
        %v4287 = vpack.c.b16 %v4026, %v4017
        %v4288 = vpack.c.b16 %v4027, %v4018
        %v4289 = vpack.c.b16 %v4028, %v4019
        %v4290 = vpack.c.b16 %v4029, %v4020
        %v4291 = vpack.c.b16 %v4030, %v4021
        %v4292 = vpack.c.b16 %v4031, %v4022
        %v4293 = vpack.c.b16 %v4032, %v4023
        %v4294 = vpack.c.b16 %v4042, %v4033
        %v4295 = vpack.c.b16 %v4043, %v4034
        %v4296 = vpack.c.b16 %v4044, %v4035
        %v4297 = vpack.c.b16 %v4045, %v4036
        %v4298 = vpack.c.b16 %v4046, %v4037
        %v4299 = vpack.c.b16 %v4047, %v4038
        %v4300 = vpack.c.b16 %v4048, %v4039
        %v4301 = vpack.c.b16 %v4049, %v4040
        %v4302 = vpack.c.b16 %v4050, %v4041
        %v4303 = vpack.c.b16 %v4060, %v4051
        %v4304 = vpack.c.b16 %v4061, %v4052
        %v4305 = vpack.c.b16 %v4062, %v4053
        %v4306 = vpack.c.b16 %v4063, %v4054
        %v4307 = vpack.c.b16 %v4064, %v4055
        %v4308 = vpack.c.b16 %v4065, %v4056
        %v4309 = vpack.c.b16 %v4066, %v4057
        %v4310 = vpack.c.b16 %v4067, %v4058
        %v4311 = vpack.c.b16 %v4068, %v4059
        %v4312 = vpack.c.b16 %v4078, %v4069
        %v4313 = vpack.c.b16 %v4079, %v4070
        %v4314 = vpack.c.b16 %v4080, %v4071
        %v4315 = vpack.c.b16 %v4081, %v4072
        %v4316 = vpack.c.b16 %v4082, %v4073
        %v4317 = vpack.c.b16 %v4083, %v4074
        %v4318 = vpack.c.b16 %v4084, %v4075
        %v4319 = vpack.c.b16 %v4085, %v4076
        %v4320 = vpack.c.b16 %v4086, %v4077
        %v4321 = vpack.c.b16 %v4096, %v4087
        %v4322 = vpack.c.b16 %v4097, %v4088
        %v4323 = vpack.c.b16 %v4098, %v4089
        %v4324 = vpack.c.b16 %v4099, %v4090
        %v4325 = vpack.c.b16 %v4100, %v4091
        %v4326 = vpack.c.b16 %v4101, %v4092
        %v4327 = vpack.c.b16 %v4102, %v4093
        %v4328 = vpack.c.b16 %v4103, %v4094
        %v4329 = vpack.c.b16 %v4104, %v4095
        %v4330 = vpack.c.b16 %v4114, %v4105
        %v4331 = vpack.c.b16 %v4115, %v4106
        %v4332 = vpack.c.b16 %v4116, %v4107
        %v4333 = vpack.c.b16 %v4117, %v4108
        %v4334 = vpack.c.b16 %v4118, %v4109
        %v4335 = vpack.c.b16 %v4119, %v4110
        %v4336 = vpack.c.b16 %v4120, %v4111
        %v4337 = vpack.c.b16 %v4121, %v4112
        %v4338 = vpack.c.b16 %v4122, %v4113
        %v4339 = vpack.c.b16 %v4132, %v4123
        %v4340 = vpack.c.b16 %v4133, %v4124
        %v4341 = vpack.c.b16 %v4134, %v4125
        %v4342 = vpack.c.b16 %v4135, %v4126
        %v4343 = vpack.c.b16 %v4136, %v4127
        %v4344 = vpack.c.b16 %v4137, %v4128
        %v4345 = vpack.c.b16 %v4138, %v4129
        %v4346 = vpack.c.b16 %v4139, %v4130
        %v4347 = vpack.c.b16 %v4140, %v4131
        %v4348 = vpack.c.b16 %v4150, %v4141
        %v4349 = vpack.c.b16 %v4151, %v4142
        %v4350 = vpack.c.b16 %v4152, %v4143
        %v4351 = vpack.c.b16 %v4153, %v4144
        %v4352 = vpack.c.b16 %v4154, %v4145
        %v4353 = vpack.c.b16 %v4155, %v4146
        %v4354 = vpack.c.b16 %v4156, %v4147
        %v4355 = vpack.c.b16 %v4157, %v4148
        %v4356 = vpack.c.b16 %v4158, %v4149
        %v4357 = vpack.c.b16 %v4168, %v4159
        %v4358 = vpack.c.b16 %v4169, %v4160
        %v4359 = vpack.c.b16 %v4170, %v4161
        %v4360 = vpack.c.b16 %v4171, %v4162
        %v4361 = vpack.c.b16 %v4172, %v4163
        %v4362 = vpack.c.b16 %v4173, %v4164
        %v4363 = vpack.c.b16 %v4174, %v4165
        %v4364 = vpack.c.b16 %v4175, %v4166
        %v4365 = vpack.c.b16 %v4176, %v4167
        %v4366 = vpack.c.b16 %v4186, %v4177
        %v4367 = vpack.c.b16 %v4187, %v4178
        %v4368 = vpack.c.b16 %v4188, %v4179
        %v4369 = vpack.c.b16 %v4189, %v4180
        %v4370 = vpack.c.b16 %v4190, %v4181
        %v4371 = vpack.c.b16 %v4191, %v4182
        %v4372 = vpack.c.b16 %v4192, %v4183
        %v4373 = vpack.c.b16 %v4193, %v4184
        %v4374 = vpack.c.b16 %v4194, %v4185
        %v4375 = vpack.c.b16 %v4204, %v4195
        %v4376 = vpack.c.b16 %v4205, %v4196
        %v4377 = vpack.c.b16 %v4206, %v4197
        %v4378 = vpack.c.b16 %v4207, %v4198
        %v4379 = vpack.c.b16 %v4208, %v4199
        %v4380 = vpack.c.b16 %v4209, %v4200
        %v4381 = vpack.c.b16 %v4210, %v4201
        %v4382 = vpack.c.b16 %v4211, %v4202
        %v4383 = vpack.c.b16 %v4212, %v4203
        %v4384 = vpack.c.b16 %v4222, %v4213
        %v4385 = vpack.c.b16 %v4223, %v4214
        %v4386 = vpack.c.b16 %v4224, %v4215
        %v4387 = vpack.c.b16 %v4225, %v4216
        %v4388 = vpack.c.b16 %v4226, %v4217
        %v4389 = vpack.c.b16 %v4227, %v4218
        %v4390 = vpack.c.b16 %v4228, %v4219
        %v4391 = vpack.c.b16 %v4229, %v4220
        %v4392 = vpack.c.b16 %v4230, %v4221
        %v4393 = vpack.c.b16 %v4240, %v4231
        %v4394 = vpack.c.b16 %v4241, %v4232
        %v4395 = vpack.c.b16 %v4242, %v4233
        %v4396 = vpack.c.b16 %v4243, %v4234
        %v4397 = vpack.c.b16 %v4244, %v4235
        %v4398 = vpack.c.b16 %v4245, %v4236
        %v4399 = vpack.c.b16 %v4246, %v4237
        %v4400 = vpack.c.b16 %v4247, %v4238
        %v4401 = vpack.c.b16 %v4248, %v4239
        %v4402 = vpack.c.b16 %v4258, %v4249
        %v4403 = vpack.c.b16 %v4259, %v4250
        %v4404 = vpack.c.b16 %v4260, %v4251
        %v4405 = vpack.c.b16 %v4261, %v4252
        %v4406 = vpack.c.b16 %v4262, %v4253
        %v4407 = vpack.c.b16 %v4263, %v4254
        %v4408 = vpack.c.b16 %v4264, %v4255
        %v4409 = vpack.c.b16 %v4265, %v4256
        %v4410 = vpack.c.b16 %v4266, %v4257
        %v4699 = vunpack.c.l.b16 %v3675
        %v4700 = vunpack.c.l.b16 %v3676
        %v4701 = vunpack.c.l.b16 %v3677
        %v4702 = vunpack.c.l.b16 %v3678
        %v4703 = vunpack.c.l.b16 %v3679
        %v4704 = vunpack.c.l.b16 %v3680
        %v4705 = vunpack.c.l.b16 %v3681
        %v4706 = vunpack.c.l.b16 %v3682
        %v4707 = vunpack.c.l.b16 %v3683
        %v4708 = vunpack.c.l.b16 %v3684
        %v4709 = vunpack.c.l.b16 %v3685
        %v4710 = vunpack.c.l.b16 %v3686
        %v4711 = vunpack.c.l.b16 %v3687
        %v4712 = vunpack.c.l.b16 %v3688
        %v4713 = vunpack.c.l.b16 %v3689
        %v4714 = vunpack.c.l.b16 %v3690
        %v4715 = vunpack.c.l.b16 %v3691
        %v4716 = vunpack.c.l.b16 %v3692
        %v4717 = vunpack.c.l.b16 %v3693
        %v4718 = vunpack.c.l.b16 %v3694
        %v4719 = vunpack.c.l.b16 %v3695
        %v4720 = vunpack.c.l.b16 %v3696
        %v4721 = vunpack.c.l.b16 %v3697
        %v4722 = vunpack.c.l.b16 %v3698
        %v4723 = vunpack.c.l.b16 %v3699
        %v4724 = vunpack.c.l.b16 %v3700
        %v4725 = vunpack.c.l.b16 %v3701
        %v4726 = vunpack.c.l.b16 %v3702
        %v4727 = vunpack.c.l.b16 %v3703
        %v4728 = vunpack.c.l.b16 %v3704
        %v4729 = vunpack.c.l.b16 %v3705
        %v4730 = vunpack.c.l.b16 %v3706
        %v4731 = vunpack.c.l.b16 %v3707
        %v4732 = vunpack.c.l.b16 %v3708
        %v4733 = vunpack.c.l.b16 %v3709
        %v4734 = vunpack.c.l.b16 %v3710
        %v4735 = vunpack.c.l.b16 %v3711
        %v4736 = vunpack.c.l.b16 %v3712
        %v4737 = vunpack.c.l.b16 %v3713
        %v4738 = vunpack.c.l.b16 %v3714
        %v4739 = vunpack.c.l.b16 %v3715
        %v4740 = vunpack.c.l.b16 %v3716
        %v4741 = vunpack.c.l.b16 %v3717
        %v4742 = vunpack.c.l.b16 %v3718
        %v4743 = vunpack.c.l.b16 %v3719
        %v4744 = vunpack.c.l.b16 %v3720
        %v4745 = vunpack.c.l.b16 %v3721
        %v4746 = vunpack.c.l.b16 %v3722
        %v4747 = vunpack.c.l.b16 %v3723
        %v4748 = vunpack.c.l.b16 %v3724
        %v4749 = vunpack.c.l.b16 %v3725
        %v4750 = vunpack.c.l.b16 %v3726
        %v4751 = vunpack.c.l.b16 %v3727
        %v4752 = vunpack.c.l.b16 %v3728
        %v4753 = vunpack.c.l.b16 %v3729
        %v4754 = vunpack.c.l.b16 %v3730
        %v4755 = vunpack.c.l.b16 %v3731
        %v4756 = vunpack.c.l.b16 %v3732
        %v4757 = vunpack.c.l.b16 %v3733
        %v4758 = vunpack.c.l.b16 %v3734
        %v4759 = vunpack.c.l.b16 %v3735
        %v4760 = vunpack.c.l.b16 %v3736
        %v4761 = vunpack.c.l.b16 %v3737
        %v4762 = vunpack.c.l.b16 %v3738
        %v4763 = vunpack.c.l.b16 %v3739
        %v4764 = vunpack.c.l.b16 %v3740
        %v4765 = vunpack.c.l.b16 %v3741
        %v4766 = vunpack.c.l.b16 %v3742
        %v4767 = vunpack.c.l.b16 %v3743
        %v4768 = vunpack.c.l.b16 %v3744
        %v4769 = vunpack.c.l.b16 %v3745
        %v4770 = vunpack.c.l.b16 %v3746
        %v4771 = vunpack.c.l.b16 %v3747
        %v4772 = vunpack.c.l.b16 %v3748
        %v4773 = vunpack.c.l.b16 %v3749
        %v4774 = vunpack.c.l.b16 %v3750
        %v4775 = vunpack.c.l.b16 %v3751
        %v4776 = vunpack.c.l.b16 %v3752
        %v4777 = vunpack.c.l.b16 %v3753
        %v4778 = vunpack.c.l.b16 %v3754
        %v4779 = vunpack.c.l.b16 %v3755
        %v4780 = vunpack.c.l.b16 %v3756
        %v4781 = vunpack.c.l.b16 %v3757
        %v4782 = vunpack.c.l.b16 %v3758
        %v4783 = vunpack.c.l.b16 %v3759
        %v4784 = vunpack.c.l.b16 %v3760
        %v4785 = vunpack.c.l.b16 %v3761
        %v4786 = vunpack.c.l.b16 %v3762
        %v4787 = vunpack.c.l.b16 %v3763
        %v4788 = vunpack.c.l.b16 %v3764
        %v4789 = vunpack.c.l.b16 %v3765
        %v4790 = vunpack.c.l.b16 %v3766
        %v4791 = vunpack.c.l.b16 %v3767
        %v4792 = vunpack.c.l.b16 %v3768
        %v4793 = vunpack.c.l.b16 %v3769
        %v4794 = vunpack.c.l.b16 %v3770
        %v4795 = vunpack.c.l.b16 %v3771
        %v4796 = vunpack.c.l.b16 %v3772
        %v4797 = vunpack.c.l.b16 %v3773
        %v4798 = vunpack.c.l.b16 %v3774
        %v4799 = vunpack.c.l.b16 %v3775
        %v4800 = vunpack.c.l.b16 %v3776
        %v4801 = vunpack.c.l.b16 %v3777
        %v4802 = vunpack.c.l.b16 %v3778
        %v4803 = vunpack.c.l.b16 %v3779
        %v4804 = vunpack.c.l.b16 %v3780
        %v4805 = vunpack.c.l.b16 %v3781
        %v4806 = vunpack.c.l.b16 %v3782
        %v4807 = vunpack.c.l.b16 %v3783
        %v4808 = vunpack.c.l.b16 %v3784
        %v4809 = vunpack.c.l.b16 %v3785
        %v4810 = vunpack.c.l.b16 %v3786
        %v4811 = vunpack.c.l.b16 %v3787
        %v4812 = vunpack.c.l.b16 %v3788
        %v4813 = vunpack.c.l.b16 %v3789
        %v4814 = vunpack.c.l.b16 %v3790
        %v4815 = vunpack.c.l.b16 %v3791
        %v4816 = vunpack.c.l.b16 %v3792
        %v4817 = vunpack.c.l.b16 %v3793
        %v4818 = vunpack.c.l.b16 %v3794
        %v4819 = vunpack.c.l.b16 %v3795
        %v4820 = vunpack.c.l.b16 %v3796
        %v4821 = vunpack.c.l.b16 %v3797
        %v4822 = vunpack.c.l.b16 %v3798
        %v4823 = vunpack.c.l.b16 %v3799
        %v4824 = vunpack.c.l.b16 %v3800
        %v4825 = vunpack.c.l.b16 %v3801
        %v4826 = vunpack.c.l.b16 %v3802
        %v4827 = vunpack.c.l.b16 %v3803
        %v4828 = vunpack.c.l.b16 %v3804
        %v4829 = vunpack.c.l.b16 %v3805
        %v4830 = vunpack.c.l.b16 %v3806
        %v4831 = vunpack.c.l.b16 %v3807
        %v4832 = vunpack.c.l.b16 %v3808
        %v4833 = vunpack.c.l.b16 %v3809
        %v4834 = vunpack.c.l.b16 %v3810
        %v4835 = vunpack.c.l.b16 %v3811
        %v4836 = vunpack.c.l.b16 %v3812
        %v4837 = vunpack.c.l.b16 %v3813
        %v4838 = vunpack.c.l.b16 %v3814
        %v4839 = vunpack.c.l.b16 %v3815
        %v4840 = vunpack.c.l.b16 %v3816
        %v4841 = vunpack.c.l.b16 %v3817
        %v4842 = vunpack.c.l.b16 %v3818
        %v4843 = vpack.c.b16 %v4700, %v4699
        %v4844 = vpack.c.b16 %v4702, %v4701
        %v4845 = vpack.c.b16 %v4704, %v4703
        %v4846 = vpack.c.b16 %v4706, %v4705
        %v4847 = vpack.c.b16 %v4708, %v4707
        %v4848 = vpack.c.b16 %v4710, %v4709
        %v4849 = vpack.c.b16 %v4712, %v4711
        %v4850 = vpack.c.b16 %v4714, %v4713
        %v4851 = vpack.c.b16 %v4716, %v4715
        %v4852 = vpack.c.b16 %v4718, %v4717
        %v4853 = vpack.c.b16 %v4720, %v4719
        %v4854 = vpack.c.b16 %v4722, %v4721
        %v4855 = vpack.c.b16 %v4724, %v4723
        %v4856 = vpack.c.b16 %v4726, %v4725
        %v4857 = vpack.c.b16 %v4728, %v4727
        %v4858 = vpack.c.b16 %v4730, %v4729
        %v4859 = vpack.c.b16 %v4732, %v4731
        %v4860 = vpack.c.b16 %v4734, %v4733
        %v4861 = vpack.c.b16 %v4736, %v4735
        %v4862 = vpack.c.b16 %v4738, %v4737
        %v4863 = vpack.c.b16 %v4740, %v4739
        %v4864 = vpack.c.b16 %v4742, %v4741
        %v4865 = vpack.c.b16 %v4744, %v4743
        %v4866 = vpack.c.b16 %v4746, %v4745
        %v4867 = vpack.c.b16 %v4748, %v4747
        %v4868 = vpack.c.b16 %v4750, %v4749
        %v4869 = vpack.c.b16 %v4752, %v4751
        %v4870 = vpack.c.b16 %v4754, %v4753
        %v4871 = vpack.c.b16 %v4756, %v4755
        %v4872 = vpack.c.b16 %v4758, %v4757
        %v4873 = vpack.c.b16 %v4760, %v4759
        %v4874 = vpack.c.b16 %v4762, %v4761
        %v4875 = vpack.c.b16 %v4764, %v4763
        %v4876 = vpack.c.b16 %v4766, %v4765
        %v4877 = vpack.c.b16 %v4768, %v4767
        %v4878 = vpack.c.b16 %v4770, %v4769
        %v4879 = vpack.c.b16 %v4772, %v4771
        %v4880 = vpack.c.b16 %v4774, %v4773
        %v4881 = vpack.c.b16 %v4776, %v4775
        %v4882 = vpack.c.b16 %v4778, %v4777
        %v4883 = vpack.c.b16 %v4780, %v4779
        %v4884 = vpack.c.b16 %v4782, %v4781
        %v4885 = vpack.c.b16 %v4784, %v4783
        %v4886 = vpack.c.b16 %v4786, %v4785
        %v4887 = vpack.c.b16 %v4788, %v4787
        %v4888 = vpack.c.b16 %v4790, %v4789
        %v4889 = vpack.c.b16 %v4792, %v4791
        %v4890 = vpack.c.b16 %v4794, %v4793
        %v4891 = vpack.c.b16 %v4796, %v4795
        %v4892 = vpack.c.b16 %v4798, %v4797
        %v4893 = vpack.c.b16 %v4800, %v4799
        %v4894 = vpack.c.b16 %v4802, %v4801
        %v4895 = vpack.c.b16 %v4804, %v4803
        %v4896 = vpack.c.b16 %v4806, %v4805
        %v4897 = vpack.c.b16 %v4808, %v4807
        %v4898 = vpack.c.b16 %v4810, %v4809
        %v4899 = vpack.c.b16 %v4812, %v4811
        %v4900 = vpack.c.b16 %v4814, %v4813
        %v4901 = vpack.c.b16 %v4816, %v4815
        %v4902 = vpack.c.b16 %v4818, %v4817
        %v4903 = vpack.c.b16 %v4820, %v4819
        %v4904 = vpack.c.b16 %v4822, %v4821
        %v4905 = vpack.c.b16 %v4824, %v4823
        %v4906 = vpack.c.b16 %v4826, %v4825
        %v4907 = vpack.c.b16 %v4828, %v4827
        %v4908 = vpack.c.b16 %v4830, %v4829
        %v4909 = vpack.c.b16 %v4832, %v4831
        %v4910 = vpack.c.b16 %v4834, %v4833
        %v4911 = vpack.c.b16 %v4836, %v4835
        %v4912 = vpack.c.b16 %v4838, %v4837
        %v4913 = vpack.c.b16 %v4840, %v4839
        %v4914 = vpack.c.b16 %v4842, %v4841
        %4987 = vmatprep.subr.bf16.mxu0 0
        %4988 = vmatpush1.bf16.msra.mxu0 %v4850
        %4989 = vmatprep.subr.bf16.mxu0 0
        %4990 = vmatpush1.bf16.msra.mxu0 %v4849
        %4991 = vmatprep.subr.bf16.mxu0 0
        %4992 = vmatpush1.bf16.msra.mxu0 %v4848
        %4993 = vmatprep.subr.bf16.mxu0 0
        %4994 = vmatpush1.bf16.msra.mxu0 %v4847
        %4995 = vmatprep.subr.bf16.mxu0 0
        %4996 = vmatpush1.bf16.msra.mxu0 %v4846
        %4997 = vmatprep.subr.bf16.mxu0 0
        %4998 = vmatpush1.bf16.msra.mxu0 %v4845
        %4999 = vmatprep.subr.bf16.mxu0 0
        %5000 = vmatpush1.bf16.msra.mxu0 %v4844
        %5001 = vmatprep.subr.bf16.mxu0 0
        %5002 = vmatpush1.bf16.msra.mxu0 %v4843
        %5003 = vmatprep.subr.bf16.mxu0 0
        %5004 = vmatpush2.bf16.msra.mxu0 %v4858
        %5005 = vmatprep.subr.bf16.mxu0 0
        %5006 = vmatpush2.bf16.msra.mxu0 %v4857
        %5007 = vmatprep.subr.bf16.mxu0 0
        %5008 = vmatpush2.bf16.msra.mxu0 %v4856
        %5009 = vmatprep.subr.bf16.mxu0 0
        %5010 = vmatpush2.bf16.msra.mxu0 %v4855
        %5011 = vmatprep.subr.bf16.mxu0 0
        %5012 = vmatpush2.bf16.msra.mxu0 %v4854
        %5013 = vmatprep.subr.bf16.mxu0 0
        %5014 = vmatpush2.bf16.msra.mxu0 %v4853
        %5015 = vmatprep.subr.bf16.mxu0 0
        %5016 = vmatpush2.bf16.msra.mxu0 %v4852
        %5017 = vmatprep.subr.bf16.mxu0 0
        %5018 = vmatpush2.bf16.msra.mxu0 %v4851
        %5019 = vmatprep.mubr.bf16.mxu0 %v4268
        %5020 = vmatmul.mubr.bf16.gmra.mxu0 %v4267
        %v5021 = vpop.f32.mrf.mxu0
        %v5022 = vadd.f32 0.0, %v5021
        %v5023 = vpop.f32.mrf.mxu0
        %v5024 = vpop.f32.mrf.mxu0
        %v5025 = vadd.f32 0.0, %v5024
        %v5026 = vpop.f32.mrf.mxu0
        %5027 = vmatprep.mubr.bf16.mxu0 %v4277
        %5028 = vmatmul.mubr.bf16.gmra.mxu0 %v4276
        %v5029 = vpop.f32.mrf.mxu0
        %v5030 = vadd.f32 0.0, %v5029
        %v5031 = vpop.f32.mrf.mxu0
        %v5032 = vpop.f32.mrf.mxu0
        %v5033 = vadd.f32 0.0, %v5032
        %v5034 = vpop.f32.mrf.mxu0
        %5035 = vmatprep.mubr.bf16.mxu0 %v4286
        %5036 = vmatmul.mubr.bf16.gmra.mxu0 %v4285
        %v5037 = vpop.f32.mrf.mxu0
        %v5038 = vadd.f32 0.0, %v5037
        %v5039 = vpop.f32.mrf.mxu0
        %v5040 = vpop.f32.mrf.mxu0
        %v5041 = vadd.f32 0.0, %v5040
        %v5042 = vpop.f32.mrf.mxu0
        %5043 = vmatprep.mubr.bf16.mxu0 %v4295
        %5044 = vmatmul.mubr.bf16.gmra.mxu0 %v4294
        %v5045 = vpop.f32.mrf.mxu0
        %v5046 = vadd.f32 0.0, %v5045
        %v5047 = vpop.f32.mrf.mxu0
        %v5048 = vpop.f32.mrf.mxu0
        %v5049 = vadd.f32 0.0, %v5048
        %v5050 = vpop.f32.mrf.mxu0
        %5051 = vmatprep.mubr.bf16.mxu0 %v4304
        %5052 = vmatmul.mubr.bf16.gmra.mxu0 %v4303
        %v5053 = vpop.f32.mrf.mxu0
        %v5054 = vadd.f32 0.0, %v5053
        %v5055 = vpop.f32.mrf.mxu0
        %v5056 = vpop.f32.mrf.mxu0
        %v5057 = vadd.f32 0.0, %v5056
        %v5058 = vpop.f32.mrf.mxu0
        %5059 = vmatprep.mubr.bf16.mxu0 %v4313
        %5060 = vmatmul.mubr.bf16.gmra.mxu0 %v4312
        %v5061 = vpop.f32.mrf.mxu0
        %v5062 = vadd.f32 0.0, %v5061
        %v5063 = vpop.f32.mrf.mxu0
        %v5064 = vpop.f32.mrf.mxu0
        %v5065 = vadd.f32 0.0, %v5064
        %v5066 = vpop.f32.mrf.mxu0
        %5067 = vmatprep.mubr.bf16.mxu0 %v4322
        %5068 = vmatmul.mubr.bf16.gmra.mxu0 %v4321
        %v5069 = vpop.f32.mrf.mxu0
        %v5070 = vadd.f32 0.0, %v5069
        %v5071 = vpop.f32.mrf.mxu0
        %v5072 = vpop.f32.mrf.mxu0
        %v5073 = vadd.f32 0.0, %v5072
        %v5074 = vpop.f32.mrf.mxu0
        %5075 = vmatprep.mubr.bf16.mxu0 %v4331
        %5076 = vmatmul.mubr.bf16.gmra.mxu0 %v4330
        %v5077 = vpop.f32.mrf.mxu0
        %v5078 = vadd.f32 0.0, %v5077
        %v5079 = vpop.f32.mrf.mxu0
        %v5080 = vpop.f32.mrf.mxu0
        %v5081 = vadd.f32 0.0, %v5080
        %v5082 = vpop.f32.mrf.mxu0
        %5083 = vmatprep.mubr.bf16.mxu0 %v4340
        %5084 = vmatmul.mubr.bf16.gmra.mxu0 %v4339
        %v5085 = vpop.f32.mrf.mxu0
        %v5086 = vadd.f32 0.0, %v5085
        %v5087 = vpop.f32.mrf.mxu0
        %v5088 = vpop.f32.mrf.mxu0
        %v5089 = vadd.f32 0.0, %v5088
        %v5090 = vpop.f32.mrf.mxu0
        %5091 = vmatprep.mubr.bf16.mxu0 %v4349
        %5092 = vmatmul.mubr.bf16.gmra.mxu0 %v4348
        %v5093 = vpop.f32.mrf.mxu0
        %v5094 = vadd.f32 0.0, %v5093
        %v5095 = vpop.f32.mrf.mxu0
        %v5096 = vpop.f32.mrf.mxu0
        %v5097 = vadd.f32 0.0, %v5096
        %v5098 = vpop.f32.mrf.mxu0
        %5099 = vmatprep.mubr.bf16.mxu0 %v4358
        %5100 = vmatmul.mubr.bf16.gmra.mxu0 %v4357
        %v5101 = vpop.f32.mrf.mxu0
        %v5102 = vadd.f32 0.0, %v5101
        %v5103 = vpop.f32.mrf.mxu0
        %v5104 = vpop.f32.mrf.mxu0
        %v5105 = vadd.f32 0.0, %v5104
        %v5106 = vpop.f32.mrf.mxu0
        %5107 = vmatprep.mubr.bf16.mxu0 %v4367
        %5108 = vmatmul.mubr.bf16.gmra.mxu0 %v4366
        %v5109 = vpop.f32.mrf.mxu0
        %v5110 = vadd.f32 0.0, %v5109
        %v5111 = vpop.f32.mrf.mxu0
        %v5112 = vpop.f32.mrf.mxu0
        %v5113 = vadd.f32 0.0, %v5112
        %v5114 = vpop.f32.mrf.mxu0
        %5115 = vmatprep.mubr.bf16.mxu0 %v4376
        %5116 = vmatmul.mubr.bf16.gmra.mxu0 %v4375
        %v5117 = vpop.f32.mrf.mxu0
        %v5118 = vadd.f32 0.0, %v5117
        %v5119 = vpop.f32.mrf.mxu0
        %v5120 = vpop.f32.mrf.mxu0
        %v5121 = vadd.f32 0.0, %v5120
        %v5122 = vpop.f32.mrf.mxu0
        %5123 = vmatprep.mubr.bf16.mxu0 %v4385
        %5124 = vmatmul.mubr.bf16.gmra.mxu0 %v4384
        %v5125 = vpop.f32.mrf.mxu0
        %v5126 = vadd.f32 0.0, %v5125
        %v5127 = vpop.f32.mrf.mxu0
        %v5128 = vpop.f32.mrf.mxu0
        %v5129 = vadd.f32 0.0, %v5128
        %v5130 = vpop.f32.mrf.mxu0
        %5131 = vmatprep.mubr.bf16.mxu0 %v4394
        %5132 = vmatmul.mubr.bf16.gmra.mxu0 %v4393
        %v5133 = vpop.f32.mrf.mxu0
        %v5134 = vadd.f32 0.0, %v5133
        %v5135 = vpop.f32.mrf.mxu0
        %v5136 = vpop.f32.mrf.mxu0
        %v5137 = vadd.f32 0.0, %v5136
        %v5138 = vpop.f32.mrf.mxu0
        %5139 = vmatprep.mubr.bf16.mxu0 %v4403
        %5140 = vmatmul.mubr.bf16.gmra.mxu0 %v4402
        %v5141 = vpop.f32.mrf.mxu0
        %v5142 = vadd.f32 0.0, %v5141
        %v5143 = vpop.f32.mrf.mxu0
        %v5144 = vpop.f32.mrf.mxu0
        %v5145 = vadd.f32 0.0, %v5144
        %v5146 = vpop.f32.mrf.mxu0
        %5147 = vdwg.mxu0
        %5148 = vmatprep.subr.bf16.mxu0 0
        %5149 = vmatpush1.bf16.msra.mxu0 %v4866
        %5150 = vmatprep.subr.bf16.mxu0 0
        %5151 = vmatpush1.bf16.msra.mxu0 %v4865
        %5152 = vmatprep.subr.bf16.mxu0 0
        %5153 = vmatpush1.bf16.msra.mxu0 %v4864
        %5154 = vmatprep.subr.bf16.mxu0 0
        %5155 = vmatpush1.bf16.msra.mxu0 %v4863
        %5156 = vmatprep.subr.bf16.mxu0 0
        %5157 = vmatpush1.bf16.msra.mxu0 %v4862
        %5158 = vmatprep.subr.bf16.mxu0 0
        %5159 = vmatpush1.bf16.msra.mxu0 %v4861
        %5160 = vmatprep.subr.bf16.mxu0 0
        %5161 = vmatpush1.bf16.msra.mxu0 %v4860
        %5162 = vmatprep.subr.bf16.mxu0 0
        %5163 = vmatpush1.bf16.msra.mxu0 %v4859
        %5164 = vmatprep.subr.bf16.mxu0 0
        %5165 = vmatpush2.bf16.msra.mxu0 %v4874
        %5166 = vmatprep.subr.bf16.mxu0 0
        %5167 = vmatpush2.bf16.msra.mxu0 %v4873
        %5168 = vmatprep.subr.bf16.mxu0 0
        %5169 = vmatpush2.bf16.msra.mxu0 %v4872
        %5170 = vmatprep.subr.bf16.mxu0 0
        %5171 = vmatpush2.bf16.msra.mxu0 %v4871
        %5172 = vmatprep.subr.bf16.mxu0 0
        %5173 = vmatpush2.bf16.msra.mxu0 %v4870
        %5174 = vmatprep.subr.bf16.mxu0 0
        %5175 = vmatpush2.bf16.msra.mxu0 %v4869
        %5176 = vmatprep.subr.bf16.mxu0 0
        %5177 = vmatpush2.bf16.msra.mxu0 %v4868
        %5178 = vmatprep.subr.bf16.mxu0 0
        %5179 = vmatpush2.bf16.msra.mxu0 %v4867
        %5180 = vmatprep.mubr.bf16.mxu0 %v4270
        %5181 = vmatmul.mubr.bf16.gmra.mxu0 %v4269
        %v5182 = vpop.f32.mrf.mxu0
        %v5183 = vadd.f32 %v5022, %v5182
        %v5184 = vpop.f32.mrf.mxu0
        %v5185 = vpop.f32.mrf.mxu0
        %v5186 = vadd.f32 %v5025, %v5185
        %v5187 = vpop.f32.mrf.mxu0
        %5188 = vmatprep.mubr.bf16.mxu0 %v4279
        %5189 = vmatmul.mubr.bf16.gmra.mxu0 %v4278
        %v5190 = vpop.f32.mrf.mxu0
        %v5191 = vadd.f32 %v5030, %v5190
        %v5192 = vpop.f32.mrf.mxu0
        %v5193 = vpop.f32.mrf.mxu0
        %v5194 = vadd.f32 %v5033, %v5193
        %v5195 = vpop.f32.mrf.mxu0
        %5196 = vmatprep.mubr.bf16.mxu0 %v4288
        %5197 = vmatmul.mubr.bf16.gmra.mxu0 %v4287
        %v5198 = vpop.f32.mrf.mxu0
        %v5199 = vadd.f32 %v5038, %v5198
        %v5200 = vpop.f32.mrf.mxu0
        %v5201 = vpop.f32.mrf.mxu0
        %v5202 = vadd.f32 %v5041, %v5201
        %v5203 = vpop.f32.mrf.mxu0
        %5204 = vmatprep.mubr.bf16.mxu0 %v4297
        %5205 = vmatmul.mubr.bf16.gmra.mxu0 %v4296
        %v5206 = vpop.f32.mrf.mxu0
        %v5207 = vadd.f32 %v5046, %v5206
        %v5208 = vpop.f32.mrf.mxu0
        %v5209 = vpop.f32.mrf.mxu0
        %v5210 = vadd.f32 %v5049, %v5209
        %v5211 = vpop.f32.mrf.mxu0
        %5212 = vmatprep.mubr.bf16.mxu0 %v4306
        %5213 = vmatmul.mubr.bf16.gmra.mxu0 %v4305
        %v5214 = vpop.f32.mrf.mxu0
        %v5215 = vadd.f32 %v5054, %v5214
        %v5216 = vpop.f32.mrf.mxu0
        %v5217 = vpop.f32.mrf.mxu0
        %v5218 = vadd.f32 %v5057, %v5217
        %v5219 = vpop.f32.mrf.mxu0
        %5220 = vmatprep.mubr.bf16.mxu0 %v4315
        %5221 = vmatmul.mubr.bf16.gmra.mxu0 %v4314
        %v5222 = vpop.f32.mrf.mxu0
        %v5223 = vadd.f32 %v5062, %v5222
        %v5224 = vpop.f32.mrf.mxu0
        %v5225 = vpop.f32.mrf.mxu0
        %v5226 = vadd.f32 %v5065, %v5225
        %v5227 = vpop.f32.mrf.mxu0
        %5228 = vmatprep.mubr.bf16.mxu0 %v4324
        %5229 = vmatmul.mubr.bf16.gmra.mxu0 %v4323
        %v5230 = vpop.f32.mrf.mxu0
        %v5231 = vadd.f32 %v5070, %v5230
        %v5232 = vpop.f32.mrf.mxu0
        %v5233 = vpop.f32.mrf.mxu0
        %v5234 = vadd.f32 %v5073, %v5233
        %v5235 = vpop.f32.mrf.mxu0
        %5236 = vmatprep.mubr.bf16.mxu0 %v4333
        %5237 = vmatmul.mubr.bf16.gmra.mxu0 %v4332
        %v5238 = vpop.f32.mrf.mxu0
        %v5239 = vadd.f32 %v5078, %v5238
        %v5240 = vpop.f32.mrf.mxu0
        %v5241 = vpop.f32.mrf.mxu0
        %v5242 = vadd.f32 %v5081, %v5241
        %v5243 = vpop.f32.mrf.mxu0
        %5244 = vmatprep.mubr.bf16.mxu0 %v4342
        %5245 = vmatmul.mubr.bf16.gmra.mxu0 %v4341
        %v5246 = vpop.f32.mrf.mxu0
        %v5247 = vadd.f32 %v5086, %v5246
        %v5248 = vpop.f32.mrf.mxu0
        %v5249 = vpop.f32.mrf.mxu0
        %v5250 = vadd.f32 %v5089, %v5249
        %v5251 = vpop.f32.mrf.mxu0
        %5252 = vmatprep.mubr.bf16.mxu0 %v4351
        %5253 = vmatmul.mubr.bf16.gmra.mxu0 %v4350
        %v5254 = vpop.f32.mrf.mxu0
        %v5255 = vadd.f32 %v5094, %v5254
        %v5256 = vpop.f32.mrf.mxu0
        %v5257 = vpop.f32.mrf.mxu0
        %v5258 = vadd.f32 %v5097, %v5257
        %v5259 = vpop.f32.mrf.mxu0
        %5260 = vmatprep.mubr.bf16.mxu0 %v4360
        %5261 = vmatmul.mubr.bf16.gmra.mxu0 %v4359
        %v5262 = vpop.f32.mrf.mxu0
        %v5263 = vadd.f32 %v5102, %v5262
        %v5264 = vpop.f32.mrf.mxu0
        %v5265 = vpop.f32.mrf.mxu0
        %v5266 = vadd.f32 %v5105, %v5265
        %v5267 = vpop.f32.mrf.mxu0
        %5268 = vmatprep.mubr.bf16.mxu0 %v4369
        %5269 = vmatmul.mubr.bf16.gmra.mxu0 %v4368
        %v5270 = vpop.f32.mrf.mxu0
        %v5271 = vadd.f32 %v5110, %v5270
        %v5272 = vpop.f32.mrf.mxu0
        %v5273 = vpop.f32.mrf.mxu0
        %v5274 = vadd.f32 %v5113, %v5273
        %v5275 = vpop.f32.mrf.mxu0
        %5276 = vmatprep.mubr.bf16.mxu0 %v4378
        %5277 = vmatmul.mubr.bf16.gmra.mxu0 %v4377
        %v5278 = vpop.f32.mrf.mxu0
        %v5279 = vadd.f32 %v5118, %v5278
        %v5280 = vpop.f32.mrf.mxu0
        %v5281 = vpop.f32.mrf.mxu0
        %v5282 = vadd.f32 %v5121, %v5281
        %v5283 = vpop.f32.mrf.mxu0
        %5284 = vmatprep.mubr.bf16.mxu0 %v4387
        %5285 = vmatmul.mubr.bf16.gmra.mxu0 %v4386
        %v5286 = vpop.f32.mrf.mxu0
        %v5287 = vadd.f32 %v5126, %v5286
        %v5288 = vpop.f32.mrf.mxu0
        %v5289 = vpop.f32.mrf.mxu0
        %v5290 = vadd.f32 %v5129, %v5289
        %v5291 = vpop.f32.mrf.mxu0
        %5292 = vmatprep.mubr.bf16.mxu0 %v4396
        %5293 = vmatmul.mubr.bf16.gmra.mxu0 %v4395
        %v5294 = vpop.f32.mrf.mxu0
        %v5295 = vadd.f32 %v5134, %v5294
        %v5296 = vpop.f32.mrf.mxu0
        %v5297 = vpop.f32.mrf.mxu0
        %v5298 = vadd.f32 %v5137, %v5297
        %v5299 = vpop.f32.mrf.mxu0
        %5300 = vmatprep.mubr.bf16.mxu0 %v4405
        %5301 = vmatmul.mubr.bf16.gmra.mxu0 %v4404
        %v5302 = vpop.f32.mrf.mxu0
        %v5303 = vadd.f32 %v5142, %v5302
        %v5304 = vpop.f32.mrf.mxu0
        %v5305 = vpop.f32.mrf.mxu0
        %v5306 = vadd.f32 %v5145, %v5305
        %v5307 = vpop.f32.mrf.mxu0
        %5308 = vdwg.mxu0
        %5309 = vmatprep.subr.bf16.mxu0 0
        %5310 = vmatpush1.bf16.msra.mxu0 %v4882
        %5311 = vmatprep.subr.bf16.mxu0 0
        %5312 = vmatpush1.bf16.msra.mxu0 %v4881
        %5313 = vmatprep.subr.bf16.mxu0 0
        %5314 = vmatpush1.bf16.msra.mxu0 %v4880
        %5315 = vmatprep.subr.bf16.mxu0 0
        %5316 = vmatpush1.bf16.msra.mxu0 %v4879
        %5317 = vmatprep.subr.bf16.mxu0 0
        %5318 = vmatpush1.bf16.msra.mxu0 %v4878
        %5319 = vmatprep.subr.bf16.mxu0 0
        %5320 = vmatpush1.bf16.msra.mxu0 %v4877
        %5321 = vmatprep.subr.bf16.mxu0 0
        %5322 = vmatpush1.bf16.msra.mxu0 %v4876
        %5323 = vmatprep.subr.bf16.mxu0 0
        %5324 = vmatpush1.bf16.msra.mxu0 %v4875
        %5325 = vmatprep.subr.bf16.mxu0 0
        %5326 = vmatpush2.bf16.msra.mxu0 %v4890
        %5327 = vmatprep.subr.bf16.mxu0 0
        %5328 = vmatpush2.bf16.msra.mxu0 %v4889
        %5329 = vmatprep.subr.bf16.mxu0 0
        %5330 = vmatpush2.bf16.msra.mxu0 %v4888
        %5331 = vmatprep.subr.bf16.mxu0 0
        %5332 = vmatpush2.bf16.msra.mxu0 %v4887
        %5333 = vmatprep.subr.bf16.mxu0 0
        %5334 = vmatpush2.bf16.msra.mxu0 %v4886
        %5335 = vmatprep.subr.bf16.mxu0 0
        %5336 = vmatpush2.bf16.msra.mxu0 %v4885
        %5337 = vmatprep.subr.bf16.mxu0 0
        %5338 = vmatpush2.bf16.msra.mxu0 %v4884
        %5339 = vmatprep.subr.bf16.mxu0 0
        %5340 = vmatpush2.bf16.msra.mxu0 %v4883
        %5341 = vmatprep.mubr.bf16.mxu0 %v4272
        %5342 = vmatmul.mubr.bf16.gmra.mxu0 %v4271
        %v5343 = vpop.f32.mrf.mxu0
        %v5344 = vadd.f32 %v5183, %v5343
        %v5345 = vpop.f32.mrf.mxu0
        %v5346 = vpop.f32.mrf.mxu0
        %v5347 = vadd.f32 %v5186, %v5346
        %v5348 = vpop.f32.mrf.mxu0
        %5349 = vmatprep.mubr.bf16.mxu0 %v4281
        %5350 = vmatmul.mubr.bf16.gmra.mxu0 %v4280
        %v5351 = vpop.f32.mrf.mxu0
        %v5352 = vadd.f32 %v5191, %v5351
        %v5353 = vpop.f32.mrf.mxu0
        %v5354 = vpop.f32.mrf.mxu0
        %v5355 = vadd.f32 %v5194, %v5354
        %v5356 = vpop.f32.mrf.mxu0
        %5357 = vmatprep.mubr.bf16.mxu0 %v4290
        %5358 = vmatmul.mubr.bf16.gmra.mxu0 %v4289
        %v5359 = vpop.f32.mrf.mxu0
        %v5360 = vadd.f32 %v5199, %v5359
        %v5361 = vpop.f32.mrf.mxu0
        %v5362 = vpop.f32.mrf.mxu0
        %v5363 = vadd.f32 %v5202, %v5362
        %v5364 = vpop.f32.mrf.mxu0
        %5365 = vmatprep.mubr.bf16.mxu0 %v4299
        %5366 = vmatmul.mubr.bf16.gmra.mxu0 %v4298
        %v5367 = vpop.f32.mrf.mxu0
        %v5368 = vadd.f32 %v5207, %v5367
        %v5369 = vpop.f32.mrf.mxu0
        %v5370 = vpop.f32.mrf.mxu0
        %v5371 = vadd.f32 %v5210, %v5370
        %v5372 = vpop.f32.mrf.mxu0
        %5373 = vmatprep.mubr.bf16.mxu0 %v4308
        %5374 = vmatmul.mubr.bf16.gmra.mxu0 %v4307
        %v5375 = vpop.f32.mrf.mxu0
        %v5376 = vadd.f32 %v5215, %v5375
        %v5377 = vpop.f32.mrf.mxu0
        %v5378 = vpop.f32.mrf.mxu0
        %v5379 = vadd.f32 %v5218, %v5378
        %v5380 = vpop.f32.mrf.mxu0
        %5381 = vmatprep.mubr.bf16.mxu0 %v4317
        %5382 = vmatmul.mubr.bf16.gmra.mxu0 %v4316
        %v5383 = vpop.f32.mrf.mxu0
        %v5384 = vadd.f32 %v5223, %v5383
        %v5385 = vpop.f32.mrf.mxu0
        %v5386 = vpop.f32.mrf.mxu0
        %v5387 = vadd.f32 %v5226, %v5386
        %v5388 = vpop.f32.mrf.mxu0
        %5389 = vmatprep.mubr.bf16.mxu0 %v4326
        %5390 = vmatmul.mubr.bf16.gmra.mxu0 %v4325
        %v5391 = vpop.f32.mrf.mxu0
        %v5392 = vadd.f32 %v5231, %v5391
        %v5393 = vpop.f32.mrf.mxu0
        %v5394 = vpop.f32.mrf.mxu0
        %v5395 = vadd.f32 %v5234, %v5394
        %v5396 = vpop.f32.mrf.mxu0
        %5397 = vmatprep.mubr.bf16.mxu0 %v4335
        %5398 = vmatmul.mubr.bf16.gmra.mxu0 %v4334
        %v5399 = vpop.f32.mrf.mxu0
        %v5400 = vadd.f32 %v5239, %v5399
        %v5401 = vpop.f32.mrf.mxu0
        %v5402 = vpop.f32.mrf.mxu0
        %v5403 = vadd.f32 %v5242, %v5402
        %v5404 = vpop.f32.mrf.mxu0
        %5405 = vmatprep.mubr.bf16.mxu0 %v4344
        %5406 = vmatmul.mubr.bf16.gmra.mxu0 %v4343
        %v5407 = vpop.f32.mrf.mxu0
        %v5408 = vadd.f32 %v5247, %v5407
        %v5409 = vpop.f32.mrf.mxu0
        %v5410 = vpop.f32.mrf.mxu0
        %v5411 = vadd.f32 %v5250, %v5410
        %v5412 = vpop.f32.mrf.mxu0
        %5413 = vmatprep.mubr.bf16.mxu0 %v4353
        %5414 = vmatmul.mubr.bf16.gmra.mxu0 %v4352
        %v5415 = vpop.f32.mrf.mxu0
        %v5416 = vadd.f32 %v5255, %v5415
        %v5417 = vpop.f32.mrf.mxu0
        %v5418 = vpop.f32.mrf.mxu0
        %v5419 = vadd.f32 %v5258, %v5418
        %v5420 = vpop.f32.mrf.mxu0
        %5421 = vmatprep.mubr.bf16.mxu0 %v4362
        %5422 = vmatmul.mubr.bf16.gmra.mxu0 %v4361
        %v5423 = vpop.f32.mrf.mxu0
        %v5424 = vadd.f32 %v5263, %v5423
        %v5425 = vpop.f32.mrf.mxu0
        %v5426 = vpop.f32.mrf.mxu0
        %v5427 = vadd.f32 %v5266, %v5426
        %v5428 = vpop.f32.mrf.mxu0
        %5429 = vmatprep.mubr.bf16.mxu0 %v4371
        %5430 = vmatmul.mubr.bf16.gmra.mxu0 %v4370
        %v5431 = vpop.f32.mrf.mxu0
        %v5432 = vadd.f32 %v5271, %v5431
        %v5433 = vpop.f32.mrf.mxu0
        %v5434 = vpop.f32.mrf.mxu0
        %v5435 = vadd.f32 %v5274, %v5434
        %v5436 = vpop.f32.mrf.mxu0
        %5437 = vmatprep.mubr.bf16.mxu0 %v4380
        %5438 = vmatmul.mubr.bf16.gmra.mxu0 %v4379
        %v5439 = vpop.f32.mrf.mxu0
        %v5440 = vadd.f32 %v5279, %v5439
        %v5441 = vpop.f32.mrf.mxu0
        %v5442 = vpop.f32.mrf.mxu0
        %v5443 = vadd.f32 %v5282, %v5442
        %v5444 = vpop.f32.mrf.mxu0
        %5445 = vmatprep.mubr.bf16.mxu0 %v4389
        %5446 = vmatmul.mubr.bf16.gmra.mxu0 %v4388
        %v5447 = vpop.f32.mrf.mxu0
        %v5448 = vadd.f32 %v5287, %v5447
        %v5449 = vpop.f32.mrf.mxu0
        %v5450 = vpop.f32.mrf.mxu0
        %v5451 = vadd.f32 %v5290, %v5450
        %v5452 = vpop.f32.mrf.mxu0
        %5453 = vmatprep.mubr.bf16.mxu0 %v4398
        %5454 = vmatmul.mubr.bf16.gmra.mxu0 %v4397
        %v5455 = vpop.f32.mrf.mxu0
        %v5456 = vadd.f32 %v5295, %v5455
        %v5457 = vpop.f32.mrf.mxu0
        %v5458 = vpop.f32.mrf.mxu0
        %v5459 = vadd.f32 %v5298, %v5458
        %v5460 = vpop.f32.mrf.mxu0
        %5461 = vmatprep.mubr.bf16.mxu0 %v4407
        %5462 = vmatmul.mubr.bf16.gmra.mxu0 %v4406
        %v5463 = vpop.f32.mrf.mxu0
        %v5464 = vadd.f32 %v5303, %v5463
        %v5465 = vpop.f32.mrf.mxu0
        %v5466 = vpop.f32.mrf.mxu0
        %v5467 = vadd.f32 %v5306, %v5466
        %v5468 = vpop.f32.mrf.mxu0
        %5469 = vdwg.mxu0
        %5470 = vmatprep.subr.bf16.mxu0 0
        %5471 = vmatpush1.bf16.msra.mxu0 %v4898
        %5472 = vmatprep.subr.bf16.mxu0 0
        %5473 = vmatpush1.bf16.msra.mxu0 %v4897
        %5474 = vmatprep.subr.bf16.mxu0 0
        %5475 = vmatpush1.bf16.msra.mxu0 %v4896
        %5476 = vmatprep.subr.bf16.mxu0 0
        %5477 = vmatpush1.bf16.msra.mxu0 %v4895
        %5478 = vmatprep.subr.bf16.mxu0 0
        %5479 = vmatpush1.bf16.msra.mxu0 %v4894
        %5480 = vmatprep.subr.bf16.mxu0 0
        %5481 = vmatpush1.bf16.msra.mxu0 %v4893
        %5482 = vmatprep.subr.bf16.mxu0 0
        %5483 = vmatpush1.bf16.msra.mxu0 %v4892
        %5484 = vmatprep.subr.bf16.mxu0 0
        %5485 = vmatpush1.bf16.msra.mxu0 %v4891
        %5486 = vmatprep.subr.bf16.mxu0 0
        %5487 = vmatpush2.bf16.msra.mxu0 %v4906
        %5488 = vmatprep.subr.bf16.mxu0 0
        %5489 = vmatpush2.bf16.msra.mxu0 %v4905
        %5490 = vmatprep.subr.bf16.mxu0 0
        %5491 = vmatpush2.bf16.msra.mxu0 %v4904
        %5492 = vmatprep.subr.bf16.mxu0 0
        %5493 = vmatpush2.bf16.msra.mxu0 %v4903
        %5494 = vmatprep.subr.bf16.mxu0 0
        %5495 = vmatpush2.bf16.msra.mxu0 %v4902
        %5496 = vmatprep.subr.bf16.mxu0 0
        %5497 = vmatpush2.bf16.msra.mxu0 %v4901
        %5498 = vmatprep.subr.bf16.mxu0 0
        %5499 = vmatpush2.bf16.msra.mxu0 %v4900
        %5500 = vmatprep.subr.bf16.mxu0 0
        %5501 = vmatpush2.bf16.msra.mxu0 %v4899
        %5502 = vmatprep.mubr.bf16.mxu0 %v4274
        %5503 = vmatmul.mubr.bf16.gmra.mxu0 %v4273
        %v5504 = vpop.f32.mrf.mxu0
        %v5505 = vadd.f32 %v5344, %v5504
        %v5506 = vpop.f32.mrf.mxu0
        %v5507 = vpop.f32.mrf.mxu0
        %v5508 = vadd.f32 %v5347, %v5507
        %v5509 = vpop.f32.mrf.mxu0
        %5510 = vmatprep.mubr.bf16.mxu0 %v4283
        %5511 = vmatmul.mubr.bf16.gmra.mxu0 %v4282
        %v5512 = vpop.f32.mrf.mxu0
        %v5513 = vadd.f32 %v5352, %v5512
        %v5514 = vpop.f32.mrf.mxu0
        %v5515 = vpop.f32.mrf.mxu0
        %v5516 = vadd.f32 %v5355, %v5515
        %v5517 = vpop.f32.mrf.mxu0
        %5518 = vmatprep.mubr.bf16.mxu0 %v4292
        %5519 = vmatmul.mubr.bf16.gmra.mxu0 %v4291
        %v5520 = vpop.f32.mrf.mxu0
        %v5521 = vadd.f32 %v5360, %v5520
        %v5522 = vpop.f32.mrf.mxu0
        %v5523 = vpop.f32.mrf.mxu0
        %v5524 = vadd.f32 %v5363, %v5523
        %v5525 = vpop.f32.mrf.mxu0
        %5526 = vmatprep.mubr.bf16.mxu0 %v4301
        %5527 = vmatmul.mubr.bf16.gmra.mxu0 %v4300
        %v5528 = vpop.f32.mrf.mxu0
        %v5529 = vadd.f32 %v5368, %v5528
        %v5530 = vpop.f32.mrf.mxu0
        %v5531 = vpop.f32.mrf.mxu0
        %v5532 = vadd.f32 %v5371, %v5531
        %v5533 = vpop.f32.mrf.mxu0
        %5534 = vmatprep.mubr.bf16.mxu0 %v4310
        %5535 = vmatmul.mubr.bf16.gmra.mxu0 %v4309
        %v5536 = vpop.f32.mrf.mxu0
        %v5537 = vadd.f32 %v5376, %v5536
        %v5538 = vpop.f32.mrf.mxu0
        %v5539 = vpop.f32.mrf.mxu0
        %v5540 = vadd.f32 %v5379, %v5539
        %v5541 = vpop.f32.mrf.mxu0
        %5542 = vmatprep.mubr.bf16.mxu0 %v4319
        %5543 = vmatmul.mubr.bf16.gmra.mxu0 %v4318
        %v5544 = vpop.f32.mrf.mxu0
        %v5545 = vadd.f32 %v5384, %v5544
        %v5546 = vpop.f32.mrf.mxu0
        %v5547 = vpop.f32.mrf.mxu0
        %v5548 = vadd.f32 %v5387, %v5547
        %v5549 = vpop.f32.mrf.mxu0
        %5550 = vmatprep.mubr.bf16.mxu0 %v4328
        %5551 = vmatmul.mubr.bf16.gmra.mxu0 %v4327
        %v5552 = vpop.f32.mrf.mxu0
        %v5553 = vadd.f32 %v5392, %v5552
        %v5554 = vpop.f32.mrf.mxu0
        %v5555 = vpop.f32.mrf.mxu0
        %v5556 = vadd.f32 %v5395, %v5555
        %v5557 = vpop.f32.mrf.mxu0
        %5558 = vmatprep.mubr.bf16.mxu0 %v4337
        %5559 = vmatmul.mubr.bf16.gmra.mxu0 %v4336
        %v5560 = vpop.f32.mrf.mxu0
        %v5561 = vadd.f32 %v5400, %v5560
        %v5562 = vpop.f32.mrf.mxu0
        %v5563 = vpop.f32.mrf.mxu0
        %v5564 = vadd.f32 %v5403, %v5563
        %v5565 = vpop.f32.mrf.mxu0
        %5566 = vmatprep.mubr.bf16.mxu0 %v4346
        %5567 = vmatmul.mubr.bf16.gmra.mxu0 %v4345
        %v5568 = vpop.f32.mrf.mxu0
        %v5569 = vadd.f32 %v5408, %v5568
        %v5570 = vpop.f32.mrf.mxu0
        %v5571 = vpop.f32.mrf.mxu0
        %v5572 = vadd.f32 %v5411, %v5571
        %v5573 = vpop.f32.mrf.mxu0
        %5574 = vmatprep.mubr.bf16.mxu0 %v4355
        %5575 = vmatmul.mubr.bf16.gmra.mxu0 %v4354
        %v5576 = vpop.f32.mrf.mxu0
        %v5577 = vadd.f32 %v5416, %v5576
        %v5578 = vpop.f32.mrf.mxu0
        %v5579 = vpop.f32.mrf.mxu0
        %v5580 = vadd.f32 %v5419, %v5579
        %v5581 = vpop.f32.mrf.mxu0
        %5582 = vmatprep.mubr.bf16.mxu0 %v4364
        %5583 = vmatmul.mubr.bf16.gmra.mxu0 %v4363
        %v5584 = vpop.f32.mrf.mxu0
        %v5585 = vadd.f32 %v5424, %v5584
        %v5586 = vpop.f32.mrf.mxu0
        %v5587 = vpop.f32.mrf.mxu0
        %v5588 = vadd.f32 %v5427, %v5587
        %v5589 = vpop.f32.mrf.mxu0
        %5590 = vmatprep.mubr.bf16.mxu0 %v4373
        %5591 = vmatmul.mubr.bf16.gmra.mxu0 %v4372
        %v5592 = vpop.f32.mrf.mxu0
        %v5593 = vadd.f32 %v5432, %v5592
        %v5594 = vpop.f32.mrf.mxu0
        %v5595 = vpop.f32.mrf.mxu0
        %v5596 = vadd.f32 %v5435, %v5595
        %v5597 = vpop.f32.mrf.mxu0
        %5598 = vmatprep.mubr.bf16.mxu0 %v4382
        %5599 = vmatmul.mubr.bf16.gmra.mxu0 %v4381
        %v5600 = vpop.f32.mrf.mxu0
        %v5601 = vadd.f32 %v5440, %v5600
        %v5602 = vpop.f32.mrf.mxu0
        %v5603 = vpop.f32.mrf.mxu0
        %v5604 = vadd.f32 %v5443, %v5603
        %v5605 = vpop.f32.mrf.mxu0
        %5606 = vmatprep.mubr.bf16.mxu0 %v4391
        %5607 = vmatmul.mubr.bf16.gmra.mxu0 %v4390
        %v5608 = vpop.f32.mrf.mxu0
        %v5609 = vadd.f32 %v5448, %v5608
        %v5610 = vpop.f32.mrf.mxu0
        %v5611 = vpop.f32.mrf.mxu0
        %v5612 = vadd.f32 %v5451, %v5611
        %v5613 = vpop.f32.mrf.mxu0
        %5614 = vmatprep.mubr.bf16.mxu0 %v4400
        %5615 = vmatmul.mubr.bf16.gmra.mxu0 %v4399
        %v5616 = vpop.f32.mrf.mxu0
        %v5617 = vadd.f32 %v5456, %v5616
        %v5618 = vpop.f32.mrf.mxu0
        %v5619 = vpop.f32.mrf.mxu0
        %v5620 = vadd.f32 %v5459, %v5619
        %v5621 = vpop.f32.mrf.mxu0
        %5622 = vmatprep.mubr.bf16.mxu0 %v4409
        %5623 = vmatmul.mubr.bf16.gmra.mxu0 %v4408
        %v5624 = vpop.f32.mrf.mxu0
        %v5625 = vadd.f32 %v5464, %v5624
        %v5626 = vpop.f32.mrf.mxu0
        %v5627 = vpop.f32.mrf.mxu0
        %v5628 = vadd.f32 %v5467, %v5627
        %v5629 = vpop.f32.mrf.mxu0
        %5630 = vdwg.mxu0
        %5631 = vmatprep.subr.bf16.mxu0 0
        %5632 = vmatpush1.bf16.msra.mxu0 %v4914
        %5633 = vmatprep.subr.bf16.mxu0 0
        %5634 = vmatpush1.bf16.msra.mxu0 %v4913
        %5635 = vmatprep.subr.bf16.mxu0 0
        %5636 = vmatpush1.bf16.msra.mxu0 %v4912
        %5637 = vmatprep.subr.bf16.mxu0 0
        %5638 = vmatpush1.bf16.msra.mxu0 %v4911
        %5639 = vmatprep.subr.bf16.mxu0 0
        %5640 = vmatpush1.bf16.msra.mxu0 %v4910
        %5641 = vmatprep.subr.bf16.mxu0 0
        %5642 = vmatpush1.bf16.msra.mxu0 %v4909
        %5643 = vmatprep.subr.bf16.mxu0 0
        %5644 = vmatpush1.bf16.msra.mxu0 %v4908
        %5645 = vmatprep.subr.bf16.mxu0 0
        %5646 = vmatpush1.bf16.msra.mxu0 %v4907
        %5647 = vmatprep.subr.bf16.mxu0 0
        %5648 = vmatpush2.bf16.msra.mxu0 0
        %5649 = vmatprep.subr.bf16.mxu0 0
        %5650 = vmatpush2.bf16.msra.mxu0 0
        %5651 = vmatprep.subr.bf16.mxu0 0
        %5652 = vmatpush2.bf16.msra.mxu0 0
        %5653 = vmatprep.subr.bf16.mxu0 0
        %5654 = vmatpush2.bf16.msra.mxu0 0
        %5655 = vmatprep.subr.bf16.mxu0 0
        %5656 = vmatpush2.bf16.msra.mxu0 0
        %5657 = vmatprep.subr.bf16.mxu0 0
        %5658 = vmatpush2.bf16.msra.mxu0 0
        %5659 = vmatprep.subr.bf16.mxu0 0
        %5660 = vmatpush2.bf16.msra.mxu0 0
        %5661 = vmatprep.subr.bf16.mxu0 0
        %5662 = vmatpush2.bf16.msra.mxu0 0
        %5663 = vmatprep.mubr.bf16.mxu0 0
        %5664 = vmatmul.mubr.bf16.gmra.mxu0 %v4275
        %v5665 = vpop.f32.mrf.mxu0
        %v5666 = vadd.f32 %v5505, %v5665
        %v5667 = vpop.f32.mrf.mxu0
        %v5668 = vpop.f32.mrf.mxu0
        %v5669 = vadd.f32 %v5508, %v5668
        %v5670 = vpop.f32.mrf.mxu0
        %5671 = vmatprep.mubr.bf16.mxu0 0
        %5672 = vmatmul.mubr.bf16.gmra.mxu0 %v4284
        %v5673 = vpop.f32.mrf.mxu0
        %v5674 = vadd.f32 %v5513, %v5673
        %v5675 = vpop.f32.mrf.mxu0
        %v5676 = vpop.f32.mrf.mxu0
        %v5677 = vadd.f32 %v5516, %v5676
        %v5678 = vpop.f32.mrf.mxu0
        %5679 = vmatprep.mubr.bf16.mxu0 0
        %5680 = vmatmul.mubr.bf16.gmra.mxu0 %v4293
        %v5681 = vpop.f32.mrf.mxu0
        %v5682 = vadd.f32 %v5521, %v5681
        %v5683 = vpop.f32.mrf.mxu0
        %v5684 = vpop.f32.mrf.mxu0
        %v5685 = vadd.f32 %v5524, %v5684
        %v5686 = vpop.f32.mrf.mxu0
        %5687 = vmatprep.mubr.bf16.mxu0 0
        %5688 = vmatmul.mubr.bf16.gmra.mxu0 %v4302
        %v5689 = vpop.f32.mrf.mxu0
        %v5690 = vadd.f32 %v5529, %v5689
        %v5691 = vpop.f32.mrf.mxu0
        %v5692 = vpop.f32.mrf.mxu0
        %v5693 = vadd.f32 %v5532, %v5692
        %v5694 = vpop.f32.mrf.mxu0
        %5695 = vmatprep.mubr.bf16.mxu0 0
        %5696 = vmatmul.mubr.bf16.gmra.mxu0 %v4311
        %v5697 = vpop.f32.mrf.mxu0
        %v5698 = vadd.f32 %v5537, %v5697
        %v5699 = vpop.f32.mrf.mxu0
        %v5700 = vpop.f32.mrf.mxu0
        %v5701 = vadd.f32 %v5540, %v5700
        %v5702 = vpop.f32.mrf.mxu0
        %5703 = vmatprep.mubr.bf16.mxu0 0
        %5704 = vmatmul.mubr.bf16.gmra.mxu0 %v4320
        %v5705 = vpop.f32.mrf.mxu0
        %v5706 = vadd.f32 %v5545, %v5705
        %v5707 = vpop.f32.mrf.mxu0
        %v5708 = vpop.f32.mrf.mxu0
        %v5709 = vadd.f32 %v5548, %v5708
        %v5710 = vpop.f32.mrf.mxu0
        %5711 = vmatprep.mubr.bf16.mxu0 0
        %5712 = vmatmul.mubr.bf16.gmra.mxu0 %v4329
        %v5713 = vpop.f32.mrf.mxu0
        %v5714 = vadd.f32 %v5553, %v5713
        %v5715 = vpop.f32.mrf.mxu0
        %v5716 = vpop.f32.mrf.mxu0
        %v5717 = vadd.f32 %v5556, %v5716
        %v5718 = vpop.f32.mrf.mxu0
        %5719 = vmatprep.mubr.bf16.mxu0 0
        %5720 = vmatmul.mubr.bf16.gmra.mxu0 %v4338
        %v5721 = vpop.f32.mrf.mxu0
        %v5722 = vadd.f32 %v5561, %v5721
        %v5723 = vpop.f32.mrf.mxu0
        %v5724 = vpop.f32.mrf.mxu0
        %v5725 = vadd.f32 %v5564, %v5724
        %v5726 = vpop.f32.mrf.mxu0
        %5727 = vmatprep.mubr.bf16.mxu0 0
        %5728 = vmatmul.mubr.bf16.gmra.mxu0 %v4347
        %v5729 = vpop.f32.mrf.mxu0
        %v5730 = vadd.f32 %v5569, %v5729
        %v5731 = vpop.f32.mrf.mxu0
        %v5732 = vpop.f32.mrf.mxu0
        %v5733 = vadd.f32 %v5572, %v5732
        %v5734 = vpop.f32.mrf.mxu0
        %5735 = vmatprep.mubr.bf16.mxu0 0
        %5736 = vmatmul.mubr.bf16.gmra.mxu0 %v4356
        %v5737 = vpop.f32.mrf.mxu0
        %v5738 = vadd.f32 %v5577, %v5737
        %v5739 = vpop.f32.mrf.mxu0
        %v5740 = vpop.f32.mrf.mxu0
        %v5741 = vadd.f32 %v5580, %v5740
        %v5742 = vpop.f32.mrf.mxu0
        %5743 = vmatprep.mubr.bf16.mxu0 0
        %5744 = vmatmul.mubr.bf16.gmra.mxu0 %v4365
        %v5745 = vpop.f32.mrf.mxu0
        %v5746 = vadd.f32 %v5585, %v5745
        %v5747 = vpop.f32.mrf.mxu0
        %v5748 = vpop.f32.mrf.mxu0
        %v5749 = vadd.f32 %v5588, %v5748
        %v5750 = vpop.f32.mrf.mxu0
        %5751 = vmatprep.mubr.bf16.mxu0 0
        %5752 = vmatmul.mubr.bf16.gmra.mxu0 %v4374
        %v5753 = vpop.f32.mrf.mxu0
        %v5754 = vadd.f32 %v5593, %v5753
        %v5755 = vpop.f32.mrf.mxu0
        %v5756 = vpop.f32.mrf.mxu0
        %v5757 = vadd.f32 %v5596, %v5756
        %v5758 = vpop.f32.mrf.mxu0
        %5759 = vmatprep.mubr.bf16.mxu0 0
        %5760 = vmatmul.mubr.bf16.gmra.mxu0 %v4383
        %v5761 = vpop.f32.mrf.mxu0
        %v5762 = vadd.f32 %v5601, %v5761
        %v5763 = vpop.f32.mrf.mxu0
        %v5764 = vpop.f32.mrf.mxu0
        %v5765 = vadd.f32 %v5604, %v5764
        %v5766 = vpop.f32.mrf.mxu0
        %5767 = vmatprep.mubr.bf16.mxu0 0
        %5768 = vmatmul.mubr.bf16.gmra.mxu0 %v4392
        %v5769 = vpop.f32.mrf.mxu0
        %v5770 = vadd.f32 %v5609, %v5769
        %v5771 = vpop.f32.mrf.mxu0
        %v5772 = vpop.f32.mrf.mxu0
        %v5773 = vadd.f32 %v5612, %v5772
        %v5774 = vpop.f32.mrf.mxu0
        %5775 = vmatprep.mubr.bf16.mxu0 0
        %5776 = vmatmul.mubr.bf16.gmra.mxu0 %v4401
        %v5777 = vpop.f32.mrf.mxu0
        %v5778 = vadd.f32 %v5617, %v5777
        %v5779 = vpop.f32.mrf.mxu0
        %v5780 = vpop.f32.mrf.mxu0
        %v5781 = vadd.f32 %v5620, %v5780
        %v5782 = vpop.f32.mrf.mxu0
        %5783 = vmatprep.mubr.bf16.mxu0 0
        %5784 = vmatmul.mubr.bf16.gmra.mxu0 %v4410
        %v5785 = vpop.f32.mrf.mxu0
        %v5786 = vadd.f32 %v5625, %v5785
        %v5787 = vpop.f32.mrf.mxu0
        %v5788 = vpop.f32.mrf.mxu0
        %v5789 = vadd.f32 %v5628, %v5788
        %v5790 = vpop.f32.mrf.mxu0
        %5791 = vdwg.mxu0
        %v5792 = vld [vmem:[%s3] sm:$0x1]
        %v5794 = vlaneseq
        %v5795 = vshrl.u32 %v5794, 7
        %v5796 = vsub.s32 0, %v5795
        %v5797 = vrot.slane %v5792, %v5796
        %v5799 = vmul.f32 %v5666, %v5797
        %v5800 = vmul.f32 %v5669, %v5797
        %v5801 = vmul.f32 %v5674, %v5797
        %v5802 = vmul.f32 %v5677, %v5797
        %v5803 = vmul.f32 %v5682, %v5797
        %v5804 = vmul.f32 %v5685, %v5797
        %v5805 = vmul.f32 %v5690, %v5797
        %v5806 = vmul.f32 %v5693, %v5797
        %v5807 = vmul.f32 %v5698, %v5797
        %v5808 = vmul.f32 %v5701, %v5797
        %v5809 = vmul.f32 %v5706, %v5797
        %v5810 = vmul.f32 %v5709, %v5797
        %v5811 = vmul.f32 %v5714, %v5797
        %v5812 = vmul.f32 %v5717, %v5797
        %v5813 = vmul.f32 %v5722, %v5797
        %v5814 = vmul.f32 %v5725, %v5797
        %v5815 = vmul.f32 %v5730, %v5797
        %v5816 = vmul.f32 %v5733, %v5797
        %v5817 = vmul.f32 %v5738, %v5797
        %v5818 = vmul.f32 %v5741, %v5797
        %v5819 = vmul.f32 %v5746, %v5797
        %v5820 = vmul.f32 %v5749, %v5797
        %v5821 = vmul.f32 %v5754, %v5797
        %v5822 = vmul.f32 %v5757, %v5797
        %v5823 = vmul.f32 %v5762, %v5797
        %v5824 = vmul.f32 %v5765, %v5797
        %v5825 = vmul.f32 %v5770, %v5797
        %v5826 = vmul.f32 %v5773, %v5797
        %v5827 = vmul.f32 %v5778, %v5797
        %v5828 = vmul.f32 %v5781, %v5797
        %v5829 = vmul.f32 %v5786, %v5797
        %v5830 = vmul.f32 %v5789, %v5797
        %v5831 = vld [vmem:[%s4] sm:$0x1]
        %v5833 = vlaneseq
        %v5834 = vshrl.u32 %v5833, 7
        %v5835 = vsub.s32 0, %v5834
        %v5836 = vrot.slane %v5831, %v5835
        %v5838 = vadd.f32 %v5799, %v5836
        %v5839 = vadd.f32 %v5800, %v5836
        %v5840 = vadd.f32 %v5801, %v5836
        %v5841 = vadd.f32 %v5802, %v5836
        %v5842 = vadd.f32 %v5803, %v5836
        %v5843 = vadd.f32 %v5804, %v5836
        %v5844 = vadd.f32 %v5805, %v5836
        %v5845 = vadd.f32 %v5806, %v5836
        %v5846 = vadd.f32 %v5807, %v5836
        %v5847 = vadd.f32 %v5808, %v5836
        %v5848 = vadd.f32 %v5809, %v5836
        %v5849 = vadd.f32 %v5810, %v5836
        %v5850 = vadd.f32 %v5811, %v5836
        %v5851 = vadd.f32 %v5812, %v5836
        %v5852 = vadd.f32 %v5813, %v5836
        %v5853 = vadd.f32 %v5814, %v5836
        %v5854 = vadd.f32 %v5815, %v5836
        %v5855 = vadd.f32 %v5816, %v5836
        %v5856 = vadd.f32 %v5817, %v5836
        %v5857 = vadd.f32 %v5818, %v5836
        %v5858 = vadd.f32 %v5819, %v5836
        %v5859 = vadd.f32 %v5820, %v5836
        %v5860 = vadd.f32 %v5821, %v5836
        %v5861 = vadd.f32 %v5822, %v5836
        %v5862 = vadd.f32 %v5823, %v5836
        %v5863 = vadd.f32 %v5824, %v5836
        %v5864 = vadd.f32 %v5825, %v5836
        %v5865 = vadd.f32 %v5826, %v5836
        %v5866 = vadd.f32 %v5827, %v5836
        %v5867 = vadd.f32 %v5828, %v5836
        %v5868 = vadd.f32 %v5829, %v5836
        %v5869 = vadd.f32 %v5830, %v5836
        %v5870 = vmax.f32 %v5838, 0.0
        %v5871 = vmax.f32 %v5839, 0.0
        %v5872 = vmax.f32 %v5840, 0.0
        %v5873 = vmax.f32 %v5841, 0.0
        %v5874 = vmax.f32 %v5842, 0.0
        %v5875 = vmax.f32 %v5843, 0.0
        %v5876 = vmax.f32 %v5844, 0.0
        %v5877 = vmax.f32 %v5845, 0.0
        %v5878 = vmax.f32 %v5846, 0.0
        %v5879 = vmax.f32 %v5847, 0.0
        %v5880 = vmax.f32 %v5848, 0.0
        %v5881 = vmax.f32 %v5849, 0.0
        %v5882 = vmax.f32 %v5850, 0.0
        %v5883 = vmax.f32 %v5851, 0.0
        %v5884 = vmax.f32 %v5852, 0.0
        %v5885 = vmax.f32 %v5853, 0.0
        %v5886 = vmax.f32 %v5854, 0.0
        %v5887 = vmax.f32 %v5855, 0.0
        %v5888 = vmax.f32 %v5856, 0.0
        %v5889 = vmax.f32 %v5857, 0.0
        %v5890 = vmax.f32 %v5858, 0.0
        %v5891 = vmax.f32 %v5859, 0.0
        %v5892 = vmax.f32 %v5860, 0.0
        %v5893 = vmax.f32 %v5861, 0.0
        %v5894 = vmax.f32 %v5862, 0.0
        %v5895 = vmax.f32 %v5863, 0.0
        %v5896 = vmax.f32 %v5864, 0.0
        %v5897 = vmax.f32 %v5865, 0.0
        %v5898 = vmax.f32 %v5866, 0.0
        %v5899 = vmax.f32 %v5867, 0.0
        %v5900 = vmax.f32 %v5868, 0.0
        %v5901 = vmax.f32 %v5869, 0.0
        %v5902 = vpack.c.bf16 %v5871, %v5870
        %v5903 = vpack.c.bf16 %v5873, %v5872
        %v5904 = vpack.c.bf16 %v5875, %v5874
        %v5905 = vpack.c.bf16 %v5877, %v5876
        %v5906 = vpack.c.bf16 %v5879, %v5878
        %v5907 = vpack.c.bf16 %v5881, %v5880
        %v5908 = vpack.c.bf16 %v5883, %v5882
        %v5909 = vpack.c.bf16 %v5885, %v5884
        %v5910 = vpack.c.bf16 %v5887, %v5886
        %v5911 = vpack.c.bf16 %v5889, %v5888
        %v5912 = vpack.c.bf16 %v5891, %v5890
        %v5913 = vpack.c.bf16 %v5893, %v5892
        %v5914 = vpack.c.bf16 %v5895, %v5894
        %v5915 = vpack.c.bf16 %v5897, %v5896
        %v5916 = vpack.c.bf16 %v5899, %v5898
        %v5917 = vpack.c.bf16 %v5901, %v5900
        %v5934 = vunpack.c.l.b16 %v5902
        %v5935 = vunpack.c.h.b16 %v5902
        %v5936 = vunpack.c.l.b16 %v5903
        %v5937 = vunpack.c.h.b16 %v5903
        %v5938 = vunpack.c.l.b16 %v5904
        %v5939 = vunpack.c.h.b16 %v5904
        %v5940 = vunpack.c.l.b16 %v5905
        %v5941 = vunpack.c.h.b16 %v5905
        %v5942 = vunpack.c.l.b16 %v5906
        %v5943 = vunpack.c.h.b16 %v5906
        %v5944 = vunpack.c.l.b16 %v5907
        %v5945 = vunpack.c.h.b16 %v5907
        %v5946 = vunpack.c.l.b16 %v5908
        %v5947 = vunpack.c.h.b16 %v5908
        %v5948 = vunpack.c.l.b16 %v5909
        %v5949 = vunpack.c.h.b16 %v5909
        %v5950 = vunpack.c.l.b16 %v5910
        %v5951 = vunpack.c.h.b16 %v5910
        %v5952 = vunpack.c.l.b16 %v5911
        %v5953 = vunpack.c.h.b16 %v5911
        %v5954 = vunpack.c.l.b16 %v5912
        %v5955 = vunpack.c.h.b16 %v5912
        %v5956 = vunpack.c.l.b16 %v5913
        %v5957 = vunpack.c.h.b16 %v5913
        %v5958 = vunpack.c.l.b16 %v5914
        %v5959 = vunpack.c.h.b16 %v5914
        %v5960 = vunpack.c.l.b16 %v5915
        %v5961 = vunpack.c.h.b16 %v5915
        %v5962 = vunpack.c.l.b16 %v5916
        %v5963 = vunpack.c.h.b16 %v5916
        %v5964 = vunpack.c.l.b16 %v5917
        %v5965 = vunpack.c.h.b16 %v5917
        %v5966 = vpack.c.b16 %v5934, %v5934
        %v5967 = vpack.c.b16 %v5935, %v5935
        %v5968 = vpack.c.b16 %v5936, %v5936
        %v5969 = vpack.c.b16 %v5937, %v5937
        %v5970 = vpack.c.b16 %v5938, %v5938
        %v5971 = vpack.c.b16 %v5939, %v5939
        %v5972 = vpack.c.b16 %v5940, %v5940
        %v5973 = vpack.c.b16 %v5941, %v5941
        %v5974 = vpack.c.b16 %v5942, %v5942
        %v5975 = vpack.c.b16 %v5943, %v5943
        %v5976 = vpack.c.b16 %v5944, %v5944
        %v5977 = vpack.c.b16 %v5945, %v5945
        %v5978 = vpack.c.b16 %v5946, %v5946
        %v5979 = vpack.c.b16 %v5947, %v5947
        %v5980 = vpack.c.b16 %v5948, %v5948
        %v5981 = vpack.c.b16 %v5949, %v5949
        %v5982 = vpack.c.b16 %v5950, %v5950
        %v5983 = vpack.c.b16 %v5951, %v5951
        %v5984 = vpack.c.b16 %v5952, %v5952
        %v5985 = vpack.c.b16 %v5953, %v5953
        %v5986 = vpack.c.b16 %v5954, %v5954
        %v5987 = vpack.c.b16 %v5955, %v5955
        %v5988 = vpack.c.b16 %v5956, %v5956
        %v5989 = vpack.c.b16 %v5957, %v5957
        %v5990 = vpack.c.b16 %v5958, %v5958
        %v5991 = vpack.c.b16 %v5959, %v5959
        %v5992 = vpack.c.b16 %v5960, %v5960
        %v5993 = vpack.c.b16 %v5961, %v5961
        %v5994 = vpack.c.b16 %v5962, %v5962
        %v5995 = vpack.c.b16 %v5963, %v5963
        %v5996 = vpack.c.b16 %v5964, %v5964
        %v5997 = vpack.c.b16 %v5965, %v5965
        %v5999 = vshrl.u32 %v5966, 16
        %v6001 = vrot.slane %v5999, 7
        %v6002 = vshll.u32 %v5966, 16
        %v6004 = vor.u32 %v6001, %v6002
        %v6005 = vrot.slane %v6001, 4
        %v6007 = vshrl.u32 %v5967, 16
        %v6009 = vrot.slane %v6007, 7
        %v6010 = vshll.u32 %v5967, 16
        %v6012 = vor.u32 %v6009, %v6010
        %v6013 = vsel %vm576, %v6005, %v6012
        %v6014 = vrot.slane %v6009, 4
        %v6016 = vshrl.u32 %v5968, 16
        %v6018 = vrot.slane %v6016, 7
        %v6019 = vshll.u32 %v5968, 16
        %v6021 = vor.u32 %v6018, %v6019
        %v6022 = vrot.slane %v6018, 4
        %v6024 = vshrl.u32 %v5969, 16
        %v6026 = vrot.slane %v6024, 7
        %v6027 = vshll.u32 %v5969, 16
        %v6029 = vor.u32 %v6026, %v6027
        %v6030 = vsel %vm576, %v6022, %v6029
        %v6031 = vrot.slane %v6026, 4
        %v6033 = vshrl.u32 %v5970, 16
        %v6035 = vrot.slane %v6033, 7
        %v6036 = vshll.u32 %v5970, 16
        %v6038 = vor.u32 %v6035, %v6036
        %v6039 = vrot.slane %v6035, 4
        %v6041 = vshrl.u32 %v5971, 16
        %v6043 = vrot.slane %v6041, 7
        %v6044 = vshll.u32 %v5971, 16
        %v6046 = vor.u32 %v6043, %v6044
        %v6047 = vsel %vm576, %v6039, %v6046
        %v6048 = vrot.slane %v6043, 4
        %v6050 = vshrl.u32 %v5972, 16
        %v6052 = vrot.slane %v6050, 7
        %v6053 = vshll.u32 %v5972, 16
        %v6055 = vor.u32 %v6052, %v6053
        %v6056 = vrot.slane %v6052, 4
        %v6058 = vshrl.u32 %v5973, 16
        %v6060 = vrot.slane %v6058, 7
        %v6061 = vshll.u32 %v5973, 16
        %v6063 = vor.u32 %v6060, %v6061
        %v6064 = vsel %vm576, %v6056, %v6063
        %v6065 = vrot.slane %v6060, 4
        %v6067 = vshrl.u32 %v5974, 16
        %v6069 = vrot.slane %v6067, 7
        %v6070 = vshll.u32 %v5974, 16
        %v6072 = vor.u32 %v6069, %v6070
        %v6073 = vrot.slane %v6069, 4
        %v6075 = vshrl.u32 %v5975, 16
        %v6077 = vrot.slane %v6075, 7
        %v6078 = vshll.u32 %v5975, 16
        %v6080 = vor.u32 %v6077, %v6078
        %v6081 = vsel %vm576, %v6073, %v6080
        %v6082 = vrot.slane %v6077, 4
        %v6084 = vshrl.u32 %v5976, 16
        %v6086 = vrot.slane %v6084, 7
        %v6087 = vshll.u32 %v5976, 16
        %v6089 = vor.u32 %v6086, %v6087
        %v6090 = vrot.slane %v6086, 4
        %v6092 = vshrl.u32 %v5977, 16
        %v6094 = vrot.slane %v6092, 7
        %v6095 = vshll.u32 %v5977, 16
        %v6097 = vor.u32 %v6094, %v6095
        %v6098 = vsel %vm576, %v6090, %v6097
        %v6099 = vrot.slane %v6094, 4
        %v6101 = vshrl.u32 %v5978, 16
        %v6103 = vrot.slane %v6101, 7
        %v6104 = vshll.u32 %v5978, 16
        %v6106 = vor.u32 %v6103, %v6104
        %v6107 = vrot.slane %v6103, 4
        %v6109 = vshrl.u32 %v5979, 16
        %v6111 = vrot.slane %v6109, 7
        %v6112 = vshll.u32 %v5979, 16
        %v6114 = vor.u32 %v6111, %v6112
        %v6115 = vsel %vm576, %v6107, %v6114
        %v6116 = vrot.slane %v6111, 4
        %v6118 = vshrl.u32 %v5980, 16
        %v6120 = vrot.slane %v6118, 7
        %v6121 = vshll.u32 %v5980, 16
        %v6123 = vor.u32 %v6120, %v6121
        %v6124 = vrot.slane %v6120, 4
        %v6126 = vshrl.u32 %v5981, 16
        %v6128 = vrot.slane %v6126, 7
        %v6129 = vshll.u32 %v5981, 16
        %v6131 = vor.u32 %v6128, %v6129
        %v6132 = vsel %vm576, %v6124, %v6131
        %v6133 = vrot.slane %v6128, 4
        %v6135 = vshrl.u32 %v5982, 16
        %v6137 = vrot.slane %v6135, 7
        %v6138 = vshll.u32 %v5982, 16
        %v6140 = vor.u32 %v6137, %v6138
        %v6141 = vrot.slane %v6137, 4
        %v6143 = vshrl.u32 %v5983, 16
        %v6145 = vrot.slane %v6143, 7
        %v6146 = vshll.u32 %v5983, 16
        %v6148 = vor.u32 %v6145, %v6146
        %v6149 = vsel %vm576, %v6141, %v6148
        %v6150 = vrot.slane %v6145, 4
        %v6152 = vshrl.u32 %v5984, 16
        %v6154 = vrot.slane %v6152, 7
        %v6155 = vshll.u32 %v5984, 16
        %v6157 = vor.u32 %v6154, %v6155
        %v6158 = vrot.slane %v6154, 4
        %v6160 = vshrl.u32 %v5985, 16
        %v6162 = vrot.slane %v6160, 7
        %v6163 = vshll.u32 %v5985, 16
        %v6165 = vor.u32 %v6162, %v6163
        %v6166 = vsel %vm576, %v6158, %v6165
        %v6167 = vrot.slane %v6162, 4
        %v6169 = vshrl.u32 %v5986, 16
        %v6171 = vrot.slane %v6169, 7
        %v6172 = vshll.u32 %v5986, 16
        %v6174 = vor.u32 %v6171, %v6172
        %v6175 = vrot.slane %v6171, 4
        %v6177 = vshrl.u32 %v5987, 16
        %v6179 = vrot.slane %v6177, 7
        %v6180 = vshll.u32 %v5987, 16
        %v6182 = vor.u32 %v6179, %v6180
        %v6183 = vsel %vm576, %v6175, %v6182
        %v6184 = vrot.slane %v6179, 4
        %v6186 = vshrl.u32 %v5988, 16
        %v6188 = vrot.slane %v6186, 7
        %v6189 = vshll.u32 %v5988, 16
        %v6191 = vor.u32 %v6188, %v6189
        %v6192 = vrot.slane %v6188, 4
        %v6194 = vshrl.u32 %v5989, 16
        %v6196 = vrot.slane %v6194, 7
        %v6197 = vshll.u32 %v5989, 16
        %v6199 = vor.u32 %v6196, %v6197
        %v6200 = vsel %vm576, %v6192, %v6199
        %v6201 = vrot.slane %v6196, 4
        %v6203 = vshrl.u32 %v5990, 16
        %v6205 = vrot.slane %v6203, 7
        %v6206 = vshll.u32 %v5990, 16
        %v6208 = vor.u32 %v6205, %v6206
        %v6209 = vrot.slane %v6205, 4
        %v6211 = vshrl.u32 %v5991, 16
        %v6213 = vrot.slane %v6211, 7
        %v6214 = vshll.u32 %v5991, 16
        %v6216 = vor.u32 %v6213, %v6214
        %v6217 = vsel %vm576, %v6209, %v6216
        %v6218 = vrot.slane %v6213, 4
        %v6220 = vshrl.u32 %v5992, 16
        %v6222 = vrot.slane %v6220, 7
        %v6223 = vshll.u32 %v5992, 16
        %v6225 = vor.u32 %v6222, %v6223
        %v6226 = vrot.slane %v6222, 4
        %v6228 = vshrl.u32 %v5993, 16
        %v6230 = vrot.slane %v6228, 7
        %v6231 = vshll.u32 %v5993, 16
        %v6233 = vor.u32 %v6230, %v6231
        %v6234 = vsel %vm576, %v6226, %v6233
        %v6235 = vrot.slane %v6230, 4
        %v6237 = vshrl.u32 %v5994, 16
        %v6239 = vrot.slane %v6237, 7
        %v6240 = vshll.u32 %v5994, 16
        %v6242 = vor.u32 %v6239, %v6240
        %v6243 = vrot.slane %v6239, 4
        %v6245 = vshrl.u32 %v5995, 16
        %v6247 = vrot.slane %v6245, 7
        %v6248 = vshll.u32 %v5995, 16
        %v6250 = vor.u32 %v6247, %v6248
        %v6251 = vsel %vm576, %v6243, %v6250
        %v6252 = vrot.slane %v6247, 4
        %v6254 = vshrl.u32 %v5996, 16
        %v6256 = vrot.slane %v6254, 7
        %v6257 = vshll.u32 %v5996, 16
        %v6259 = vor.u32 %v6256, %v6257
        %v6260 = vrot.slane %v6256, 4
        %v6262 = vshrl.u32 %v5997, 16
        %v6264 = vrot.slane %v6262, 7
        %v6265 = vshll.u32 %v5997, 16
        %v6267 = vor.u32 %v6264, %v6265
        %v6268 = vsel %vm576, %v6260, %v6267
        %v6269 = vrot.slane %v6264, 4
        %v6318 = vld [vmem:[%s897] sm:$0xf]
        %v6319 = vsel %vm899, %v6004, %v6318
        %6320 = vst [vmem:[%s897] sm:$0xf] %v6319
        %6321 = vst [vmem:[%s897 + $0x4] sm:$0xf] %v6013
        %v6322 = vld [vmem:[%s897 + $0x8] sm:$0x1]
        %v6323 = vsel %vm336, %v6014, %v6322
        %6324 = vst [vmem:[%s897 + $0x8] sm:$0x1] %v6323
        %v6325 = vld [vmem:[%s897 + $0xc] sm:$0xf]
        %v6326 = vsel %vm899, %v6021, %v6325
        %6327 = vst [vmem:[%s897 + $0xc] sm:$0xf] %v6326
        %6328 = vst [vmem:[%s897 + $0x10] sm:$0xf] %v6030
        %v6329 = vld [vmem:[%s897 + $0x14] sm:$0x1]
        %v6330 = vsel %vm336, %v6031, %v6329
        %6331 = vst [vmem:[%s897 + $0x14] sm:$0x1] %v6330
        %v6332 = vld [vmem:[%s897 + $0x18] sm:$0xf]
        %v6333 = vsel %vm899, %v6038, %v6332
        %6334 = vst [vmem:[%s897 + $0x18] sm:$0xf] %v6333
        %6335 = vst [vmem:[%s897 + $0x1c] sm:$0xf] %v6047
        %v6336 = vld [vmem:[%s897 + $0x20] sm:$0x1]
        %v6337 = vsel %vm336, %v6048, %v6336
        %6338 = vst [vmem:[%s897 + $0x20] sm:$0x1] %v6337
        %v6339 = vld [vmem:[%s897 + $0x24] sm:$0xf]
        %v6340 = vsel %vm899, %v6055, %v6339
        %6341 = vst [vmem:[%s897 + $0x24] sm:$0xf] %v6340
        %6342 = vst [vmem:[%s897 + $0x28] sm:$0xf] %v6064
        %v6343 = vld [vmem:[%s897 + $0x2c] sm:$0x1]
        %v6344 = vsel %vm336, %v6065, %v6343
        %6345 = vst [vmem:[%s897 + $0x2c] sm:$0x1] %v6344
        %v6346 = vld [vmem:[%s897 + $0x30] sm:$0xf]
        %v6347 = vsel %vm899, %v6072, %v6346
        %6348 = vst [vmem:[%s897 + $0x30] sm:$0xf] %v6347
        %6349 = vst [vmem:[%s897 + $0x34] sm:$0xf] %v6081
        %v6350 = vld [vmem:[%s897 + $0x38] sm:$0x1]
        %v6351 = vsel %vm336, %v6082, %v6350
        %6352 = vst [vmem:[%s897 + $0x38] sm:$0x1] %v6351
        %v6353 = vld [vmem:[%s897 + $0x3c] sm:$0xf]
        %v6354 = vsel %vm899, %v6089, %v6353
        %6355 = vst [vmem:[%s897 + $0x3c] sm:$0xf] %v6354
        %6356 = vst [vmem:[%s897 + $0x40] sm:$0xf] %v6098
        %v6357 = vld [vmem:[%s897 + $0x44] sm:$0x1]
        %v6358 = vsel %vm336, %v6099, %v6357
        %6359 = vst [vmem:[%s897 + $0x44] sm:$0x1] %v6358
        %v6360 = vld [vmem:[%s897 + $0x48] sm:$0xf]
        %v6361 = vsel %vm899, %v6106, %v6360
        %6362 = vst [vmem:[%s897 + $0x48] sm:$0xf] %v6361
        %6363 = vst [vmem:[%s897 + $0x4c] sm:$0xf] %v6115
        %v6364 = vld [vmem:[%s897 + $0x50] sm:$0x1]
        %v6365 = vsel %vm336, %v6116, %v6364
        %6366 = vst [vmem:[%s897 + $0x50] sm:$0x1] %v6365
        %v6367 = vld [vmem:[%s897 + $0x54] sm:$0xf]
        %v6368 = vsel %vm899, %v6123, %v6367
        %6369 = vst [vmem:[%s897 + $0x54] sm:$0xf] %v6368
        %6370 = vst [vmem:[%s897 + $0x58] sm:$0xf] %v6132
        %v6371 = vld [vmem:[%s897 + $0x5c] sm:$0x1]
        %v6372 = vsel %vm336, %v6133, %v6371
        %6373 = vst [vmem:[%s897 + $0x5c] sm:$0x1] %v6372
        %v6374 = vld [vmem:[%s897 + $0x60] sm:$0xf]
        %v6375 = vsel %vm899, %v6140, %v6374
        %6376 = vst [vmem:[%s897 + $0x60] sm:$0xf] %v6375
        %6377 = vst [vmem:[%s897 + $0x64] sm:$0xf] %v6149
        %v6378 = vld [vmem:[%s897 + $0x68] sm:$0x1]
        %v6379 = vsel %vm336, %v6150, %v6378
        %6380 = vst [vmem:[%s897 + $0x68] sm:$0x1] %v6379
        %v6381 = vld [vmem:[%s897 + $0x6c] sm:$0xf]
        %v6382 = vsel %vm899, %v6157, %v6381
        %6383 = vst [vmem:[%s897 + $0x6c] sm:$0xf] %v6382
        %6384 = vst [vmem:[%s897 + $0x70] sm:$0xf] %v6166
        %v6385 = vld [vmem:[%s897 + $0x74] sm:$0x1]
        %v6386 = vsel %vm336, %v6167, %v6385
        %6387 = vst [vmem:[%s897 + $0x74] sm:$0x1] %v6386
        %v6388 = vld [vmem:[%s897 + $0x78] sm:$0xf]
        %v6389 = vsel %vm899, %v6174, %v6388
        %6390 = vst [vmem:[%s897 + $0x78] sm:$0xf] %v6389
        %6391 = vst [vmem:[%s897 + $0x7c] sm:$0xf] %v6183
        %v6392 = vld [vmem:[%s897 + $0x80] sm:$0x1]
        %v6393 = vsel %vm336, %v6184, %v6392
        %6394 = vst [vmem:[%s897 + $0x80] sm:$0x1] %v6393
        %v6395 = vld [vmem:[%s897 + $0x84] sm:$0xf]
        %v6396 = vsel %vm899, %v6191, %v6395
        %6397 = vst [vmem:[%s897 + $0x84] sm:$0xf] %v6396
        %6398 = vst [vmem:[%s897 + $0x88] sm:$0xf] %v6200
        %v6399 = vld [vmem:[%s897 + $0x8c] sm:$0x1]
        %v6400 = vsel %vm336, %v6201, %v6399
        %6401 = vst [vmem:[%s897 + $0x8c] sm:$0x1] %v6400
        %v6402 = vld [vmem:[%s897 + $0x90] sm:$0xf]
        %v6403 = vsel %vm899, %v6208, %v6402
        %6404 = vst [vmem:[%s897 + $0x90] sm:$0xf] %v6403
        %6405 = vst [vmem:[%s897 + $0x94] sm:$0xf] %v6217
        %v6406 = vld [vmem:[%s897 + $0x98] sm:$0x1]
        %v6407 = vsel %vm336, %v6218, %v6406
        %6408 = vst [vmem:[%s897 + $0x98] sm:$0x1] %v6407
        %v6409 = vld [vmem:[%s897 + $0x9c] sm:$0xf]
        %v6410 = vsel %vm899, %v6225, %v6409
        %6411 = vst [vmem:[%s897 + $0x9c] sm:$0xf] %v6410
        %6412 = vst [vmem:[%s897 + $0xa0] sm:$0xf] %v6234
        %v6413 = vld [vmem:[%s897 + $0xa4] sm:$0x1]
        %v6414 = vsel %vm336, %v6235, %v6413
        %6415 = vst [vmem:[%s897 + $0xa4] sm:$0x1] %v6414
        %v6416 = vld [vmem:[%s897 + $0xa8] sm:$0xf]
        %v6417 = vsel %vm899, %v6242, %v6416
        %6418 = vst [vmem:[%s897 + $0xa8] sm:$0xf] %v6417
        %6419 = vst [vmem:[%s897 + $0xac] sm:$0xf] %v6251
        %v6420 = vld [vmem:[%s897 + $0xb0] sm:$0x1]
        %v6421 = vsel %vm336, %v6252, %v6420
        %6422 = vst [vmem:[%s897 + $0xb0] sm:$0x1] %v6421
        %v6423 = vld [vmem:[%s897 + $0xb4] sm:$0xf]
        %v6424 = vsel %vm899, %v6259, %v6423
        %6425 = vst [vmem:[%s897 + $0xb4] sm:$0xf] %v6424
        %6426 = vst [vmem:[%s897 + $0xb8] sm:$0xf] %v6268
        %v6427 = vld [vmem:[%s897 + $0xbc] sm:$0x1]
        %v6428 = vsel %vm336, %v6269, %v6427
        %6429 = vst [vmem:[%s897 + $0xbc] sm:$0x1] %v6428
        %v6430 = vld [vmem:[#allocation2] sm:$0xf]
        %v6431 = vld [vmem:[#allocation2 + $0x4] sm:$0xf]
        %v6432 = vld [vmem:[#allocation2 + $0xc] sm:$0xf]
        %v6433 = vld [vmem:[#allocation2 + $0x10] sm:$0xf]
        %v6434 = vld [vmem:[#allocation2 + $0x18] sm:$0xf]
        %v6435 = vld [vmem:[#allocation2 + $0x1c] sm:$0xf]
        %v6436 = vld [vmem:[#allocation2 + $0x24] sm:$0xf]
        %v6437 = vld [vmem:[#allocation2 + $0x28] sm:$0xf]
        %v6438 = vld [vmem:[#allocation2 + $0x30] sm:$0xf]
        %v6439 = vld [vmem:[#allocation2 + $0x34] sm:$0xf]
        %v6440 = vld [vmem:[#allocation2 + $0x3c] sm:$0xf]
        %v6441 = vld [vmem:[#allocation2 + $0x40] sm:$0xf]
        %v6442 = vld [vmem:[#allocation2 + $0x48] sm:$0xf]
        %v6443 = vld [vmem:[#allocation2 + $0x4c] sm:$0xf]
        %v6444 = vld [vmem:[#allocation2 + $0x54] sm:$0xf]
        %v6445 = vld [vmem:[#allocation2 + $0x58] sm:$0xf]
        %v6446 = vld [vmem:[#allocation2 + $0x60] sm:$0xf]
        %v6447 = vld [vmem:[#allocation2 + $0x64] sm:$0xf]
        %v6448 = vld [vmem:[#allocation2 + $0x6c] sm:$0xf]
        %v6449 = vld [vmem:[#allocation2 + $0x70] sm:$0xf]
        %v6450 = vld [vmem:[#allocation2 + $0x78] sm:$0xf]
        %v6451 = vld [vmem:[#allocation2 + $0x7c] sm:$0xf]
        %v6452 = vld [vmem:[#allocation2 + $0x84] sm:$0xf]
        %v6453 = vld [vmem:[#allocation2 + $0x88] sm:$0xf]
        %v6454 = vld [vmem:[#allocation2 + $0x90] sm:$0xf]
        %v6455 = vld [vmem:[#allocation2 + $0x94] sm:$0xf]
        %v6456 = vld [vmem:[#allocation2 + $0x9c] sm:$0xf]
        %v6457 = vld [vmem:[#allocation2 + $0xa0] sm:$0xf]
        %v6458 = vld [vmem:[#allocation2 + $0xa8] sm:$0xf]
        %v6459 = vld [vmem:[#allocation2 + $0xac] sm:$0xf]
        %v6460 = vld [vmem:[#allocation2 + $0xb4] sm:$0xf]
        %v6461 = vld [vmem:[#allocation2 + $0xb8] sm:$0xf]
        %6462 = vst [vmem:[#allocation3] sm:$0xf] %v6430
        %6463 = vst [vmem:[#allocation3 + $0x24] sm:$0xf] %v6431
        %6464 = vst [vmem:[#allocation3 + $0x48] sm:$0xf] %v6432
        %6465 = vst [vmem:[#allocation3 + $0x6c] sm:$0xf] %v6433
        %6466 = vst [vmem:[#allocation3 + $0x90] sm:$0xf] %v6434
        %6467 = vst [vmem:[#allocation3 + $0xb4] sm:$0xf] %v6435
        %6468 = vst [vmem:[#allocation3 + $0xd8] sm:$0xf] %v6436
        %6469 = vst [vmem:[#allocation3 + $0xfc] sm:$0xf] %v6437
        %6470 = vst [vmem:[#allocation3 + $0x120] sm:$0xf] %v6438
        %6471 = vst [vmem:[#allocation3 + $0x144] sm:$0xf] %v6439
        %6472 = vst [vmem:[#allocation3 + $0x168] sm:$0xf] %v6440
        %6473 = vst [vmem:[#allocation3 + $0x18c] sm:$0xf] %v6441
        %6474 = vst [vmem:[#allocation3 + $0x1b0] sm:$0xf] %v6442
        %6475 = vst [vmem:[#allocation3 + $0x1d4] sm:$0xf] %v6443
        %6476 = vst [vmem:[#allocation3 + $0x1f8] sm:$0xf] %v6444
        %6477 = vst [vmem:[#allocation3 + $0x21c] sm:$0xf] %v6445
        %6478 = vst [vmem:[#allocation3 + $0x240] sm:$0xf] %v6446
        %6479 = vst [vmem:[#allocation3 + $0x264] sm:$0xf] %v6447
        %6480 = vst [vmem:[#allocation3 + $0x288] sm:$0xf] %v6448
        %6481 = vst [vmem:[#allocation3 + $0x2ac] sm:$0xf] %v6449
        %6482 = vst [vmem:[#allocation3 + $0x2d0] sm:$0xf] %v6450
        %6483 = vst [vmem:[#allocation3 + $0x2f4] sm:$0xf] %v6451
        %6484 = vst [vmem:[#allocation3 + $0x318] sm:$0xf] %v6452
        %6485 = vst [vmem:[#allocation3 + $0x33c] sm:$0xf] %v6453
        %6486 = vst [vmem:[#allocation3 + $0x360] sm:$0xf] %v6454
        %6487 = vst [vmem:[#allocation3 + $0x384] sm:$0xf] %v6455
        %6488 = vst [vmem:[#allocation3 + $0x3a8] sm:$0xf] %v6456
        %6489 = vst [vmem:[#allocation3 + $0x3cc] sm:$0xf] %v6457
        %6490 = vst [vmem:[#allocation3 + $0x3f0] sm:$0xf] %v6458
        %6491 = vst [vmem:[#allocation3 + $0x414] sm:$0xf] %v6459
        %6492 = vst [vmem:[#allocation3 + $0x438] sm:$0xf] %v6460
        %6493 = vst [vmem:[#allocation3 + $0x45c] sm:$0xf] %v6461
        %v6494 = vld [vmem:[#allocation2] sm:$0xf]
        %v6495 = vld [vmem:[#allocation2 + $0x4] sm:$0xf]
        %v6496 = vld [vmem:[#allocation2 + $0x8] sm:$0x1]
        %v6497 = vld [vmem:[#allocation2 + $0xc] sm:$0xf]
        %v6498 = vld [vmem:[#allocation2 + $0x10] sm:$0xf]
        %v6499 = vld [vmem:[#allocation2 + $0x14] sm:$0x1]
        %v6500 = vld [vmem:[#allocation2 + $0x18] sm:$0xf]
        %v6501 = vld [vmem:[#allocation2 + $0x1c] sm:$0xf]
        %v6502 = vld [vmem:[#allocation2 + $0x20] sm:$0x1]
        %v6503 = vld [vmem:[#allocation2 + $0x24] sm:$0xf]
        %v6504 = vld [vmem:[#allocation2 + $0x28] sm:$0xf]
        %v6505 = vld [vmem:[#allocation2 + $0x2c] sm:$0x1]
        %v6506 = vld [vmem:[#allocation2 + $0x30] sm:$0xf]
        %v6507 = vld [vmem:[#allocation2 + $0x34] sm:$0xf]
        %v6508 = vld [vmem:[#allocation2 + $0x38] sm:$0x1]
        %v6509 = vld [vmem:[#allocation2 + $0x3c] sm:$0xf]
        %v6510 = vld [vmem:[#allocation2 + $0x40] sm:$0xf]
        %v6511 = vld [vmem:[#allocation2 + $0x44] sm:$0x1]
        %v6512 = vld [vmem:[#allocation2 + $0x48] sm:$0xf]
        %v6513 = vld [vmem:[#allocation2 + $0x4c] sm:$0xf]
        %v6514 = vld [vmem:[#allocation2 + $0x50] sm:$0x1]
        %v6515 = vld [vmem:[#allocation2 + $0x54] sm:$0xf]
        %v6516 = vld [vmem:[#allocation2 + $0x58] sm:$0xf]
        %v6517 = vld [vmem:[#allocation2 + $0x5c] sm:$0x1]
        %v6518 = vld [vmem:[#allocation2 + $0x60] sm:$0xf]
        %v6519 = vld [vmem:[#allocation2 + $0x64] sm:$0xf]
        %v6520 = vld [vmem:[#allocation2 + $0x68] sm:$0x1]
        %v6521 = vld [vmem:[#allocation2 + $0x6c] sm:$0xf]
        %v6522 = vld [vmem:[#allocation2 + $0x70] sm:$0xf]
        %v6523 = vld [vmem:[#allocation2 + $0x74] sm:$0x1]
        %v6524 = vld [vmem:[#allocation2 + $0x78] sm:$0xf]
        %v6525 = vld [vmem:[#allocation2 + $0x7c] sm:$0xf]
        %v6526 = vld [vmem:[#allocation2 + $0x80] sm:$0x1]
        %v6527 = vld [vmem:[#allocation2 + $0x84] sm:$0xf]
        %v6528 = vld [vmem:[#allocation2 + $0x88] sm:$0xf]
        %v6529 = vld [vmem:[#allocation2 + $0x8c] sm:$0x1]
        %v6530 = vld [vmem:[#allocation2 + $0x90] sm:$0xf]
        %v6531 = vld [vmem:[#allocation2 + $0x94] sm:$0xf]
        %v6532 = vld [vmem:[#allocation2 + $0x98] sm:$0x1]
        %v6533 = vld [vmem:[#allocation2 + $0x9c] sm:$0xf]
        %v6534 = vld [vmem:[#allocation2 + $0xa0] sm:$0xf]
        %v6535 = vld [vmem:[#allocation2 + $0xa4] sm:$0x1]
        %v6536 = vld [vmem:[#allocation2 + $0xa8] sm:$0xf]
        %v6537 = vld [vmem:[#allocation2 + $0xac] sm:$0xf]
        %v6538 = vld [vmem:[#allocation2 + $0xb0] sm:$0x1]
        %v6539 = vld [vmem:[#allocation2 + $0xb4] sm:$0xf]
        %v6540 = vld [vmem:[#allocation2 + $0xb8] sm:$0xf]
        %v6541 = vld [vmem:[#allocation2 + $0xbc] sm:$0x1]
        %v6543 = vshrl.u32 %v6494, 16
        %v6545 = vrot.slane %v6543, 4
        %v6546 = vshll.u32 %v6494, 16
        %v6548 = vrot.slane %v6546, 5
        %v6549 = vor.u32 %v6545, %v6548
        %v6550 = vrot.slane %v6549, 4
        %v6552 = vshll.u32 %v6495, 16
        %v6554 = vrot.slane %v6552, 5
        %v6555 = vsel %vm1126, %v6550, %v6554
        %v6556 = vshrl.u32 %v6495, 16
        %v6558 = vrot.slane %v6556, 4
        %v6559 = vor.u32 %v6558, %v6554
        %v6560 = vrot.slane %v6559, 4
        %v6562 = vshll.u32 %v6496, 16
        %v6564 = vrot.slane %v6562, 5
        %v6565 = vsel %vm1126, %v6560, %v6564
        %v6567 = vshrl.u32 %v6497, 16
        %v6569 = vrot.slane %v6567, 4
        %v6570 = vshll.u32 %v6497, 16
        %v6572 = vrot.slane %v6570, 5
        %v6573 = vor.u32 %v6569, %v6572
        %v6574 = vrot.slane %v6573, 4
        %v6576 = vshll.u32 %v6498, 16
        %v6578 = vrot.slane %v6576, 5
        %v6579 = vsel %vm1126, %v6574, %v6578
        %v6580 = vshrl.u32 %v6498, 16
        %v6582 = vrot.slane %v6580, 4
        %v6583 = vor.u32 %v6582, %v6578
        %v6584 = vrot.slane %v6583, 4
        %v6586 = vshll.u32 %v6499, 16
        %v6588 = vrot.slane %v6586, 5
        %v6589 = vsel %vm1126, %v6584, %v6588
        %v6591 = vshrl.u32 %v6500, 16
        %v6593 = vrot.slane %v6591, 4
        %v6594 = vshll.u32 %v6500, 16
        %v6596 = vrot.slane %v6594, 5
        %v6597 = vor.u32 %v6593, %v6596
        %v6598 = vrot.slane %v6597, 4
        %v6600 = vshll.u32 %v6501, 16
        %v6602 = vrot.slane %v6600, 5
        %v6603 = vsel %vm1126, %v6598, %v6602
        %v6604 = vshrl.u32 %v6501, 16
        %v6606 = vrot.slane %v6604, 4
        %v6607 = vor.u32 %v6606, %v6602
        %v6608 = vrot.slane %v6607, 4
        %v6610 = vshll.u32 %v6502, 16
        %v6612 = vrot.slane %v6610, 5
        %v6613 = vsel %vm1126, %v6608, %v6612
        %v6615 = vshrl.u32 %v6503, 16
        %v6617 = vrot.slane %v6615, 4
        %v6618 = vshll.u32 %v6503, 16
        %v6620 = vrot.slane %v6618, 5
        %v6621 = vor.u32 %v6617, %v6620
        %v6622 = vrot.slane %v6621, 4
        %v6624 = vshll.u32 %v6504, 16
        %v6626 = vrot.slane %v6624, 5
        %v6627 = vsel %vm1126, %v6622, %v6626
        %v6628 = vshrl.u32 %v6504, 16
        %v6630 = vrot.slane %v6628, 4
        %v6631 = vor.u32 %v6630, %v6626
        %v6632 = vrot.slane %v6631, 4
        %v6634 = vshll.u32 %v6505, 16
        %v6636 = vrot.slane %v6634, 5
        %v6637 = vsel %vm1126, %v6632, %v6636
        %v6639 = vshrl.u32 %v6506, 16
        %v6641 = vrot.slane %v6639, 4
        %v6642 = vshll.u32 %v6506, 16
        %v6644 = vrot.slane %v6642, 5
        %v6645 = vor.u32 %v6641, %v6644
        %v6646 = vrot.slane %v6645, 4
        %v6648 = vshll.u32 %v6507, 16
        %v6650 = vrot.slane %v6648, 5
        %v6651 = vsel %vm1126, %v6646, %v6650
        %v6652 = vshrl.u32 %v6507, 16
        %v6654 = vrot.slane %v6652, 4
        %v6655 = vor.u32 %v6654, %v6650
        %v6656 = vrot.slane %v6655, 4
        %v6658 = vshll.u32 %v6508, 16
        %v6660 = vrot.slane %v6658, 5
        %v6661 = vsel %vm1126, %v6656, %v6660
        %v6663 = vshrl.u32 %v6509, 16
        %v6665 = vrot.slane %v6663, 4
        %v6666 = vshll.u32 %v6509, 16
        %v6668 = vrot.slane %v6666, 5
        %v6669 = vor.u32 %v6665, %v6668
        %v6670 = vrot.slane %v6669, 4
        %v6672 = vshll.u32 %v6510, 16
        %v6674 = vrot.slane %v6672, 5
        %v6675 = vsel %vm1126, %v6670, %v6674
        %v6676 = vshrl.u32 %v6510, 16
        %v6678 = vrot.slane %v6676, 4
        %v6679 = vor.u32 %v6678, %v6674
        %v6680 = vrot.slane %v6679, 4
        %v6682 = vshll.u32 %v6511, 16
        %v6684 = vrot.slane %v6682, 5
        %v6685 = vsel %vm1126, %v6680, %v6684
        %v6687 = vshrl.u32 %v6512, 16
        %v6689 = vrot.slane %v6687, 4
        %v6690 = vshll.u32 %v6512, 16
        %v6692 = vrot.slane %v6690, 5
        %v6693 = vor.u32 %v6689, %v6692
        %v6694 = vrot.slane %v6693, 4
        %v6696 = vshll.u32 %v6513, 16
        %v6698 = vrot.slane %v6696, 5
        %v6699 = vsel %vm1126, %v6694, %v6698
        %v6700 = vshrl.u32 %v6513, 16
        %v6702 = vrot.slane %v6700, 4
        %v6703 = vor.u32 %v6702, %v6698
        %v6704 = vrot.slane %v6703, 4
        %v6706 = vshll.u32 %v6514, 16
        %v6708 = vrot.slane %v6706, 5
        %v6709 = vsel %vm1126, %v6704, %v6708
        %v6711 = vshrl.u32 %v6515, 16
        %v6713 = vrot.slane %v6711, 4
        %v6714 = vshll.u32 %v6515, 16
        %v6716 = vrot.slane %v6714, 5
        %v6717 = vor.u32 %v6713, %v6716
        %v6718 = vrot.slane %v6717, 4
        %v6720 = vshll.u32 %v6516, 16
        %v6722 = vrot.slane %v6720, 5
        %v6723 = vsel %vm1126, %v6718, %v6722
        %v6724 = vshrl.u32 %v6516, 16
        %v6726 = vrot.slane %v6724, 4
        %v6727 = vor.u32 %v6726, %v6722
        %v6728 = vrot.slane %v6727, 4
        %v6730 = vshll.u32 %v6517, 16
        %v6732 = vrot.slane %v6730, 5
        %v6733 = vsel %vm1126, %v6728, %v6732
        %v6735 = vshrl.u32 %v6518, 16
        %v6737 = vrot.slane %v6735, 4
        %v6738 = vshll.u32 %v6518, 16
        %v6740 = vrot.slane %v6738, 5
        %v6741 = vor.u32 %v6737, %v6740
        %v6742 = vrot.slane %v6741, 4
        %v6744 = vshll.u32 %v6519, 16
        %v6746 = vrot.slane %v6744, 5
        %v6747 = vsel %vm1126, %v6742, %v6746
        %v6748 = vshrl.u32 %v6519, 16
        %v6750 = vrot.slane %v6748, 4
        %v6751 = vor.u32 %v6750, %v6746
        %v6752 = vrot.slane %v6751, 4
        %v6754 = vshll.u32 %v6520, 16
        %v6756 = vrot.slane %v6754, 5
        %v6757 = vsel %vm1126, %v6752, %v6756
        %v6759 = vshrl.u32 %v6521, 16
        %v6761 = vrot.slane %v6759, 4
        %v6762 = vshll.u32 %v6521, 16
        %v6764 = vrot.slane %v6762, 5
        %v6765 = vor.u32 %v6761, %v6764
        %v6766 = vrot.slane %v6765, 4
        %v6768 = vshll.u32 %v6522, 16
        %v6770 = vrot.slane %v6768, 5
        %v6771 = vsel %vm1126, %v6766, %v6770
        %v6772 = vshrl.u32 %v6522, 16
        %v6774 = vrot.slane %v6772, 4
        %v6775 = vor.u32 %v6774, %v6770
        %v6776 = vrot.slane %v6775, 4
        %v6778 = vshll.u32 %v6523, 16
        %v6780 = vrot.slane %v6778, 5
        %v6781 = vsel %vm1126, %v6776, %v6780
        %v6783 = vshrl.u32 %v6524, 16
        %v6785 = vrot.slane %v6783, 4
        %v6786 = vshll.u32 %v6524, 16
        %v6788 = vrot.slane %v6786, 5
        %v6789 = vor.u32 %v6785, %v6788
        %v6790 = vrot.slane %v6789, 4
        %v6792 = vshll.u32 %v6525, 16
        %v6794 = vrot.slane %v6792, 5
        %v6795 = vsel %vm1126, %v6790, %v6794
        %v6796 = vshrl.u32 %v6525, 16
        %v6798 = vrot.slane %v6796, 4
        %v6799 = vor.u32 %v6798, %v6794
        %v6800 = vrot.slane %v6799, 4
        %v6802 = vshll.u32 %v6526, 16
        %v6804 = vrot.slane %v6802, 5
        %v6805 = vsel %vm1126, %v6800, %v6804
        %v6807 = vshrl.u32 %v6527, 16
        %v6809 = vrot.slane %v6807, 4
        %v6810 = vshll.u32 %v6527, 16
        %v6812 = vrot.slane %v6810, 5
        %v6813 = vor.u32 %v6809, %v6812
        %v6814 = vrot.slane %v6813, 4
        %v6816 = vshll.u32 %v6528, 16
        %v6818 = vrot.slane %v6816, 5
        %v6819 = vsel %vm1126, %v6814, %v6818
        %v6820 = vshrl.u32 %v6528, 16
        %v6822 = vrot.slane %v6820, 4
        %v6823 = vor.u32 %v6822, %v6818
        %v6824 = vrot.slane %v6823, 4
        %v6826 = vshll.u32 %v6529, 16
        %v6828 = vrot.slane %v6826, 5
        %v6829 = vsel %vm1126, %v6824, %v6828
        %v6831 = vshrl.u32 %v6530, 16
        %v6833 = vrot.slane %v6831, 4
        %v6834 = vshll.u32 %v6530, 16
        %v6836 = vrot.slane %v6834, 5
        %v6837 = vor.u32 %v6833, %v6836
        %v6838 = vrot.slane %v6837, 4
        %v6840 = vshll.u32 %v6531, 16
        %v6842 = vrot.slane %v6840, 5
        %v6843 = vsel %vm1126, %v6838, %v6842
        %v6844 = vshrl.u32 %v6531, 16
        %v6846 = vrot.slane %v6844, 4
        %v6847 = vor.u32 %v6846, %v6842
        %v6848 = vrot.slane %v6847, 4
        %v6850 = vshll.u32 %v6532, 16
        %v6852 = vrot.slane %v6850, 5
        %v6853 = vsel %vm1126, %v6848, %v6852
        %v6855 = vshrl.u32 %v6533, 16
        %v6857 = vrot.slane %v6855, 4
        %v6858 = vshll.u32 %v6533, 16
        %v6860 = vrot.slane %v6858, 5
        %v6861 = vor.u32 %v6857, %v6860
        %v6862 = vrot.slane %v6861, 4
        %v6864 = vshll.u32 %v6534, 16
        %v6866 = vrot.slane %v6864, 5
        %v6867 = vsel %vm1126, %v6862, %v6866
        %v6868 = vshrl.u32 %v6534, 16
        %v6870 = vrot.slane %v6868, 4
        %v6871 = vor.u32 %v6870, %v6866
        %v6872 = vrot.slane %v6871, 4
        %v6874 = vshll.u32 %v6535, 16
        %v6876 = vrot.slane %v6874, 5
        %v6877 = vsel %vm1126, %v6872, %v6876
        %v6879 = vshrl.u32 %v6536, 16
        %v6881 = vrot.slane %v6879, 4
        %v6882 = vshll.u32 %v6536, 16
        %v6884 = vrot.slane %v6882, 5
        %v6885 = vor.u32 %v6881, %v6884
        %v6886 = vrot.slane %v6885, 4
        %v6888 = vshll.u32 %v6537, 16
        %v6890 = vrot.slane %v6888, 5
        %v6891 = vsel %vm1126, %v6886, %v6890
        %v6892 = vshrl.u32 %v6537, 16
        %v6894 = vrot.slane %v6892, 4
        %v6895 = vor.u32 %v6894, %v6890
        %v6896 = vrot.slane %v6895, 4
        %v6898 = vshll.u32 %v6538, 16
        %v6900 = vrot.slane %v6898, 5
        %v6901 = vsel %vm1126, %v6896, %v6900
        %v6903 = vshrl.u32 %v6539, 16
        %v6905 = vrot.slane %v6903, 4
        %v6906 = vshll.u32 %v6539, 16
        %v6908 = vrot.slane %v6906, 5
        %v6909 = vor.u32 %v6905, %v6908
        %v6910 = vrot.slane %v6909, 4
        %v6912 = vshll.u32 %v6540, 16
        %v6914 = vrot.slane %v6912, 5
        %v6915 = vsel %vm1126, %v6910, %v6914
        %v6916 = vshrl.u32 %v6540, 16
        %v6918 = vrot.slane %v6916, 4
        %v6919 = vor.u32 %v6918, %v6914
        %v6920 = vrot.slane %v6919, 4
        %v6922 = vshll.u32 %v6541, 16
        %v6924 = vrot.slane %v6922, 5
        %v6925 = vsel %vm1126, %v6920, %v6924
        %6958 = vst [vmem:[#allocation3 + $0x4] sm:$0xf] %v6555
        %6959 = vst [vmem:[#allocation3 + $0x28] sm:$0xf] %v6565
        %6960 = vst [vmem:[#allocation3 + $0x4c] sm:$0xf] %v6579
        %6961 = vst [vmem:[#allocation3 + $0x70] sm:$0xf] %v6589
        %6962 = vst [vmem:[#allocation3 + $0x94] sm:$0xf] %v6603
        %6963 = vst [vmem:[#allocation3 + $0xb8] sm:$0xf] %v6613
        %6964 = vst [vmem:[#allocation3 + $0xdc] sm:$0xf] %v6627
        %6965 = vst [vmem:[#allocation3 + $0x100] sm:$0xf] %v6637
        %6966 = vst [vmem:[#allocation3 + $0x124] sm:$0xf] %v6651
        %6967 = vst [vmem:[#allocation3 + $0x148] sm:$0xf] %v6661
        %6968 = vst [vmem:[#allocation3 + $0x16c] sm:$0xf] %v6675
        %6969 = vst [vmem:[#allocation3 + $0x190] sm:$0xf] %v6685
        %6970 = vst [vmem:[#allocation3 + $0x1b4] sm:$0xf] %v6699
        %6971 = vst [vmem:[#allocation3 + $0x1d8] sm:$0xf] %v6709
        %6972 = vst [vmem:[#allocation3 + $0x1fc] sm:$0xf] %v6723
        %6973 = vst [vmem:[#allocation3 + $0x220] sm:$0xf] %v6733
        %6974 = vst [vmem:[#allocation3 + $0x244] sm:$0xf] %v6747
        %6975 = vst [vmem:[#allocation3 + $0x268] sm:$0xf] %v6757
        %6976 = vst [vmem:[#allocation3 + $0x28c] sm:$0xf] %v6771
        %6977 = vst [vmem:[#allocation3 + $0x2b0] sm:$0xf] %v6781
        %6978 = vst [vmem:[#allocation3 + $0x2d4] sm:$0xf] %v6795
        %6979 = vst [vmem:[#allocation3 + $0x2f8] sm:$0xf] %v6805
        %6980 = vst [vmem:[#allocation3 + $0x31c] sm:$0xf] %v6819
        %6981 = vst [vmem:[#allocation3 + $0x340] sm:$0xf] %v6829
        %6982 = vst [vmem:[#allocation3 + $0x364] sm:$0xf] %v6843
        %6983 = vst [vmem:[#allocation3 + $0x388] sm:$0xf] %v6853
        %6984 = vst [vmem:[#allocation3 + $0x3ac] sm:$0xf] %v6867
        %6985 = vst [vmem:[#allocation3 + $0x3d0] sm:$0xf] %v6877
        %6986 = vst [vmem:[#allocation3 + $0x3f4] sm:$0xf] %v6891
        %6987 = vst [vmem:[#allocation3 + $0x418] sm:$0xf] %v6901
        %6988 = vst [vmem:[#allocation3 + $0x43c] sm:$0xf] %v6915
        %6989 = vst [vmem:[#allocation3 + $0x460] sm:$0xf] %v6925
        %v6990 = vld [vmem:[#allocation2] sm:$0xe]
        %v6991 = vld [vmem:[#allocation2 + $0x4] sm:$0xf]
        %v6992 = vld [vmem:[#allocation2 + $0x8] sm:$0x1]
        %v6993 = vld [vmem:[#allocation2 + $0xc] sm:$0xe]
        %v6994 = vld [vmem:[#allocation2 + $0x10] sm:$0xf]
        %v6995 = vld [vmem:[#allocation2 + $0x14] sm:$0x1]
        %v6996 = vld [vmem:[#allocation2 + $0x18] sm:$0xe]
        %v6997 = vld [vmem:[#allocation2 + $0x1c] sm:$0xf]
        %v6998 = vld [vmem:[#allocation2 + $0x20] sm:$0x1]
        %v6999 = vld [vmem:[#allocation2 + $0x24] sm:$0xe]
        %v7000 = vld [vmem:[#allocation2 + $0x28] sm:$0xf]
        %v7001 = vld [vmem:[#allocation2 + $0x2c] sm:$0x1]
        %v7002 = vld [vmem:[#allocation2 + $0x30] sm:$0xe]
        %v7003 = vld [vmem:[#allocation2 + $0x34] sm:$0xf]
        %v7004 = vld [vmem:[#allocation2 + $0x38] sm:$0x1]
        %v7005 = vld [vmem:[#allocation2 + $0x3c] sm:$0xe]
        %v7006 = vld [vmem:[#allocation2 + $0x40] sm:$0xf]
        %v7007 = vld [vmem:[#allocation2 + $0x44] sm:$0x1]
        %v7008 = vld [vmem:[#allocation2 + $0x48] sm:$0xe]
        %v7009 = vld [vmem:[#allocation2 + $0x4c] sm:$0xf]
        %v7010 = vld [vmem:[#allocation2 + $0x50] sm:$0x1]
        %v7011 = vld [vmem:[#allocation2 + $0x54] sm:$0xe]
        %v7012 = vld [vmem:[#allocation2 + $0x58] sm:$0xf]
        %v7013 = vld [vmem:[#allocation2 + $0x5c] sm:$0x1]
        %v7014 = vld [vmem:[#allocation2 + $0x60] sm:$0xe]
        %v7015 = vld [vmem:[#allocation2 + $0x64] sm:$0xf]
        %v7016 = vld [vmem:[#allocation2 + $0x68] sm:$0x1]
        %v7017 = vld [vmem:[#allocation2 + $0x6c] sm:$0xe]
        %v7018 = vld [vmem:[#allocation2 + $0x70] sm:$0xf]
        %v7019 = vld [vmem:[#allocation2 + $0x74] sm:$0x1]
        %v7020 = vld [vmem:[#allocation2 + $0x78] sm:$0xe]
        %v7021 = vld [vmem:[#allocation2 + $0x7c] sm:$0xf]
        %v7022 = vld [vmem:[#allocation2 + $0x80] sm:$0x1]
        %v7023 = vld [vmem:[#allocation2 + $0x84] sm:$0xe]
        %v7024 = vld [vmem:[#allocation2 + $0x88] sm:$0xf]
        %v7025 = vld [vmem:[#allocation2 + $0x8c] sm:$0x1]
        %v7026 = vld [vmem:[#allocation2 + $0x90] sm:$0xe]
        %v7027 = vld [vmem:[#allocation2 + $0x94] sm:$0xf]
        %v7028 = vld [vmem:[#allocation2 + $0x98] sm:$0x1]
        %v7029 = vld [vmem:[#allocation2 + $0x9c] sm:$0xe]
        %v7030 = vld [vmem:[#allocation2 + $0xa0] sm:$0xf]
        %v7031 = vld [vmem:[#allocation2 + $0xa4] sm:$0x1]
        %v7032 = vld [vmem:[#allocation2 + $0xa8] sm:$0xe]
        %v7033 = vld [vmem:[#allocation2 + $0xac] sm:$0xf]
        %v7034 = vld [vmem:[#allocation2 + $0xb0] sm:$0x1]
        %v7035 = vld [vmem:[#allocation2 + $0xb4] sm:$0xe]
        %v7036 = vld [vmem:[#allocation2 + $0xb8] sm:$0xf]
        %v7037 = vld [vmem:[#allocation2 + $0xbc] sm:$0x1]
        %v7086 = vrot.slane %v6990, 5
        %v7087 = vrot.slane %v7086, 4
        %v7088 = vrot.slane %v6991, 5
        %v7089 = vsel %vm1673, %v7087, %v7088
        %v7090 = vrot.slane %v7088, 4
        %v7091 = vrot.slane %v6992, 5
        %v7092 = vsel %vm1673, %v7090, %v7091
        %v7093 = vrot.slane %v6993, 5
        %v7094 = vrot.slane %v7093, 4
        %v7095 = vrot.slane %v6994, 5
        %v7096 = vsel %vm1673, %v7094, %v7095
        %v7097 = vrot.slane %v7095, 4
        %v7098 = vrot.slane %v6995, 5
        %v7099 = vsel %vm1673, %v7097, %v7098
        %v7100 = vrot.slane %v6996, 5
        %v7101 = vrot.slane %v7100, 4
        %v7102 = vrot.slane %v6997, 5
        %v7103 = vsel %vm1673, %v7101, %v7102
        %v7104 = vrot.slane %v7102, 4
        %v7105 = vrot.slane %v6998, 5
        %v7106 = vsel %vm1673, %v7104, %v7105
        %v7107 = vrot.slane %v6999, 5
        %v7108 = vrot.slane %v7107, 4
        %v7109 = vrot.slane %v7000, 5
        %v7110 = vsel %vm1673, %v7108, %v7109
        %v7111 = vrot.slane %v7109, 4
        %v7112 = vrot.slane %v7001, 5
        %v7113 = vsel %vm1673, %v7111, %v7112
        %v7114 = vrot.slane %v7002, 5
        %v7115 = vrot.slane %v7114, 4
        %v7116 = vrot.slane %v7003, 5
        %v7117 = vsel %vm1673, %v7115, %v7116
        %v7118 = vrot.slane %v7116, 4
        %v7119 = vrot.slane %v7004, 5
        %v7120 = vsel %vm1673, %v7118, %v7119
        %v7121 = vrot.slane %v7005, 5
        %v7122 = vrot.slane %v7121, 4
        %v7123 = vrot.slane %v7006, 5
        %v7124 = vsel %vm1673, %v7122, %v7123
        %v7125 = vrot.slane %v7123, 4
        %v7126 = vrot.slane %v7007, 5
        %v7127 = vsel %vm1673, %v7125, %v7126
        %v7128 = vrot.slane %v7008, 5
        %v7129 = vrot.slane %v7128, 4
        %v7130 = vrot.slane %v7009, 5
        %v7131 = vsel %vm1673, %v7129, %v7130
        %v7132 = vrot.slane %v7130, 4
        %v7133 = vrot.slane %v7010, 5
        %v7134 = vsel %vm1673, %v7132, %v7133
        %v7135 = vrot.slane %v7011, 5
        %v7136 = vrot.slane %v7135, 4
        %v7137 = vrot.slane %v7012, 5
        %v7138 = vsel %vm1673, %v7136, %v7137
        %v7139 = vrot.slane %v7137, 4
        %v7140 = vrot.slane %v7013, 5
        %v7141 = vsel %vm1673, %v7139, %v7140
        %v7142 = vrot.slane %v7014, 5
        %v7143 = vrot.slane %v7142, 4
        %v7144 = vrot.slane %v7015, 5
        %v7145 = vsel %vm1673, %v7143, %v7144
        %v7146 = vrot.slane %v7144, 4
        %v7147 = vrot.slane %v7016, 5
        %v7148 = vsel %vm1673, %v7146, %v7147
        %v7149 = vrot.slane %v7017, 5
        %v7150 = vrot.slane %v7149, 4
        %v7151 = vrot.slane %v7018, 5
        %v7152 = vsel %vm1673, %v7150, %v7151
        %v7153 = vrot.slane %v7151, 4
        %v7154 = vrot.slane %v7019, 5
        %v7155 = vsel %vm1673, %v7153, %v7154
        %v7156 = vrot.slane %v7020, 5
        %v7157 = vrot.slane %v7156, 4
        %v7158 = vrot.slane %v7021, 5
        %v7159 = vsel %vm1673, %v7157, %v7158
        %v7160 = vrot.slane %v7158, 4
        %v7161 = vrot.slane %v7022, 5
        %v7162 = vsel %vm1673, %v7160, %v7161
        %v7163 = vrot.slane %v7023, 5
        %v7164 = vrot.slane %v7163, 4
        %v7165 = vrot.slane %v7024, 5
        %v7166 = vsel %vm1673, %v7164, %v7165
        %v7167 = vrot.slane %v7165, 4
        %v7168 = vrot.slane %v7025, 5
        %v7169 = vsel %vm1673, %v7167, %v7168
        %v7170 = vrot.slane %v7026, 5
        %v7171 = vrot.slane %v7170, 4
        %v7172 = vrot.slane %v7027, 5
        %v7173 = vsel %vm1673, %v7171, %v7172
        %v7174 = vrot.slane %v7172, 4
        %v7175 = vrot.slane %v7028, 5
        %v7176 = vsel %vm1673, %v7174, %v7175
        %v7177 = vrot.slane %v7029, 5
        %v7178 = vrot.slane %v7177, 4
        %v7179 = vrot.slane %v7030, 5
        %v7180 = vsel %vm1673, %v7178, %v7179
        %v7181 = vrot.slane %v7179, 4
        %v7182 = vrot.slane %v7031, 5
        %v7183 = vsel %vm1673, %v7181, %v7182
        %v7184 = vrot.slane %v7032, 5
        %v7185 = vrot.slane %v7184, 4
        %v7186 = vrot.slane %v7033, 5
        %v7187 = vsel %vm1673, %v7185, %v7186
        %v7188 = vrot.slane %v7186, 4
        %v7189 = vrot.slane %v7034, 5
        %v7190 = vsel %vm1673, %v7188, %v7189
        %v7191 = vrot.slane %v7035, 5
        %v7192 = vrot.slane %v7191, 4
        %v7193 = vrot.slane %v7036, 5
        %v7194 = vsel %vm1673, %v7192, %v7193
        %v7195 = vrot.slane %v7193, 4
        %v7196 = vrot.slane %v7037, 5
        %v7197 = vsel %vm1673, %v7195, %v7196
        %7230 = vst [vmem:[#allocation3 + $0x8] sm:$0xf] %v7089
        %7231 = vst [vmem:[#allocation3 + $0x2c] sm:$0xf] %v7092
        %7232 = vst [vmem:[#allocation3 + $0x50] sm:$0xf] %v7096
        %7233 = vst [vmem:[#allocation3 + $0x74] sm:$0xf] %v7099
        %7234 = vst [vmem:[#allocation3 + $0x98] sm:$0xf] %v7103
        %7235 = vst [vmem:[#allocation3 + $0xbc] sm:$0xf] %v7106
        %7236 = vst [vmem:[#allocation3 + $0xe0] sm:$0xf] %v7110
        %7237 = vst [vmem:[#allocation3 + $0x104] sm:$0xf] %v7113
        %7238 = vst [vmem:[#allocation3 + $0x128] sm:$0xf] %v7117
        %7239 = vst [vmem:[#allocation3 + $0x14c] sm:$0xf] %v7120
        %7240 = vst [vmem:[#allocation3 + $0x170] sm:$0xf] %v7124
        %7241 = vst [vmem:[#allocation3 + $0x194] sm:$0xf] %v7127
        %7242 = vst [vmem:[#allocation3 + $0x1b8] sm:$0xf] %v7131
        %7243 = vst [vmem:[#allocation3 + $0x1dc] sm:$0xf] %v7134
        %7244 = vst [vmem:[#allocation3 + $0x200] sm:$0xf] %v7138
        %7245 = vst [vmem:[#allocation3 + $0x224] sm:$0xf] %v7141
        %7246 = vst [vmem:[#allocation3 + $0x248] sm:$0xf] %v7145
        %7247 = vst [vmem:[#allocation3 + $0x26c] sm:$0xf] %v7148
        %7248 = vst [vmem:[#allocation3 + $0x290] sm:$0xf] %v7152
        %7249 = vst [vmem:[#allocation3 + $0x2b4] sm:$0xf] %v7155
        %7250 = vst [vmem:[#allocation3 + $0x2d8] sm:$0xf] %v7159
        %7251 = vst [vmem:[#allocation3 + $0x2fc] sm:$0xf] %v7162
        %7252 = vst [vmem:[#allocation3 + $0x320] sm:$0xf] %v7166
        %7253 = vst [vmem:[#allocation3 + $0x344] sm:$0xf] %v7169
        %7254 = vst [vmem:[#allocation3 + $0x368] sm:$0xf] %v7173
        %7255 = vst [vmem:[#allocation3 + $0x38c] sm:$0xf] %v7176
        %7256 = vst [vmem:[#allocation3 + $0x3b0] sm:$0xf] %v7180
        %7257 = vst [vmem:[#allocation3 + $0x3d4] sm:$0xf] %v7183
        %7258 = vst [vmem:[#allocation3 + $0x3f8] sm:$0xf] %v7187
        %7259 = vst [vmem:[#allocation3 + $0x41c] sm:$0xf] %v7190
        %7260 = vst [vmem:[#allocation3 + $0x440] sm:$0xf] %v7194
        %7261 = vst [vmem:[#allocation3 + $0x464] sm:$0xf] %v7197
        %v7262 = vld [vmem:[%s897] sm:$0xf]
        %v7263 = vld [vmem:[%s897 + $0x4] sm:$0xf]
        %v7264 = vld [vmem:[%s897 + $0xc] sm:$0xf]
        %v7265 = vld [vmem:[%s897 + $0x10] sm:$0xf]
        %v7266 = vld [vmem:[%s897 + $0x18] sm:$0xf]
        %v7267 = vld [vmem:[%s897 + $0x1c] sm:$0xf]
        %v7268 = vld [vmem:[%s897 + $0x24] sm:$0xf]
        %v7269 = vld [vmem:[%s897 + $0x28] sm:$0xf]
        %v7270 = vld [vmem:[%s897 + $0x30] sm:$0xf]
        %v7271 = vld [vmem:[%s897 + $0x34] sm:$0xf]
        %v7272 = vld [vmem:[%s897 + $0x3c] sm:$0xf]
        %v7273 = vld [vmem:[%s897 + $0x40] sm:$0xf]
        %v7274 = vld [vmem:[%s897 + $0x48] sm:$0xf]
        %v7275 = vld [vmem:[%s897 + $0x4c] sm:$0xf]
        %v7276 = vld [vmem:[%s897 + $0x54] sm:$0xf]
        %v7277 = vld [vmem:[%s897 + $0x58] sm:$0xf]
        %v7278 = vld [vmem:[%s897 + $0x60] sm:$0xf]
        %v7279 = vld [vmem:[%s897 + $0x64] sm:$0xf]
        %v7280 = vld [vmem:[%s897 + $0x6c] sm:$0xf]
        %v7281 = vld [vmem:[%s897 + $0x70] sm:$0xf]
        %v7282 = vld [vmem:[%s897 + $0x78] sm:$0xf]
        %v7283 = vld [vmem:[%s897 + $0x7c] sm:$0xf]
        %v7284 = vld [vmem:[%s897 + $0x84] sm:$0xf]
        %v7285 = vld [vmem:[%s897 + $0x88] sm:$0xf]
        %v7286 = vld [vmem:[%s897 + $0x90] sm:$0xf]
        %v7287 = vld [vmem:[%s897 + $0x94] sm:$0xf]
        %v7288 = vld [vmem:[%s897 + $0x9c] sm:$0xf]
        %v7289 = vld [vmem:[%s897 + $0xa0] sm:$0xf]
        %v7290 = vld [vmem:[%s897 + $0xa8] sm:$0xf]
        %v7291 = vld [vmem:[%s897 + $0xac] sm:$0xf]
        %v7292 = vld [vmem:[%s897 + $0xb4] sm:$0xf]
        %v7293 = vld [vmem:[%s897 + $0xb8] sm:$0xf]
        %7294 = vst [vmem:[#allocation3 + $0xc] sm:$0xf] %v7262
        %7295 = vst [vmem:[#allocation3 + $0x30] sm:$0xf] %v7263
        %7296 = vst [vmem:[#allocation3 + $0x54] sm:$0xf] %v7264
        %7297 = vst [vmem:[#allocation3 + $0x78] sm:$0xf] %v7265
        %7298 = vst [vmem:[#allocation3 + $0x9c] sm:$0xf] %v7266
        %7299 = vst [vmem:[#allocation3 + $0xc0] sm:$0xf] %v7267
        %7300 = vst [vmem:[#allocation3 + $0xe4] sm:$0xf] %v7268
        %7301 = vst [vmem:[#allocation3 + $0x108] sm:$0xf] %v7269
        %7302 = vst [vmem:[#allocation3 + $0x12c] sm:$0xf] %v7270
        %7303 = vst [vmem:[#allocation3 + $0x150] sm:$0xf] %v7271
        %7304 = vst [vmem:[#allocation3 + $0x174] sm:$0xf] %v7272
        %7305 = vst [vmem:[#allocation3 + $0x198] sm:$0xf] %v7273
        %7306 = vst [vmem:[#allocation3 + $0x1bc] sm:$0xf] %v7274
        %7307 = vst [vmem:[#allocation3 + $0x1e0] sm:$0xf] %v7275
        %7308 = vst [vmem:[#allocation3 + $0x204] sm:$0xf] %v7276
        %7309 = vst [vmem:[#allocation3 + $0x228] sm:$0xf] %v7277
        %7310 = vst [vmem:[#allocation3 + $0x24c] sm:$0xf] %v7278
        %7311 = vst [vmem:[#allocation3 + $0x270] sm:$0xf] %v7279
        %7312 = vst [vmem:[#allocation3 + $0x294] sm:$0xf] %v7280
        %7313 = vst [vmem:[#allocation3 + $0x2b8] sm:$0xf] %v7281
        %7314 = vst [vmem:[#allocation3 + $0x2dc] sm:$0xf] %v7282
        %7315 = vst [vmem:[#allocation3 + $0x300] sm:$0xf] %v7283
        %7316 = vst [vmem:[#allocation3 + $0x324] sm:$0xf] %v7284
        %7317 = vst [vmem:[#allocation3 + $0x348] sm:$0xf] %v7285
        %7318 = vst [vmem:[#allocation3 + $0x36c] sm:$0xf] %v7286
        %7319 = vst [vmem:[#allocation3 + $0x390] sm:$0xf] %v7287
        %7320 = vst [vmem:[#allocation3 + $0x3b4] sm:$0xf] %v7288
        %7321 = vst [vmem:[#allocation3 + $0x3d8] sm:$0xf] %v7289
        %7322 = vst [vmem:[#allocation3 + $0x3fc] sm:$0xf] %v7290
        %7323 = vst [vmem:[#allocation3 + $0x420] sm:$0xf] %v7291
        %7324 = vst [vmem:[#allocation3 + $0x444] sm:$0xf] %v7292
        %7325 = vst [vmem:[#allocation3 + $0x468] sm:$0xf] %v7293
        %v7326 = vld [vmem:[%s897] sm:$0xf]
        %v7327 = vld [vmem:[%s897 + $0x4] sm:$0xf]
        %v7328 = vld [vmem:[%s897 + $0x8] sm:$0x1]
        %v7329 = vld [vmem:[%s897 + $0xc] sm:$0xf]
        %v7330 = vld [vmem:[%s897 + $0x10] sm:$0xf]
        %v7331 = vld [vmem:[%s897 + $0x14] sm:$0x1]
        %v7332 = vld [vmem:[%s897 + $0x18] sm:$0xf]
        %v7333 = vld [vmem:[%s897 + $0x1c] sm:$0xf]
        %v7334 = vld [vmem:[%s897 + $0x20] sm:$0x1]
        %v7335 = vld [vmem:[%s897 + $0x24] sm:$0xf]
        %v7336 = vld [vmem:[%s897 + $0x28] sm:$0xf]
        %v7337 = vld [vmem:[%s897 + $0x2c] sm:$0x1]
        %v7338 = vld [vmem:[%s897 + $0x30] sm:$0xf]
        %v7339 = vld [vmem:[%s897 + $0x34] sm:$0xf]
        %v7340 = vld [vmem:[%s897 + $0x38] sm:$0x1]
        %v7341 = vld [vmem:[%s897 + $0x3c] sm:$0xf]
        %v7342 = vld [vmem:[%s897 + $0x40] sm:$0xf]
        %v7343 = vld [vmem:[%s897 + $0x44] sm:$0x1]
        %v7344 = vld [vmem:[%s897 + $0x48] sm:$0xf]
        %v7345 = vld [vmem:[%s897 + $0x4c] sm:$0xf]
        %v7346 = vld [vmem:[%s897 + $0x50] sm:$0x1]
        %v7347 = vld [vmem:[%s897 + $0x54] sm:$0xf]
        %v7348 = vld [vmem:[%s897 + $0x58] sm:$0xf]
        %v7349 = vld [vmem:[%s897 + $0x5c] sm:$0x1]
        %v7350 = vld [vmem:[%s897 + $0x60] sm:$0xf]
        %v7351 = vld [vmem:[%s897 + $0x64] sm:$0xf]
        %v7352 = vld [vmem:[%s897 + $0x68] sm:$0x1]
        %v7353 = vld [vmem:[%s897 + $0x6c] sm:$0xf]
        %v7354 = vld [vmem:[%s897 + $0x70] sm:$0xf]
        %v7355 = vld [vmem:[%s897 + $0x74] sm:$0x1]
        %v7356 = vld [vmem:[%s897 + $0x78] sm:$0xf]
        %v7357 = vld [vmem:[%s897 + $0x7c] sm:$0xf]
        %v7358 = vld [vmem:[%s897 + $0x80] sm:$0x1]
        %v7359 = vld [vmem:[%s897 + $0x84] sm:$0xf]
        %v7360 = vld [vmem:[%s897 + $0x88] sm:$0xf]
        %v7361 = vld [vmem:[%s897 + $0x8c] sm:$0x1]
        %v7362 = vld [vmem:[%s897 + $0x90] sm:$0xf]
        %v7363 = vld [vmem:[%s897 + $0x94] sm:$0xf]
        %v7364 = vld [vmem:[%s897 + $0x98] sm:$0x1]
        %v7365 = vld [vmem:[%s897 + $0x9c] sm:$0xf]
        %v7366 = vld [vmem:[%s897 + $0xa0] sm:$0xf]
        %v7367 = vld [vmem:[%s897 + $0xa4] sm:$0x1]
        %v7368 = vld [vmem:[%s897 + $0xa8] sm:$0xf]
        %v7369 = vld [vmem:[%s897 + $0xac] sm:$0xf]
        %v7370 = vld [vmem:[%s897 + $0xb0] sm:$0x1]
        %v7371 = vld [vmem:[%s897 + $0xb4] sm:$0xf]
        %v7372 = vld [vmem:[%s897 + $0xb8] sm:$0xf]
        %v7373 = vld [vmem:[%s897 + $0xbc] sm:$0x1]
        %v7375 = vshrl.u32 %v7326, 16
        %v7377 = vrot.slane %v7375, 4
        %v7378 = vshll.u32 %v7326, 16
        %v7380 = vrot.slane %v7378, 5
        %v7381 = vor.u32 %v7377, %v7380
        %v7382 = vrot.slane %v7381, 4
        %v7384 = vshll.u32 %v7327, 16
        %v7386 = vrot.slane %v7384, 5
        %v7387 = vsel %vm1126, %v7382, %v7386
        %v7388 = vshrl.u32 %v7327, 16
        %v7390 = vrot.slane %v7388, 4
        %v7391 = vor.u32 %v7390, %v7386
        %v7392 = vrot.slane %v7391, 4
        %v7394 = vshll.u32 %v7328, 16
        %v7396 = vrot.slane %v7394, 5
        %v7397 = vsel %vm1126, %v7392, %v7396
        %v7399 = vshrl.u32 %v7329, 16
        %v7401 = vrot.slane %v7399, 4
        %v7402 = vshll.u32 %v7329, 16
        %v7404 = vrot.slane %v7402, 5
        %v7405 = vor.u32 %v7401, %v7404
        %v7406 = vrot.slane %v7405, 4
        %v7408 = vshll.u32 %v7330, 16
        %v7410 = vrot.slane %v7408, 5
        %v7411 = vsel %vm1126, %v7406, %v7410
        %v7412 = vshrl.u32 %v7330, 16
        %v7414 = vrot.slane %v7412, 4
        %v7415 = vor.u32 %v7414, %v7410
        %v7416 = vrot.slane %v7415, 4
        %v7418 = vshll.u32 %v7331, 16
        %v7420 = vrot.slane %v7418, 5
        %v7421 = vsel %vm1126, %v7416, %v7420
        %v7423 = vshrl.u32 %v7332, 16
        %v7425 = vrot.slane %v7423, 4
        %v7426 = vshll.u32 %v7332, 16
        %v7428 = vrot.slane %v7426, 5
        %v7429 = vor.u32 %v7425, %v7428
        %v7430 = vrot.slane %v7429, 4
        %v7432 = vshll.u32 %v7333, 16
        %v7434 = vrot.slane %v7432, 5
        %v7435 = vsel %vm1126, %v7430, %v7434
        %v7436 = vshrl.u32 %v7333, 16
        %v7438 = vrot.slane %v7436, 4
        %v7439 = vor.u32 %v7438, %v7434
        %v7440 = vrot.slane %v7439, 4
        %v7442 = vshll.u32 %v7334, 16
        %v7444 = vrot.slane %v7442, 5
        %v7445 = vsel %vm1126, %v7440, %v7444
        %v7447 = vshrl.u32 %v7335, 16
        %v7449 = vrot.slane %v7447, 4
        %v7450 = vshll.u32 %v7335, 16
        %v7452 = vrot.slane %v7450, 5
        %v7453 = vor.u32 %v7449, %v7452
        %v7454 = vrot.slane %v7453, 4
        %v7456 = vshll.u32 %v7336, 16
        %v7458 = vrot.slane %v7456, 5
        %v7459 = vsel %vm1126, %v7454, %v7458
        %v7460 = vshrl.u32 %v7336, 16
        %v7462 = vrot.slane %v7460, 4
        %v7463 = vor.u32 %v7462, %v7458
        %v7464 = vrot.slane %v7463, 4
        %v7466 = vshll.u32 %v7337, 16
        %v7468 = vrot.slane %v7466, 5
        %v7469 = vsel %vm1126, %v7464, %v7468
        %v7471 = vshrl.u32 %v7338, 16
        %v7473 = vrot.slane %v7471, 4
        %v7474 = vshll.u32 %v7338, 16
        %v7476 = vrot.slane %v7474, 5
        %v7477 = vor.u32 %v7473, %v7476
        %v7478 = vrot.slane %v7477, 4
        %v7480 = vshll.u32 %v7339, 16
        %v7482 = vrot.slane %v7480, 5
        %v7483 = vsel %vm1126, %v7478, %v7482
        %v7484 = vshrl.u32 %v7339, 16
        %v7486 = vrot.slane %v7484, 4
        %v7487 = vor.u32 %v7486, %v7482
        %v7488 = vrot.slane %v7487, 4
        %v7490 = vshll.u32 %v7340, 16
        %v7492 = vrot.slane %v7490, 5
        %v7493 = vsel %vm1126, %v7488, %v7492
        %v7495 = vshrl.u32 %v7341, 16
        %v7497 = vrot.slane %v7495, 4
        %v7498 = vshll.u32 %v7341, 16
        %v7500 = vrot.slane %v7498, 5
        %v7501 = vor.u32 %v7497, %v7500
        %v7502 = vrot.slane %v7501, 4
        %v7504 = vshll.u32 %v7342, 16
        %v7506 = vrot.slane %v7504, 5
        %v7507 = vsel %vm1126, %v7502, %v7506
        %v7508 = vshrl.u32 %v7342, 16
        %v7510 = vrot.slane %v7508, 4
        %v7511 = vor.u32 %v7510, %v7506
        %v7512 = vrot.slane %v7511, 4
        %v7514 = vshll.u32 %v7343, 16
        %v7516 = vrot.slane %v7514, 5
        %v7517 = vsel %vm1126, %v7512, %v7516
        %v7519 = vshrl.u32 %v7344, 16
        %v7521 = vrot.slane %v7519, 4
        %v7522 = vshll.u32 %v7344, 16
        %v7524 = vrot.slane %v7522, 5
        %v7525 = vor.u32 %v7521, %v7524
        %v7526 = vrot.slane %v7525, 4
        %v7528 = vshll.u32 %v7345, 16
        %v7530 = vrot.slane %v7528, 5
        %v7531 = vsel %vm1126, %v7526, %v7530
        %v7532 = vshrl.u32 %v7345, 16
        %v7534 = vrot.slane %v7532, 4
        %v7535 = vor.u32 %v7534, %v7530
        %v7536 = vrot.slane %v7535, 4
        %v7538 = vshll.u32 %v7346, 16
        %v7540 = vrot.slane %v7538, 5
        %v7541 = vsel %vm1126, %v7536, %v7540
        %v7543 = vshrl.u32 %v7347, 16
        %v7545 = vrot.slane %v7543, 4
        %v7546 = vshll.u32 %v7347, 16
        %v7548 = vrot.slane %v7546, 5
        %v7549 = vor.u32 %v7545, %v7548
        %v7550 = vrot.slane %v7549, 4
        %v7552 = vshll.u32 %v7348, 16
        %v7554 = vrot.slane %v7552, 5
        %v7555 = vsel %vm1126, %v7550, %v7554
        %v7556 = vshrl.u32 %v7348, 16
        %v7558 = vrot.slane %v7556, 4
        %v7559 = vor.u32 %v7558, %v7554
        %v7560 = vrot.slane %v7559, 4
        %v7562 = vshll.u32 %v7349, 16
        %v7564 = vrot.slane %v7562, 5
        %v7565 = vsel %vm1126, %v7560, %v7564
        %v7567 = vshrl.u32 %v7350, 16
        %v7569 = vrot.slane %v7567, 4
        %v7570 = vshll.u32 %v7350, 16
        %v7572 = vrot.slane %v7570, 5
        %v7573 = vor.u32 %v7569, %v7572
        %v7574 = vrot.slane %v7573, 4
        %v7576 = vshll.u32 %v7351, 16
        %v7578 = vrot.slane %v7576, 5
        %v7579 = vsel %vm1126, %v7574, %v7578
        %v7580 = vshrl.u32 %v7351, 16
        %v7582 = vrot.slane %v7580, 4
        %v7583 = vor.u32 %v7582, %v7578
        %v7584 = vrot.slane %v7583, 4
        %v7586 = vshll.u32 %v7352, 16
        %v7588 = vrot.slane %v7586, 5
        %v7589 = vsel %vm1126, %v7584, %v7588
        %v7591 = vshrl.u32 %v7353, 16
        %v7593 = vrot.slane %v7591, 4
        %v7594 = vshll.u32 %v7353, 16
        %v7596 = vrot.slane %v7594, 5
        %v7597 = vor.u32 %v7593, %v7596
        %v7598 = vrot.slane %v7597, 4
        %v7600 = vshll.u32 %v7354, 16
        %v7602 = vrot.slane %v7600, 5
        %v7603 = vsel %vm1126, %v7598, %v7602
        %v7604 = vshrl.u32 %v7354, 16
        %v7606 = vrot.slane %v7604, 4
        %v7607 = vor.u32 %v7606, %v7602
        %v7608 = vrot.slane %v7607, 4
        %v7610 = vshll.u32 %v7355, 16
        %v7612 = vrot.slane %v7610, 5
        %v7613 = vsel %vm1126, %v7608, %v7612
        %v7615 = vshrl.u32 %v7356, 16
        %v7617 = vrot.slane %v7615, 4
        %v7618 = vshll.u32 %v7356, 16
        %v7620 = vrot.slane %v7618, 5
        %v7621 = vor.u32 %v7617, %v7620
        %v7622 = vrot.slane %v7621, 4
        %v7624 = vshll.u32 %v7357, 16
        %v7626 = vrot.slane %v7624, 5
        %v7627 = vsel %vm1126, %v7622, %v7626
        %v7628 = vshrl.u32 %v7357, 16
        %v7630 = vrot.slane %v7628, 4
        %v7631 = vor.u32 %v7630, %v7626
        %v7632 = vrot.slane %v7631, 4
        %v7634 = vshll.u32 %v7358, 16
        %v7636 = vrot.slane %v7634, 5
        %v7637 = vsel %vm1126, %v7632, %v7636
        %v7639 = vshrl.u32 %v7359, 16
        %v7641 = vrot.slane %v7639, 4
        %v7642 = vshll.u32 %v7359, 16
        %v7644 = vrot.slane %v7642, 5
        %v7645 = vor.u32 %v7641, %v7644
        %v7646 = vrot.slane %v7645, 4
        %v7648 = vshll.u32 %v7360, 16
        %v7650 = vrot.slane %v7648, 5
        %v7651 = vsel %vm1126, %v7646, %v7650
        %v7652 = vshrl.u32 %v7360, 16
        %v7654 = vrot.slane %v7652, 4
        %v7655 = vor.u32 %v7654, %v7650
        %v7656 = vrot.slane %v7655, 4
        %v7658 = vshll.u32 %v7361, 16
        %v7660 = vrot.slane %v7658, 5
        %v7661 = vsel %vm1126, %v7656, %v7660
        %v7663 = vshrl.u32 %v7362, 16
        %v7665 = vrot.slane %v7663, 4
        %v7666 = vshll.u32 %v7362, 16
        %v7668 = vrot.slane %v7666, 5
        %v7669 = vor.u32 %v7665, %v7668
        %v7670 = vrot.slane %v7669, 4
        %v7672 = vshll.u32 %v7363, 16
        %v7674 = vrot.slane %v7672, 5
        %v7675 = vsel %vm1126, %v7670, %v7674
        %v7676 = vshrl.u32 %v7363, 16
        %v7678 = vrot.slane %v7676, 4
        %v7679 = vor.u32 %v7678, %v7674
        %v7680 = vrot.slane %v7679, 4
        %v7682 = vshll.u32 %v7364, 16
        %v7684 = vrot.slane %v7682, 5
        %v7685 = vsel %vm1126, %v7680, %v7684
        %v7687 = vshrl.u32 %v7365, 16
        %v7689 = vrot.slane %v7687, 4
        %v7690 = vshll.u32 %v7365, 16
        %v7692 = vrot.slane %v7690, 5
        %v7693 = vor.u32 %v7689, %v7692
        %v7694 = vrot.slane %v7693, 4
        %v7696 = vshll.u32 %v7366, 16
        %v7698 = vrot.slane %v7696, 5
        %v7699 = vsel %vm1126, %v7694, %v7698
        %v7700 = vshrl.u32 %v7366, 16
        %v7702 = vrot.slane %v7700, 4
        %v7703 = vor.u32 %v7702, %v7698
        %v7704 = vrot.slane %v7703, 4
        %v7706 = vshll.u32 %v7367, 16
        %v7708 = vrot.slane %v7706, 5
        %v7709 = vsel %vm1126, %v7704, %v7708
        %v7711 = vshrl.u32 %v7368, 16
        %v7713 = vrot.slane %v7711, 4
        %v7714 = vshll.u32 %v7368, 16
        %v7716 = vrot.slane %v7714, 5
        %v7717 = vor.u32 %v7713, %v7716
        %v7718 = vrot.slane %v7717, 4
        %v7720 = vshll.u32 %v7369, 16
        %v7722 = vrot.slane %v7720, 5
        %v7723 = vsel %vm1126, %v7718, %v7722
        %v7724 = vshrl.u32 %v7369, 16
        %v7726 = vrot.slane %v7724, 4
        %v7727 = vor.u32 %v7726, %v7722
        %v7728 = vrot.slane %v7727, 4
        %v7730 = vshll.u32 %v7370, 16
        %v7732 = vrot.slane %v7730, 5
        %v7733 = vsel %vm1126, %v7728, %v7732
        %v7735 = vshrl.u32 %v7371, 16
        %v7737 = vrot.slane %v7735, 4
        %v7738 = vshll.u32 %v7371, 16
        %v7740 = vrot.slane %v7738, 5
        %v7741 = vor.u32 %v7737, %v7740
        %v7742 = vrot.slane %v7741, 4
        %v7744 = vshll.u32 %v7372, 16
        %v7746 = vrot.slane %v7744, 5
        %v7747 = vsel %vm1126, %v7742, %v7746
        %v7748 = vshrl.u32 %v7372, 16
        %v7750 = vrot.slane %v7748, 4
        %v7751 = vor.u32 %v7750, %v7746
        %v7752 = vrot.slane %v7751, 4
        %v7754 = vshll.u32 %v7373, 16
        %v7756 = vrot.slane %v7754, 5
        %v7757 = vsel %vm1126, %v7752, %v7756
        %7790 = vst [vmem:[#allocation3 + $0x10] sm:$0xf] %v7387
        %7791 = vst [vmem:[#allocation3 + $0x34] sm:$0xf] %v7397
        %7792 = vst [vmem:[#allocation3 + $0x58] sm:$0xf] %v7411
        %7793 = vst [vmem:[#allocation3 + $0x7c] sm:$0xf] %v7421
        %7794 = vst [vmem:[#allocation3 + $0xa0] sm:$0xf] %v7435
        %7795 = vst [vmem:[#allocation3 + $0xc4] sm:$0xf] %v7445
        %7796 = vst [vmem:[#allocation3 + $0xe8] sm:$0xf] %v7459
        %7797 = vst [vmem:[#allocation3 + $0x10c] sm:$0xf] %v7469
        %7798 = vst [vmem:[#allocation3 + $0x130] sm:$0xf] %v7483
        %7799 = vst [vmem:[#allocation3 + $0x154] sm:$0xf] %v7493
        %7800 = vst [vmem:[#allocation3 + $0x178] sm:$0xf] %v7507
        %7801 = vst [vmem:[#allocation3 + $0x19c] sm:$0xf] %v7517
        %7802 = vst [vmem:[#allocation3 + $0x1c0] sm:$0xf] %v7531
        %7803 = vst [vmem:[#allocation3 + $0x1e4] sm:$0xf] %v7541
        %7804 = vst [vmem:[#allocation3 + $0x208] sm:$0xf] %v7555
        %7805 = vst [vmem:[#allocation3 + $0x22c] sm:$0xf] %v7565
        %7806 = vst [vmem:[#allocation3 + $0x250] sm:$0xf] %v7579
        %7807 = vst [vmem:[#allocation3 + $0x274] sm:$0xf] %v7589
        %7808 = vst [vmem:[#allocation3 + $0x298] sm:$0xf] %v7603
        %7809 = vst [vmem:[#allocation3 + $0x2bc] sm:$0xf] %v7613
        %7810 = vst [vmem:[#allocation3 + $0x2e0] sm:$0xf] %v7627
        %7811 = vst [vmem:[#allocation3 + $0x304] sm:$0xf] %v7637
        %7812 = vst [vmem:[#allocation3 + $0x328] sm:$0xf] %v7651
        %7813 = vst [vmem:[#allocation3 + $0x34c] sm:$0xf] %v7661
        %7814 = vst [vmem:[#allocation3 + $0x370] sm:$0xf] %v7675
        %7815 = vst [vmem:[#allocation3 + $0x394] sm:$0xf] %v7685
        %7816 = vst [vmem:[#allocation3 + $0x3b8] sm:$0xf] %v7699
        %7817 = vst [vmem:[#allocation3 + $0x3dc] sm:$0xf] %v7709
        %7818 = vst [vmem:[#allocation3 + $0x400] sm:$0xf] %v7723
        %7819 = vst [vmem:[#allocation3 + $0x424] sm:$0xf] %v7733
        %7820 = vst [vmem:[#allocation3 + $0x448] sm:$0xf] %v7747
        %7821 = vst [vmem:[#allocation3 + $0x46c] sm:$0xf] %v7757
        %v7822 = vld [vmem:[%s897] sm:$0xe]
        %v7823 = vld [vmem:[%s897 + $0x4] sm:$0xf]
        %v7824 = vld [vmem:[%s897 + $0x8] sm:$0x1]
        %v7825 = vld [vmem:[%s897 + $0xc] sm:$0xe]
        %v7826 = vld [vmem:[%s897 + $0x10] sm:$0xf]
        %v7827 = vld [vmem:[%s897 + $0x14] sm:$0x1]
        %v7828 = vld [vmem:[%s897 + $0x18] sm:$0xe]
        %v7829 = vld [vmem:[%s897 + $0x1c] sm:$0xf]
        %v7830 = vld [vmem:[%s897 + $0x20] sm:$0x1]
        %v7831 = vld [vmem:[%s897 + $0x24] sm:$0xe]
        %v7832 = vld [vmem:[%s897 + $0x28] sm:$0xf]
        %v7833 = vld [vmem:[%s897 + $0x2c] sm:$0x1]
        %v7834 = vld [vmem:[%s897 + $0x30] sm:$0xe]
        %v7835 = vld [vmem:[%s897 + $0x34] sm:$0xf]
        %v7836 = vld [vmem:[%s897 + $0x38] sm:$0x1]
        %v7837 = vld [vmem:[%s897 + $0x3c] sm:$0xe]
        %v7838 = vld [vmem:[%s897 + $0x40] sm:$0xf]
        %v7839 = vld [vmem:[%s897 + $0x44] sm:$0x1]
        %v7840 = vld [vmem:[%s897 + $0x48] sm:$0xe]
        %v7841 = vld [vmem:[%s897 + $0x4c] sm:$0xf]
        %v7842 = vld [vmem:[%s897 + $0x50] sm:$0x1]
        %v7843 = vld [vmem:[%s897 + $0x54] sm:$0xe]
        %v7844 = vld [vmem:[%s897 + $0x58] sm:$0xf]
        %v7845 = vld [vmem:[%s897 + $0x5c] sm:$0x1]
        %v7846 = vld [vmem:[%s897 + $0x60] sm:$0xe]
        %v7847 = vld [vmem:[%s897 + $0x64] sm:$0xf]
        %v7848 = vld [vmem:[%s897 + $0x68] sm:$0x1]
        %v7849 = vld [vmem:[%s897 + $0x6c] sm:$0xe]
        %v7850 = vld [vmem:[%s897 + $0x70] sm:$0xf]
        %v7851 = vld [vmem:[%s897 + $0x74] sm:$0x1]
        %v7852 = vld [vmem:[%s897 + $0x78] sm:$0xe]
        %v7853 = vld [vmem:[%s897 + $0x7c] sm:$0xf]
        %v7854 = vld [vmem:[%s897 + $0x80] sm:$0x1]
        %v7855 = vld [vmem:[%s897 + $0x84] sm:$0xe]
        %v7856 = vld [vmem:[%s897 + $0x88] sm:$0xf]
        %v7857 = vld [vmem:[%s897 + $0x8c] sm:$0x1]
        %v7858 = vld [vmem:[%s897 + $0x90] sm:$0xe]
        %v7859 = vld [vmem:[%s897 + $0x94] sm:$0xf]
        %v7860 = vld [vmem:[%s897 + $0x98] sm:$0x1]
        %v7861 = vld [vmem:[%s897 + $0x9c] sm:$0xe]
        %v7862 = vld [vmem:[%s897 + $0xa0] sm:$0xf]
        %v7863 = vld [vmem:[%s897 + $0xa4] sm:$0x1]
        %v7864 = vld [vmem:[%s897 + $0xa8] sm:$0xe]
        %v7865 = vld [vmem:[%s897 + $0xac] sm:$0xf]
        %v7866 = vld [vmem:[%s897 + $0xb0] sm:$0x1]
        %v7867 = vld [vmem:[%s897 + $0xb4] sm:$0xe]
        %v7868 = vld [vmem:[%s897 + $0xb8] sm:$0xf]
        %v7869 = vld [vmem:[%s897 + $0xbc] sm:$0x1]
        %v7918 = vrot.slane %v7822, 5
        %v7919 = vrot.slane %v7918, 4
        %v7920 = vrot.slane %v7823, 5
        %v7921 = vsel %vm1673, %v7919, %v7920
        %v7922 = vrot.slane %v7920, 4
        %v7923 = vrot.slane %v7824, 5
        %v7924 = vsel %vm1673, %v7922, %v7923
        %v7925 = vrot.slane %v7825, 5
        %v7926 = vrot.slane %v7925, 4
        %v7927 = vrot.slane %v7826, 5
        %v7928 = vsel %vm1673, %v7926, %v7927
        %v7929 = vrot.slane %v7927, 4
        %v7930 = vrot.slane %v7827, 5
        %v7931 = vsel %vm1673, %v7929, %v7930
        %v7932 = vrot.slane %v7828, 5
        %v7933 = vrot.slane %v7932, 4
        %v7934 = vrot.slane %v7829, 5
        %v7935 = vsel %vm1673, %v7933, %v7934
        %v7936 = vrot.slane %v7934, 4
        %v7937 = vrot.slane %v7830, 5
        %v7938 = vsel %vm1673, %v7936, %v7937
        %v7939 = vrot.slane %v7831, 5
        %v7940 = vrot.slane %v7939, 4
        %v7941 = vrot.slane %v7832, 5
        %v7942 = vsel %vm1673, %v7940, %v7941
        %v7943 = vrot.slane %v7941, 4
        %v7944 = vrot.slane %v7833, 5
        %v7945 = vsel %vm1673, %v7943, %v7944
        %v7946 = vrot.slane %v7834, 5
        %v7947 = vrot.slane %v7946, 4
        %v7948 = vrot.slane %v7835, 5
        %v7949 = vsel %vm1673, %v7947, %v7948
        %v7950 = vrot.slane %v7948, 4
        %v7951 = vrot.slane %v7836, 5
        %v7952 = vsel %vm1673, %v7950, %v7951
        %v7953 = vrot.slane %v7837, 5
        %v7954 = vrot.slane %v7953, 4
        %v7955 = vrot.slane %v7838, 5
        %v7956 = vsel %vm1673, %v7954, %v7955
        %v7957 = vrot.slane %v7955, 4
        %v7958 = vrot.slane %v7839, 5
        %v7959 = vsel %vm1673, %v7957, %v7958
        %v7960 = vrot.slane %v7840, 5
        %v7961 = vrot.slane %v7960, 4
        %v7962 = vrot.slane %v7841, 5
        %v7963 = vsel %vm1673, %v7961, %v7962
        %v7964 = vrot.slane %v7962, 4
        %v7965 = vrot.slane %v7842, 5
        %v7966 = vsel %vm1673, %v7964, %v7965
        %v7967 = vrot.slane %v7843, 5
        %v7968 = vrot.slane %v7967, 4
        %v7969 = vrot.slane %v7844, 5
        %v7970 = vsel %vm1673, %v7968, %v7969
        %v7971 = vrot.slane %v7969, 4
        %v7972 = vrot.slane %v7845, 5
        %v7973 = vsel %vm1673, %v7971, %v7972
        %v7974 = vrot.slane %v7846, 5
        %v7975 = vrot.slane %v7974, 4
        %v7976 = vrot.slane %v7847, 5
        %v7977 = vsel %vm1673, %v7975, %v7976
        %v7978 = vrot.slane %v7976, 4
        %v7979 = vrot.slane %v7848, 5
        %v7980 = vsel %vm1673, %v7978, %v7979
        %v7981 = vrot.slane %v7849, 5
        %v7982 = vrot.slane %v7981, 4
        %v7983 = vrot.slane %v7850, 5
        %v7984 = vsel %vm1673, %v7982, %v7983
        %v7985 = vrot.slane %v7983, 4
        %v7986 = vrot.slane %v7851, 5
        %v7987 = vsel %vm1673, %v7985, %v7986
        %v7988 = vrot.slane %v7852, 5
        %v7989 = vrot.slane %v7988, 4
        %v7990 = vrot.slane %v7853, 5
        %v7991 = vsel %vm1673, %v7989, %v7990
        %v7992 = vrot.slane %v7990, 4
        %v7993 = vrot.slane %v7854, 5
        %v7994 = vsel %vm1673, %v7992, %v7993
        %v7995 = vrot.slane %v7855, 5
        %v7996 = vrot.slane %v7995, 4
        %v7997 = vrot.slane %v7856, 5
        %v7998 = vsel %vm1673, %v7996, %v7997
        %v7999 = vrot.slane %v7997, 4
        %v8000 = vrot.slane %v7857, 5
        %v8001 = vsel %vm1673, %v7999, %v8000
        %v8002 = vrot.slane %v7858, 5
        %v8003 = vrot.slane %v8002, 4
        %v8004 = vrot.slane %v7859, 5
        %v8005 = vsel %vm1673, %v8003, %v8004
        %v8006 = vrot.slane %v8004, 4
        %v8007 = vrot.slane %v7860, 5
        %v8008 = vsel %vm1673, %v8006, %v8007
        %v8009 = vrot.slane %v7861, 5
        %v8010 = vrot.slane %v8009, 4
        %v8011 = vrot.slane %v7862, 5
        %v8012 = vsel %vm1673, %v8010, %v8011
        %v8013 = vrot.slane %v8011, 4
        %v8014 = vrot.slane %v7863, 5
        %v8015 = vsel %vm1673, %v8013, %v8014
        %v8016 = vrot.slane %v7864, 5
        %v8017 = vrot.slane %v8016, 4
        %v8018 = vrot.slane %v7865, 5
        %v8019 = vsel %vm1673, %v8017, %v8018
        %v8020 = vrot.slane %v8018, 4
        %v8021 = vrot.slane %v7866, 5
        %v8022 = vsel %vm1673, %v8020, %v8021
        %v8023 = vrot.slane %v7867, 5
        %v8024 = vrot.slane %v8023, 4
        %v8025 = vrot.slane %v7868, 5
        %v8026 = vsel %vm1673, %v8024, %v8025
        %v8027 = vrot.slane %v8025, 4
        %v8028 = vrot.slane %v7869, 5
        %v8029 = vsel %vm1673, %v8027, %v8028
        %8062 = vst [vmem:[#allocation3 + $0x14] sm:$0xf] %v7921
        %8063 = vst [vmem:[#allocation3 + $0x38] sm:$0xf] %v7924
        %8064 = vst [vmem:[#allocation3 + $0x5c] sm:$0xf] %v7928
        %8065 = vst [vmem:[#allocation3 + $0x80] sm:$0xf] %v7931
        %8066 = vst [vmem:[#allocation3 + $0xa4] sm:$0xf] %v7935
        %8067 = vst [vmem:[#allocation3 + $0xc8] sm:$0xf] %v7938
        %8068 = vst [vmem:[#allocation3 + $0xec] sm:$0xf] %v7942
        %8069 = vst [vmem:[#allocation3 + $0x110] sm:$0xf] %v7945
        %8070 = vst [vmem:[#allocation3 + $0x134] sm:$0xf] %v7949
        %8071 = vst [vmem:[#allocation3 + $0x158] sm:$0xf] %v7952
        %8072 = vst [vmem:[#allocation3 + $0x17c] sm:$0xf] %v7956
        %8073 = vst [vmem:[#allocation3 + $0x1a0] sm:$0xf] %v7959
        %8074 = vst [vmem:[#allocation3 + $0x1c4] sm:$0xf] %v7963
        %8075 = vst [vmem:[#allocation3 + $0x1e8] sm:$0xf] %v7966
        %8076 = vst [vmem:[#allocation3 + $0x20c] sm:$0xf] %v7970
        %8077 = vst [vmem:[#allocation3 + $0x230] sm:$0xf] %v7973
        %8078 = vst [vmem:[#allocation3 + $0x254] sm:$0xf] %v7977
        %8079 = vst [vmem:[#allocation3 + $0x278] sm:$0xf] %v7980
        %8080 = vst [vmem:[#allocation3 + $0x29c] sm:$0xf] %v7984
        %8081 = vst [vmem:[#allocation3 + $0x2c0] sm:$0xf] %v7987
        %8082 = vst [vmem:[#allocation3 + $0x2e4] sm:$0xf] %v7991
        %8083 = vst [vmem:[#allocation3 + $0x308] sm:$0xf] %v7994
        %8084 = vst [vmem:[#allocation3 + $0x32c] sm:$0xf] %v7998
        %8085 = vst [vmem:[#allocation3 + $0x350] sm:$0xf] %v8001
        %8086 = vst [vmem:[#allocation3 + $0x374] sm:$0xf] %v8005
        %8087 = vst [vmem:[#allocation3 + $0x398] sm:$0xf] %v8008
        %8088 = vst [vmem:[#allocation3 + $0x3bc] sm:$0xf] %v8012
        %8089 = vst [vmem:[#allocation3 + $0x3e0] sm:$0xf] %v8015
        %8090 = vst [vmem:[#allocation3 + $0x404] sm:$0xf] %v8019
        %8091 = vst [vmem:[#allocation3 + $0x428] sm:$0xf] %v8022
        %8092 = vst [vmem:[#allocation3 + $0x44c] sm:$0xf] %v8026
        %8093 = vst [vmem:[#allocation3 + $0x470] sm:$0xf] %v8029
        %v8094 = vld [vmem:[%s2682] sm:$0xf]
        %v8095 = vld [vmem:[%s2682 + $0x4] sm:$0xf]
        %v8096 = vld [vmem:[%s2682 + $0xc] sm:$0xf]
        %v8097 = vld [vmem:[%s2682 + $0x10] sm:$0xf]
        %v8098 = vld [vmem:[%s2682 + $0x18] sm:$0xf]
        %v8099 = vld [vmem:[%s2682 + $0x1c] sm:$0xf]
        %v8100 = vld [vmem:[%s2682 + $0x24] sm:$0xf]
        %v8101 = vld [vmem:[%s2682 + $0x28] sm:$0xf]
        %v8102 = vld [vmem:[%s2682 + $0x30] sm:$0xf]
        %v8103 = vld [vmem:[%s2682 + $0x34] sm:$0xf]
        %v8104 = vld [vmem:[%s2682 + $0x3c] sm:$0xf]
        %v8105 = vld [vmem:[%s2682 + $0x40] sm:$0xf]
        %v8106 = vld [vmem:[%s2682 + $0x48] sm:$0xf]
        %v8107 = vld [vmem:[%s2682 + $0x4c] sm:$0xf]
        %v8108 = vld [vmem:[%s2682 + $0x54] sm:$0xf]
        %v8109 = vld [vmem:[%s2682 + $0x58] sm:$0xf]
        %v8110 = vld [vmem:[%s2682 + $0x60] sm:$0xf]
        %v8111 = vld [vmem:[%s2682 + $0x64] sm:$0xf]
        %v8112 = vld [vmem:[%s2682 + $0x6c] sm:$0xf]
        %v8113 = vld [vmem:[%s2682 + $0x70] sm:$0xf]
        %v8114 = vld [vmem:[%s2682 + $0x78] sm:$0xf]
        %v8115 = vld [vmem:[%s2682 + $0x7c] sm:$0xf]
        %v8116 = vld [vmem:[%s2682 + $0x84] sm:$0xf]
        %v8117 = vld [vmem:[%s2682 + $0x88] sm:$0xf]
        %v8118 = vld [vmem:[%s2682 + $0x90] sm:$0xf]
        %v8119 = vld [vmem:[%s2682 + $0x94] sm:$0xf]
        %v8120 = vld [vmem:[%s2682 + $0x9c] sm:$0xf]
        %v8121 = vld [vmem:[%s2682 + $0xa0] sm:$0xf]
        %v8122 = vld [vmem:[%s2682 + $0xa8] sm:$0xf]
        %v8123 = vld [vmem:[%s2682 + $0xac] sm:$0xf]
        %v8124 = vld [vmem:[%s2682 + $0xb4] sm:$0xf]
        %v8125 = vld [vmem:[%s2682 + $0xb8] sm:$0xf]
        %8126 = vst [vmem:[#allocation3 + $0x18] sm:$0xf] %v8094
        %8127 = vst [vmem:[#allocation3 + $0x3c] sm:$0xf] %v8095
        %8128 = vst [vmem:[#allocation3 + $0x60] sm:$0xf] %v8096
        %8129 = vst [vmem:[#allocation3 + $0x84] sm:$0xf] %v8097
        %8130 = vst [vmem:[#allocation3 + $0xa8] sm:$0xf] %v8098
        %8131 = vst [vmem:[#allocation3 + $0xcc] sm:$0xf] %v8099
        %8132 = vst [vmem:[#allocation3 + $0xf0] sm:$0xf] %v8100
        %8133 = vst [vmem:[#allocation3 + $0x114] sm:$0xf] %v8101
        %8134 = vst [vmem:[#allocation3 + $0x138] sm:$0xf] %v8102
        %8135 = vst [vmem:[#allocation3 + $0x15c] sm:$0xf] %v8103
        %8136 = vst [vmem:[#allocation3 + $0x180] sm:$0xf] %v8104
        %8137 = vst [vmem:[#allocation3 + $0x1a4] sm:$0xf] %v8105
        %8138 = vst [vmem:[#allocation3 + $0x1c8] sm:$0xf] %v8106
        %8139 = vst [vmem:[#allocation3 + $0x1ec] sm:$0xf] %v8107
        %8140 = vst [vmem:[#allocation3 + $0x210] sm:$0xf] %v8108
        %8141 = vst [vmem:[#allocation3 + $0x234] sm:$0xf] %v8109
        %8142 = vst [vmem:[#allocation3 + $0x258] sm:$0xf] %v8110
        %8143 = vst [vmem:[#allocation3 + $0x27c] sm:$0xf] %v8111
        %8144 = vst [vmem:[#allocation3 + $0x2a0] sm:$0xf] %v8112
        %8145 = vst [vmem:[#allocation3 + $0x2c4] sm:$0xf] %v8113
        %8146 = vst [vmem:[#allocation3 + $0x2e8] sm:$0xf] %v8114
        %8147 = vst [vmem:[#allocation3 + $0x30c] sm:$0xf] %v8115
        %8148 = vst [vmem:[#allocation3 + $0x330] sm:$0xf] %v8116
        %8149 = vst [vmem:[#allocation3 + $0x354] sm:$0xf] %v8117
        %8150 = vst [vmem:[#allocation3 + $0x378] sm:$0xf] %v8118
        %8151 = vst [vmem:[#allocation3 + $0x39c] sm:$0xf] %v8119
        %8152 = vst [vmem:[#allocation3 + $0x3c0] sm:$0xf] %v8120
        %8153 = vst [vmem:[#allocation3 + $0x3e4] sm:$0xf] %v8121
        %8154 = vst [vmem:[#allocation3 + $0x408] sm:$0xf] %v8122
        %8155 = vst [vmem:[#allocation3 + $0x42c] sm:$0xf] %v8123
        %8156 = vst [vmem:[#allocation3 + $0x450] sm:$0xf] %v8124
        %8157 = vst [vmem:[#allocation3 + $0x474] sm:$0xf] %v8125
        %v8158 = vld [vmem:[%s2682] sm:$0xf]
        %v8159 = vld [vmem:[%s2682 + $0x4] sm:$0xf]
        %v8160 = vld [vmem:[%s2682 + $0x8] sm:$0x1]
        %v8161 = vld [vmem:[%s2682 + $0xc] sm:$0xf]
        %v8162 = vld [vmem:[%s2682 + $0x10] sm:$0xf]
        %v8163 = vld [vmem:[%s2682 + $0x14] sm:$0x1]
        %v8164 = vld [vmem:[%s2682 + $0x18] sm:$0xf]
        %v8165 = vld [vmem:[%s2682 + $0x1c] sm:$0xf]
        %v8166 = vld [vmem:[%s2682 + $0x20] sm:$0x1]
        %v8167 = vld [vmem:[%s2682 + $0x24] sm:$0xf]
        %v8168 = vld [vmem:[%s2682 + $0x28] sm:$0xf]
        %v8169 = vld [vmem:[%s2682 + $0x2c] sm:$0x1]
        %v8170 = vld [vmem:[%s2682 + $0x30] sm:$0xf]
        %v8171 = vld [vmem:[%s2682 + $0x34] sm:$0xf]
        %v8172 = vld [vmem:[%s2682 + $0x38] sm:$0x1]
        %v8173 = vld [vmem:[%s2682 + $0x3c] sm:$0xf]
        %v8174 = vld [vmem:[%s2682 + $0x40] sm:$0xf]
        %v8175 = vld [vmem:[%s2682 + $0x44] sm:$0x1]
        %v8176 = vld [vmem:[%s2682 + $0x48] sm:$0xf]
        %v8177 = vld [vmem:[%s2682 + $0x4c] sm:$0xf]
        %v8178 = vld [vmem:[%s2682 + $0x50] sm:$0x1]
        %v8179 = vld [vmem:[%s2682 + $0x54] sm:$0xf]
        %v8180 = vld [vmem:[%s2682 + $0x58] sm:$0xf]
        %v8181 = vld [vmem:[%s2682 + $0x5c] sm:$0x1]
        %v8182 = vld [vmem:[%s2682 + $0x60] sm:$0xf]
        %v8183 = vld [vmem:[%s2682 + $0x64] sm:$0xf]
        %v8184 = vld [vmem:[%s2682 + $0x68] sm:$0x1]
        %v8185 = vld [vmem:[%s2682 + $0x6c] sm:$0xf]
        %v8186 = vld [vmem:[%s2682 + $0x70] sm:$0xf]
        %v8187 = vld [vmem:[%s2682 + $0x74] sm:$0x1]
        %v8188 = vld [vmem:[%s2682 + $0x78] sm:$0xf]
        %v8189 = vld [vmem:[%s2682 + $0x7c] sm:$0xf]
        %v8190 = vld [vmem:[%s2682 + $0x80] sm:$0x1]
        %v8191 = vld [vmem:[%s2682 + $0x84] sm:$0xf]
        %v8192 = vld [vmem:[%s2682 + $0x88] sm:$0xf]
        %v8193 = vld [vmem:[%s2682 + $0x8c] sm:$0x1]
        %v8194 = vld [vmem:[%s2682 + $0x90] sm:$0xf]
        %v8195 = vld [vmem:[%s2682 + $0x94] sm:$0xf]
        %v8196 = vld [vmem:[%s2682 + $0x98] sm:$0x1]
        %v8197 = vld [vmem:[%s2682 + $0x9c] sm:$0xf]
        %v8198 = vld [vmem:[%s2682 + $0xa0] sm:$0xf]
        %v8199 = vld [vmem:[%s2682 + $0xa4] sm:$0x1]
        %v8200 = vld [vmem:[%s2682 + $0xa8] sm:$0xf]
        %v8201 = vld [vmem:[%s2682 + $0xac] sm:$0xf]
        %v8202 = vld [vmem:[%s2682 + $0xb0] sm:$0x1]
        %v8203 = vld [vmem:[%s2682 + $0xb4] sm:$0xf]
        %v8204 = vld [vmem:[%s2682 + $0xb8] sm:$0xf]
        %v8205 = vld [vmem:[%s2682 + $0xbc] sm:$0x1]
        %v8207 = vshrl.u32 %v8158, 16
        %v8209 = vrot.slane %v8207, 4
        %v8210 = vshll.u32 %v8158, 16
        %v8212 = vrot.slane %v8210, 5
        %v8213 = vor.u32 %v8209, %v8212
        %v8214 = vrot.slane %v8213, 4
        %v8216 = vshll.u32 %v8159, 16
        %v8218 = vrot.slane %v8216, 5
        %v8219 = vsel %vm1126, %v8214, %v8218
        %v8220 = vshrl.u32 %v8159, 16
        %v8222 = vrot.slane %v8220, 4
        %v8223 = vor.u32 %v8222, %v8218
        %v8224 = vrot.slane %v8223, 4
        %v8226 = vshll.u32 %v8160, 16
        %v8228 = vrot.slane %v8226, 5
        %v8229 = vsel %vm1126, %v8224, %v8228
        %v8231 = vshrl.u32 %v8161, 16
        %v8233 = vrot.slane %v8231, 4
        %v8234 = vshll.u32 %v8161, 16
        %v8236 = vrot.slane %v8234, 5
        %v8237 = vor.u32 %v8233, %v8236
        %v8238 = vrot.slane %v8237, 4
        %v8240 = vshll.u32 %v8162, 16
        %v8242 = vrot.slane %v8240, 5
        %v8243 = vsel %vm1126, %v8238, %v8242
        %v8244 = vshrl.u32 %v8162, 16
        %v8246 = vrot.slane %v8244, 4
        %v8247 = vor.u32 %v8246, %v8242
        %v8248 = vrot.slane %v8247, 4
        %v8250 = vshll.u32 %v8163, 16
        %v8252 = vrot.slane %v8250, 5
        %v8253 = vsel %vm1126, %v8248, %v8252
        %v8255 = vshrl.u32 %v8164, 16
        %v8257 = vrot.slane %v8255, 4
        %v8258 = vshll.u32 %v8164, 16
        %v8260 = vrot.slane %v8258, 5
        %v8261 = vor.u32 %v8257, %v8260
        %v8262 = vrot.slane %v8261, 4
        %v8264 = vshll.u32 %v8165, 16
        %v8266 = vrot.slane %v8264, 5
        %v8267 = vsel %vm1126, %v8262, %v8266
        %v8268 = vshrl.u32 %v8165, 16
        %v8270 = vrot.slane %v8268, 4
        %v8271 = vor.u32 %v8270, %v8266
        %v8272 = vrot.slane %v8271, 4
        %v8274 = vshll.u32 %v8166, 16
        %v8276 = vrot.slane %v8274, 5
        %v8277 = vsel %vm1126, %v8272, %v8276
        %v8279 = vshrl.u32 %v8167, 16
        %v8281 = vrot.slane %v8279, 4
        %v8282 = vshll.u32 %v8167, 16
        %v8284 = vrot.slane %v8282, 5
        %v8285 = vor.u32 %v8281, %v8284
        %v8286 = vrot.slane %v8285, 4
        %v8288 = vshll.u32 %v8168, 16
        %v8290 = vrot.slane %v8288, 5
        %v8291 = vsel %vm1126, %v8286, %v8290
        %v8292 = vshrl.u32 %v8168, 16
        %v8294 = vrot.slane %v8292, 4
        %v8295 = vor.u32 %v8294, %v8290
        %v8296 = vrot.slane %v8295, 4
        %v8298 = vshll.u32 %v8169, 16
        %v8300 = vrot.slane %v8298, 5
        %v8301 = vsel %vm1126, %v8296, %v8300
        %v8303 = vshrl.u32 %v8170, 16
        %v8305 = vrot.slane %v8303, 4
        %v8306 = vshll.u32 %v8170, 16
        %v8308 = vrot.slane %v8306, 5
        %v8309 = vor.u32 %v8305, %v8308
        %v8310 = vrot.slane %v8309, 4
        %v8312 = vshll.u32 %v8171, 16
        %v8314 = vrot.slane %v8312, 5
        %v8315 = vsel %vm1126, %v8310, %v8314
        %v8316 = vshrl.u32 %v8171, 16
        %v8318 = vrot.slane %v8316, 4
        %v8319 = vor.u32 %v8318, %v8314
        %v8320 = vrot.slane %v8319, 4
        %v8322 = vshll.u32 %v8172, 16
        %v8324 = vrot.slane %v8322, 5
        %v8325 = vsel %vm1126, %v8320, %v8324
        %v8327 = vshrl.u32 %v8173, 16
        %v8329 = vrot.slane %v8327, 4
        %v8330 = vshll.u32 %v8173, 16
        %v8332 = vrot.slane %v8330, 5
        %v8333 = vor.u32 %v8329, %v8332
        %v8334 = vrot.slane %v8333, 4
        %v8336 = vshll.u32 %v8174, 16
        %v8338 = vrot.slane %v8336, 5
        %v8339 = vsel %vm1126, %v8334, %v8338
        %v8340 = vshrl.u32 %v8174, 16
        %v8342 = vrot.slane %v8340, 4
        %v8343 = vor.u32 %v8342, %v8338
        %v8344 = vrot.slane %v8343, 4
        %v8346 = vshll.u32 %v8175, 16
        %v8348 = vrot.slane %v8346, 5
        %v8349 = vsel %vm1126, %v8344, %v8348
        %v8351 = vshrl.u32 %v8176, 16
        %v8353 = vrot.slane %v8351, 4
        %v8354 = vshll.u32 %v8176, 16
        %v8356 = vrot.slane %v8354, 5
        %v8357 = vor.u32 %v8353, %v8356
        %v8358 = vrot.slane %v8357, 4
        %v8360 = vshll.u32 %v8177, 16
        %v8362 = vrot.slane %v8360, 5
        %v8363 = vsel %vm1126, %v8358, %v8362
        %v8364 = vshrl.u32 %v8177, 16
        %v8366 = vrot.slane %v8364, 4
        %v8367 = vor.u32 %v8366, %v8362
        %v8368 = vrot.slane %v8367, 4
        %v8370 = vshll.u32 %v8178, 16
        %v8372 = vrot.slane %v8370, 5
        %v8373 = vsel %vm1126, %v8368, %v8372
        %v8375 = vshrl.u32 %v8179, 16
        %v8377 = vrot.slane %v8375, 4
        %v8378 = vshll.u32 %v8179, 16
        %v8380 = vrot.slane %v8378, 5
        %v8381 = vor.u32 %v8377, %v8380
        %v8382 = vrot.slane %v8381, 4
        %v8384 = vshll.u32 %v8180, 16
        %v8386 = vrot.slane %v8384, 5
        %v8387 = vsel %vm1126, %v8382, %v8386
        %v8388 = vshrl.u32 %v8180, 16
        %v8390 = vrot.slane %v8388, 4
        %v8391 = vor.u32 %v8390, %v8386
        %v8392 = vrot.slane %v8391, 4
        %v8394 = vshll.u32 %v8181, 16
        %v8396 = vrot.slane %v8394, 5
        %v8397 = vsel %vm1126, %v8392, %v8396
        %v8399 = vshrl.u32 %v8182, 16
        %v8401 = vrot.slane %v8399, 4
        %v8402 = vshll.u32 %v8182, 16
        %v8404 = vrot.slane %v8402, 5
        %v8405 = vor.u32 %v8401, %v8404
        %v8406 = vrot.slane %v8405, 4
        %v8408 = vshll.u32 %v8183, 16
        %v8410 = vrot.slane %v8408, 5
        %v8411 = vsel %vm1126, %v8406, %v8410
        %v8412 = vshrl.u32 %v8183, 16
        %v8414 = vrot.slane %v8412, 4
        %v8415 = vor.u32 %v8414, %v8410
        %v8416 = vrot.slane %v8415, 4
        %v8418 = vshll.u32 %v8184, 16
        %v8420 = vrot.slane %v8418, 5
        %v8421 = vsel %vm1126, %v8416, %v8420
        %v8423 = vshrl.u32 %v8185, 16
        %v8425 = vrot.slane %v8423, 4
        %v8426 = vshll.u32 %v8185, 16
        %v8428 = vrot.slane %v8426, 5
        %v8429 = vor.u32 %v8425, %v8428
        %v8430 = vrot.slane %v8429, 4
        %v8432 = vshll.u32 %v8186, 16
        %v8434 = vrot.slane %v8432, 5
        %v8435 = vsel %vm1126, %v8430, %v8434
        %v8436 = vshrl.u32 %v8186, 16
        %v8438 = vrot.slane %v8436, 4
        %v8439 = vor.u32 %v8438, %v8434
        %v8440 = vrot.slane %v8439, 4
        %v8442 = vshll.u32 %v8187, 16
        %v8444 = vrot.slane %v8442, 5
        %v8445 = vsel %vm1126, %v8440, %v8444
        %v8447 = vshrl.u32 %v8188, 16
        %v8449 = vrot.slane %v8447, 4
        %v8450 = vshll.u32 %v8188, 16
        %v8452 = vrot.slane %v8450, 5
        %v8453 = vor.u32 %v8449, %v8452
        %v8454 = vrot.slane %v8453, 4
        %v8456 = vshll.u32 %v8189, 16
        %v8458 = vrot.slane %v8456, 5
        %v8459 = vsel %vm1126, %v8454, %v8458
        %v8460 = vshrl.u32 %v8189, 16
        %v8462 = vrot.slane %v8460, 4
        %v8463 = vor.u32 %v8462, %v8458
        %v8464 = vrot.slane %v8463, 4
        %v8466 = vshll.u32 %v8190, 16
        %v8468 = vrot.slane %v8466, 5
        %v8469 = vsel %vm1126, %v8464, %v8468
        %v8471 = vshrl.u32 %v8191, 16
        %v8473 = vrot.slane %v8471, 4
        %v8474 = vshll.u32 %v8191, 16
        %v8476 = vrot.slane %v8474, 5
        %v8477 = vor.u32 %v8473, %v8476
        %v8478 = vrot.slane %v8477, 4
        %v8480 = vshll.u32 %v8192, 16
        %v8482 = vrot.slane %v8480, 5
        %v8483 = vsel %vm1126, %v8478, %v8482
        %v8484 = vshrl.u32 %v8192, 16
        %v8486 = vrot.slane %v8484, 4
        %v8487 = vor.u32 %v8486, %v8482
        %v8488 = vrot.slane %v8487, 4
        %v8490 = vshll.u32 %v8193, 16
        %v8492 = vrot.slane %v8490, 5
        %v8493 = vsel %vm1126, %v8488, %v8492
        %v8495 = vshrl.u32 %v8194, 16
        %v8497 = vrot.slane %v8495, 4
        %v8498 = vshll.u32 %v8194, 16
        %v8500 = vrot.slane %v8498, 5
        %v8501 = vor.u32 %v8497, %v8500
        %v8502 = vrot.slane %v8501, 4
        %v8504 = vshll.u32 %v8195, 16
        %v8506 = vrot.slane %v8504, 5
        %v8507 = vsel %vm1126, %v8502, %v8506
        %v8508 = vshrl.u32 %v8195, 16
        %v8510 = vrot.slane %v8508, 4
        %v8511 = vor.u32 %v8510, %v8506
        %v8512 = vrot.slane %v8511, 4
        %v8514 = vshll.u32 %v8196, 16
        %v8516 = vrot.slane %v8514, 5
        %v8517 = vsel %vm1126, %v8512, %v8516
        %v8519 = vshrl.u32 %v8197, 16
        %v8521 = vrot.slane %v8519, 4
        %v8522 = vshll.u32 %v8197, 16
        %v8524 = vrot.slane %v8522, 5
        %v8525 = vor.u32 %v8521, %v8524
        %v8526 = vrot.slane %v8525, 4
        %v8528 = vshll.u32 %v8198, 16
        %v8530 = vrot.slane %v8528, 5
        %v8531 = vsel %vm1126, %v8526, %v8530
        %v8532 = vshrl.u32 %v8198, 16
        %v8534 = vrot.slane %v8532, 4
        %v8535 = vor.u32 %v8534, %v8530
        %v8536 = vrot.slane %v8535, 4
        %v8538 = vshll.u32 %v8199, 16
        %v8540 = vrot.slane %v8538, 5
        %v8541 = vsel %vm1126, %v8536, %v8540
        %v8543 = vshrl.u32 %v8200, 16
        %v8545 = vrot.slane %v8543, 4
        %v8546 = vshll.u32 %v8200, 16
        %v8548 = vrot.slane %v8546, 5
        %v8549 = vor.u32 %v8545, %v8548
        %v8550 = vrot.slane %v8549, 4
        %v8552 = vshll.u32 %v8201, 16
        %v8554 = vrot.slane %v8552, 5
        %v8555 = vsel %vm1126, %v8550, %v8554
        %v8556 = vshrl.u32 %v8201, 16
        %v8558 = vrot.slane %v8556, 4
        %v8559 = vor.u32 %v8558, %v8554
        %v8560 = vrot.slane %v8559, 4
        %v8562 = vshll.u32 %v8202, 16
        %v8564 = vrot.slane %v8562, 5
        %v8565 = vsel %vm1126, %v8560, %v8564
        %v8567 = vshrl.u32 %v8203, 16
        %v8569 = vrot.slane %v8567, 4
        %v8570 = vshll.u32 %v8203, 16
        %v8572 = vrot.slane %v8570, 5
        %v8573 = vor.u32 %v8569, %v8572
        %v8574 = vrot.slane %v8573, 4
        %v8576 = vshll.u32 %v8204, 16
        %v8578 = vrot.slane %v8576, 5
        %v8579 = vsel %vm1126, %v8574, %v8578
        %v8580 = vshrl.u32 %v8204, 16
        %v8582 = vrot.slane %v8580, 4
        %v8583 = vor.u32 %v8582, %v8578
        %v8584 = vrot.slane %v8583, 4
        %v8586 = vshll.u32 %v8205, 16
        %v8588 = vrot.slane %v8586, 5
        %v8589 = vsel %vm1126, %v8584, %v8588
        %8622 = vst [vmem:[#allocation3 + $0x1c] sm:$0xf] %v8219
        %8623 = vst [vmem:[#allocation3 + $0x40] sm:$0xf] %v8229
        %8624 = vst [vmem:[#allocation3 + $0x64] sm:$0xf] %v8243
        %8625 = vst [vmem:[#allocation3 + $0x88] sm:$0xf] %v8253
        %8626 = vst [vmem:[#allocation3 + $0xac] sm:$0xf] %v8267
        %8627 = vst [vmem:[#allocation3 + $0xd0] sm:$0xf] %v8277
        %8628 = vst [vmem:[#allocation3 + $0xf4] sm:$0xf] %v8291
        %8629 = vst [vmem:[#allocation3 + $0x118] sm:$0xf] %v8301
        %8630 = vst [vmem:[#allocation3 + $0x13c] sm:$0xf] %v8315
        %8631 = vst [vmem:[#allocation3 + $0x160] sm:$0xf] %v8325
        %8632 = vst [vmem:[#allocation3 + $0x184] sm:$0xf] %v8339
        %8633 = vst [vmem:[#allocation3 + $0x1a8] sm:$0xf] %v8349
        %8634 = vst [vmem:[#allocation3 + $0x1cc] sm:$0xf] %v8363
        %8635 = vst [vmem:[#allocation3 + $0x1f0] sm:$0xf] %v8373
        %8636 = vst [vmem:[#allocation3 + $0x214] sm:$0xf] %v8387
        %8637 = vst [vmem:[#allocation3 + $0x238] sm:$0xf] %v8397
        %8638 = vst [vmem:[#allocation3 + $0x25c] sm:$0xf] %v8411
        %8639 = vst [vmem:[#allocation3 + $0x280] sm:$0xf] %v8421
        %8640 = vst [vmem:[#allocation3 + $0x2a4] sm:$0xf] %v8435
        %8641 = vst [vmem:[#allocation3 + $0x2c8] sm:$0xf] %v8445
        %8642 = vst [vmem:[#allocation3 + $0x2ec] sm:$0xf] %v8459
        %8643 = vst [vmem:[#allocation3 + $0x310] sm:$0xf] %v8469
        %8644 = vst [vmem:[#allocation3 + $0x334] sm:$0xf] %v8483
        %8645 = vst [vmem:[#allocation3 + $0x358] sm:$0xf] %v8493
        %8646 = vst [vmem:[#allocation3 + $0x37c] sm:$0xf] %v8507
        %8647 = vst [vmem:[#allocation3 + $0x3a0] sm:$0xf] %v8517
        %8648 = vst [vmem:[#allocation3 + $0x3c4] sm:$0xf] %v8531
        %8649 = vst [vmem:[#allocation3 + $0x3e8] sm:$0xf] %v8541
        %8650 = vst [vmem:[#allocation3 + $0x40c] sm:$0xf] %v8555
        %8651 = vst [vmem:[#allocation3 + $0x430] sm:$0xf] %v8565
        %8652 = vst [vmem:[#allocation3 + $0x454] sm:$0xf] %v8579
        %8653 = vst [vmem:[#allocation3 + $0x478] sm:$0xf] %v8589
        %v8654 = vld [vmem:[%s2682] sm:$0xe]
        %v8655 = vld [vmem:[%s2682 + $0x4] sm:$0xf]
        %v8656 = vld [vmem:[%s2682 + $0x8] sm:$0x1]
        %v8657 = vld [vmem:[%s2682 + $0xc] sm:$0xe]
        %v8658 = vld [vmem:[%s2682 + $0x10] sm:$0xf]
        %v8659 = vld [vmem:[%s2682 + $0x14] sm:$0x1]
        %v8660 = vld [vmem:[%s2682 + $0x18] sm:$0xe]
        %v8661 = vld [vmem:[%s2682 + $0x1c] sm:$0xf]
        %v8662 = vld [vmem:[%s2682 + $0x20] sm:$0x1]
        %v8663 = vld [vmem:[%s2682 + $0x24] sm:$0xe]
        %v8664 = vld [vmem:[%s2682 + $0x28] sm:$0xf]
        %v8665 = vld [vmem:[%s2682 + $0x2c] sm:$0x1]
        %v8666 = vld [vmem:[%s2682 + $0x30] sm:$0xe]
        %v8667 = vld [vmem:[%s2682 + $0x34] sm:$0xf]
        %v8668 = vld [vmem:[%s2682 + $0x38] sm:$0x1]
        %v8669 = vld [vmem:[%s2682 + $0x3c] sm:$0xe]
        %v8670 = vld [vmem:[%s2682 + $0x40] sm:$0xf]
        %v8671 = vld [vmem:[%s2682 + $0x44] sm:$0x1]
        %v8672 = vld [vmem:[%s2682 + $0x48] sm:$0xe]
        %v8673 = vld [vmem:[%s2682 + $0x4c] sm:$0xf]
        %v8674 = vld [vmem:[%s2682 + $0x50] sm:$0x1]
        %v8675 = vld [vmem:[%s2682 + $0x54] sm:$0xe]
        %v8676 = vld [vmem:[%s2682 + $0x58] sm:$0xf]
        %v8677 = vld [vmem:[%s2682 + $0x5c] sm:$0x1]
        %v8678 = vld [vmem:[%s2682 + $0x60] sm:$0xe]
        %v8679 = vld [vmem:[%s2682 + $0x64] sm:$0xf]
        %v8680 = vld [vmem:[%s2682 + $0x68] sm:$0x1]
        %v8681 = vld [vmem:[%s2682 + $0x6c] sm:$0xe]
        %v8682 = vld [vmem:[%s2682 + $0x70] sm:$0xf]
        %v8683 = vld [vmem:[%s2682 + $0x74] sm:$0x1]
        %v8684 = vld [vmem:[%s2682 + $0x78] sm:$0xe]
        %v8685 = vld [vmem:[%s2682 + $0x7c] sm:$0xf]
        %v8686 = vld [vmem:[%s2682 + $0x80] sm:$0x1]
        %v8687 = vld [vmem:[%s2682 + $0x84] sm:$0xe]
        %v8688 = vld [vmem:[%s2682 + $0x88] sm:$0xf]
        %v8689 = vld [vmem:[%s2682 + $0x8c] sm:$0x1]
        %v8690 = vld [vmem:[%s2682 + $0x90] sm:$0xe]
        %v8691 = vld [vmem:[%s2682 + $0x94] sm:$0xf]
        %v8692 = vld [vmem:[%s2682 + $0x98] sm:$0x1]
        %v8693 = vld [vmem:[%s2682 + $0x9c] sm:$0xe]
        %v8694 = vld [vmem:[%s2682 + $0xa0] sm:$0xf]
        %v8695 = vld [vmem:[%s2682 + $0xa4] sm:$0x1]
        %v8696 = vld [vmem:[%s2682 + $0xa8] sm:$0xe]
        %v8697 = vld [vmem:[%s2682 + $0xac] sm:$0xf]
        %v8698 = vld [vmem:[%s2682 + $0xb0] sm:$0x1]
        %v8699 = vld [vmem:[%s2682 + $0xb4] sm:$0xe]
        %v8700 = vld [vmem:[%s2682 + $0xb8] sm:$0xf]
        %v8701 = vld [vmem:[%s2682 + $0xbc] sm:$0x1]
        %v8750 = vrot.slane %v8654, 5
        %v8751 = vrot.slane %v8750, 4
        %v8752 = vrot.slane %v8655, 5
        %v8753 = vsel %vm1673, %v8751, %v8752
        %v8754 = vrot.slane %v8752, 4
        %v8755 = vrot.slane %v8656, 5
        %v8756 = vsel %vm1673, %v8754, %v8755
        %v8757 = vrot.slane %v8657, 5
        %v8758 = vrot.slane %v8757, 4
        %v8759 = vrot.slane %v8658, 5
        %v8760 = vsel %vm1673, %v8758, %v8759
        %v8761 = vrot.slane %v8759, 4
        %v8762 = vrot.slane %v8659, 5
        %v8763 = vsel %vm1673, %v8761, %v8762
        %v8764 = vrot.slane %v8660, 5
        %v8765 = vrot.slane %v8764, 4
        %v8766 = vrot.slane %v8661, 5
        %v8767 = vsel %vm1673, %v8765, %v8766
        %v8768 = vrot.slane %v8766, 4
        %v8769 = vrot.slane %v8662, 5
        %v8770 = vsel %vm1673, %v8768, %v8769
        %v8771 = vrot.slane %v8663, 5
        %v8772 = vrot.slane %v8771, 4
        %v8773 = vrot.slane %v8664, 5
        %v8774 = vsel %vm1673, %v8772, %v8773
        %v8775 = vrot.slane %v8773, 4
        %v8776 = vrot.slane %v8665, 5
        %v8777 = vsel %vm1673, %v8775, %v8776
        %v8778 = vrot.slane %v8666, 5
        %v8779 = vrot.slane %v8778, 4
        %v8780 = vrot.slane %v8667, 5
        %v8781 = vsel %vm1673, %v8779, %v8780
        %v8782 = vrot.slane %v8780, 4
        %v8783 = vrot.slane %v8668, 5
        %v8784 = vsel %vm1673, %v8782, %v8783
        %v8785 = vrot.slane %v8669, 5
        %v8786 = vrot.slane %v8785, 4
        %v8787 = vrot.slane %v8670, 5
        %v8788 = vsel %vm1673, %v8786, %v8787
        %v8789 = vrot.slane %v8787, 4
        %v8790 = vrot.slane %v8671, 5
        %v8791 = vsel %vm1673, %v8789, %v8790
        %v8792 = vrot.slane %v8672, 5
        %v8793 = vrot.slane %v8792, 4
        %v8794 = vrot.slane %v8673, 5
        %v8795 = vsel %vm1673, %v8793, %v8794
        %v8796 = vrot.slane %v8794, 4
        %v8797 = vrot.slane %v8674, 5
        %v8798 = vsel %vm1673, %v8796, %v8797
        %v8799 = vrot.slane %v8675, 5
        %v8800 = vrot.slane %v8799, 4
        %v8801 = vrot.slane %v8676, 5
        %v8802 = vsel %vm1673, %v8800, %v8801
        %v8803 = vrot.slane %v8801, 4
        %v8804 = vrot.slane %v8677, 5
        %v8805 = vsel %vm1673, %v8803, %v8804
        %v8806 = vrot.slane %v8678, 5
        %v8807 = vrot.slane %v8806, 4
        %v8808 = vrot.slane %v8679, 5
        %v8809 = vsel %vm1673, %v8807, %v8808
        %v8810 = vrot.slane %v8808, 4
        %v8811 = vrot.slane %v8680, 5
        %v8812 = vsel %vm1673, %v8810, %v8811
        %v8813 = vrot.slane %v8681, 5
        %v8814 = vrot.slane %v8813, 4
        %v8815 = vrot.slane %v8682, 5
        %v8816 = vsel %vm1673, %v8814, %v8815
        %v8817 = vrot.slane %v8815, 4
        %v8818 = vrot.slane %v8683, 5
        %v8819 = vsel %vm1673, %v8817, %v8818
        %v8820 = vrot.slane %v8684, 5
        %v8821 = vrot.slane %v8820, 4
        %v8822 = vrot.slane %v8685, 5
        %v8823 = vsel %vm1673, %v8821, %v8822
        %v8824 = vrot.slane %v8822, 4
        %v8825 = vrot.slane %v8686, 5
        %v8826 = vsel %vm1673, %v8824, %v8825
        %v8827 = vrot.slane %v8687, 5
        %v8828 = vrot.slane %v8827, 4
        %v8829 = vrot.slane %v8688, 5
        %v8830 = vsel %vm1673, %v8828, %v8829
        %v8831 = vrot.slane %v8829, 4
        %v8832 = vrot.slane %v8689, 5
        %v8833 = vsel %vm1673, %v8831, %v8832
        %v8834 = vrot.slane %v8690, 5
        %v8835 = vrot.slane %v8834, 4
        %v8836 = vrot.slane %v8691, 5
        %v8837 = vsel %vm1673, %v8835, %v8836
        %v8838 = vrot.slane %v8836, 4
        %v8839 = vrot.slane %v8692, 5
        %v8840 = vsel %vm1673, %v8838, %v8839
        %v8841 = vrot.slane %v8693, 5
        %v8842 = vrot.slane %v8841, 4
        %v8843 = vrot.slane %v8694, 5
        %v8844 = vsel %vm1673, %v8842, %v8843
        %v8845 = vrot.slane %v8843, 4
        %v8846 = vrot.slane %v8695, 5
        %v8847 = vsel %vm1673, %v8845, %v8846
        %v8848 = vrot.slane %v8696, 5
        %v8849 = vrot.slane %v8848, 4
        %v8850 = vrot.slane %v8697, 5
        %v8851 = vsel %vm1673, %v8849, %v8850
        %v8852 = vrot.slane %v8850, 4
        %v8853 = vrot.slane %v8698, 5
        %v8854 = vsel %vm1673, %v8852, %v8853
        %v8855 = vrot.slane %v8699, 5
        %v8856 = vrot.slane %v8855, 4
        %v8857 = vrot.slane %v8700, 5
        %v8858 = vsel %vm1673, %v8856, %v8857
        %v8859 = vrot.slane %v8857, 4
        %v8860 = vrot.slane %v8701, 5
        %v8861 = vsel %vm1673, %v8859, %v8860
        %8894 = vst [vmem:[#allocation3 + $0x20] sm:$0xf] %v8753
        %8895 = vst [vmem:[#allocation3 + $0x44] sm:$0xf] %v8756
        %8896 = vst [vmem:[#allocation3 + $0x68] sm:$0xf] %v8760
        %8897 = vst [vmem:[#allocation3 + $0x8c] sm:$0xf] %v8763
        %8898 = vst [vmem:[#allocation3 + $0xb0] sm:$0xf] %v8767
        %8899 = vst [vmem:[#allocation3 + $0xd4] sm:$0xf] %v8770
        %8900 = vst [vmem:[#allocation3 + $0xf8] sm:$0xf] %v8774
        %8901 = vst [vmem:[#allocation3 + $0x11c] sm:$0xf] %v8777
        %8902 = vst [vmem:[#allocation3 + $0x140] sm:$0xf] %v8781
        %8903 = vst [vmem:[#allocation3 + $0x164] sm:$0xf] %v8784
        %8904 = vst [vmem:[#allocation3 + $0x188] sm:$0xf] %v8788
        %8905 = vst [vmem:[#allocation3 + $0x1ac] sm:$0xf] %v8791
        %8906 = vst [vmem:[#allocation3 + $0x1d0] sm:$0xf] %v8795
        %8907 = vst [vmem:[#allocation3 + $0x1f4] sm:$0xf] %v8798
        %8908 = vst [vmem:[#allocation3 + $0x218] sm:$0xf] %v8802
        %8909 = vst [vmem:[#allocation3 + $0x23c] sm:$0xf] %v8805
        %8910 = vst [vmem:[#allocation3 + $0x260] sm:$0xf] %v8809
        %8911 = vst [vmem:[#allocation3 + $0x284] sm:$0xf] %v8812
        %8912 = vst [vmem:[#allocation3 + $0x2a8] sm:$0xf] %v8816
        %8913 = vst [vmem:[#allocation3 + $0x2cc] sm:$0xf] %v8819
        %8914 = vst [vmem:[#allocation3 + $0x2f0] sm:$0xf] %v8823
        %8915 = vst [vmem:[#allocation3 + $0x314] sm:$0xf] %v8826
        %8916 = vst [vmem:[#allocation3 + $0x338] sm:$0xf] %v8830
        %8917 = vst [vmem:[#allocation3 + $0x35c] sm:$0xf] %v8833
        %8918 = vst [vmem:[#allocation3 + $0x380] sm:$0xf] %v8837
        %8919 = vst [vmem:[#allocation3 + $0x3a4] sm:$0xf] %v8840
        %8920 = vst [vmem:[#allocation3 + $0x3c8] sm:$0xf] %v8844
        %8921 = vst [vmem:[#allocation3 + $0x3ec] sm:$0xf] %v8847
        %8922 = vst [vmem:[#allocation3 + $0x410] sm:$0xf] %v8851
        %8923 = vst [vmem:[#allocation3 + $0x434] sm:$0xf] %v8854
        %8924 = vst [vmem:[#allocation3 + $0x458] sm:$0xf] %v8858
        %8925 = vst [vmem:[#allocation3 + $0x47c] sm:$0xf] %v8861
        %v8926 = vld [vmem:[#allocation3] sm:$0xff]
        %v8927 = vld [vmem:[#allocation3 + $0x8] sm:$0xff]
        %v8928 = vld [vmem:[#allocation3 + $0x10] sm:$0xff]
        %v8929 = vld [vmem:[#allocation3 + $0x18] sm:$0xff]
        %v8930 = vld [vmem:[#allocation3 + $0x20] sm:$0xf]
        %v8931 = vld [vmem:[#allocation3 + $0x24] sm:$0xff]
        %v8932 = vld [vmem:[#allocation3 + $0x2c] sm:$0xff]
        %v8933 = vld [vmem:[#allocation3 + $0x34] sm:$0xff]
        %v8934 = vld [vmem:[#allocation3 + $0x3c] sm:$0xff]
        %v8935 = vld [vmem:[#allocation3 + $0x44] sm:$0xf]
        %v8936 = vld [vmem:[#allocation3 + $0x48] sm:$0xff]
        %v8937 = vld [vmem:[#allocation3 + $0x50] sm:$0xff]
        %v8938 = vld [vmem:[#allocation3 + $0x58] sm:$0xff]
        %v8939 = vld [vmem:[#allocation3 + $0x60] sm:$0xff]
        %v8940 = vld [vmem:[#allocation3 + $0x68] sm:$0xf]
        %v8941 = vld [vmem:[#allocation3 + $0x6c] sm:$0xff]
        %v8942 = vld [vmem:[#allocation3 + $0x74] sm:$0xff]
        %v8943 = vld [vmem:[#allocation3 + $0x7c] sm:$0xff]
        %v8944 = vld [vmem:[#allocation3 + $0x84] sm:$0xff]
        %v8945 = vld [vmem:[#allocation3 + $0x8c] sm:$0xf]
        %v8946 = vld [vmem:[#allocation3 + $0x90] sm:$0xff]
        %v8947 = vld [vmem:[#allocation3 + $0x98] sm:$0xff]
        %v8948 = vld [vmem:[#allocation3 + $0xa0] sm:$0xff]
        %v8949 = vld [vmem:[#allocation3 + $0xa8] sm:$0xff]
        %v8950 = vld [vmem:[#allocation3 + $0xb0] sm:$0xf]
        %v8951 = vld [vmem:[#allocation3 + $0xb4] sm:$0xff]
        %v8952 = vld [vmem:[#allocation3 + $0xbc] sm:$0xff]
        %v8953 = vld [vmem:[#allocation3 + $0xc4] sm:$0xff]
        %v8954 = vld [vmem:[#allocation3 + $0xcc] sm:$0xff]
        %v8955 = vld [vmem:[#allocation3 + $0xd4] sm:$0xf]
        %v8956 = vld [vmem:[#allocation3 + $0xd8] sm:$0xff]
        %v8957 = vld [vmem:[#allocation3 + $0xe0] sm:$0xff]
        %v8958 = vld [vmem:[#allocation3 + $0xe8] sm:$0xff]
        %v8959 = vld [vmem:[#allocation3 + $0xf0] sm:$0xff]
        %v8960 = vld [vmem:[#allocation3 + $0xf8] sm:$0xf]
        %v8961 = vld [vmem:[#allocation3 + $0xfc] sm:$0xff]
        %v8962 = vld [vmem:[#allocation3 + $0x104] sm:$0xff]
        %v8963 = vld [vmem:[#allocation3 + $0x10c] sm:$0xff]
        %v8964 = vld [vmem:[#allocation3 + $0x114] sm:$0xff]
        %v8965 = vld [vmem:[#allocation3 + $0x11c] sm:$0xf]
        %v8966 = vld [vmem:[#allocation3 + $0x120] sm:$0xff]
        %v8967 = vld [vmem:[#allocation3 + $0x128] sm:$0xff]
        %v8968 = vld [vmem:[#allocation3 + $0x130] sm:$0xff]
        %v8969 = vld [vmem:[#allocation3 + $0x138] sm:$0xff]
        %v8970 = vld [vmem:[#allocation3 + $0x140] sm:$0xf]
        %v8971 = vld [vmem:[#allocation3 + $0x144] sm:$0xff]
        %v8972 = vld [vmem:[#allocation3 + $0x14c] sm:$0xff]
        %v8973 = vld [vmem:[#allocation3 + $0x154] sm:$0xff]
        %v8974 = vld [vmem:[#allocation3 + $0x15c] sm:$0xff]
        %v8975 = vld [vmem:[#allocation3 + $0x164] sm:$0xf]
        %v8976 = vld [vmem:[#allocation3 + $0x168] sm:$0xff]
        %v8977 = vld [vmem:[#allocation3 + $0x170] sm:$0xff]
        %v8978 = vld [vmem:[#allocation3 + $0x178] sm:$0xff]
        %v8979 = vld [vmem:[#allocation3 + $0x180] sm:$0xff]
        %v8980 = vld [vmem:[#allocation3 + $0x188] sm:$0xf]
        %v8981 = vld [vmem:[#allocation3 + $0x18c] sm:$0xff]
        %v8982 = vld [vmem:[#allocation3 + $0x194] sm:$0xff]
        %v8983 = vld [vmem:[#allocation3 + $0x19c] sm:$0xff]
        %v8984 = vld [vmem:[#allocation3 + $0x1a4] sm:$0xff]
        %v8985 = vld [vmem:[#allocation3 + $0x1ac] sm:$0xf]
        %v8986 = vld [vmem:[#allocation3 + $0x1b0] sm:$0xff]
        %v8987 = vld [vmem:[#allocation3 + $0x1b8] sm:$0xff]
        %v8988 = vld [vmem:[#allocation3 + $0x1c0] sm:$0xff]
        %v8989 = vld [vmem:[#allocation3 + $0x1c8] sm:$0xff]
        %v8990 = vld [vmem:[#allocation3 + $0x1d0] sm:$0xf]
        %v8991 = vld [vmem:[#allocation3 + $0x1d4] sm:$0xff]
        %v8992 = vld [vmem:[#allocation3 + $0x1dc] sm:$0xff]
        %v8993 = vld [vmem:[#allocation3 + $0x1e4] sm:$0xff]
        %v8994 = vld [vmem:[#allocation3 + $0x1ec] sm:$0xff]
        %v8995 = vld [vmem:[#allocation3 + $0x1f4] sm:$0xf]
        %v8996 = vld [vmem:[#allocation3 + $0x1f8] sm:$0xff]
        %v8997 = vld [vmem:[#allocation3 + $0x200] sm:$0xff]
        %v8998 = vld [vmem:[#allocation3 + $0x208] sm:$0xff]
        %v8999 = vld [vmem:[#allocation3 + $0x210] sm:$0xff]
        %v9000 = vld [vmem:[#allocation3 + $0x218] sm:$0xf]
        %v9001 = vld [vmem:[#allocation3 + $0x21c] sm:$0xff]
        %v9002 = vld [vmem:[#allocation3 + $0x224] sm:$0xff]
        %v9003 = vld [vmem:[#allocation3 + $0x22c] sm:$0xff]
        %v9004 = vld [vmem:[#allocation3 + $0x234] sm:$0xff]
        %v9005 = vld [vmem:[#allocation3 + $0x23c] sm:$0xf]
        %v9006 = vld [vmem:[#allocation3 + $0x240] sm:$0xff]
        %v9007 = vld [vmem:[#allocation3 + $0x248] sm:$0xff]
        %v9008 = vld [vmem:[#allocation3 + $0x250] sm:$0xff]
        %v9009 = vld [vmem:[#allocation3 + $0x258] sm:$0xff]
        %v9010 = vld [vmem:[#allocation3 + $0x260] sm:$0xf]
        %v9011 = vld [vmem:[#allocation3 + $0x264] sm:$0xff]
        %v9012 = vld [vmem:[#allocation3 + $0x26c] sm:$0xff]
        %v9013 = vld [vmem:[#allocation3 + $0x274] sm:$0xff]
        %v9014 = vld [vmem:[#allocation3 + $0x27c] sm:$0xff]
        %v9015 = vld [vmem:[#allocation3 + $0x284] sm:$0xf]
        %v9016 = vld [vmem:[#allocation3 + $0x288] sm:$0xff]
        %v9017 = vld [vmem:[#allocation3 + $0x290] sm:$0xff]
        %v9018 = vld [vmem:[#allocation3 + $0x298] sm:$0xff]
        %v9019 = vld [vmem:[#allocation3 + $0x2a0] sm:$0xff]
        %v9020 = vld [vmem:[#allocation3 + $0x2a8] sm:$0xf]
        %v9021 = vld [vmem:[#allocation3 + $0x2ac] sm:$0xff]
        %v9022 = vld [vmem:[#allocation3 + $0x2b4] sm:$0xff]
        %v9023 = vld [vmem:[#allocation3 + $0x2bc] sm:$0xff]
        %v9024 = vld [vmem:[#allocation3 + $0x2c4] sm:$0xff]
        %v9025 = vld [vmem:[#allocation3 + $0x2cc] sm:$0xf]
        %v9026 = vld [vmem:[#allocation3 + $0x2d0] sm:$0xff]
        %v9027 = vld [vmem:[#allocation3 + $0x2d8] sm:$0xff]
        %v9028 = vld [vmem:[#allocation3 + $0x2e0] sm:$0xff]
        %v9029 = vld [vmem:[#allocation3 + $0x2e8] sm:$0xff]
        %v9030 = vld [vmem:[#allocation3 + $0x2f0] sm:$0xf]
        %v9031 = vld [vmem:[#allocation3 + $0x2f4] sm:$0xff]
        %v9032 = vld [vmem:[#allocation3 + $0x2fc] sm:$0xff]
        %v9033 = vld [vmem:[#allocation3 + $0x304] sm:$0xff]
        %v9034 = vld [vmem:[#allocation3 + $0x30c] sm:$0xff]
        %v9035 = vld [vmem:[#allocation3 + $0x314] sm:$0xf]
        %v9036 = vld [vmem:[#allocation3 + $0x318] sm:$0xff]
        %v9037 = vld [vmem:[#allocation3 + $0x320] sm:$0xff]
        %v9038 = vld [vmem:[#allocation3 + $0x328] sm:$0xff]
        %v9039 = vld [vmem:[#allocation3 + $0x330] sm:$0xff]
        %v9040 = vld [vmem:[#allocation3 + $0x338] sm:$0xf]
        %v9041 = vld [vmem:[#allocation3 + $0x33c] sm:$0xff]
        %v9042 = vld [vmem:[#allocation3 + $0x344] sm:$0xff]
        %v9043 = vld [vmem:[#allocation3 + $0x34c] sm:$0xff]
        %v9044 = vld [vmem:[#allocation3 + $0x354] sm:$0xff]
        %v9045 = vld [vmem:[#allocation3 + $0x35c] sm:$0xf]
        %v9046 = vld [vmem:[#allocation3 + $0x360] sm:$0xff]
        %v9047 = vld [vmem:[#allocation3 + $0x368] sm:$0xff]
        %v9048 = vld [vmem:[#allocation3 + $0x370] sm:$0xff]
        %v9049 = vld [vmem:[#allocation3 + $0x378] sm:$0xff]
        %v9050 = vld [vmem:[#allocation3 + $0x380] sm:$0xf]
        %v9051 = vld [vmem:[#allocation3 + $0x384] sm:$0xff]
        %v9052 = vld [vmem:[#allocation3 + $0x38c] sm:$0xff]
        %v9053 = vld [vmem:[#allocation3 + $0x394] sm:$0xff]
        %v9054 = vld [vmem:[#allocation3 + $0x39c] sm:$0xff]
        %v9055 = vld [vmem:[#allocation3 + $0x3a4] sm:$0xf]
        %v9056 = vld [vmem:[#allocation3 + $0x3a8] sm:$0xff]
        %v9057 = vld [vmem:[#allocation3 + $0x3b0] sm:$0xff]
        %v9058 = vld [vmem:[#allocation3 + $0x3b8] sm:$0xff]
        %v9059 = vld [vmem:[#allocation3 + $0x3c0] sm:$0xff]
        %v9060 = vld [vmem:[#allocation3 + $0x3c8] sm:$0xf]
        %v9061 = vld [vmem:[#allocation3 + $0x3cc] sm:$0xff]
        %v9062 = vld [vmem:[#allocation3 + $0x3d4] sm:$0xff]
        %v9063 = vld [vmem:[#allocation3 + $0x3dc] sm:$0xff]
        %v9064 = vld [vmem:[#allocation3 + $0x3e4] sm:$0xff]
        %v9065 = vld [vmem:[#allocation3 + $0x3ec] sm:$0xf]
        %v9066 = vld [vmem:[#allocation3 + $0x3f0] sm:$0xff]
        %v9067 = vld [vmem:[#allocation3 + $0x3f8] sm:$0xff]
        %v9068 = vld [vmem:[#allocation3 + $0x400] sm:$0xff]
        %v9069 = vld [vmem:[#allocation3 + $0x408] sm:$0xff]
        %v9070 = vld [vmem:[#allocation3 + $0x410] sm:$0xf]
        %v9071 = vld [vmem:[#allocation3 + $0x414] sm:$0xff]
        %v9072 = vld [vmem:[#allocation3 + $0x41c] sm:$0xff]
        %v9073 = vld [vmem:[#allocation3 + $0x424] sm:$0xff]
        %v9074 = vld [vmem:[#allocation3 + $0x42c] sm:$0xff]
        %v9075 = vld [vmem:[#allocation3 + $0x434] sm:$0xf]
        %v9076 = vld [vmem:[#allocation3 + $0x438] sm:$0xff]
        %v9077 = vld [vmem:[#allocation3 + $0x440] sm:$0xff]
        %v9078 = vld [vmem:[#allocation3 + $0x448] sm:$0xff]
        %v9079 = vld [vmem:[#allocation3 + $0x450] sm:$0xff]
        %v9080 = vld [vmem:[#allocation3 + $0x458] sm:$0xf]
        %v9081 = vld [vmem:[#allocation3 + $0x45c] sm:$0xff]
        %v9082 = vld [vmem:[#allocation3 + $0x464] sm:$0xff]
        %v9083 = vld [vmem:[#allocation3 + $0x46c] sm:$0xff]
        %v9084 = vld [vmem:[#allocation3 + $0x474] sm:$0xff]
        %v9085 = vld [vmem:[#allocation3 + $0x47c] sm:$0xf]
        %v9086 = vld [vmem:[#allocation9] sm:$0xf]
        %v9087 = vld [vmem:[#allocation9 + $0x4] sm:$0xf]
        %v9088 = vld [vmem:[#allocation9 + $0x8] sm:$0xf]
        %v9089 = vld [vmem:[#allocation9 + $0xc] sm:$0xf]
        %v9090 = vld [vmem:[#allocation9 + $0x10] sm:$0xf]
        %v9091 = vld [vmem:[#allocation9 + $0x14] sm:$0xf]
        %v9092 = vld [vmem:[#allocation9 + $0x18] sm:$0xf]
        %v9093 = vld [vmem:[#allocation9 + $0x1c] sm:$0xf]
        %v9094 = vld [vmem:[#allocation9 + $0x20] sm:$0xf]
        %v9095 = vld [vmem:[#allocation9 + $0x24] sm:$0xf]
        %v9096 = vld [vmem:[#allocation9 + $0x28] sm:$0xf]
        %v9097 = vld [vmem:[#allocation9 + $0x2c] sm:$0xf]
        %v9098 = vld [vmem:[#allocation9 + $0x30] sm:$0xf]
        %v9099 = vld [vmem:[#allocation9 + $0x34] sm:$0xf]
        %v9100 = vld [vmem:[#allocation9 + $0x38] sm:$0xf]
        %v9101 = vld [vmem:[#allocation9 + $0x3c] sm:$0xf]
        %v9102 = vld [vmem:[#allocation9 + $0x40] sm:$0xf]
        %v9103 = vld [vmem:[#allocation9 + $0x44] sm:$0xf]
        %v9104 = vld [vmem:[#allocation9 + $0x48] sm:$0xf]
        %v9105 = vld [vmem:[#allocation9 + $0x4c] sm:$0xf]
        %v9106 = vld [vmem:[#allocation9 + $0x50] sm:$0xf]
        %v9107 = vld [vmem:[#allocation9 + $0x54] sm:$0xf]
        %v9108 = vld [vmem:[#allocation9 + $0x58] sm:$0xf]
        %v9109 = vld [vmem:[#allocation9 + $0x5c] sm:$0xf]
        %v9110 = vld [vmem:[#allocation9 + $0x60] sm:$0xf]
        %v9111 = vld [vmem:[#allocation9 + $0x64] sm:$0xf]
        %v9112 = vld [vmem:[#allocation9 + $0x68] sm:$0xf]
        %v9113 = vld [vmem:[#allocation9 + $0x6c] sm:$0xf]
        %v9114 = vld [vmem:[#allocation9 + $0x70] sm:$0xf]
        %v9115 = vld [vmem:[#allocation9 + $0x74] sm:$0xf]
        %v9116 = vld [vmem:[#allocation9 + $0x78] sm:$0xf]
        %v9117 = vld [vmem:[#allocation9 + $0x7c] sm:$0xf]
        %v9118 = vld [vmem:[#allocation9 + $0x80] sm:$0xf]
        %v9119 = vld [vmem:[#allocation9 + $0x84] sm:$0xf]
        %v9120 = vld [vmem:[#allocation9 + $0x88] sm:$0xf]
        %v9121 = vld [vmem:[#allocation9 + $0x8c] sm:$0xf]
        %v9122 = vld [vmem:[#allocation9 + $0x90] sm:$0xf]
        %v9123 = vld [vmem:[#allocation9 + $0x94] sm:$0xf]
        %v9124 = vld [vmem:[#allocation9 + $0x98] sm:$0xf]
        %v9125 = vld [vmem:[#allocation9 + $0x9c] sm:$0xf]
        %v9126 = vld [vmem:[#allocation9 + $0xa0] sm:$0xf]
        %v9127 = vld [vmem:[#allocation9 + $0xa4] sm:$0xf]
        %v9128 = vld [vmem:[#allocation9 + $0xa8] sm:$0xf]
        %v9129 = vld [vmem:[#allocation9 + $0xac] sm:$0xf]
        %v9130 = vld [vmem:[#allocation9 + $0xb0] sm:$0xf]
        %v9131 = vld [vmem:[#allocation9 + $0xb4] sm:$0xf]
        %v9132 = vld [vmem:[#allocation9 + $0xb8] sm:$0xf]
        %v9133 = vld [vmem:[#allocation9 + $0xbc] sm:$0xf]
        %v9134 = vld [vmem:[#allocation9 + $0xc0] sm:$0xf]
        %v9135 = vld [vmem:[#allocation9 + $0xc4] sm:$0xf]
        %v9136 = vld [vmem:[#allocation9 + $0xc8] sm:$0xf]
        %v9137 = vld [vmem:[#allocation9 + $0xcc] sm:$0xf]
        %v9138 = vld [vmem:[#allocation9 + $0xd0] sm:$0xf]
        %v9139 = vld [vmem:[#allocation9 + $0xd4] sm:$0xf]
        %v9140 = vld [vmem:[#allocation9 + $0xd8] sm:$0xf]
        %v9141 = vld [vmem:[#allocation9 + $0xdc] sm:$0xf]
        %v9142 = vld [vmem:[#allocation9 + $0xe0] sm:$0xf]
        %v9143 = vld [vmem:[#allocation9 + $0xe4] sm:$0xf]
        %v9144 = vld [vmem:[#allocation9 + $0xe8] sm:$0xf]
        %v9145 = vld [vmem:[#allocation9 + $0xec] sm:$0xf]
        %v9146 = vld [vmem:[#allocation9 + $0xf0] sm:$0xf]
        %v9147 = vld [vmem:[#allocation9 + $0xf4] sm:$0xf]
        %v9148 = vld [vmem:[#allocation9 + $0xf8] sm:$0xf]
        %v9149 = vld [vmem:[#allocation9 + $0xfc] sm:$0xf]
        %v9150 = vld [vmem:[#allocation9 + $0x100] sm:$0xf]
        %v9151 = vld [vmem:[#allocation9 + $0x104] sm:$0xf]
        %v9152 = vld [vmem:[#allocation9 + $0x108] sm:$0xf]
        %v9153 = vld [vmem:[#allocation9 + $0x10c] sm:$0xf]
        %v9154 = vld [vmem:[#allocation9 + $0x110] sm:$0xf]
        %v9155 = vld [vmem:[#allocation9 + $0x114] sm:$0xf]
        %v9156 = vld [vmem:[#allocation9 + $0x118] sm:$0xf]
        %v9157 = vld [vmem:[#allocation9 + $0x11c] sm:$0xf]
        %v9158 = vld [vmem:[#allocation9 + $0x120] sm:$0xf]
        %v9159 = vld [vmem:[#allocation9 + $0x124] sm:$0xf]
        %v9160 = vld [vmem:[#allocation9 + $0x128] sm:$0xf]
        %v9161 = vld [vmem:[#allocation9 + $0x12c] sm:$0xf]
        %v9162 = vld [vmem:[#allocation9 + $0x130] sm:$0xf]
        %v9163 = vld [vmem:[#allocation9 + $0x134] sm:$0xf]
        %v9164 = vld [vmem:[#allocation9 + $0x138] sm:$0xf]
        %v9165 = vld [vmem:[#allocation9 + $0x13c] sm:$0xf]
        %v9166 = vld [vmem:[#allocation9 + $0x140] sm:$0xf]
        %v9167 = vld [vmem:[#allocation9 + $0x144] sm:$0xf]
        %v9168 = vld [vmem:[#allocation9 + $0x148] sm:$0xf]
        %v9169 = vld [vmem:[#allocation9 + $0x14c] sm:$0xf]
        %v9170 = vld [vmem:[#allocation9 + $0x150] sm:$0xf]
        %v9171 = vld [vmem:[#allocation9 + $0x154] sm:$0xf]
        %v9172 = vld [vmem:[#allocation9 + $0x158] sm:$0xf]
        %v9173 = vld [vmem:[#allocation9 + $0x15c] sm:$0xf]
        %v9174 = vld [vmem:[#allocation9 + $0x160] sm:$0xf]
        %v9175 = vld [vmem:[#allocation9 + $0x164] sm:$0xf]
        %v9176 = vld [vmem:[#allocation9 + $0x168] sm:$0xf]
        %v9177 = vld [vmem:[#allocation9 + $0x16c] sm:$0xf]
        %v9178 = vld [vmem:[#allocation9 + $0x170] sm:$0xf]
        %v9179 = vld [vmem:[#allocation9 + $0x174] sm:$0xf]
        %v9180 = vld [vmem:[#allocation9 + $0x178] sm:$0xf]
        %v9181 = vld [vmem:[#allocation9 + $0x17c] sm:$0xf]
        %v9182 = vld [vmem:[#allocation9 + $0x180] sm:$0xf]
        %v9183 = vld [vmem:[#allocation9 + $0x184] sm:$0xf]
        %v9184 = vld [vmem:[#allocation9 + $0x188] sm:$0xf]
        %v9185 = vld [vmem:[#allocation9 + $0x18c] sm:$0xf]
        %v9186 = vld [vmem:[#allocation9 + $0x190] sm:$0xf]
        %v9187 = vld [vmem:[#allocation9 + $0x194] sm:$0xf]
        %v9188 = vld [vmem:[#allocation9 + $0x198] sm:$0xf]
        %v9189 = vld [vmem:[#allocation9 + $0x19c] sm:$0xf]
        %v9190 = vld [vmem:[#allocation9 + $0x1a0] sm:$0xf]
        %v9191 = vld [vmem:[#allocation9 + $0x1a4] sm:$0xf]
        %v9192 = vld [vmem:[#allocation9 + $0x1a8] sm:$0xf]
        %v9193 = vld [vmem:[#allocation9 + $0x1ac] sm:$0xf]
        %v9194 = vld [vmem:[#allocation9 + $0x1b0] sm:$0xf]
        %v9195 = vld [vmem:[#allocation9 + $0x1b4] sm:$0xf]
        %v9196 = vld [vmem:[#allocation9 + $0x1b8] sm:$0xf]
        %v9197 = vld [vmem:[#allocation9 + $0x1bc] sm:$0xf]
        %v9198 = vld [vmem:[#allocation9 + $0x1c0] sm:$0xf]
        %v9199 = vld [vmem:[#allocation9 + $0x1c4] sm:$0xf]
        %v9200 = vld [vmem:[#allocation9 + $0x1c8] sm:$0xf]
        %v9201 = vld [vmem:[#allocation9 + $0x1cc] sm:$0xf]
        %v9202 = vld [vmem:[#allocation9 + $0x1d0] sm:$0xf]
        %v9203 = vld [vmem:[#allocation9 + $0x1d4] sm:$0xf]
        %v9204 = vld [vmem:[#allocation9 + $0x1d8] sm:$0xf]
        %v9205 = vld [vmem:[#allocation9 + $0x1dc] sm:$0xf]
        %v9206 = vld [vmem:[#allocation9 + $0x1e0] sm:$0xf]
        %v9207 = vld [vmem:[#allocation9 + $0x1e4] sm:$0xf]
        %v9208 = vld [vmem:[#allocation9 + $0x1e8] sm:$0xf]
        %v9209 = vld [vmem:[#allocation9 + $0x1ec] sm:$0xf]
        %v9210 = vld [vmem:[#allocation9 + $0x1f0] sm:$0xf]
        %v9211 = vld [vmem:[#allocation9 + $0x1f4] sm:$0xf]
        %v9212 = vld [vmem:[#allocation9 + $0x1f8] sm:$0xf]
        %v9213 = vld [vmem:[#allocation9 + $0x1fc] sm:$0xf]
        %v9214 = vld [vmem:[#allocation9 + $0x200] sm:$0xf]
        %v9215 = vld [vmem:[#allocation9 + $0x204] sm:$0xf]
        %v9216 = vld [vmem:[#allocation9 + $0x208] sm:$0xf]
        %v9217 = vld [vmem:[#allocation9 + $0x20c] sm:$0xf]
        %v9218 = vld [vmem:[#allocation9 + $0x210] sm:$0xf]
        %v9219 = vld [vmem:[#allocation9 + $0x214] sm:$0xf]
        %v9220 = vld [vmem:[#allocation9 + $0x218] sm:$0xf]
        %v9221 = vld [vmem:[#allocation9 + $0x21c] sm:$0xf]
        %v9222 = vld [vmem:[#allocation9 + $0x220] sm:$0xf]
        %v9223 = vld [vmem:[#allocation9 + $0x224] sm:$0xf]
        %v9224 = vld [vmem:[#allocation9 + $0x228] sm:$0xf]
        %v9225 = vld [vmem:[#allocation9 + $0x22c] sm:$0xf]
        %v9226 = vld [vmem:[#allocation9 + $0x230] sm:$0xf]
        %v9227 = vld [vmem:[#allocation9 + $0x234] sm:$0xf]
        %v9228 = vld [vmem:[#allocation9 + $0x238] sm:$0xf]
        %v9229 = vld [vmem:[#allocation9 + $0x23c] sm:$0xf]
        %v9390 = vunpack.c.l.b16 %v8926
        %v9391 = vunpack.c.h.b16 %v8926
        %v9392 = vunpack.c.l.b16 %v8927
        %v9393 = vunpack.c.h.b16 %v8927
        %v9394 = vunpack.c.l.b16 %v8928
        %v9395 = vunpack.c.h.b16 %v8928
        %v9396 = vunpack.c.l.b16 %v8929
        %v9397 = vunpack.c.h.b16 %v8929
        %v9398 = vunpack.c.l.b16 %v8930
        %v9399 = vunpack.c.l.b16 %v8931
        %v9400 = vunpack.c.h.b16 %v8931
        %v9401 = vunpack.c.l.b16 %v8932
        %v9402 = vunpack.c.h.b16 %v8932
        %v9403 = vunpack.c.l.b16 %v8933
        %v9404 = vunpack.c.h.b16 %v8933
        %v9405 = vunpack.c.l.b16 %v8934
        %v9406 = vunpack.c.h.b16 %v8934
        %v9407 = vunpack.c.l.b16 %v8935
        %v9408 = vunpack.c.l.b16 %v8936
        %v9409 = vunpack.c.h.b16 %v8936
        %v9410 = vunpack.c.l.b16 %v8937
        %v9411 = vunpack.c.h.b16 %v8937
        %v9412 = vunpack.c.l.b16 %v8938
        %v9413 = vunpack.c.h.b16 %v8938
        %v9414 = vunpack.c.l.b16 %v8939
        %v9415 = vunpack.c.h.b16 %v8939
        %v9416 = vunpack.c.l.b16 %v8940
        %v9417 = vunpack.c.l.b16 %v8941
        %v9418 = vunpack.c.h.b16 %v8941
        %v9419 = vunpack.c.l.b16 %v8942
        %v9420 = vunpack.c.h.b16 %v8942
        %v9421 = vunpack.c.l.b16 %v8943
        %v9422 = vunpack.c.h.b16 %v8943
        %v9423 = vunpack.c.l.b16 %v8944
        %v9424 = vunpack.c.h.b16 %v8944
        %v9425 = vunpack.c.l.b16 %v8945
        %v9426 = vunpack.c.l.b16 %v8946
        %v9427 = vunpack.c.h.b16 %v8946
        %v9428 = vunpack.c.l.b16 %v8947
        %v9429 = vunpack.c.h.b16 %v8947
        %v9430 = vunpack.c.l.b16 %v8948
        %v9431 = vunpack.c.h.b16 %v8948
        %v9432 = vunpack.c.l.b16 %v8949
        %v9433 = vunpack.c.h.b16 %v8949
        %v9434 = vunpack.c.l.b16 %v8950
        %v9435 = vunpack.c.l.b16 %v8951
        %v9436 = vunpack.c.h.b16 %v8951
        %v9437 = vunpack.c.l.b16 %v8952
        %v9438 = vunpack.c.h.b16 %v8952
        %v9439 = vunpack.c.l.b16 %v8953
        %v9440 = vunpack.c.h.b16 %v8953
        %v9441 = vunpack.c.l.b16 %v8954
        %v9442 = vunpack.c.h.b16 %v8954
        %v9443 = vunpack.c.l.b16 %v8955
        %v9444 = vunpack.c.l.b16 %v8956
        %v9445 = vunpack.c.h.b16 %v8956
        %v9446 = vunpack.c.l.b16 %v8957
        %v9447 = vunpack.c.h.b16 %v8957
        %v9448 = vunpack.c.l.b16 %v8958
        %v9449 = vunpack.c.h.b16 %v8958
        %v9450 = vunpack.c.l.b16 %v8959
        %v9451 = vunpack.c.h.b16 %v8959
        %v9452 = vunpack.c.l.b16 %v8960
        %v9453 = vunpack.c.l.b16 %v8961
        %v9454 = vunpack.c.h.b16 %v8961
        %v9455 = vunpack.c.l.b16 %v8962
        %v9456 = vunpack.c.h.b16 %v8962
        %v9457 = vunpack.c.l.b16 %v8963
        %v9458 = vunpack.c.h.b16 %v8963
        %v9459 = vunpack.c.l.b16 %v8964
        %v9460 = vunpack.c.h.b16 %v8964
        %v9461 = vunpack.c.l.b16 %v8965
        %v9462 = vunpack.c.l.b16 %v8966
        %v9463 = vunpack.c.h.b16 %v8966
        %v9464 = vunpack.c.l.b16 %v8967
        %v9465 = vunpack.c.h.b16 %v8967
        %v9466 = vunpack.c.l.b16 %v8968
        %v9467 = vunpack.c.h.b16 %v8968
        %v9468 = vunpack.c.l.b16 %v8969
        %v9469 = vunpack.c.h.b16 %v8969
        %v9470 = vunpack.c.l.b16 %v8970
        %v9471 = vunpack.c.l.b16 %v8971
        %v9472 = vunpack.c.h.b16 %v8971
        %v9473 = vunpack.c.l.b16 %v8972
        %v9474 = vunpack.c.h.b16 %v8972
        %v9475 = vunpack.c.l.b16 %v8973
        %v9476 = vunpack.c.h.b16 %v8973
        %v9477 = vunpack.c.l.b16 %v8974
        %v9478 = vunpack.c.h.b16 %v8974
        %v9479 = vunpack.c.l.b16 %v8975
        %v9480 = vunpack.c.l.b16 %v8976
        %v9481 = vunpack.c.h.b16 %v8976
        %v9482 = vunpack.c.l.b16 %v8977
        %v9483 = vunpack.c.h.b16 %v8977
        %v9484 = vunpack.c.l.b16 %v8978
        %v9485 = vunpack.c.h.b16 %v8978
        %v9486 = vunpack.c.l.b16 %v8979
        %v9487 = vunpack.c.h.b16 %v8979
        %v9488 = vunpack.c.l.b16 %v8980
        %v9489 = vunpack.c.l.b16 %v8981
        %v9490 = vunpack.c.h.b16 %v8981
        %v9491 = vunpack.c.l.b16 %v8982
        %v9492 = vunpack.c.h.b16 %v8982
        %v9493 = vunpack.c.l.b16 %v8983
        %v9494 = vunpack.c.h.b16 %v8983
        %v9495 = vunpack.c.l.b16 %v8984
        %v9496 = vunpack.c.h.b16 %v8984
        %v9497 = vunpack.c.l.b16 %v8985
        %v9498 = vunpack.c.l.b16 %v8986
        %v9499 = vunpack.c.h.b16 %v8986
        %v9500 = vunpack.c.l.b16 %v8987
        %v9501 = vunpack.c.h.b16 %v8987
        %v9502 = vunpack.c.l.b16 %v8988
        %v9503 = vunpack.c.h.b16 %v8988
        %v9504 = vunpack.c.l.b16 %v8989
        %v9505 = vunpack.c.h.b16 %v8989
        %v9506 = vunpack.c.l.b16 %v8990
        %v9507 = vunpack.c.l.b16 %v8991
        %v9508 = vunpack.c.h.b16 %v8991
        %v9509 = vunpack.c.l.b16 %v8992
        %v9510 = vunpack.c.h.b16 %v8992
        %v9511 = vunpack.c.l.b16 %v8993
        %v9512 = vunpack.c.h.b16 %v8993
        %v9513 = vunpack.c.l.b16 %v8994
        %v9514 = vunpack.c.h.b16 %v8994
        %v9515 = vunpack.c.l.b16 %v8995
        %v9516 = vunpack.c.l.b16 %v8996
        %v9517 = vunpack.c.h.b16 %v8996
        %v9518 = vunpack.c.l.b16 %v8997
        %v9519 = vunpack.c.h.b16 %v8997
        %v9520 = vunpack.c.l.b16 %v8998
        %v9521 = vunpack.c.h.b16 %v8998
        %v9522 = vunpack.c.l.b16 %v8999
        %v9523 = vunpack.c.h.b16 %v8999
        %v9524 = vunpack.c.l.b16 %v9000
        %v9525 = vunpack.c.l.b16 %v9001
        %v9526 = vunpack.c.h.b16 %v9001
        %v9527 = vunpack.c.l.b16 %v9002
        %v9528 = vunpack.c.h.b16 %v9002
        %v9529 = vunpack.c.l.b16 %v9003
        %v9530 = vunpack.c.h.b16 %v9003
        %v9531 = vunpack.c.l.b16 %v9004
        %v9532 = vunpack.c.h.b16 %v9004
        %v9533 = vunpack.c.l.b16 %v9005
        %v9534 = vunpack.c.l.b16 %v9006
        %v9535 = vunpack.c.h.b16 %v9006
        %v9536 = vunpack.c.l.b16 %v9007
        %v9537 = vunpack.c.h.b16 %v9007
        %v9538 = vunpack.c.l.b16 %v9008
        %v9539 = vunpack.c.h.b16 %v9008
        %v9540 = vunpack.c.l.b16 %v9009
        %v9541 = vunpack.c.h.b16 %v9009
        %v9542 = vunpack.c.l.b16 %v9010
        %v9543 = vunpack.c.l.b16 %v9011
        %v9544 = vunpack.c.h.b16 %v9011
        %v9545 = vunpack.c.l.b16 %v9012
        %v9546 = vunpack.c.h.b16 %v9012
        %v9547 = vunpack.c.l.b16 %v9013
        %v9548 = vunpack.c.h.b16 %v9013
        %v9549 = vunpack.c.l.b16 %v9014
        %v9550 = vunpack.c.h.b16 %v9014
        %v9551 = vunpack.c.l.b16 %v9015
        %v9552 = vunpack.c.l.b16 %v9016
        %v9553 = vunpack.c.h.b16 %v9016
        %v9554 = vunpack.c.l.b16 %v9017
        %v9555 = vunpack.c.h.b16 %v9017
        %v9556 = vunpack.c.l.b16 %v9018
        %v9557 = vunpack.c.h.b16 %v9018
        %v9558 = vunpack.c.l.b16 %v9019
        %v9559 = vunpack.c.h.b16 %v9019
        %v9560 = vunpack.c.l.b16 %v9020
        %v9561 = vunpack.c.l.b16 %v9021
        %v9562 = vunpack.c.h.b16 %v9021
        %v9563 = vunpack.c.l.b16 %v9022
        %v9564 = vunpack.c.h.b16 %v9022
        %v9565 = vunpack.c.l.b16 %v9023
        %v9566 = vunpack.c.h.b16 %v9023
        %v9567 = vunpack.c.l.b16 %v9024
        %v9568 = vunpack.c.h.b16 %v9024
        %v9569 = vunpack.c.l.b16 %v9025
        %v9570 = vunpack.c.l.b16 %v9026
        %v9571 = vunpack.c.h.b16 %v9026
        %v9572 = vunpack.c.l.b16 %v9027
        %v9573 = vunpack.c.h.b16 %v9027
        %v9574 = vunpack.c.l.b16 %v9028
        %v9575 = vunpack.c.h.b16 %v9028
        %v9576 = vunpack.c.l.b16 %v9029
        %v9577 = vunpack.c.h.b16 %v9029
        %v9578 = vunpack.c.l.b16 %v9030
        %v9579 = vunpack.c.l.b16 %v9031
        %v9580 = vunpack.c.h.b16 %v9031
        %v9581 = vunpack.c.l.b16 %v9032
        %v9582 = vunpack.c.h.b16 %v9032
        %v9583 = vunpack.c.l.b16 %v9033
        %v9584 = vunpack.c.h.b16 %v9033
        %v9585 = vunpack.c.l.b16 %v9034
        %v9586 = vunpack.c.h.b16 %v9034
        %v9587 = vunpack.c.l.b16 %v9035
        %v9588 = vunpack.c.l.b16 %v9036
        %v9589 = vunpack.c.h.b16 %v9036
        %v9590 = vunpack.c.l.b16 %v9037
        %v9591 = vunpack.c.h.b16 %v9037
        %v9592 = vunpack.c.l.b16 %v9038
        %v9593 = vunpack.c.h.b16 %v9038
        %v9594 = vunpack.c.l.b16 %v9039
        %v9595 = vunpack.c.h.b16 %v9039
        %v9596 = vunpack.c.l.b16 %v9040
        %v9597 = vunpack.c.l.b16 %v9041
        %v9598 = vunpack.c.h.b16 %v9041
        %v9599 = vunpack.c.l.b16 %v9042
        %v9600 = vunpack.c.h.b16 %v9042
        %v9601 = vunpack.c.l.b16 %v9043
        %v9602 = vunpack.c.h.b16 %v9043
        %v9603 = vunpack.c.l.b16 %v9044
        %v9604 = vunpack.c.h.b16 %v9044
        %v9605 = vunpack.c.l.b16 %v9045
        %v9606 = vunpack.c.l.b16 %v9046
        %v9607 = vunpack.c.h.b16 %v9046
        %v9608 = vunpack.c.l.b16 %v9047
        %v9609 = vunpack.c.h.b16 %v9047
        %v9610 = vunpack.c.l.b16 %v9048
        %v9611 = vunpack.c.h.b16 %v9048
        %v9612 = vunpack.c.l.b16 %v9049
        %v9613 = vunpack.c.h.b16 %v9049
        %v9614 = vunpack.c.l.b16 %v9050
        %v9615 = vunpack.c.l.b16 %v9051
        %v9616 = vunpack.c.h.b16 %v9051
        %v9617 = vunpack.c.l.b16 %v9052
        %v9618 = vunpack.c.h.b16 %v9052
        %v9619 = vunpack.c.l.b16 %v9053
        %v9620 = vunpack.c.h.b16 %v9053
        %v9621 = vunpack.c.l.b16 %v9054
        %v9622 = vunpack.c.h.b16 %v9054
        %v9623 = vunpack.c.l.b16 %v9055
        %v9624 = vunpack.c.l.b16 %v9056
        %v9625 = vunpack.c.h.b16 %v9056
        %v9626 = vunpack.c.l.b16 %v9057
        %v9627 = vunpack.c.h.b16 %v9057
        %v9628 = vunpack.c.l.b16 %v9058
        %v9629 = vunpack.c.h.b16 %v9058
        %v9630 = vunpack.c.l.b16 %v9059
        %v9631 = vunpack.c.h.b16 %v9059
        %v9632 = vunpack.c.l.b16 %v9060
        %v9633 = vunpack.c.l.b16 %v9061
        %v9634 = vunpack.c.h.b16 %v9061
        %v9635 = vunpack.c.l.b16 %v9062
        %v9636 = vunpack.c.h.b16 %v9062
        %v9637 = vunpack.c.l.b16 %v9063
        %v9638 = vunpack.c.h.b16 %v9063
        %v9639 = vunpack.c.l.b16 %v9064
        %v9640 = vunpack.c.h.b16 %v9064
        %v9641 = vunpack.c.l.b16 %v9065
        %v9642 = vunpack.c.l.b16 %v9066
        %v9643 = vunpack.c.h.b16 %v9066
        %v9644 = vunpack.c.l.b16 %v9067
        %v9645 = vunpack.c.h.b16 %v9067
        %v9646 = vunpack.c.l.b16 %v9068
        %v9647 = vunpack.c.h.b16 %v9068
        %v9648 = vunpack.c.l.b16 %v9069
        %v9649 = vunpack.c.h.b16 %v9069
        %v9650 = vunpack.c.l.b16 %v9070
        %v9651 = vunpack.c.l.b16 %v9071
        %v9652 = vunpack.c.h.b16 %v9071
        %v9653 = vunpack.c.l.b16 %v9072
        %v9654 = vunpack.c.h.b16 %v9072
        %v9655 = vunpack.c.l.b16 %v9073
        %v9656 = vunpack.c.h.b16 %v9073
        %v9657 = vunpack.c.l.b16 %v9074
        %v9658 = vunpack.c.h.b16 %v9074
        %v9659 = vunpack.c.l.b16 %v9075
        %v9660 = vunpack.c.l.b16 %v9076
        %v9661 = vunpack.c.h.b16 %v9076
        %v9662 = vunpack.c.l.b16 %v9077
        %v9663 = vunpack.c.h.b16 %v9077
        %v9664 = vunpack.c.l.b16 %v9078
        %v9665 = vunpack.c.h.b16 %v9078
        %v9666 = vunpack.c.l.b16 %v9079
        %v9667 = vunpack.c.h.b16 %v9079
        %v9668 = vunpack.c.l.b16 %v9080
        %v9669 = vunpack.c.l.b16 %v9081
        %v9670 = vunpack.c.h.b16 %v9081
        %v9671 = vunpack.c.l.b16 %v9082
        %v9672 = vunpack.c.h.b16 %v9082
        %v9673 = vunpack.c.l.b16 %v9083
        %v9674 = vunpack.c.h.b16 %v9083
        %v9675 = vunpack.c.l.b16 %v9084
        %v9676 = vunpack.c.h.b16 %v9084
        %v9677 = vunpack.c.l.b16 %v9085
        %v9678 = vpack.c.b16 %v9399, %v9390
        %v9679 = vpack.c.b16 %v9400, %v9391
        %v9680 = vpack.c.b16 %v9401, %v9392
        %v9681 = vpack.c.b16 %v9402, %v9393
        %v9682 = vpack.c.b16 %v9403, %v9394
        %v9683 = vpack.c.b16 %v9404, %v9395
        %v9684 = vpack.c.b16 %v9405, %v9396
        %v9685 = vpack.c.b16 %v9406, %v9397
        %v9686 = vpack.c.b16 %v9407, %v9398
        %v9687 = vpack.c.b16 %v9417, %v9408
        %v9688 = vpack.c.b16 %v9418, %v9409
        %v9689 = vpack.c.b16 %v9419, %v9410
        %v9690 = vpack.c.b16 %v9420, %v9411
        %v9691 = vpack.c.b16 %v9421, %v9412
        %v9692 = vpack.c.b16 %v9422, %v9413
        %v9693 = vpack.c.b16 %v9423, %v9414
        %v9694 = vpack.c.b16 %v9424, %v9415
        %v9695 = vpack.c.b16 %v9425, %v9416
        %v9696 = vpack.c.b16 %v9435, %v9426
        %v9697 = vpack.c.b16 %v9436, %v9427
        %v9698 = vpack.c.b16 %v9437, %v9428
        %v9699 = vpack.c.b16 %v9438, %v9429
        %v9700 = vpack.c.b16 %v9439, %v9430
        %v9701 = vpack.c.b16 %v9440, %v9431
        %v9702 = vpack.c.b16 %v9441, %v9432
        %v9703 = vpack.c.b16 %v9442, %v9433
        %v9704 = vpack.c.b16 %v9443, %v9434
        %v9705 = vpack.c.b16 %v9453, %v9444
        %v9706 = vpack.c.b16 %v9454, %v9445
        %v9707 = vpack.c.b16 %v9455, %v9446
        %v9708 = vpack.c.b16 %v9456, %v9447
        %v9709 = vpack.c.b16 %v9457, %v9448
        %v9710 = vpack.c.b16 %v9458, %v9449
        %v9711 = vpack.c.b16 %v9459, %v9450
        %v9712 = vpack.c.b16 %v9460, %v9451
        %v9713 = vpack.c.b16 %v9461, %v9452
        %v9714 = vpack.c.b16 %v9471, %v9462
        %v9715 = vpack.c.b16 %v9472, %v9463
        %v9716 = vpack.c.b16 %v9473, %v9464
        %v9717 = vpack.c.b16 %v9474, %v9465
        %v9718 = vpack.c.b16 %v9475, %v9466
        %v9719 = vpack.c.b16 %v9476, %v9467
        %v9720 = vpack.c.b16 %v9477, %v9468
        %v9721 = vpack.c.b16 %v9478, %v9469
        %v9722 = vpack.c.b16 %v9479, %v9470
        %v9723 = vpack.c.b16 %v9489, %v9480
        %v9724 = vpack.c.b16 %v9490, %v9481
        %v9725 = vpack.c.b16 %v9491, %v9482
        %v9726 = vpack.c.b16 %v9492, %v9483
        %v9727 = vpack.c.b16 %v9493, %v9484
        %v9728 = vpack.c.b16 %v9494, %v9485
        %v9729 = vpack.c.b16 %v9495, %v9486
        %v9730 = vpack.c.b16 %v9496, %v9487
        %v9731 = vpack.c.b16 %v9497, %v9488
        %v9732 = vpack.c.b16 %v9507, %v9498
        %v9733 = vpack.c.b16 %v9508, %v9499
        %v9734 = vpack.c.b16 %v9509, %v9500
        %v9735 = vpack.c.b16 %v9510, %v9501
        %v9736 = vpack.c.b16 %v9511, %v9502
        %v9737 = vpack.c.b16 %v9512, %v9503
        %v9738 = vpack.c.b16 %v9513, %v9504
        %v9739 = vpack.c.b16 %v9514, %v9505
        %v9740 = vpack.c.b16 %v9515, %v9506
        %v9741 = vpack.c.b16 %v9525, %v9516
        %v9742 = vpack.c.b16 %v9526, %v9517
        %v9743 = vpack.c.b16 %v9527, %v9518
        %v9744 = vpack.c.b16 %v9528, %v9519
        %v9745 = vpack.c.b16 %v9529, %v9520
        %v9746 = vpack.c.b16 %v9530, %v9521
        %v9747 = vpack.c.b16 %v9531, %v9522
        %v9748 = vpack.c.b16 %v9532, %v9523
        %v9749 = vpack.c.b16 %v9533, %v9524
        %v9750 = vpack.c.b16 %v9543, %v9534
        %v9751 = vpack.c.b16 %v9544, %v9535
        %v9752 = vpack.c.b16 %v9545, %v9536
        %v9753 = vpack.c.b16 %v9546, %v9537
        %v9754 = vpack.c.b16 %v9547, %v9538
        %v9755 = vpack.c.b16 %v9548, %v9539
        %v9756 = vpack.c.b16 %v9549, %v9540
        %v9757 = vpack.c.b16 %v9550, %v9541
        %v9758 = vpack.c.b16 %v9551, %v9542
        %v9759 = vpack.c.b16 %v9561, %v9552
        %v9760 = vpack.c.b16 %v9562, %v9553
        %v9761 = vpack.c.b16 %v9563, %v9554
        %v9762 = vpack.c.b16 %v9564, %v9555
        %v9763 = vpack.c.b16 %v9565, %v9556
        %v9764 = vpack.c.b16 %v9566, %v9557
        %v9765 = vpack.c.b16 %v9567, %v9558
        %v9766 = vpack.c.b16 %v9568, %v9559
        %v9767 = vpack.c.b16 %v9569, %v9560
        %v9768 = vpack.c.b16 %v9579, %v9570
        %v9769 = vpack.c.b16 %v9580, %v9571
        %v9770 = vpack.c.b16 %v9581, %v9572
        %v9771 = vpack.c.b16 %v9582, %v9573
        %v9772 = vpack.c.b16 %v9583, %v9574
        %v9773 = vpack.c.b16 %v9584, %v9575
        %v9774 = vpack.c.b16 %v9585, %v9576
        %v9775 = vpack.c.b16 %v9586, %v9577
        %v9776 = vpack.c.b16 %v9587, %v9578
        %v9777 = vpack.c.b16 %v9597, %v9588
        %v9778 = vpack.c.b16 %v9598, %v9589
        %v9779 = vpack.c.b16 %v9599, %v9590
        %v9780 = vpack.c.b16 %v9600, %v9591
        %v9781 = vpack.c.b16 %v9601, %v9592
        %v9782 = vpack.c.b16 %v9602, %v9593
        %v9783 = vpack.c.b16 %v9603, %v9594
        %v9784 = vpack.c.b16 %v9604, %v9595
        %v9785 = vpack.c.b16 %v9605, %v9596
        %v9786 = vpack.c.b16 %v9615, %v9606
        %v9787 = vpack.c.b16 %v9616, %v9607
        %v9788 = vpack.c.b16 %v9617, %v9608
        %v9789 = vpack.c.b16 %v9618, %v9609
        %v9790 = vpack.c.b16 %v9619, %v9610
        %v9791 = vpack.c.b16 %v9620, %v9611
        %v9792 = vpack.c.b16 %v9621, %v9612
        %v9793 = vpack.c.b16 %v9622, %v9613
        %v9794 = vpack.c.b16 %v9623, %v9614
        %v9795 = vpack.c.b16 %v9633, %v9624
        %v9796 = vpack.c.b16 %v9634, %v9625
        %v9797 = vpack.c.b16 %v9635, %v9626
        %v9798 = vpack.c.b16 %v9636, %v9627
        %v9799 = vpack.c.b16 %v9637, %v9628
        %v9800 = vpack.c.b16 %v9638, %v9629
        %v9801 = vpack.c.b16 %v9639, %v9630
        %v9802 = vpack.c.b16 %v9640, %v9631
        %v9803 = vpack.c.b16 %v9641, %v9632
        %v9804 = vpack.c.b16 %v9651, %v9642
        %v9805 = vpack.c.b16 %v9652, %v9643
        %v9806 = vpack.c.b16 %v9653, %v9644
        %v9807 = vpack.c.b16 %v9654, %v9645
        %v9808 = vpack.c.b16 %v9655, %v9646
        %v9809 = vpack.c.b16 %v9656, %v9647
        %v9810 = vpack.c.b16 %v9657, %v9648
        %v9811 = vpack.c.b16 %v9658, %v9649
        %v9812 = vpack.c.b16 %v9659, %v9650
        %v9813 = vpack.c.b16 %v9669, %v9660
        %v9814 = vpack.c.b16 %v9670, %v9661
        %v9815 = vpack.c.b16 %v9671, %v9662
        %v9816 = vpack.c.b16 %v9672, %v9663
        %v9817 = vpack.c.b16 %v9673, %v9664
        %v9818 = vpack.c.b16 %v9674, %v9665
        %v9819 = vpack.c.b16 %v9675, %v9666
        %v9820 = vpack.c.b16 %v9676, %v9667
        %v9821 = vpack.c.b16 %v9677, %v9668
        %v10110 = vunpack.c.l.b16 %v9086
        %v10111 = vunpack.c.l.b16 %v9087
        %v10112 = vunpack.c.l.b16 %v9088
        %v10113 = vunpack.c.l.b16 %v9089
        %v10114 = vunpack.c.l.b16 %v9090
        %v10115 = vunpack.c.l.b16 %v9091
        %v10116 = vunpack.c.l.b16 %v9092
        %v10117 = vunpack.c.l.b16 %v9093
        %v10118 = vunpack.c.l.b16 %v9094
        %v10119 = vunpack.c.l.b16 %v9095
        %v10120 = vunpack.c.l.b16 %v9096
        %v10121 = vunpack.c.l.b16 %v9097
        %v10122 = vunpack.c.l.b16 %v9098
        %v10123 = vunpack.c.l.b16 %v9099
        %v10124 = vunpack.c.l.b16 %v9100
        %v10125 = vunpack.c.l.b16 %v9101
        %v10126 = vunpack.c.l.b16 %v9102
        %v10127 = vunpack.c.l.b16 %v9103
        %v10128 = vunpack.c.l.b16 %v9104
        %v10129 = vunpack.c.l.b16 %v9105
        %v10130 = vunpack.c.l.b16 %v9106
        %v10131 = vunpack.c.l.b16 %v9107
        %v10132 = vunpack.c.l.b16 %v9108
        %v10133 = vunpack.c.l.b16 %v9109
        %v10134 = vunpack.c.l.b16 %v9110
        %v10135 = vunpack.c.l.b16 %v9111
        %v10136 = vunpack.c.l.b16 %v9112
        %v10137 = vunpack.c.l.b16 %v9113
        %v10138 = vunpack.c.l.b16 %v9114
        %v10139 = vunpack.c.l.b16 %v9115
        %v10140 = vunpack.c.l.b16 %v9116
        %v10141 = vunpack.c.l.b16 %v9117
        %v10142 = vunpack.c.l.b16 %v9118
        %v10143 = vunpack.c.l.b16 %v9119
        %v10144 = vunpack.c.l.b16 %v9120
        %v10145 = vunpack.c.l.b16 %v9121
        %v10146 = vunpack.c.l.b16 %v9122
        %v10147 = vunpack.c.l.b16 %v9123
        %v10148 = vunpack.c.l.b16 %v9124
        %v10149 = vunpack.c.l.b16 %v9125
        %v10150 = vunpack.c.l.b16 %v9126
        %v10151 = vunpack.c.l.b16 %v9127
        %v10152 = vunpack.c.l.b16 %v9128
        %v10153 = vunpack.c.l.b16 %v9129
        %v10154 = vunpack.c.l.b16 %v9130
        %v10155 = vunpack.c.l.b16 %v9131
        %v10156 = vunpack.c.l.b16 %v9132
        %v10157 = vunpack.c.l.b16 %v9133
        %v10158 = vunpack.c.l.b16 %v9134
        %v10159 = vunpack.c.l.b16 %v9135
        %v10160 = vunpack.c.l.b16 %v9136
        %v10161 = vunpack.c.l.b16 %v9137
        %v10162 = vunpack.c.l.b16 %v9138
        %v10163 = vunpack.c.l.b16 %v9139
        %v10164 = vunpack.c.l.b16 %v9140
        %v10165 = vunpack.c.l.b16 %v9141
        %v10166 = vunpack.c.l.b16 %v9142
        %v10167 = vunpack.c.l.b16 %v9143
        %v10168 = vunpack.c.l.b16 %v9144
        %v10169 = vunpack.c.l.b16 %v9145
        %v10170 = vunpack.c.l.b16 %v9146
        %v10171 = vunpack.c.l.b16 %v9147
        %v10172 = vunpack.c.l.b16 %v9148
        %v10173 = vunpack.c.l.b16 %v9149
        %v10174 = vunpack.c.l.b16 %v9150
        %v10175 = vunpack.c.l.b16 %v9151
        %v10176 = vunpack.c.l.b16 %v9152
        %v10177 = vunpack.c.l.b16 %v9153
        %v10178 = vunpack.c.l.b16 %v9154
        %v10179 = vunpack.c.l.b16 %v9155
        %v10180 = vunpack.c.l.b16 %v9156
        %v10181 = vunpack.c.l.b16 %v9157
        %v10182 = vunpack.c.l.b16 %v9158
        %v10183 = vunpack.c.l.b16 %v9159
        %v10184 = vunpack.c.l.b16 %v9160
        %v10185 = vunpack.c.l.b16 %v9161
        %v10186 = vunpack.c.l.b16 %v9162
        %v10187 = vunpack.c.l.b16 %v9163
        %v10188 = vunpack.c.l.b16 %v9164
        %v10189 = vunpack.c.l.b16 %v9165
        %v10190 = vunpack.c.l.b16 %v9166
        %v10191 = vunpack.c.l.b16 %v9167
        %v10192 = vunpack.c.l.b16 %v9168
        %v10193 = vunpack.c.l.b16 %v9169
        %v10194 = vunpack.c.l.b16 %v9170
        %v10195 = vunpack.c.l.b16 %v9171
        %v10196 = vunpack.c.l.b16 %v9172
        %v10197 = vunpack.c.l.b16 %v9173
        %v10198 = vunpack.c.l.b16 %v9174
        %v10199 = vunpack.c.l.b16 %v9175
        %v10200 = vunpack.c.l.b16 %v9176
        %v10201 = vunpack.c.l.b16 %v9177
        %v10202 = vunpack.c.l.b16 %v9178
        %v10203 = vunpack.c.l.b16 %v9179
        %v10204 = vunpack.c.l.b16 %v9180
        %v10205 = vunpack.c.l.b16 %v9181
        %v10206 = vunpack.c.l.b16 %v9182
        %v10207 = vunpack.c.l.b16 %v9183
        %v10208 = vunpack.c.l.b16 %v9184
        %v10209 = vunpack.c.l.b16 %v9185
        %v10210 = vunpack.c.l.b16 %v9186
        %v10211 = vunpack.c.l.b16 %v9187
        %v10212 = vunpack.c.l.b16 %v9188
        %v10213 = vunpack.c.l.b16 %v9189
        %v10214 = vunpack.c.l.b16 %v9190
        %v10215 = vunpack.c.l.b16 %v9191
        %v10216 = vunpack.c.l.b16 %v9192
        %v10217 = vunpack.c.l.b16 %v9193
        %v10218 = vunpack.c.l.b16 %v9194
        %v10219 = vunpack.c.l.b16 %v9195
        %v10220 = vunpack.c.l.b16 %v9196
        %v10221 = vunpack.c.l.b16 %v9197
        %v10222 = vunpack.c.l.b16 %v9198
        %v10223 = vunpack.c.l.b16 %v9199
        %v10224 = vunpack.c.l.b16 %v9200
        %v10225 = vunpack.c.l.b16 %v9201
        %v10226 = vunpack.c.l.b16 %v9202
        %v10227 = vunpack.c.l.b16 %v9203
        %v10228 = vunpack.c.l.b16 %v9204
        %v10229 = vunpack.c.l.b16 %v9205
        %v10230 = vunpack.c.l.b16 %v9206
        %v10231 = vunpack.c.l.b16 %v9207
        %v10232 = vunpack.c.l.b16 %v9208
        %v10233 = vunpack.c.l.b16 %v9209
        %v10234 = vunpack.c.l.b16 %v9210
        %v10235 = vunpack.c.l.b16 %v9211
        %v10236 = vunpack.c.l.b16 %v9212
        %v10237 = vunpack.c.l.b16 %v9213
        %v10238 = vunpack.c.l.b16 %v9214
        %v10239 = vunpack.c.l.b16 %v9215
        %v10240 = vunpack.c.l.b16 %v9216
        %v10241 = vunpack.c.l.b16 %v9217
        %v10242 = vunpack.c.l.b16 %v9218
        %v10243 = vunpack.c.l.b16 %v9219
        %v10244 = vunpack.c.l.b16 %v9220
        %v10245 = vunpack.c.l.b16 %v9221
        %v10246 = vunpack.c.l.b16 %v9222
        %v10247 = vunpack.c.l.b16 %v9223
        %v10248 = vunpack.c.l.b16 %v9224
        %v10249 = vunpack.c.l.b16 %v9225
        %v10250 = vunpack.c.l.b16 %v9226
        %v10251 = vunpack.c.l.b16 %v9227
        %v10252 = vunpack.c.l.b16 %v9228
        %v10253 = vunpack.c.l.b16 %v9229
        %v10254 = vpack.c.b16 %v10111, %v10110
        %v10255 = vpack.c.b16 %v10113, %v10112
        %v10256 = vpack.c.b16 %v10115, %v10114
        %v10257 = vpack.c.b16 %v10117, %v10116
        %v10258 = vpack.c.b16 %v10119, %v10118
        %v10259 = vpack.c.b16 %v10121, %v10120
        %v10260 = vpack.c.b16 %v10123, %v10122
        %v10261 = vpack.c.b16 %v10125, %v10124
        %v10262 = vpack.c.b16 %v10127, %v10126
        %v10263 = vpack.c.b16 %v10129, %v10128
        %v10264 = vpack.c.b16 %v10131, %v10130
        %v10265 = vpack.c.b16 %v10133, %v10132
        %v10266 = vpack.c.b16 %v10135, %v10134
        %v10267 = vpack.c.b16 %v10137, %v10136
        %v10268 = vpack.c.b16 %v10139, %v10138
        %v10269 = vpack.c.b16 %v10141, %v10140
        %v10270 = vpack.c.b16 %v10143, %v10142
        %v10271 = vpack.c.b16 %v10145, %v10144
        %v10272 = vpack.c.b16 %v10147, %v10146
        %v10273 = vpack.c.b16 %v10149, %v10148
        %v10274 = vpack.c.b16 %v10151, %v10150
        %v10275 = vpack.c.b16 %v10153, %v10152
        %v10276 = vpack.c.b16 %v10155, %v10154
        %v10277 = vpack.c.b16 %v10157, %v10156
        %v10278 = vpack.c.b16 %v10159, %v10158
        %v10279 = vpack.c.b16 %v10161, %v10160
        %v10280 = vpack.c.b16 %v10163, %v10162
        %v10281 = vpack.c.b16 %v10165, %v10164
        %v10282 = vpack.c.b16 %v10167, %v10166
        %v10283 = vpack.c.b16 %v10169, %v10168
        %v10284 = vpack.c.b16 %v10171, %v10170
        %v10285 = vpack.c.b16 %v10173, %v10172
        %v10286 = vpack.c.b16 %v10175, %v10174
        %v10287 = vpack.c.b16 %v10177, %v10176
        %v10288 = vpack.c.b16 %v10179, %v10178
        %v10289 = vpack.c.b16 %v10181, %v10180
        %v10290 = vpack.c.b16 %v10183, %v10182
        %v10291 = vpack.c.b16 %v10185, %v10184
        %v10292 = vpack.c.b16 %v10187, %v10186
        %v10293 = vpack.c.b16 %v10189, %v10188
        %v10294 = vpack.c.b16 %v10191, %v10190
        %v10295 = vpack.c.b16 %v10193, %v10192
        %v10296 = vpack.c.b16 %v10195, %v10194
        %v10297 = vpack.c.b16 %v10197, %v10196
        %v10298 = vpack.c.b16 %v10199, %v10198
        %v10299 = vpack.c.b16 %v10201, %v10200
        %v10300 = vpack.c.b16 %v10203, %v10202
        %v10301 = vpack.c.b16 %v10205, %v10204
        %v10302 = vpack.c.b16 %v10207, %v10206
        %v10303 = vpack.c.b16 %v10209, %v10208
        %v10304 = vpack.c.b16 %v10211, %v10210
        %v10305 = vpack.c.b16 %v10213, %v10212
        %v10306 = vpack.c.b16 %v10215, %v10214
        %v10307 = vpack.c.b16 %v10217, %v10216
        %v10308 = vpack.c.b16 %v10219, %v10218
        %v10309 = vpack.c.b16 %v10221, %v10220
        %v10310 = vpack.c.b16 %v10223, %v10222
        %v10311 = vpack.c.b16 %v10225, %v10224
        %v10312 = vpack.c.b16 %v10227, %v10226
        %v10313 = vpack.c.b16 %v10229, %v10228
        %v10314 = vpack.c.b16 %v10231, %v10230
        %v10315 = vpack.c.b16 %v10233, %v10232
        %v10316 = vpack.c.b16 %v10235, %v10234
        %v10317 = vpack.c.b16 %v10237, %v10236
        %v10318 = vpack.c.b16 %v10239, %v10238
        %v10319 = vpack.c.b16 %v10241, %v10240
        %v10320 = vpack.c.b16 %v10243, %v10242
        %v10321 = vpack.c.b16 %v10245, %v10244
        %v10322 = vpack.c.b16 %v10247, %v10246
        %v10323 = vpack.c.b16 %v10249, %v10248
        %v10324 = vpack.c.b16 %v10251, %v10250
        %v10325 = vpack.c.b16 %v10253, %v10252
        %10398 = vmatprep.subr.bf16.mxu0 0
        %10399 = vmatpush1.bf16.msra.mxu0 %v10261
        %10400 = vmatprep.subr.bf16.mxu0 0
        %10401 = vmatpush1.bf16.msra.mxu0 %v10260
        %10402 = vmatprep.subr.bf16.mxu0 0
        %10403 = vmatpush1.bf16.msra.mxu0 %v10259
        %10404 = vmatprep.subr.bf16.mxu0 0
        %10405 = vmatpush1.bf16.msra.mxu0 %v10258
        %10406 = vmatprep.subr.bf16.mxu0 0
        %10407 = vmatpush1.bf16.msra.mxu0 %v10257
        %10408 = vmatprep.subr.bf16.mxu0 0
        %10409 = vmatpush1.bf16.msra.mxu0 %v10256
        %10410 = vmatprep.subr.bf16.mxu0 0
        %10411 = vmatpush1.bf16.msra.mxu0 %v10255
        %10412 = vmatprep.subr.bf16.mxu0 0
        %10413 = vmatpush1.bf16.msra.mxu0 %v10254
        %10414 = vmatprep.subr.bf16.mxu0 0
        %10415 = vmatpush2.bf16.msra.mxu0 %v10269
        %10416 = vmatprep.subr.bf16.mxu0 0
        %10417 = vmatpush2.bf16.msra.mxu0 %v10268
        %10418 = vmatprep.subr.bf16.mxu0 0
        %10419 = vmatpush2.bf16.msra.mxu0 %v10267
        %10420 = vmatprep.subr.bf16.mxu0 0
        %10421 = vmatpush2.bf16.msra.mxu0 %v10266
        %10422 = vmatprep.subr.bf16.mxu0 0
        %10423 = vmatpush2.bf16.msra.mxu0 %v10265
        %10424 = vmatprep.subr.bf16.mxu0 0
        %10425 = vmatpush2.bf16.msra.mxu0 %v10264
        %10426 = vmatprep.subr.bf16.mxu0 0
        %10427 = vmatpush2.bf16.msra.mxu0 %v10263
        %10428 = vmatprep.subr.bf16.mxu0 0
        %10429 = vmatpush2.bf16.msra.mxu0 %v10262
        %10430 = vmatprep.mubr.bf16.mxu0 %v9679
        %10431 = vmatmul.mubr.bf16.gmra.mxu0 %v9678
        %v10432 = vpop.f32.mrf.mxu0
        %v10433 = vadd.f32 0.0, %v10432
        %v10434 = vpop.f32.mrf.mxu0
        %v10435 = vpop.f32.mrf.mxu0
        %v10436 = vadd.f32 0.0, %v10435
        %v10437 = vpop.f32.mrf.mxu0
        %10438 = vmatprep.mubr.bf16.mxu0 %v9688
        %10439 = vmatmul.mubr.bf16.gmra.mxu0 %v9687
        %v10440 = vpop.f32.mrf.mxu0
        %v10441 = vadd.f32 0.0, %v10440
        %v10442 = vpop.f32.mrf.mxu0
        %v10443 = vpop.f32.mrf.mxu0
        %v10444 = vadd.f32 0.0, %v10443
        %v10445 = vpop.f32.mrf.mxu0
        %10446 = vmatprep.mubr.bf16.mxu0 %v9697
        %10447 = vmatmul.mubr.bf16.gmra.mxu0 %v9696
        %v10448 = vpop.f32.mrf.mxu0
        %v10449 = vadd.f32 0.0, %v10448
        %v10450 = vpop.f32.mrf.mxu0
        %v10451 = vpop.f32.mrf.mxu0
        %v10452 = vadd.f32 0.0, %v10451
        %v10453 = vpop.f32.mrf.mxu0
        %10454 = vmatprep.mubr.bf16.mxu0 %v9706
        %10455 = vmatmul.mubr.bf16.gmra.mxu0 %v9705
        %v10456 = vpop.f32.mrf.mxu0
        %v10457 = vadd.f32 0.0, %v10456
        %v10458 = vpop.f32.mrf.mxu0
        %v10459 = vpop.f32.mrf.mxu0
        %v10460 = vadd.f32 0.0, %v10459
        %v10461 = vpop.f32.mrf.mxu0
        %10462 = vmatprep.mubr.bf16.mxu0 %v9715
        %10463 = vmatmul.mubr.bf16.gmra.mxu0 %v9714
        %v10464 = vpop.f32.mrf.mxu0
        %v10465 = vadd.f32 0.0, %v10464
        %v10466 = vpop.f32.mrf.mxu0
        %v10467 = vpop.f32.mrf.mxu0
        %v10468 = vadd.f32 0.0, %v10467
        %v10469 = vpop.f32.mrf.mxu0
        %10470 = vmatprep.mubr.bf16.mxu0 %v9724
        %10471 = vmatmul.mubr.bf16.gmra.mxu0 %v9723
        %v10472 = vpop.f32.mrf.mxu0
        %v10473 = vadd.f32 0.0, %v10472
        %v10474 = vpop.f32.mrf.mxu0
        %v10475 = vpop.f32.mrf.mxu0
        %v10476 = vadd.f32 0.0, %v10475
        %v10477 = vpop.f32.mrf.mxu0
        %10478 = vmatprep.mubr.bf16.mxu0 %v9733
        %10479 = vmatmul.mubr.bf16.gmra.mxu0 %v9732
        %v10480 = vpop.f32.mrf.mxu0
        %v10481 = vadd.f32 0.0, %v10480
        %v10482 = vpop.f32.mrf.mxu0
        %v10483 = vpop.f32.mrf.mxu0
        %v10484 = vadd.f32 0.0, %v10483
        %v10485 = vpop.f32.mrf.mxu0
        %10486 = vmatprep.mubr.bf16.mxu0 %v9742
        %10487 = vmatmul.mubr.bf16.gmra.mxu0 %v9741
        %v10488 = vpop.f32.mrf.mxu0
        %v10489 = vadd.f32 0.0, %v10488
        %v10490 = vpop.f32.mrf.mxu0
        %v10491 = vpop.f32.mrf.mxu0
        %v10492 = vadd.f32 0.0, %v10491
        %v10493 = vpop.f32.mrf.mxu0
        %10494 = vmatprep.mubr.bf16.mxu0 %v9751
        %10495 = vmatmul.mubr.bf16.gmra.mxu0 %v9750
        %v10496 = vpop.f32.mrf.mxu0
        %v10497 = vadd.f32 0.0, %v10496
        %v10498 = vpop.f32.mrf.mxu0
        %v10499 = vpop.f32.mrf.mxu0
        %v10500 = vadd.f32 0.0, %v10499
        %v10501 = vpop.f32.mrf.mxu0
        %10502 = vmatprep.mubr.bf16.mxu0 %v9760
        %10503 = vmatmul.mubr.bf16.gmra.mxu0 %v9759
        %v10504 = vpop.f32.mrf.mxu0
        %v10505 = vadd.f32 0.0, %v10504
        %v10506 = vpop.f32.mrf.mxu0
        %v10507 = vpop.f32.mrf.mxu0
        %v10508 = vadd.f32 0.0, %v10507
        %v10509 = vpop.f32.mrf.mxu0
        %10510 = vmatprep.mubr.bf16.mxu0 %v9769
        %10511 = vmatmul.mubr.bf16.gmra.mxu0 %v9768
        %v10512 = vpop.f32.mrf.mxu0
        %v10513 = vadd.f32 0.0, %v10512
        %v10514 = vpop.f32.mrf.mxu0
        %v10515 = vpop.f32.mrf.mxu0
        %v10516 = vadd.f32 0.0, %v10515
        %v10517 = vpop.f32.mrf.mxu0
        %10518 = vmatprep.mubr.bf16.mxu0 %v9778
        %10519 = vmatmul.mubr.bf16.gmra.mxu0 %v9777
        %v10520 = vpop.f32.mrf.mxu0
        %v10521 = vadd.f32 0.0, %v10520
        %v10522 = vpop.f32.mrf.mxu0
        %v10523 = vpop.f32.mrf.mxu0
        %v10524 = vadd.f32 0.0, %v10523
        %v10525 = vpop.f32.mrf.mxu0
        %10526 = vmatprep.mubr.bf16.mxu0 %v9787
        %10527 = vmatmul.mubr.bf16.gmra.mxu0 %v9786
        %v10528 = vpop.f32.mrf.mxu0
        %v10529 = vadd.f32 0.0, %v10528
        %v10530 = vpop.f32.mrf.mxu0
        %v10531 = vpop.f32.mrf.mxu0
        %v10532 = vadd.f32 0.0, %v10531
        %v10533 = vpop.f32.mrf.mxu0
        %10534 = vmatprep.mubr.bf16.mxu0 %v9796
        %10535 = vmatmul.mubr.bf16.gmra.mxu0 %v9795
        %v10536 = vpop.f32.mrf.mxu0
        %v10537 = vadd.f32 0.0, %v10536
        %v10538 = vpop.f32.mrf.mxu0
        %v10539 = vpop.f32.mrf.mxu0
        %v10540 = vadd.f32 0.0, %v10539
        %v10541 = vpop.f32.mrf.mxu0
        %10542 = vmatprep.mubr.bf16.mxu0 %v9805
        %10543 = vmatmul.mubr.bf16.gmra.mxu0 %v9804
        %v10544 = vpop.f32.mrf.mxu0
        %v10545 = vadd.f32 0.0, %v10544
        %v10546 = vpop.f32.mrf.mxu0
        %v10547 = vpop.f32.mrf.mxu0
        %v10548 = vadd.f32 0.0, %v10547
        %v10549 = vpop.f32.mrf.mxu0
        %10550 = vmatprep.mubr.bf16.mxu0 %v9814
        %10551 = vmatmul.mubr.bf16.gmra.mxu0 %v9813
        %v10552 = vpop.f32.mrf.mxu0
        %v10553 = vadd.f32 0.0, %v10552
        %v10554 = vpop.f32.mrf.mxu0
        %v10555 = vpop.f32.mrf.mxu0
        %v10556 = vadd.f32 0.0, %v10555
        %v10557 = vpop.f32.mrf.mxu0
        %10558 = vdwg.mxu0
        %10559 = vmatprep.subr.bf16.mxu0 0
        %10560 = vmatpush1.bf16.msra.mxu0 %v10277
        %10561 = vmatprep.subr.bf16.mxu0 0
        %10562 = vmatpush1.bf16.msra.mxu0 %v10276
        %10563 = vmatprep.subr.bf16.mxu0 0
        %10564 = vmatpush1.bf16.msra.mxu0 %v10275
        %10565 = vmatprep.subr.bf16.mxu0 0
        %10566 = vmatpush1.bf16.msra.mxu0 %v10274
        %10567 = vmatprep.subr.bf16.mxu0 0
        %10568 = vmatpush1.bf16.msra.mxu0 %v10273
        %10569 = vmatprep.subr.bf16.mxu0 0
        %10570 = vmatpush1.bf16.msra.mxu0 %v10272
        %10571 = vmatprep.subr.bf16.mxu0 0
        %10572 = vmatpush1.bf16.msra.mxu0 %v10271
        %10573 = vmatprep.subr.bf16.mxu0 0
        %10574 = vmatpush1.bf16.msra.mxu0 %v10270
        %10575 = vmatprep.subr.bf16.mxu0 0
        %10576 = vmatpush2.bf16.msra.mxu0 %v10285
        %10577 = vmatprep.subr.bf16.mxu0 0
        %10578 = vmatpush2.bf16.msra.mxu0 %v10284
        %10579 = vmatprep.subr.bf16.mxu0 0
        %10580 = vmatpush2.bf16.msra.mxu0 %v10283
        %10581 = vmatprep.subr.bf16.mxu0 0
        %10582 = vmatpush2.bf16.msra.mxu0 %v10282
        %10583 = vmatprep.subr.bf16.mxu0 0
        %10584 = vmatpush2.bf16.msra.mxu0 %v10281
        %10585 = vmatprep.subr.bf16.mxu0 0
        %10586 = vmatpush2.bf16.msra.mxu0 %v10280
        %10587 = vmatprep.subr.bf16.mxu0 0
        %10588 = vmatpush2.bf16.msra.mxu0 %v10279
        %10589 = vmatprep.subr.bf16.mxu0 0
        %10590 = vmatpush2.bf16.msra.mxu0 %v10278
        %10591 = vmatprep.mubr.bf16.mxu0 %v9681
        %10592 = vmatmul.mubr.bf16.gmra.mxu0 %v9680
        %v10593 = vpop.f32.mrf.mxu0
        %v10594 = vadd.f32 %v10433, %v10593
        %v10595 = vpop.f32.mrf.mxu0
        %v10596 = vpop.f32.mrf.mxu0
        %v10597 = vadd.f32 %v10436, %v10596
        %v10598 = vpop.f32.mrf.mxu0
        %10599 = vmatprep.mubr.bf16.mxu0 %v9690
        %10600 = vmatmul.mubr.bf16.gmra.mxu0 %v9689
        %v10601 = vpop.f32.mrf.mxu0
        %v10602 = vadd.f32 %v10441, %v10601
        %v10603 = vpop.f32.mrf.mxu0
        %v10604 = vpop.f32.mrf.mxu0
        %v10605 = vadd.f32 %v10444, %v10604
        %v10606 = vpop.f32.mrf.mxu0
        %10607 = vmatprep.mubr.bf16.mxu0 %v9699
        %10608 = vmatmul.mubr.bf16.gmra.mxu0 %v9698
        %v10609 = vpop.f32.mrf.mxu0
        %v10610 = vadd.f32 %v10449, %v10609
        %v10611 = vpop.f32.mrf.mxu0
        %v10612 = vpop.f32.mrf.mxu0
        %v10613 = vadd.f32 %v10452, %v10612
        %v10614 = vpop.f32.mrf.mxu0
        %10615 = vmatprep.mubr.bf16.mxu0 %v9708
        %10616 = vmatmul.mubr.bf16.gmra.mxu0 %v9707
        %v10617 = vpop.f32.mrf.mxu0
        %v10618 = vadd.f32 %v10457, %v10617
        %v10619 = vpop.f32.mrf.mxu0
        %v10620 = vpop.f32.mrf.mxu0
        %v10621 = vadd.f32 %v10460, %v10620
        %v10622 = vpop.f32.mrf.mxu0
        %10623 = vmatprep.mubr.bf16.mxu0 %v9717
        %10624 = vmatmul.mubr.bf16.gmra.mxu0 %v9716
        %v10625 = vpop.f32.mrf.mxu0
        %v10626 = vadd.f32 %v10465, %v10625
        %v10627 = vpop.f32.mrf.mxu0
        %v10628 = vpop.f32.mrf.mxu0
        %v10629 = vadd.f32 %v10468, %v10628
        %v10630 = vpop.f32.mrf.mxu0
        %10631 = vmatprep.mubr.bf16.mxu0 %v9726
        %10632 = vmatmul.mubr.bf16.gmra.mxu0 %v9725
        %v10633 = vpop.f32.mrf.mxu0
        %v10634 = vadd.f32 %v10473, %v10633
        %v10635 = vpop.f32.mrf.mxu0
        %v10636 = vpop.f32.mrf.mxu0
        %v10637 = vadd.f32 %v10476, %v10636
        %v10638 = vpop.f32.mrf.mxu0
        %10639 = vmatprep.mubr.bf16.mxu0 %v9735
        %10640 = vmatmul.mubr.bf16.gmra.mxu0 %v9734
        %v10641 = vpop.f32.mrf.mxu0
        %v10642 = vadd.f32 %v10481, %v10641
        %v10643 = vpop.f32.mrf.mxu0
        %v10644 = vpop.f32.mrf.mxu0
        %v10645 = vadd.f32 %v10484, %v10644
        %v10646 = vpop.f32.mrf.mxu0
        %10647 = vmatprep.mubr.bf16.mxu0 %v9744
        %10648 = vmatmul.mubr.bf16.gmra.mxu0 %v9743
        %v10649 = vpop.f32.mrf.mxu0
        %v10650 = vadd.f32 %v10489, %v10649
        %v10651 = vpop.f32.mrf.mxu0
        %v10652 = vpop.f32.mrf.mxu0
        %v10653 = vadd.f32 %v10492, %v10652
        %v10654 = vpop.f32.mrf.mxu0
        %10655 = vmatprep.mubr.bf16.mxu0 %v9753
        %10656 = vmatmul.mubr.bf16.gmra.mxu0 %v9752
        %v10657 = vpop.f32.mrf.mxu0
        %v10658 = vadd.f32 %v10497, %v10657
        %v10659 = vpop.f32.mrf.mxu0
        %v10660 = vpop.f32.mrf.mxu0
        %v10661 = vadd.f32 %v10500, %v10660
        %v10662 = vpop.f32.mrf.mxu0
        %10663 = vmatprep.mubr.bf16.mxu0 %v9762
        %10664 = vmatmul.mubr.bf16.gmra.mxu0 %v9761
        %v10665 = vpop.f32.mrf.mxu0
        %v10666 = vadd.f32 %v10505, %v10665
        %v10667 = vpop.f32.mrf.mxu0
        %v10668 = vpop.f32.mrf.mxu0
        %v10669 = vadd.f32 %v10508, %v10668
        %v10670 = vpop.f32.mrf.mxu0
        %10671 = vmatprep.mubr.bf16.mxu0 %v9771
        %10672 = vmatmul.mubr.bf16.gmra.mxu0 %v9770
        %v10673 = vpop.f32.mrf.mxu0
        %v10674 = vadd.f32 %v10513, %v10673
        %v10675 = vpop.f32.mrf.mxu0
        %v10676 = vpop.f32.mrf.mxu0
        %v10677 = vadd.f32 %v10516, %v10676
        %v10678 = vpop.f32.mrf.mxu0
        %10679 = vmatprep.mubr.bf16.mxu0 %v9780
        %10680 = vmatmul.mubr.bf16.gmra.mxu0 %v9779
        %v10681 = vpop.f32.mrf.mxu0
        %v10682 = vadd.f32 %v10521, %v10681
        %v10683 = vpop.f32.mrf.mxu0
        %v10684 = vpop.f32.mrf.mxu0
        %v10685 = vadd.f32 %v10524, %v10684
        %v10686 = vpop.f32.mrf.mxu0
        %10687 = vmatprep.mubr.bf16.mxu0 %v9789
        %10688 = vmatmul.mubr.bf16.gmra.mxu0 %v9788
        %v10689 = vpop.f32.mrf.mxu0
        %v10690 = vadd.f32 %v10529, %v10689
        %v10691 = vpop.f32.mrf.mxu0
        %v10692 = vpop.f32.mrf.mxu0
        %v10693 = vadd.f32 %v10532, %v10692
        %v10694 = vpop.f32.mrf.mxu0
        %10695 = vmatprep.mubr.bf16.mxu0 %v9798
        %10696 = vmatmul.mubr.bf16.gmra.mxu0 %v9797
        %v10697 = vpop.f32.mrf.mxu0
        %v10698 = vadd.f32 %v10537, %v10697
        %v10699 = vpop.f32.mrf.mxu0
        %v10700 = vpop.f32.mrf.mxu0
        %v10701 = vadd.f32 %v10540, %v10700
        %v10702 = vpop.f32.mrf.mxu0
        %10703 = vmatprep.mubr.bf16.mxu0 %v9807
        %10704 = vmatmul.mubr.bf16.gmra.mxu0 %v9806
        %v10705 = vpop.f32.mrf.mxu0
        %v10706 = vadd.f32 %v10545, %v10705
        %v10707 = vpop.f32.mrf.mxu0
        %v10708 = vpop.f32.mrf.mxu0
        %v10709 = vadd.f32 %v10548, %v10708
        %v10710 = vpop.f32.mrf.mxu0
        %10711 = vmatprep.mubr.bf16.mxu0 %v9816
        %10712 = vmatmul.mubr.bf16.gmra.mxu0 %v9815
        %v10713 = vpop.f32.mrf.mxu0
        %v10714 = vadd.f32 %v10553, %v10713
        %v10715 = vpop.f32.mrf.mxu0
        %v10716 = vpop.f32.mrf.mxu0
        %v10717 = vadd.f32 %v10556, %v10716
        %v10718 = vpop.f32.mrf.mxu0
        %10719 = vdwg.mxu0
        %10720 = vmatprep.subr.bf16.mxu0 0
        %10721 = vmatpush1.bf16.msra.mxu0 %v10293
        %10722 = vmatprep.subr.bf16.mxu0 0
        %10723 = vmatpush1.bf16.msra.mxu0 %v10292
        %10724 = vmatprep.subr.bf16.mxu0 0
        %10725 = vmatpush1.bf16.msra.mxu0 %v10291
        %10726 = vmatprep.subr.bf16.mxu0 0
        %10727 = vmatpush1.bf16.msra.mxu0 %v10290
        %10728 = vmatprep.subr.bf16.mxu0 0
        %10729 = vmatpush1.bf16.msra.mxu0 %v10289
        %10730 = vmatprep.subr.bf16.mxu0 0
        %10731 = vmatpush1.bf16.msra.mxu0 %v10288
        %10732 = vmatprep.subr.bf16.mxu0 0
        %10733 = vmatpush1.bf16.msra.mxu0 %v10287
        %10734 = vmatprep.subr.bf16.mxu0 0
        %10735 = vmatpush1.bf16.msra.mxu0 %v10286
        %10736 = vmatprep.subr.bf16.mxu0 0
        %10737 = vmatpush2.bf16.msra.mxu0 %v10301
        %10738 = vmatprep.subr.bf16.mxu0 0
        %10739 = vmatpush2.bf16.msra.mxu0 %v10300
        %10740 = vmatprep.subr.bf16.mxu0 0
        %10741 = vmatpush2.bf16.msra.mxu0 %v10299
        %10742 = vmatprep.subr.bf16.mxu0 0
        %10743 = vmatpush2.bf16.msra.mxu0 %v10298
        %10744 = vmatprep.subr.bf16.mxu0 0
        %10745 = vmatpush2.bf16.msra.mxu0 %v10297
        %10746 = vmatprep.subr.bf16.mxu0 0
        %10747 = vmatpush2.bf16.msra.mxu0 %v10296
        %10748 = vmatprep.subr.bf16.mxu0 0
        %10749 = vmatpush2.bf16.msra.mxu0 %v10295
        %10750 = vmatprep.subr.bf16.mxu0 0
        %10751 = vmatpush2.bf16.msra.mxu0 %v10294
        %10752 = vmatprep.mubr.bf16.mxu0 %v9683
        %10753 = vmatmul.mubr.bf16.gmra.mxu0 %v9682
        %v10754 = vpop.f32.mrf.mxu0
        %v10755 = vadd.f32 %v10594, %v10754
        %v10756 = vpop.f32.mrf.mxu0
        %v10757 = vpop.f32.mrf.mxu0
        %v10758 = vadd.f32 %v10597, %v10757
        %v10759 = vpop.f32.mrf.mxu0
        %10760 = vmatprep.mubr.bf16.mxu0 %v9692
        %10761 = vmatmul.mubr.bf16.gmra.mxu0 %v9691
        %v10762 = vpop.f32.mrf.mxu0
        %v10763 = vadd.f32 %v10602, %v10762
        %v10764 = vpop.f32.mrf.mxu0
        %v10765 = vpop.f32.mrf.mxu0
        %v10766 = vadd.f32 %v10605, %v10765
        %v10767 = vpop.f32.mrf.mxu0
        %10768 = vmatprep.mubr.bf16.mxu0 %v9701
        %10769 = vmatmul.mubr.bf16.gmra.mxu0 %v9700
        %v10770 = vpop.f32.mrf.mxu0
        %v10771 = vadd.f32 %v10610, %v10770
        %v10772 = vpop.f32.mrf.mxu0
        %v10773 = vpop.f32.mrf.mxu0
        %v10774 = vadd.f32 %v10613, %v10773
        %v10775 = vpop.f32.mrf.mxu0
        %10776 = vmatprep.mubr.bf16.mxu0 %v9710
        %10777 = vmatmul.mubr.bf16.gmra.mxu0 %v9709
        %v10778 = vpop.f32.mrf.mxu0
        %v10779 = vadd.f32 %v10618, %v10778
        %v10780 = vpop.f32.mrf.mxu0
        %v10781 = vpop.f32.mrf.mxu0
        %v10782 = vadd.f32 %v10621, %v10781
        %v10783 = vpop.f32.mrf.mxu0
        %10784 = vmatprep.mubr.bf16.mxu0 %v9719
        %10785 = vmatmul.mubr.bf16.gmra.mxu0 %v9718
        %v10786 = vpop.f32.mrf.mxu0
        %v10787 = vadd.f32 %v10626, %v10786
        %v10788 = vpop.f32.mrf.mxu0
        %v10789 = vpop.f32.mrf.mxu0
        %v10790 = vadd.f32 %v10629, %v10789
        %v10791 = vpop.f32.mrf.mxu0
        %10792 = vmatprep.mubr.bf16.mxu0 %v9728
        %10793 = vmatmul.mubr.bf16.gmra.mxu0 %v9727
        %v10794 = vpop.f32.mrf.mxu0
        %v10795 = vadd.f32 %v10634, %v10794
        %v10796 = vpop.f32.mrf.mxu0
        %v10797 = vpop.f32.mrf.mxu0
        %v10798 = vadd.f32 %v10637, %v10797
        %v10799 = vpop.f32.mrf.mxu0
        %10800 = vmatprep.mubr.bf16.mxu0 %v9737
        %10801 = vmatmul.mubr.bf16.gmra.mxu0 %v9736
        %v10802 = vpop.f32.mrf.mxu0
        %v10803 = vadd.f32 %v10642, %v10802
        %v10804 = vpop.f32.mrf.mxu0
        %v10805 = vpop.f32.mrf.mxu0
        %v10806 = vadd.f32 %v10645, %v10805
        %v10807 = vpop.f32.mrf.mxu0
        %10808 = vmatprep.mubr.bf16.mxu0 %v9746
        %10809 = vmatmul.mubr.bf16.gmra.mxu0 %v9745
        %v10810 = vpop.f32.mrf.mxu0
        %v10811 = vadd.f32 %v10650, %v10810
        %v10812 = vpop.f32.mrf.mxu0
        %v10813 = vpop.f32.mrf.mxu0
        %v10814 = vadd.f32 %v10653, %v10813
        %v10815 = vpop.f32.mrf.mxu0
        %10816 = vmatprep.mubr.bf16.mxu0 %v9755
        %10817 = vmatmul.mubr.bf16.gmra.mxu0 %v9754
        %v10818 = vpop.f32.mrf.mxu0
        %v10819 = vadd.f32 %v10658, %v10818
        %v10820 = vpop.f32.mrf.mxu0
        %v10821 = vpop.f32.mrf.mxu0
        %v10822 = vadd.f32 %v10661, %v10821
        %v10823 = vpop.f32.mrf.mxu0
        %10824 = vmatprep.mubr.bf16.mxu0 %v9764
        %10825 = vmatmul.mubr.bf16.gmra.mxu0 %v9763
        %v10826 = vpop.f32.mrf.mxu0
        %v10827 = vadd.f32 %v10666, %v10826
        %v10828 = vpop.f32.mrf.mxu0
        %v10829 = vpop.f32.mrf.mxu0
        %v10830 = vadd.f32 %v10669, %v10829
        %v10831 = vpop.f32.mrf.mxu0
        %10832 = vmatprep.mubr.bf16.mxu0 %v9773
        %10833 = vmatmul.mubr.bf16.gmra.mxu0 %v9772
        %v10834 = vpop.f32.mrf.mxu0
        %v10835 = vadd.f32 %v10674, %v10834
        %v10836 = vpop.f32.mrf.mxu0
        %v10837 = vpop.f32.mrf.mxu0
        %v10838 = vadd.f32 %v10677, %v10837
        %v10839 = vpop.f32.mrf.mxu0
        %10840 = vmatprep.mubr.bf16.mxu0 %v9782
        %10841 = vmatmul.mubr.bf16.gmra.mxu0 %v9781
        %v10842 = vpop.f32.mrf.mxu0
        %v10843 = vadd.f32 %v10682, %v10842
        %v10844 = vpop.f32.mrf.mxu0
        %v10845 = vpop.f32.mrf.mxu0
        %v10846 = vadd.f32 %v10685, %v10845
        %v10847 = vpop.f32.mrf.mxu0
        %10848 = vmatprep.mubr.bf16.mxu0 %v9791
        %10849 = vmatmul.mubr.bf16.gmra.mxu0 %v9790
        %v10850 = vpop.f32.mrf.mxu0
        %v10851 = vadd.f32 %v10690, %v10850
        %v10852 = vpop.f32.mrf.mxu0
        %v10853 = vpop.f32.mrf.mxu0
        %v10854 = vadd.f32 %v10693, %v10853
        %v10855 = vpop.f32.mrf.mxu0
        %10856 = vmatprep.mubr.bf16.mxu0 %v9800
        %10857 = vmatmul.mubr.bf16.gmra.mxu0 %v9799
        %v10858 = vpop.f32.mrf.mxu0
        %v10859 = vadd.f32 %v10698, %v10858
        %v10860 = vpop.f32.mrf.mxu0
        %v10861 = vpop.f32.mrf.mxu0
        %v10862 = vadd.f32 %v10701, %v10861
        %v10863 = vpop.f32.mrf.mxu0
        %10864 = vmatprep.mubr.bf16.mxu0 %v9809
        %10865 = vmatmul.mubr.bf16.gmra.mxu0 %v9808
        %v10866 = vpop.f32.mrf.mxu0
        %v10867 = vadd.f32 %v10706, %v10866
        %v10868 = vpop.f32.mrf.mxu0
        %v10869 = vpop.f32.mrf.mxu0
        %v10870 = vadd.f32 %v10709, %v10869
        %v10871 = vpop.f32.mrf.mxu0
        %10872 = vmatprep.mubr.bf16.mxu0 %v9818
        %10873 = vmatmul.mubr.bf16.gmra.mxu0 %v9817
        %v10874 = vpop.f32.mrf.mxu0
        %v10875 = vadd.f32 %v10714, %v10874
        %v10876 = vpop.f32.mrf.mxu0
        %v10877 = vpop.f32.mrf.mxu0
        %v10878 = vadd.f32 %v10717, %v10877
        %v10879 = vpop.f32.mrf.mxu0
        %10880 = vdwg.mxu0
        %10881 = vmatprep.subr.bf16.mxu0 0
        %10882 = vmatpush1.bf16.msra.mxu0 %v10309
        %10883 = vmatprep.subr.bf16.mxu0 0
        %10884 = vmatpush1.bf16.msra.mxu0 %v10308
        %10885 = vmatprep.subr.bf16.mxu0 0
        %10886 = vmatpush1.bf16.msra.mxu0 %v10307
        %10887 = vmatprep.subr.bf16.mxu0 0
        %10888 = vmatpush1.bf16.msra.mxu0 %v10306
        %10889 = vmatprep.subr.bf16.mxu0 0
        %10890 = vmatpush1.bf16.msra.mxu0 %v10305
        %10891 = vmatprep.subr.bf16.mxu0 0
        %10892 = vmatpush1.bf16.msra.mxu0 %v10304
        %10893 = vmatprep.subr.bf16.mxu0 0
        %10894 = vmatpush1.bf16.msra.mxu0 %v10303
        %10895 = vmatprep.subr.bf16.mxu0 0
        %10896 = vmatpush1.bf16.msra.mxu0 %v10302
        %10897 = vmatprep.subr.bf16.mxu0 0
        %10898 = vmatpush2.bf16.msra.mxu0 %v10317
        %10899 = vmatprep.subr.bf16.mxu0 0
        %10900 = vmatpush2.bf16.msra.mxu0 %v10316
        %10901 = vmatprep.subr.bf16.mxu0 0
        %10902 = vmatpush2.bf16.msra.mxu0 %v10315
        %10903 = vmatprep.subr.bf16.mxu0 0
        %10904 = vmatpush2.bf16.msra.mxu0 %v10314
        %10905 = vmatprep.subr.bf16.mxu0 0
        %10906 = vmatpush2.bf16.msra.mxu0 %v10313
        %10907 = vmatprep.subr.bf16.mxu0 0
        %10908 = vmatpush2.bf16.msra.mxu0 %v10312
        %10909 = vmatprep.subr.bf16.mxu0 0
        %10910 = vmatpush2.bf16.msra.mxu0 %v10311
        %10911 = vmatprep.subr.bf16.mxu0 0
        %10912 = vmatpush2.bf16.msra.mxu0 %v10310
        %10913 = vmatprep.mubr.bf16.mxu0 %v9685
        %10914 = vmatmul.mubr.bf16.gmra.mxu0 %v9684
        %v10915 = vpop.f32.mrf.mxu0
        %v10916 = vadd.f32 %v10755, %v10915
        %v10917 = vpop.f32.mrf.mxu0
        %v10918 = vpop.f32.mrf.mxu0
        %v10919 = vadd.f32 %v10758, %v10918
        %v10920 = vpop.f32.mrf.mxu0
        %10921 = vmatprep.mubr.bf16.mxu0 %v9694
        %10922 = vmatmul.mubr.bf16.gmra.mxu0 %v9693
        %v10923 = vpop.f32.mrf.mxu0
        %v10924 = vadd.f32 %v10763, %v10923
        %v10925 = vpop.f32.mrf.mxu0
        %v10926 = vpop.f32.mrf.mxu0
        %v10927 = vadd.f32 %v10766, %v10926
        %v10928 = vpop.f32.mrf.mxu0
        %10929 = vmatprep.mubr.bf16.mxu0 %v9703
        %10930 = vmatmul.mubr.bf16.gmra.mxu0 %v9702
        %v10931 = vpop.f32.mrf.mxu0
        %v10932 = vadd.f32 %v10771, %v10931
        %v10933 = vpop.f32.mrf.mxu0
        %v10934 = vpop.f32.mrf.mxu0
        %v10935 = vadd.f32 %v10774, %v10934
        %v10936 = vpop.f32.mrf.mxu0
        %10937 = vmatprep.mubr.bf16.mxu0 %v9712
        %10938 = vmatmul.mubr.bf16.gmra.mxu0 %v9711
        %v10939 = vpop.f32.mrf.mxu0
        %v10940 = vadd.f32 %v10779, %v10939
        %v10941 = vpop.f32.mrf.mxu0
        %v10942 = vpop.f32.mrf.mxu0
        %v10943 = vadd.f32 %v10782, %v10942
        %v10944 = vpop.f32.mrf.mxu0
        %10945 = vmatprep.mubr.bf16.mxu0 %v9721
        %10946 = vmatmul.mubr.bf16.gmra.mxu0 %v9720
        %v10947 = vpop.f32.mrf.mxu0
        %v10948 = vadd.f32 %v10787, %v10947
        %v10949 = vpop.f32.mrf.mxu0
        %v10950 = vpop.f32.mrf.mxu0
        %v10951 = vadd.f32 %v10790, %v10950
        %v10952 = vpop.f32.mrf.mxu0
        %10953 = vmatprep.mubr.bf16.mxu0 %v9730
        %10954 = vmatmul.mubr.bf16.gmra.mxu0 %v9729
        %v10955 = vpop.f32.mrf.mxu0
        %v10956 = vadd.f32 %v10795, %v10955
        %v10957 = vpop.f32.mrf.mxu0
        %v10958 = vpop.f32.mrf.mxu0
        %v10959 = vadd.f32 %v10798, %v10958
        %v10960 = vpop.f32.mrf.mxu0
        %10961 = vmatprep.mubr.bf16.mxu0 %v9739
        %10962 = vmatmul.mubr.bf16.gmra.mxu0 %v9738
        %v10963 = vpop.f32.mrf.mxu0
        %v10964 = vadd.f32 %v10803, %v10963
        %v10965 = vpop.f32.mrf.mxu0
        %v10966 = vpop.f32.mrf.mxu0
        %v10967 = vadd.f32 %v10806, %v10966
        %v10968 = vpop.f32.mrf.mxu0
        %10969 = vmatprep.mubr.bf16.mxu0 %v9748
        %10970 = vmatmul.mubr.bf16.gmra.mxu0 %v9747
        %v10971 = vpop.f32.mrf.mxu0
        %v10972 = vadd.f32 %v10811, %v10971
        %v10973 = vpop.f32.mrf.mxu0
        %v10974 = vpop.f32.mrf.mxu0
        %v10975 = vadd.f32 %v10814, %v10974
        %v10976 = vpop.f32.mrf.mxu0
        %10977 = vmatprep.mubr.bf16.mxu0 %v9757
        %10978 = vmatmul.mubr.bf16.gmra.mxu0 %v9756
        %v10979 = vpop.f32.mrf.mxu0
        %v10980 = vadd.f32 %v10819, %v10979
        %v10981 = vpop.f32.mrf.mxu0
        %v10982 = vpop.f32.mrf.mxu0
        %v10983 = vadd.f32 %v10822, %v10982
        %v10984 = vpop.f32.mrf.mxu0
        %10985 = vmatprep.mubr.bf16.mxu0 %v9766
        %10986 = vmatmul.mubr.bf16.gmra.mxu0 %v9765
        %v10987 = vpop.f32.mrf.mxu0
        %v10988 = vadd.f32 %v10827, %v10987
        %v10989 = vpop.f32.mrf.mxu0
        %v10990 = vpop.f32.mrf.mxu0
        %v10991 = vadd.f32 %v10830, %v10990
        %v10992 = vpop.f32.mrf.mxu0
        %10993 = vmatprep.mubr.bf16.mxu0 %v9775
        %10994 = vmatmul.mubr.bf16.gmra.mxu0 %v9774
        %v10995 = vpop.f32.mrf.mxu0
        %v10996 = vadd.f32 %v10835, %v10995
        %v10997 = vpop.f32.mrf.mxu0
        %v10998 = vpop.f32.mrf.mxu0
        %v10999 = vadd.f32 %v10838, %v10998
        %v11000 = vpop.f32.mrf.mxu0
        %11001 = vmatprep.mubr.bf16.mxu0 %v9784
        %11002 = vmatmul.mubr.bf16.gmra.mxu0 %v9783
        %v11003 = vpop.f32.mrf.mxu0
        %v11004 = vadd.f32 %v10843, %v11003
        %v11005 = vpop.f32.mrf.mxu0
        %v11006 = vpop.f32.mrf.mxu0
        %v11007 = vadd.f32 %v10846, %v11006
        %v11008 = vpop.f32.mrf.mxu0
        %11009 = vmatprep.mubr.bf16.mxu0 %v9793
        %11010 = vmatmul.mubr.bf16.gmra.mxu0 %v9792
        %v11011 = vpop.f32.mrf.mxu0
        %v11012 = vadd.f32 %v10851, %v11011
        %v11013 = vpop.f32.mrf.mxu0
        %v11014 = vpop.f32.mrf.mxu0
        %v11015 = vadd.f32 %v10854, %v11014
        %v11016 = vpop.f32.mrf.mxu0
        %11017 = vmatprep.mubr.bf16.mxu0 %v9802
        %11018 = vmatmul.mubr.bf16.gmra.mxu0 %v9801
        %v11019 = vpop.f32.mrf.mxu0
        %v11020 = vadd.f32 %v10859, %v11019
        %v11021 = vpop.f32.mrf.mxu0
        %v11022 = vpop.f32.mrf.mxu0
        %v11023 = vadd.f32 %v10862, %v11022
        %v11024 = vpop.f32.mrf.mxu0
        %11025 = vmatprep.mubr.bf16.mxu0 %v9811
        %11026 = vmatmul.mubr.bf16.gmra.mxu0 %v9810
        %v11027 = vpop.f32.mrf.mxu0
        %v11028 = vadd.f32 %v10867, %v11027
        %v11029 = vpop.f32.mrf.mxu0
        %v11030 = vpop.f32.mrf.mxu0
        %v11031 = vadd.f32 %v10870, %v11030
        %v11032 = vpop.f32.mrf.mxu0
        %11033 = vmatprep.mubr.bf16.mxu0 %v9820
        %11034 = vmatmul.mubr.bf16.gmra.mxu0 %v9819
        %v11035 = vpop.f32.mrf.mxu0
        %v11036 = vadd.f32 %v10875, %v11035
        %v11037 = vpop.f32.mrf.mxu0
        %v11038 = vpop.f32.mrf.mxu0
        %v11039 = vadd.f32 %v10878, %v11038
        %v11040 = vpop.f32.mrf.mxu0
        %11041 = vdwg.mxu0
        %11042 = vmatprep.subr.bf16.mxu0 0
        %11043 = vmatpush1.bf16.msra.mxu0 %v10325
        %11044 = vmatprep.subr.bf16.mxu0 0
        %11045 = vmatpush1.bf16.msra.mxu0 %v10324
        %11046 = vmatprep.subr.bf16.mxu0 0
        %11047 = vmatpush1.bf16.msra.mxu0 %v10323
        %11048 = vmatprep.subr.bf16.mxu0 0
        %11049 = vmatpush1.bf16.msra.mxu0 %v10322
        %11050 = vmatprep.subr.bf16.mxu0 0
        %11051 = vmatpush1.bf16.msra.mxu0 %v10321
        %11052 = vmatprep.subr.bf16.mxu0 0
        %11053 = vmatpush1.bf16.msra.mxu0 %v10320
        %11054 = vmatprep.subr.bf16.mxu0 0
        %11055 = vmatpush1.bf16.msra.mxu0 %v10319
        %11056 = vmatprep.subr.bf16.mxu0 0
        %11057 = vmatpush1.bf16.msra.mxu0 %v10318
        %11058 = vmatprep.subr.bf16.mxu0 0
        %11059 = vmatpush2.bf16.msra.mxu0 0
        %11060 = vmatprep.subr.bf16.mxu0 0
        %11061 = vmatpush2.bf16.msra.mxu0 0
        %11062 = vmatprep.subr.bf16.mxu0 0
        %11063 = vmatpush2.bf16.msra.mxu0 0
        %11064 = vmatprep.subr.bf16.mxu0 0
        %11065 = vmatpush2.bf16.msra.mxu0 0
        %11066 = vmatprep.subr.bf16.mxu0 0
        %11067 = vmatpush2.bf16.msra.mxu0 0
        %11068 = vmatprep.subr.bf16.mxu0 0
        %11069 = vmatpush2.bf16.msra.mxu0 0
        %11070 = vmatprep.subr.bf16.mxu0 0
        %11071 = vmatpush2.bf16.msra.mxu0 0
        %11072 = vmatprep.subr.bf16.mxu0 0
        %11073 = vmatpush2.bf16.msra.mxu0 0
        %11074 = vmatprep.mubr.bf16.mxu0 0
        %11075 = vmatmul.mubr.bf16.gmra.mxu0 %v9686
        %v11076 = vpop.f32.mrf.mxu0
        %v11077 = vadd.f32 %v10916, %v11076
        %v11078 = vpop.f32.mrf.mxu0
        %v11079 = vpop.f32.mrf.mxu0
        %v11080 = vadd.f32 %v10919, %v11079
        %v11081 = vpop.f32.mrf.mxu0
        %11082 = vmatprep.mubr.bf16.mxu0 0
        %11083 = vmatmul.mubr.bf16.gmra.mxu0 %v9695
        %v11084 = vpop.f32.mrf.mxu0
        %v11085 = vadd.f32 %v10924, %v11084
        %v11086 = vpop.f32.mrf.mxu0
        %v11087 = vpop.f32.mrf.mxu0
        %v11088 = vadd.f32 %v10927, %v11087
        %v11089 = vpop.f32.mrf.mxu0
        %11090 = vmatprep.mubr.bf16.mxu0 0
        %11091 = vmatmul.mubr.bf16.gmra.mxu0 %v9704
        %v11092 = vpop.f32.mrf.mxu0
        %v11093 = vadd.f32 %v10932, %v11092
        %v11094 = vpop.f32.mrf.mxu0
        %v11095 = vpop.f32.mrf.mxu0
        %v11096 = vadd.f32 %v10935, %v11095
        %v11097 = vpop.f32.mrf.mxu0
        %11098 = vmatprep.mubr.bf16.mxu0 0
        %11099 = vmatmul.mubr.bf16.gmra.mxu0 %v9713
        %v11100 = vpop.f32.mrf.mxu0
        %v11101 = vadd.f32 %v10940, %v11100
        %v11102 = vpop.f32.mrf.mxu0
        %v11103 = vpop.f32.mrf.mxu0
        %v11104 = vadd.f32 %v10943, %v11103
        %v11105 = vpop.f32.mrf.mxu0
        %11106 = vmatprep.mubr.bf16.mxu0 0
        %11107 = vmatmul.mubr.bf16.gmra.mxu0 %v9722
        %v11108 = vpop.f32.mrf.mxu0
        %v11109 = vadd.f32 %v10948, %v11108
        %v11110 = vpop.f32.mrf.mxu0
        %v11111 = vpop.f32.mrf.mxu0
        %v11112 = vadd.f32 %v10951, %v11111
        %v11113 = vpop.f32.mrf.mxu0
        %11114 = vmatprep.mubr.bf16.mxu0 0
        %11115 = vmatmul.mubr.bf16.gmra.mxu0 %v9731
        %v11116 = vpop.f32.mrf.mxu0
        %v11117 = vadd.f32 %v10956, %v11116
        %v11118 = vpop.f32.mrf.mxu0
        %v11119 = vpop.f32.mrf.mxu0
        %v11120 = vadd.f32 %v10959, %v11119
        %v11121 = vpop.f32.mrf.mxu0
        %11122 = vmatprep.mubr.bf16.mxu0 0
        %11123 = vmatmul.mubr.bf16.gmra.mxu0 %v9740
        %v11124 = vpop.f32.mrf.mxu0
        %v11125 = vadd.f32 %v10964, %v11124
        %v11126 = vpop.f32.mrf.mxu0
        %v11127 = vpop.f32.mrf.mxu0
        %v11128 = vadd.f32 %v10967, %v11127
        %v11129 = vpop.f32.mrf.mxu0
        %11130 = vmatprep.mubr.bf16.mxu0 0
        %11131 = vmatmul.mubr.bf16.gmra.mxu0 %v9749
        %v11132 = vpop.f32.mrf.mxu0
        %v11133 = vadd.f32 %v10972, %v11132
        %v11134 = vpop.f32.mrf.mxu0
        %v11135 = vpop.f32.mrf.mxu0
        %v11136 = vadd.f32 %v10975, %v11135
        %v11137 = vpop.f32.mrf.mxu0
        %11138 = vmatprep.mubr.bf16.mxu0 0
        %11139 = vmatmul.mubr.bf16.gmra.mxu0 %v9758
        %v11140 = vpop.f32.mrf.mxu0
        %v11141 = vadd.f32 %v10980, %v11140
        %v11142 = vpop.f32.mrf.mxu0
        %v11143 = vpop.f32.mrf.mxu0
        %v11144 = vadd.f32 %v10983, %v11143
        %v11145 = vpop.f32.mrf.mxu0
        %11146 = vmatprep.mubr.bf16.mxu0 0
        %11147 = vmatmul.mubr.bf16.gmra.mxu0 %v9767
        %v11148 = vpop.f32.mrf.mxu0
        %v11149 = vadd.f32 %v10988, %v11148
        %v11150 = vpop.f32.mrf.mxu0
        %v11151 = vpop.f32.mrf.mxu0
        %v11152 = vadd.f32 %v10991, %v11151
        %v11153 = vpop.f32.mrf.mxu0
        %11154 = vmatprep.mubr.bf16.mxu0 0
        %11155 = vmatmul.mubr.bf16.gmra.mxu0 %v9776
        %v11156 = vpop.f32.mrf.mxu0
        %v11157 = vadd.f32 %v10996, %v11156
        %v11158 = vpop.f32.mrf.mxu0
        %v11159 = vpop.f32.mrf.mxu0
        %v11160 = vadd.f32 %v10999, %v11159
        %v11161 = vpop.f32.mrf.mxu0
        %11162 = vmatprep.mubr.bf16.mxu0 0
        %11163 = vmatmul.mubr.bf16.gmra.mxu0 %v9785
        %v11164 = vpop.f32.mrf.mxu0
        %v11165 = vadd.f32 %v11004, %v11164
        %v11166 = vpop.f32.mrf.mxu0
        %v11167 = vpop.f32.mrf.mxu0
        %v11168 = vadd.f32 %v11007, %v11167
        %v11169 = vpop.f32.mrf.mxu0
        %11170 = vmatprep.mubr.bf16.mxu0 0
        %11171 = vmatmul.mubr.bf16.gmra.mxu0 %v9794
        %v11172 = vpop.f32.mrf.mxu0
        %v11173 = vadd.f32 %v11012, %v11172
        %v11174 = vpop.f32.mrf.mxu0
        %v11175 = vpop.f32.mrf.mxu0
        %v11176 = vadd.f32 %v11015, %v11175
        %v11177 = vpop.f32.mrf.mxu0
        %11178 = vmatprep.mubr.bf16.mxu0 0
        %11179 = vmatmul.mubr.bf16.gmra.mxu0 %v9803
        %v11180 = vpop.f32.mrf.mxu0
        %v11181 = vadd.f32 %v11020, %v11180
        %v11182 = vpop.f32.mrf.mxu0
        %v11183 = vpop.f32.mrf.mxu0
        %v11184 = vadd.f32 %v11023, %v11183
        %v11185 = vpop.f32.mrf.mxu0
        %11186 = vmatprep.mubr.bf16.mxu0 0
        %11187 = vmatmul.mubr.bf16.gmra.mxu0 %v9812
        %v11188 = vpop.f32.mrf.mxu0
        %v11189 = vadd.f32 %v11028, %v11188
        %v11190 = vpop.f32.mrf.mxu0
        %v11191 = vpop.f32.mrf.mxu0
        %v11192 = vadd.f32 %v11031, %v11191
        %v11193 = vpop.f32.mrf.mxu0
        %11194 = vmatprep.mubr.bf16.mxu0 0
        %11195 = vmatmul.mubr.bf16.gmra.mxu0 %v9821
        %v11196 = vpop.f32.mrf.mxu0
        %v11197 = vadd.f32 %v11036, %v11196
        %v11198 = vpop.f32.mrf.mxu0
        %v11199 = vpop.f32.mrf.mxu0
        %v11200 = vadd.f32 %v11039, %v11199
        %v11201 = vpop.f32.mrf.mxu0
        %11202 = vdwg.mxu0
        %v11203 = vld [vmem:[%s5] sm:$0x1]
        %v11205 = vlaneseq
        %v11206 = vshrl.u32 %v11205, 7
        %v11207 = vsub.s32 0, %v11206
        %v11208 = vrot.slane %v11203, %v11207
        %v11210 = vmul.f32 %v11077, %v11208
        %v11211 = vmul.f32 %v11080, %v11208
        %v11212 = vmul.f32 %v11085, %v11208
        %v11213 = vmul.f32 %v11088, %v11208
        %v11214 = vmul.f32 %v11093, %v11208
        %v11215 = vmul.f32 %v11096, %v11208
        %v11216 = vmul.f32 %v11101, %v11208
        %v11217 = vmul.f32 %v11104, %v11208
        %v11218 = vmul.f32 %v11109, %v11208
        %v11219 = vmul.f32 %v11112, %v11208
        %v11220 = vmul.f32 %v11117, %v11208
        %v11221 = vmul.f32 %v11120, %v11208
        %v11222 = vmul.f32 %v11125, %v11208
        %v11223 = vmul.f32 %v11128, %v11208
        %v11224 = vmul.f32 %v11133, %v11208
        %v11225 = vmul.f32 %v11136, %v11208
        %v11226 = vmul.f32 %v11141, %v11208
        %v11227 = vmul.f32 %v11144, %v11208
        %v11228 = vmul.f32 %v11149, %v11208
        %v11229 = vmul.f32 %v11152, %v11208
        %v11230 = vmul.f32 %v11157, %v11208
        %v11231 = vmul.f32 %v11160, %v11208
        %v11232 = vmul.f32 %v11165, %v11208
        %v11233 = vmul.f32 %v11168, %v11208
        %v11234 = vmul.f32 %v11173, %v11208
        %v11235 = vmul.f32 %v11176, %v11208
        %v11236 = vmul.f32 %v11181, %v11208
        %v11237 = vmul.f32 %v11184, %v11208
        %v11238 = vmul.f32 %v11189, %v11208
        %v11239 = vmul.f32 %v11192, %v11208
        %v11240 = vmul.f32 %v11197, %v11208
        %v11241 = vmul.f32 %v11200, %v11208
        %v11242 = vld [vmem:[%s6] sm:$0x1]
        %v11244 = vlaneseq
        %v11245 = vshrl.u32 %v11244, 7
        %v11246 = vsub.s32 0, %v11245
        %v11247 = vrot.slane %v11242, %v11246
        %v11249 = vadd.f32 %v11210, %v11247
        %v11250 = vadd.f32 %v11211, %v11247
        %v11251 = vadd.f32 %v11212, %v11247
        %v11252 = vadd.f32 %v11213, %v11247
        %v11253 = vadd.f32 %v11214, %v11247
        %v11254 = vadd.f32 %v11215, %v11247
        %v11255 = vadd.f32 %v11216, %v11247
        %v11256 = vadd.f32 %v11217, %v11247
        %v11257 = vadd.f32 %v11218, %v11247
        %v11258 = vadd.f32 %v11219, %v11247
        %v11259 = vadd.f32 %v11220, %v11247
        %v11260 = vadd.f32 %v11221, %v11247
        %v11261 = vadd.f32 %v11222, %v11247
        %v11262 = vadd.f32 %v11223, %v11247
        %v11263 = vadd.f32 %v11224, %v11247
        %v11264 = vadd.f32 %v11225, %v11247
        %v11265 = vadd.f32 %v11226, %v11247
        %v11266 = vadd.f32 %v11227, %v11247
        %v11267 = vadd.f32 %v11228, %v11247
        %v11268 = vadd.f32 %v11229, %v11247
        %v11269 = vadd.f32 %v11230, %v11247
        %v11270 = vadd.f32 %v11231, %v11247
        %v11271 = vadd.f32 %v11232, %v11247
        %v11272 = vadd.f32 %v11233, %v11247
        %v11273 = vadd.f32 %v11234, %v11247
        %v11274 = vadd.f32 %v11235, %v11247
        %v11275 = vadd.f32 %v11236, %v11247
        %v11276 = vadd.f32 %v11237, %v11247
        %v11277 = vadd.f32 %v11238, %v11247
        %v11278 = vadd.f32 %v11239, %v11247
        %v11279 = vadd.f32 %v11240, %v11247
        %v11280 = vadd.f32 %v11241, %v11247
        %v11281 = vadd.f32 %v11249, %v447
        %v11282 = vadd.f32 %v11250, %v448
        %v11283 = vadd.f32 %v11251, %v449
        %v11284 = vadd.f32 %v11252, %v450
        %v11285 = vadd.f32 %v11253, %v451
        %v11286 = vadd.f32 %v11254, %v452
        %v11287 = vadd.f32 %v11255, %v453
        %v11288 = vadd.f32 %v11256, %v454
        %v11289 = vadd.f32 %v11257, %v455
        %v11290 = vadd.f32 %v11258, %v456
        %v11291 = vadd.f32 %v11259, %v457
        %v11292 = vadd.f32 %v11260, %v458
        %v11293 = vadd.f32 %v11261, %v459
        %v11294 = vadd.f32 %v11262, %v460
        %v11295 = vadd.f32 %v11263, %v461
        %v11296 = vadd.f32 %v11264, %v462
        %v11297 = vadd.f32 %v11265, %v463
        %v11298 = vadd.f32 %v11266, %v464
        %v11299 = vadd.f32 %v11267, %v465
        %v11300 = vadd.f32 %v11268, %v466
        %v11301 = vadd.f32 %v11269, %v467
        %v11302 = vadd.f32 %v11270, %v468
        %v11303 = vadd.f32 %v11271, %v469
        %v11304 = vadd.f32 %v11272, %v470
        %v11305 = vadd.f32 %v11273, %v471
        %v11306 = vadd.f32 %v11274, %v472
        %v11307 = vadd.f32 %v11275, %v473
        %v11308 = vadd.f32 %v11276, %v474
        %v11309 = vadd.f32 %v11277, %v475
        %v11310 = vadd.f32 %v11278, %v476
        %v11311 = vadd.f32 %v11279, %v477
        %v11312 = vadd.f32 %v11280, %v478
        %v11313 = vmax.f32 %v11281, 0.0
        %v11314 = vmax.f32 %v11282, 0.0
        %v11315 = vmax.f32 %v11283, 0.0
        %v11316 = vmax.f32 %v11284, 0.0
        %v11317 = vmax.f32 %v11285, 0.0
        %v11318 = vmax.f32 %v11286, 0.0
        %v11319 = vmax.f32 %v11287, 0.0
        %v11320 = vmax.f32 %v11288, 0.0
        %v11321 = vmax.f32 %v11289, 0.0
        %v11322 = vmax.f32 %v11290, 0.0
        %v11323 = vmax.f32 %v11291, 0.0
        %v11324 = vmax.f32 %v11292, 0.0
        %v11325 = vmax.f32 %v11293, 0.0
        %v11326 = vmax.f32 %v11294, 0.0
        %v11327 = vmax.f32 %v11295, 0.0
        %v11328 = vmax.f32 %v11296, 0.0
        %v11329 = vmax.f32 %v11297, 0.0
        %v11330 = vmax.f32 %v11298, 0.0
        %v11331 = vmax.f32 %v11299, 0.0
        %v11332 = vmax.f32 %v11300, 0.0
        %v11333 = vmax.f32 %v11301, 0.0
        %v11334 = vmax.f32 %v11302, 0.0
        %v11335 = vmax.f32 %v11303, 0.0
        %v11336 = vmax.f32 %v11304, 0.0
        %v11337 = vmax.f32 %v11305, 0.0
        %v11338 = vmax.f32 %v11306, 0.0
        %v11339 = vmax.f32 %v11307, 0.0
        %v11340 = vmax.f32 %v11308, 0.0
        %v11341 = vmax.f32 %v11309, 0.0
        %v11342 = vmax.f32 %v11310, 0.0
        %v11343 = vmax.f32 %v11311, 0.0
        %v11344 = vmax.f32 %v11312, 0.0
        %11345 = vst [vmem:[%s325] sm:$0xff] %v11313
        %11346 = vst [vmem:[%s325 + $0x8] sm:$0xff] %v11314
        %11347 = vst [vmem:[%s325 + $0x10] sm:$0xff] %v11315
        %11348 = vst [vmem:[%s325 + $0x18] sm:$0xff] %v11316
        %11349 = vst [vmem:[%s325 + $0x20] sm:$0xff] %v11317
        %11350 = vst [vmem:[%s325 + $0x28] sm:$0xff] %v11318
        %11351 = vst [vmem:[%s325 + $0x30] sm:$0xff] %v11319
        %11352 = vst [vmem:[%s325 + $0x38] sm:$0xff] %v11320
        %11353 = vst [vmem:[%s325 + $0x40] sm:$0xff] %v11321
        %11354 = vst [vmem:[%s325 + $0x48] sm:$0xff] %v11322
        %11355 = vst [vmem:[%s325 + $0x50] sm:$0xff] %v11323
        %11356 = vst [vmem:[%s325 + $0x58] sm:$0xff] %v11324
        %11357 = vst [vmem:[%s325 + $0x60] sm:$0xff] %v11325
        %11358 = vst [vmem:[%s325 + $0x68] sm:$0xff] %v11326
        %11359 = vst [vmem:[%s325 + $0x70] sm:$0xff] %v11327
        %11360 = vst [vmem:[%s325 + $0x78] sm:$0xff] %v11328
        %11361 = vst [vmem:[%s325 + $0x80] sm:$0xff] %v11329
        %11362 = vst [vmem:[%s325 + $0x88] sm:$0xff] %v11330
        %11363 = vst [vmem:[%s325 + $0x90] sm:$0xff] %v11331
        %11364 = vst [vmem:[%s325 + $0x98] sm:$0xff] %v11332
        %11365 = vst [vmem:[%s325 + $0xa0] sm:$0xff] %v11333
        %11366 = vst [vmem:[%s325 + $0xa8] sm:$0xff] %v11334
        %11367 = vst [vmem:[%s325 + $0xb0] sm:$0xff] %v11335
        %11368 = vst [vmem:[%s325 + $0xb8] sm:$0xff] %v11336
        %11369 = vst [vmem:[%s325 + $0xc0] sm:$0xff] %v11337
        %11370 = vst [vmem:[%s325 + $0xc8] sm:$0xff] %v11338
        %11371 = vst [vmem:[%s325 + $0xd0] sm:$0xff] %v11339
        %11372 = vst [vmem:[%s325 + $0xd8] sm:$0xff] %v11340
        %11373 = vst [vmem:[%s325 + $0xe0] sm:$0xff] %v11341
        %11374 = vst [vmem:[%s325 + $0xe8] sm:$0xff] %v11342
        %11375 = vst [vmem:[%s325 + $0xf0] sm:$0xff] %v11343
        %11376 = vst [vmem:[%s325 + $0xf8] sm:$0xff] %v11344
        %s11377 = sand.u32 %s185, 1
        %s11378 = scalar_lea.sflag [#allocation6], %s11377
        %s11379 = sand.u32 %s185, 1
        %s11380 = smul.addr %s11379, 256
        %s11381 = scalar_lea.vmem [#allocation10], %s11380
        // Predicated region
        $region61: #{tpu_custom_call.1} parent=47 // pred_check
          %p11382 = pneg %p195
        $region62: #{tpu_custom_call.1} parent=47 // pred_check_branch
          %11384 = sbr.rel (%p11382) target = $region64
        $region63: #{tpu_custom_call.1} parent=47 // pred_region
          %s11386 = ssub.s32 4096, 4096
          %11387 = vsyncadd %s11378, %s11386
          %s11388 = smul.addr %s25, 32
          %s11389 = smul.addr %s11388, 128
          %s11390 = scalar_lea.hbm %s7, %s11389
          %s11391 = sshll.u32 %s11381, 4
          %s11392 = int_to_ptr.vmem [resolvable:$true] %s11391
          %11397 = dma.vmem_to_hbm [thread:$0]  %s11392, 4096, %s11390, %s11378, 128, 128, 8
        $region64: #{tpu_custom_call.1} parent=47 // pred_fallthru
          _
      $region48: #{tpu_custom_call.1} parent=5 // pred_fallthru
        _
      %p11398 = scmp.le.s32.totalorder 2, %s20
      // Predicated region
      $region65: #{tpu_custom_call.1} parent=5 // pred_check
        %p11399 = pneg %p11398
      $region66: #{tpu_custom_call.1} parent=5 // pred_check_branch
        %11401 = sbr.rel (%p11399) target = $region68
      $region67: #{tpu_custom_call.1} parent=5 // pred_region
        %s11402 = ssub.s32 %s20, 2
        // Predicated region
        $region69: #{tpu_custom_call.1} parent=67 // pred_check
          %p11403 = pneg %p201
        $region70: #{tpu_custom_call.1} parent=67 // pred_check_branch
          %11405 = sbr.rel (%p11403) target = $region72
        $region71: #{tpu_custom_call.1} parent=67 // pred_region
          %s11406 = sand.u32 %s186, 1
          %s11407 = scalar_lea.sflag [#allocation6], %s11406
          %s11408 = sand.u32 %s186, 1
          %s11409 = smul.addr %s11408, 256
          %s11410 = scalar_lea.vmem [#allocation10], %s11409
          %11411 = dma.done %s11407, 4096
        $region72: #{tpu_custom_call.1} parent=67 // pred_fallthru
          _
      $region68: #{tpu_custom_call.1} parent=5 // pred_fallthru
        _
    $region6: #{tpu_custom_call.1} parent=1 // loop_footer
      %s24 = sadd.s32 1, %s20
    $region7: #{tpu_custom_call.1} parent=1 // loop_footer_branch
      %19 = sbr.rel target = $region3
    $region8: #{tpu_custom_call.1} parent=1 // loop_exit
      _
    %11412 = vsyncpa [#allocation5], 1
    %s11413 = scalar_lea.sflag [#allocation5], 1
    %11414 = vsyncpa %s11413, 1
    %11415 = vsyncpa [#allocation8], 1
    %11416 = vsyncpa [#allocation6], 1
    %s11417 = scalar_lea.sflag [#allocation6], 1
    %11418 = vsyncpa %s11417, 1

</llo_original>
